<compile_context>
chip_gen: v6e
topology: v6e:2x2x1
jax: 0.10.0
libtpu: 0.0.40
codegen_flags: <defaults>
</compile_context>

<pallas_src>
import typing

import jax
import jax.numpy as jnp
import numpy as np
from jax.experimental import pallas as pl
from jax.experimental.pallas import tpu as pltpu


# ----------------------------------------------------------------------------
# Fused kernel: LSTM stack + FC stack + output bounding, one grid step.
# ----------------------------------------------------------------------------
def _make_fused_kernel(n_lstm_layer: int, num_fc: int, T: int, B: int, H: int):
    def kernel(*refs):
        # ---- unpack refs: inputs..., output, scratch... --------------------
        idx = 0
        x_ref = refs[idx]; idx += 1
        lstm_refs = []
        for _ in range(n_lstm_layer):
            lstm_refs.append((refs[idx], refs[idx + 1], refs[idx + 2]))
            idx += 3
        fc_refs = []
        for _ in range(num_fc):
            fc_refs.append((refs[idx], refs[idx + 1]))
            idx += 2
        ub_ref = refs[idx]; idx += 1
        lb_ref = refs[idx]; idx += 1
        out_ref = refs[idx]; idx += 1
        seq_scr = refs[idx]; idx += 1   # (T*B, H)    current layer output seq
        gx_scr = refs[idx]; idx += 1    # (4, T*B, H) per-gate input projection

        cdt = lstm_refs[0][0].dtype     # matmul compute dtype (bfloat16)

        for layer, (wih_ref, whh_ref, b_ref) in enumerate(lstm_refs):
            # Batched input projection over the whole sequence (off the serial
            # critical path); combined bias folded in here once.
            if layer == 0:
                x_in = x_ref[...].astype(cdt)
            else:
                x_in = seq_scr[...].astype(cdt)
            for k in range(4):
                gx_scr[k] = (
                    jnp.dot(x_in, wih_ref[k],
                            preferred_element_type=jnp.float32)
                    + b_ref[k]
                )

            # Serial recurrence: per step only h @ W_hh + gate nonlinearities.
            # T is small and static, so the loop is fully unrolled (static
            # slices, no masked dynamic-index codegen in the hot path).
            h = jnp.zeros((B, H), jnp.float32)
            c = jnp.zeros((B, H), jnp.float32)
            for t in range(T):
                rows = pl.ds(t * B, B)
                h_in = h.astype(cdt)
                g = [
                    gx_scr[k, rows, :]
                    + jnp.dot(h_in, whh_ref[k],
                              preferred_element_type=jnp.float32)
                    for k in range(4)
                ]  # PyTorch gate order: i, f, g, o
                i_g = jax.nn.sigmoid(g[0])
                f_g = jax.nn.sigmoid(g[1])
                g_g = jnp.tanh(g[2])
                o_g = jax.nn.sigmoid(g[3])
                c = f_g * c + i_g * g_g
                h = o_g * jnp.tanh(c)
                seq_scr[rows, :] = h

        # ---- FC stack + bounding applied while the sequence is in VMEM -----
        z = seq_scr[...]
        for li, (w_ref, b_ref) in enumerate(fc_refs):
            z = (jnp.dot(z.astype(cdt), w_ref[...],
                         preferred_element_type=jnp.float32) + b_ref[...])
            if li < num_fc - 1:
                z = jnp.maximum(z, 0.0)   # ReLU between hidden FC layers
        # TODO(synk): outputBoundConfig source not provided; assume sigmoid
        # squashing of the raw fc output into [lower_bounds, upper_bounds].
        out_ref[...] = (lb_ref[...]
                        + (ub_ref[...] - lb_ref[...]) * jax.nn.sigmoid(z))

    return kernel


def bounded_lstm_forward(x, lstm_w_ih, lstm_w_hh, lstm_b, fc_w, fc_b, ub, lb):
    """x: (T, B, F) f32; per-gate bf16 weights; returns (T, B, n_out) f32."""
    T, B, F = x.shape
    H = lstm_w_hh[0].shape[-1]
    n_lstm_layer = len(lstm_w_ih)
    num_fc = len(fc_w)
    n_out = ub.shape[-1]
    N = T * B
    x2d = x.reshape(N, F)

    operands = [x2d]
    in_specs = [pl.BlockSpec((N, F), lambda i: (0, 0))]
    for wih, whh, b in zip(lstm_w_ih, lstm_w_hh, lstm_b):
        operands += [wih, whh, b]
        in_specs += [
            pl.BlockSpec(wih.shape, lambda i: (0, 0, 0)),
            pl.BlockSpec(whh.shape, lambda i: (0, 0, 0)),
            pl.BlockSpec(b.shape, lambda i: (0, 0, 0)),
        ]
    for w, b in zip(fc_w, fc_b):
        operands += [w, b]
        in_specs += [
            pl.BlockSpec(w.shape, lambda i: (0, 0)),
            pl.BlockSpec(b.shape, lambda i: (0, 0)),
        ]
    operands += [ub, lb]
    in_specs += [
        pl.BlockSpec(ub.shape, lambda i: (0, 0)),
        pl.BlockSpec(lb.shape, lambda i: (0, 0)),
    ]

    # Advisory cost estimate so XLA schedules the custom call sensibly.
    flops = 0
    for wih in lstm_w_ih:
        f_in = wih.shape[1]
        flops += 2 * N * f_in * 4 * H          # batched input projection
        flops += 2 * N * H * 4 * H             # recurrent h @ W_hh
    for w in fc_w:
        flops += 2 * N * w.shape[0] * w.shape[1]
    transcendentals = n_lstm_layer * 5 * N * H + N * n_out
    bytes_accessed = int(
        sum(int(np.prod(o.shape)) * o.dtype.itemsize for o in operands)
        + N * n_out * 4)

    out2d = pl.pallas_call(
        _make_fused_kernel(n_lstm_layer, num_fc, T, B, H),
        out_shape=jax.ShapeDtypeStruct((N, n_out), jnp.float32),
        grid_spec=pltpu.PrefetchScalarGridSpec(
            num_scalar_prefetch=0,
            grid=(1,),
            in_specs=in_specs,
            out_specs=pl.BlockSpec((N, n_out), lambda i: (0, 0)),
            scratch_shapes=[
                pltpu.VMEM((N, H), jnp.float32),     # layer output sequence
                pltpu.VMEM((4, N, H), jnp.float32),  # per-gate input proj
            ],
        ),
        compiler_params=pltpu.CompilerParams(
            dimension_semantics=("arbitrary",),
            vmem_limit_bytes=32 * 1024 * 1024,       # fits v5e/v6e/v7x budgets
        ),
        cost_estimate=pl.CostEstimate(
            flops=int(flops),
            transcendentals=int(transcendentals),
            bytes_accessed=bytes_accessed),
    )(*operands)
    return out2d.reshape(T, B, n_out)


# ----------------------------------------------------------------------------
# boundedLSTM module (parameters built deterministically in-script).
# ----------------------------------------------------------------------------
class BoundedLSTMPallas:
    def __init__(self, key, n_feature: int, n_output: int, n_lstm_hidden: int,
                 n_lstm_layer: int, fc_hiddens: typing.List[int],
                 upper_bounds, lower_bounds, compute_dtype=jnp.bfloat16):
        # Matches boundedLSTM.__init__: with no FC layers the module outputs
        # the (bounded) raw LSTM hidden state, so bounds must be sized H.
        if len(fc_hiddens) == 0:
            n_output = n_lstm_hidden
        self.n_feature = n_feature
        self.n_output = n_output
        self.n_lstm_hidden = n_lstm_hidden
        self.n_lstm_layer = n_lstm_layer
        self.compute_dtype = compute_dtype

        H = n_lstm_hidden
        k_lstm = 1.0 / np.sqrt(H)

        # LSTM params.  PyTorch layout: W_ih (4H, in), W_hh (4H, H), b (4H,),
        # gate order (i, f, g, o).  Stored pre-split per gate and
        # pre-transposed: w_ih (4, in, H), w_hh (4, H, H), b = b_ih+b_hh
        # as (4, 1, H) in f32.
        self.lstm_w_ih = []
        self.lstm_w_hh = []
        self.lstm_b = []
        for layer in range(n_lstm_layer):
            in_dim = n_feature if layer == 0 else H
            key, k1, k2, k3, k4 = jax.random.split(key, 5)
            w_ih = jax.random.uniform(k1, (4 * H, in_dim), jnp.float32, -k_lstm, k_lstm)
            w_hh = jax.random.uniform(k2, (4 * H, H), jnp.float32, -k_lstm, k_lstm)
            b_ih = jax.random.uniform(k3, (4 * H,), jnp.float32, -k_lstm, k_lstm)
            b_hh = jax.random.uniform(k4, (4 * H,), jnp.float32, -k_lstm, k_lstm)
            self.lstm_w_ih.append(
                jnp.transpose(w_ih.reshape(4, H, in_dim), (0, 2, 1)).astype(compute_dtype))
            self.lstm_w_hh.append(
                jnp.transpose(w_hh.reshape(4, H, H), (0, 2, 1)).astype(compute_dtype))
            self.lstm_b.append((b_ih + b_hh).reshape(4, 1, H))

        # FC params (nn.Linear: W (out, in), b (out,)); stored transposed.
        self.fc_w = []
        self.fc_b = []
        if len(fc_hiddens) > 0:
            dims = [H] + list(fc_hiddens) + [n_output]
            for i in range(len(dims) - 1):
                fan_in, fan_out = dims[i], dims[i + 1]
                k_fc = 1.0 / np.sqrt(fan_in)
                key, k1, k2 = jax.random.split(key, 3)
                w = jax.random.uniform(k1, (fan_out, fan_in), jnp.float32, -k_fc, k_fc)
                b = jax.random.uniform(k2, (fan_out,), jnp.float32, -k_fc, k_fc)
                self.fc_w.append(w.T.astype(compute_dtype))
                self.fc_b.append(b.reshape(1, fan_out))

        ub = jnp.asarray(upper_bounds, jnp.float32).reshape(-1)
        lb = jnp.asarray(lower_bounds, jnp.float32).reshape(-1)
        assert ub.shape[0] == n_output and lb.shape[0] == n_output, (
            "bounds must have length n_output "
            "(== n_lstm_hidden when fc_hiddens == [])")
        self.upper_bounds = ub.reshape(1, n_output)
        self.lower_bounds = lb.reshape(1, n_output)

    def forward(self, x):
        """x: (T, B, n_feature) -> (T, B, n_output)."""
        return bounded_lstm_forward(
            x, self.lstm_w_ih, self.lstm_w_hh, self.lstm_b,
            self.fc_w, self.fc_b, self.upper_bounds, self.lower_bounds)

    # pure-JAX reference mirroring the kernel math for verification
    def forward_ref(self, x):
        T, B, _ = x.shape
        H = self.n_lstm_hidden
        cdt = self.compute_dtype
        z = x.reshape(T * B, -1)
        for layer in range(self.n_lstm_layer):
            wih = self.lstm_w_ih[layer]
            whh = self.lstm_w_hh[layer]
            b = self.lstm_b[layer]
            xin = z.astype(cdt)
            gx = [jnp.dot(xin, wih[k], preferred_element_type=jnp.float32) + b[k]
                  for k in range(4)]
            h = jnp.zeros((B, H), jnp.float32)
            c = jnp.zeros((B, H), jnp.float32)
            outs = []
            for t in range(T):
                hb = h.astype(cdt)
                g = [gx[k][t * B:(t + 1) * B]
                     + jnp.dot(hb, whh[k], preferred_element_type=jnp.float32)
                     for k in range(4)]
                i_g = jax.nn.sigmoid(g[0])
                f_g = jax.nn.sigmoid(g[1])
                g_g = jnp.tanh(g[2])
                o_g = jax.nn.sigmoid(g[3])
                c = f_g * c + i_g * g_g
                h = o_g * jnp.tanh(c)
                outs.append(h)
            z = jnp.concatenate(outs, axis=0)
        for li, (w, bb) in enumerate(zip(self.fc_w, self.fc_b)):
            z = jnp.dot(z.astype(cdt), w, preferred_element_type=jnp.float32) + bb
            if li < len(self.fc_w) - 1:
                z = jnp.maximum(z, 0.0)
        z = (self.lower_bounds
             + (self.upper_bounds - self.lower_bounds) * jax.nn.sigmoid(z))
        return z.reshape(T, B, self.n_output)


if __name__ == "__main__":
    # Small, module-consistent shapes.
    n_feature = 8
    n_output = 4
    n_lstm_hidden = 32
    n_lstm_layer = 2
    fc_hiddens = [32]
    seq, batch = 8, 2

    upper = jnp.ones((n_output,), jnp.float32) * 2.0
    lower = -jnp.ones((n_output,), jnp.float32)

    key = jax.random.PRNGKey(0)
    key, xkey = jax.random.split(key)
    model = BoundedLSTMPallas(key, n_feature, n_output, n_lstm_hidden,
                              n_lstm_layer, fc_hiddens, upper, lower)

    # x: (T, B, F) — batch_first=False (module default)
    x = jax.random.normal(xkey, (seq, batch, n_feature), jnp.float32)

    out = jax.block_until_ready(model.forward(x))
    ref = jax.block_until_ready(model.forward_ref(x))

    np.testing.assert_allclose(np.asarray(out), np.asarray(ref),
                               rtol=5e-3, atol=5e-3)
    assert out.shape == (seq, batch, n_output)
    print("KERNEL_OK")
</pallas_src>

<mosaic_0001>
module attributes {stable_mosaic.version = 11 : i64} {
  func.func @kernel(%arg0: i32, %arg1: memref<16x8xf32, #tpu.memory_space<vmem>>, %arg2: memref<4x8x32xbf16, #tpu.memory_space<vmem>>, %arg3: memref<4x32x32xbf16, #tpu.memory_space<vmem>>, %arg4: memref<4x1x32xf32, #tpu.memory_space<vmem>>, %arg5: memref<4x32x32xbf16, #tpu.memory_space<vmem>>, %arg6: memref<4x32x32xbf16, #tpu.memory_space<vmem>>, %arg7: memref<4x1x32xf32, #tpu.memory_space<vmem>>, %arg8: memref<32x32xbf16, #tpu.memory_space<vmem>>, %arg9: memref<1x32xf32, #tpu.memory_space<vmem>>, %arg10: memref<32x4xbf16, #tpu.memory_space<vmem>>, %arg11: memref<1x4xf32, #tpu.memory_space<vmem>>, %arg12: memref<1x4xf32, #tpu.memory_space<vmem>>, %arg13: memref<1x4xf32, #tpu.memory_space<vmem>>, %arg14: memref<16x4xf32, #tpu.memory_space<vmem>>, %arg15: memref<16x32xf32, #tpu.memory_space<vmem>>, %arg16: memref<4x16x32xf32, #tpu.memory_space<vmem>>) attributes {dimension_semantics = [#tpu.dimension_semantics<arbitrary>], iteration_bounds = array<i64: 1>, scalar_prefetch = 0 : i64, scratch_operands = 2 : i64, tpu.core_type = #tpu.core_type<tc>, window_params = [{pipeline_mode = #tpu.pipeline_mode<synchronous>, transform_indices = @transform_0, window_bounds = array<i64: 16, 8>}, {pipeline_mode = #tpu.pipeline_mode<synchronous>, transform_indices = @transform_1, window_bounds = array<i64: 4, 8, 32>}, {pipeline_mode = #tpu.pipeline_mode<synchronous>, transform_indices = @transform_2, window_bounds = array<i64: 4, 32, 32>}, {pipeline_mode = #tpu.pipeline_mode<synchronous>, transform_indices = @transform_3, window_bounds = array<i64: 4, 1, 32>}, {pipeline_mode = #tpu.pipeline_mode<synchronous>, transform_indices = @transform_4, window_bounds = array<i64: 4, 32, 32>}, {pipeline_mode = #tpu.pipeline_mode<synchronous>, transform_indices = @transform_5, window_bounds = array<i64: 4, 32, 32>}, {pipeline_mode = #tpu.pipeline_mode<synchronous>, transform_indices = @transform_6, window_bounds = array<i64: 4, 1, 32>}, {pipeline_mode = #tpu.pipeline_mode<synchronous>, transform_indices = @transform_7, window_bounds = array<i64: 32, 32>}, {pipeline_mode = #tpu.pipeline_mode<synchronous>, transform_indices = @transform_8, window_bounds = array<i64: 1, 32>}, {pipeline_mode = #tpu.pipeline_mode<synchronous>, transform_indices = @transform_9, window_bounds = array<i64: 32, 4>}, {pipeline_mode = #tpu.pipeline_mode<synchronous>, transform_indices = @transform_10, window_bounds = array<i64: 1, 4>}, {pipeline_mode = #tpu.pipeline_mode<synchronous>, transform_indices = @transform_11, window_bounds = array<i64: 1, 4>}, {pipeline_mode = #tpu.pipeline_mode<synchronous>, transform_indices = @transform_12, window_bounds = array<i64: 1, 4>}, {pipeline_mode = #tpu.pipeline_mode<synchronous>, transform_indices = @transform_13, window_bounds = array<i64: 16, 4>}]} {
    %c0 = arith.constant 0 : index
    %c0_0 = arith.constant 0 : index
    %0 = vector.load %arg1[%c0, %c0_0] : memref<16x8xf32, #tpu.memory_space<vmem>>, vector<16x8xf32>
    %1 = arith.truncf %0 : vector<16x8xf32> to vector<16x8xbf16>
    %c0_1 = arith.constant 0 : index
    %c0_2 = arith.constant 0 : index
    %c0_3 = arith.constant 0 : index
    %2 = vector.load %arg2[%c0_1, %c0_2, %c0_3] : memref<4x8x32xbf16, #tpu.memory_space<vmem>>, vector<1x8x32xbf16>
    %3 = vector.shape_cast %2 : vector<1x8x32xbf16> to vector<8x32xbf16>
    %cst = arith.constant dense<0.000000e+00> : vector<16x32xf32>
    %4 = tpu.matmul %1, %3, %cst {dimension_numbers = #tpu.dot_dimension_numbers<[1], [0], [0], [1], [0, 0, 1, 1], [], []>} : vector<16x8xbf16>, vector<8x32xbf16>, vector<16x32xf32> -> vector<16x32xf32>
    %c0_4 = arith.constant 0 : index
    %c0_5 = arith.constant 0 : index
    %c0_6 = arith.constant 0 : index
    %5 = vector.load %arg4[%c0_4, %c0_5, %c0_6] : memref<4x1x32xf32, #tpu.memory_space<vmem>>, vector<1x1x32xf32>
    %6 = vector.shape_cast %5 : vector<1x1x32xf32> to vector<1x32xf32>
    %7 = vector.broadcast %6 : vector<1x32xf32> to vector<16x32xf32>
    %8 = arith.addf %4, %7 : vector<16x32xf32>
    %c0_7 = arith.constant 0 : index
    %c0_8 = arith.constant 0 : index
    %c0_9 = arith.constant 0 : index
    %9 = vector.load %arg16[%c0_7, %c0_8, %c0_9] : memref<4x16x32xf32, #tpu.memory_space<vmem>>, vector<1x16x32xf32>
    %10 = vector.shape_cast %9 : vector<1x16x32xf32> to vector<16x32xf32>
    %11 = vector.shape_cast %8 : vector<16x32xf32> to vector<1x16x32xf32>
    tpu.vector_store %arg16[%c0_7, %c0_8, %c0_9], %11 {strides = array<i32>} : memref<4x16x32xf32, #tpu.memory_space<vmem>>, vector<1x16x32xf32>,
    %c1 = arith.constant 1 : index
    %c0_10 = arith.constant 0 : index
    %c0_11 = arith.constant 0 : index
    %12 = vector.load %arg2[%c1, %c0_10, %c0_11] : memref<4x8x32xbf16, #tpu.memory_space<vmem>>, vector<1x8x32xbf16>
    %13 = vector.shape_cast %12 : vector<1x8x32xbf16> to vector<8x32xbf16>
    %cst_12 = arith.constant dense<0.000000e+00> : vector<16x32xf32>
    %14 = tpu.matmul %1, %13, %cst_12 {dimension_numbers = #tpu.dot_dimension_numbers<[1], [0], [0], [1], [0, 0, 1, 1], [], []>} : vector<16x8xbf16>, vector<8x32xbf16>, vector<16x32xf32> -> vector<16x32xf32>
    %c1_13 = arith.constant 1 : index
    %c0_14 = arith.constant 0 : index
    %c0_15 = arith.constant 0 : index
    %15 = vector.load %arg4[%c1_13, %c0_14, %c0_15] : memref<4x1x32xf32, #tpu.memory_space<vmem>>, vector<1x1x32xf32>
    %16 = vector.shape_cast %15 : vector<1x1x32xf32> to vector<1x32xf32>
    %17 = vector.broadcast %16 : vector<1x32xf32> to vector<16x32xf32>
    %18 = arith.addf %14, %17 : vector<16x32xf32>
    %c1_16 = arith.constant 1 : index
    %c0_17 = arith.constant 0 : index
    %c0_18 = arith.constant 0 : index
    %19 = vector.load %arg16[%c1_16, %c0_17, %c0_18] : memref<4x16x32xf32, #tpu.memory_space<vmem>>, vector<1x16x32xf32>
    %20 = vector.shape_cast %19 : vector<1x16x32xf32> to vector<16x32xf32>
    %21 = vector.shape_cast %18 : vector<16x32xf32> to vector<1x16x32xf32>
    tpu.vector_store %arg16[%c1_16, %c0_17, %c0_18], %21 {strides = array<i32>} : memref<4x16x32xf32, #tpu.memory_space<vmem>>, vector<1x16x32xf32>,
    %c2 = arith.constant 2 : index
    %c0_19 = arith.constant 0 : index
    %c0_20 = arith.constant 0 : index
    %22 = vector.load %arg2[%c2, %c0_19, %c0_20] : memref<4x8x32xbf16, #tpu.memory_space<vmem>>, vector<1x8x32xbf16>
    %23 = vector.shape_cast %22 : vector<1x8x32xbf16> to vector<8x32xbf16>
    %cst_21 = arith.constant dense<0.000000e+00> : vector<16x32xf32>
    %24 = tpu.matmul %1, %23, %cst_21 {dimension_numbers = #tpu.dot_dimension_numbers<[1], [0], [0], [1], [0, 0, 1, 1], [], []>} : vector<16x8xbf16>, vector<8x32xbf16>, vector<16x32xf32> -> vector<16x32xf32>
    %c2_22 = arith.constant 2 : index
    %c0_23 = arith.constant 0 : index
    %c0_24 = arith.constant 0 : index
    %25 = vector.load %arg4[%c2_22, %c0_23, %c0_24] : memref<4x1x32xf32, #tpu.memory_space<vmem>>, vector<1x1x32xf32>
    %26 = vector.shape_cast %25 : vector<1x1x32xf32> to vector<1x32xf32>
    %27 = vector.broadcast %26 : vector<1x32xf32> to vector<16x32xf32>
    %28 = arith.addf %24, %27 : vector<16x32xf32>
    %c2_25 = arith.constant 2 : index
    %c0_26 = arith.constant 0 : index
    %c0_27 = arith.constant 0 : index
    %29 = vector.load %arg16[%c2_25, %c0_26, %c0_27] : memref<4x16x32xf32, #tpu.memory_space<vmem>>, vector<1x16x32xf32>
    %30 = vector.shape_cast %29 : vector<1x16x32xf32> to vector<16x32xf32>
    %31 = vector.shape_cast %28 : vector<16x32xf32> to vector<1x16x32xf32>
    tpu.vector_store %arg16[%c2_25, %c0_26, %c0_27], %31 {strides = array<i32>} : memref<4x16x32xf32, #tpu.memory_space<vmem>>, vector<1x16x32xf32>,
    %c3 = arith.constant 3 : index
    %c0_28 = arith.constant 0 : index
    %c0_29 = arith.constant 0 : index
    %32 = vector.load %arg2[%c3, %c0_28, %c0_29] : memref<4x8x32xbf16, #tpu.memory_space<vmem>>, vector<1x8x32xbf16>
    %33 = vector.shape_cast %32 : vector<1x8x32xbf16> to vector<8x32xbf16>
    %cst_30 = arith.constant dense<0.000000e+00> : vector<16x32xf32>
    %34 = tpu.matmul %1, %33, %cst_30 {dimension_numbers = #tpu.dot_dimension_numbers<[1], [0], [0], [1], [0, 0, 1, 1], [], []>} : vector<16x8xbf16>, vector<8x32xbf16>, vector<16x32xf32> -> vector<16x32xf32>
    %c3_31 = arith.constant 3 : index
    %c0_32 = arith.constant 0 : index
    %c0_33 = arith.constant 0 : index
    %35 = vector.load %arg4[%c3_31, %c0_32, %c0_33] : memref<4x1x32xf32, #tpu.memory_space<vmem>>, vector<1x1x32xf32>
    %36 = vector.shape_cast %35 : vector<1x1x32xf32> to vector<1x32xf32>
    %37 = vector.broadcast %36 : vector<1x32xf32> to vector<16x32xf32>
    %38 = arith.addf %34, %37 : vector<16x32xf32>
    %c3_34 = arith.constant 3 : index
    %c0_35 = arith.constant 0 : index
    %c0_36 = arith.constant 0 : index
    %39 = vector.load %arg16[%c3_34, %c0_35, %c0_36] : memref<4x16x32xf32, #tpu.memory_space<vmem>>, vector<1x16x32xf32>
    %40 = vector.shape_cast %39 : vector<1x16x32xf32> to vector<16x32xf32>
    %41 = vector.shape_cast %38 : vector<16x32xf32> to vector<1x16x32xf32>
    tpu.vector_store %arg16[%c3_34, %c0_35, %c0_36], %41 {strides = array<i32>} : memref<4x16x32xf32, #tpu.memory_space<vmem>>, vector<1x16x32xf32>,
    %cst_37 = arith.constant 0.000000e+00 : f32
    %42 = vector.broadcast %cst_37 : f32 to vector<2x32xf32>
    %cst_38 = arith.constant 0.000000e+00 : f32
    %43 = vector.broadcast %cst_38 : f32 to vector<2x32xf32>
    %44 = arith.truncf %42 : vector<2x32xf32> to vector<2x32xbf16>
    %c0_39 = arith.constant 0 : index
    %c0_40 = arith.constant 0 : index
    %c0_41 = arith.constant 0 : index
    %45 = vector.load %arg16[%c0_39, %c0_40, %c0_41] : memref<4x16x32xf32, #tpu.memory_space<vmem>>, vector<1x2x32xf32>
    %46 = vector.shape_cast %45 : vector<1x2x32xf32> to vector<2x32xf32>
    %c0_42 = arith.constant 0 : index
    %c0_43 = arith.constant 0 : index
    %c0_44 = arith.constant 0 : index
    %47 = vector.load %arg3[%c0_42, %c0_43, %c0_44] : memref<4x32x32xbf16, #tpu.memory_space<vmem>>, vector<1x32x32xbf16>
    %48 = vector.shape_cast %47 : vector<1x32x32xbf16> to vector<32x32xbf16>
    %cst_45 = arith.constant dense<0.000000e+00> : vector<2x32xf32>
    %49 = tpu.matmul %44, %48, %cst_45 {dimension_numbers = #tpu.dot_dimension_numbers<[1], [0], [0], [1], [0, 0, 1, 1], [], []>} : vector<2x32xbf16>, vector<32x32xbf16>, vector<2x32xf32> -> vector<2x32xf32>
    %50 = arith.addf %46, %49 : vector<2x32xf32>
    %c1_46 = arith.constant 1 : index
    %c0_47 = arith.constant 0 : index
    %c0_48 = arith.constant 0 : index
    %51 = vector.load %arg16[%c1_46, %c0_47, %c0_48] : memref<4x16x32xf32, #tpu.memory_space<vmem>>, vector<1x2x32xf32>
    %52 = vector.shape_cast %51 : vector<1x2x32xf32> to vector<2x32xf32>
    %c1_49 = arith.constant 1 : index
    %c0_50 = arith.constant 0 : index
    %c0_51 = arith.constant 0 : index
    %53 = vector.load %arg3[%c1_49, %c0_50, %c0_51] : memref<4x32x32xbf16, #tpu.memory_space<vmem>>, vector<1x32x32xbf16>
    %54 = vector.shape_cast %53 : vector<1x32x32xbf16> to vector<32x32xbf16>
    %cst_52 = arith.constant dense<0.000000e+00> : vector<2x32xf32>
    %55 = tpu.matmul %44, %54, %cst_52 {dimension_numbers = #tpu.dot_dimension_numbers<[1], [0], [0], [1], [0, 0, 1, 1], [], []>} : vector<2x32xbf16>, vector<32x32xbf16>, vector<2x32xf32> -> vector<2x32xf32>
    %56 = arith.addf %52, %55 : vector<2x32xf32>
    %c2_53 = arith.constant 2 : index
    %c0_54 = arith.constant 0 : index
    %c0_55 = arith.constant 0 : index
    %57 = vector.load %arg16[%c2_53, %c0_54, %c0_55] : memref<4x16x32xf32, #tpu.memory_space<vmem>>, vector<1x2x32xf32>
    %58 = vector.shape_cast %57 : vector<1x2x32xf32> to vector<2x32xf32>
    %c2_56 = arith.constant 2 : index
    %c0_57 = arith.constant 0 : index
    %c0_58 = arith.constant 0 : index
    %59 = vector.load %arg3[%c2_56, %c0_57, %c0_58] : memref<4x32x32xbf16, #tpu.memory_space<vmem>>, vector<1x32x32xbf16>
    %60 = vector.shape_cast %59 : vector<1x32x32xbf16> to vector<32x32xbf16>
    %cst_59 = arith.constant dense<0.000000e+00> : vector<2x32xf32>
    %61 = tpu.matmul %44, %60, %cst_59 {dimension_numbers = #tpu.dot_dimension_numbers<[1], [0], [0], [1], [0, 0, 1, 1], [], []>} : vector<2x32xbf16>, vector<32x32xbf16>, vector<2x32xf32> -> vector<2x32xf32>
    %62 = arith.addf %58, %61 : vector<2x32xf32>
    %c3_60 = arith.constant 3 : index
    %c0_61 = arith.constant 0 : index
    %c0_62 = arith.constant 0 : index
    %63 = vector.load %arg16[%c3_60, %c0_61, %c0_62] : memref<4x16x32xf32, #tpu.memory_space<vmem>>, vector<1x2x32xf32>
    %64 = vector.shape_cast %63 : vector<1x2x32xf32> to vector<2x32xf32>
    %c3_63 = arith.constant 3 : index
    %c0_64 = arith.constant 0 : index
    %c0_65 = arith.constant 0 : index
    %65 = vector.load %arg3[%c3_63, %c0_64, %c0_65] : memref<4x32x32xbf16, #tpu.memory_space<vmem>>, vector<1x32x32xbf16>
    %66 = vector.shape_cast %65 : vector<1x32x32xbf16> to vector<32x32xbf16>
    %cst_66 = arith.constant dense<0.000000e+00> : vector<2x32xf32>
    %67 = tpu.matmul %44, %66, %cst_66 {dimension_numbers = #tpu.dot_dimension_numbers<[1], [0], [0], [1], [0, 0, 1, 1], [], []>} : vector<2x32xbf16>, vector<32x32xbf16>, vector<2x32xf32> -> vector<2x32xf32>
    %68 = arith.addf %64, %67 : vector<2x32xf32>
    %69 = arith.negf %50 : vector<2x32xf32>
    %70 = math.exp %69 : vector<2x32xf32>
    %cst_67 = arith.constant 1.000000e+00 : f32
    %71 = vector.broadcast %cst_67 : f32 to vector<2x32xf32>
    %72 = arith.addf %71, %70 : vector<2x32xf32>
    %73 = arith.divf %71, %72 : vector<2x32xf32>
    %74 = arith.negf %56 : vector<2x32xf32>
    %75 = math.exp %74 : vector<2x32xf32>
    %cst_68 = arith.constant 1.000000e+00 : f32
    %76 = vector.broadcast %cst_68 : f32 to vector<2x32xf32>
    %77 = arith.addf %76, %75 : vector<2x32xf32>
    %78 = arith.divf %76, %77 : vector<2x32xf32>
    %79 = math.tanh %62 : vector<2x32xf32>
    %80 = arith.negf %68 : vector<2x32xf32>
    %81 = math.exp %80 : vector<2x32xf32>
    %cst_69 = arith.constant 1.000000e+00 : f32
    %82 = vector.broadcast %cst_69 : f32 to vector<2x32xf32>
    %83 = arith.addf %82, %81 : vector<2x32xf32>
    %84 = arith.divf %82, %83 : vector<2x32xf32>
    %85 = arith.mulf %78, %43 : vector<2x32xf32>
    %86 = arith.mulf %73, %79 : vector<2x32xf32>
    %87 = arith.addf %85, %86 : vector<2x32xf32>
    %88 = math.tanh %87 : vector<2x32xf32>
    %89 = arith.mulf %84, %88 : vector<2x32xf32>
    %c0_70 = arith.constant 0 : index
    %c0_71 = arith.constant 0 : index
    %90 = vector.load %arg15[%c0_70, %c0_71] : memref<16x32xf32, #tpu.memory_space<vmem>>, vector<2x32xf32>
    tpu.vector_store %arg15[%c0_70, %c0_71], %89 {strides = array<i32>} : memref<16x32xf32, #tpu.memory_space<vmem>>, vector<2x32xf32>,
    %91 = arith.truncf %89 : vector<2x32xf32> to vector<2x32xbf16>
    %c0_72 = arith.constant 0 : index
    %c2_73 = arith.constant 2 : index
    %c0_74 = arith.constant 0 : index
    %92 = vector.load %arg16[%c0_72, %c2_73, %c0_74] : memref<4x16x32xf32, #tpu.memory_space<vmem>>, vector<1x2x32xf32>
    %93 = vector.shape_cast %92 : vector<1x2x32xf32> to vector<2x32xf32>
    %c0_75 = arith.constant 0 : index
    %c0_76 = arith.constant 0 : index
    %c0_77 = arith.constant 0 : index
    %94 = vector.load %arg3[%c0_75, %c0_76, %c0_77] : memref<4x32x32xbf16, #tpu.memory_space<vmem>>, vector<1x32x32xbf16>
    %95 = vector.shape_cast %94 : vector<1x32x32xbf16> to vector<32x32xbf16>
    %cst_78 = arith.constant dense<0.000000e+00> : vector<2x32xf32>
    %96 = tpu.matmul %91, %95, %cst_78 {dimension_numbers = #tpu.dot_dimension_numbers<[1], [0], [0], [1], [0, 0, 1, 1], [], []>} : vector<2x32xbf16>, vector<32x32xbf16>, vector<2x32xf32> -> vector<2x32xf32>
    %97 = arith.addf %93, %96 : vector<2x32xf32>
    %c1_79 = arith.constant 1 : index
    %c2_80 = arith.constant 2 : index
    %c0_81 = arith.constant 0 : index
    %98 = vector.load %arg16[%c1_79, %c2_80, %c0_81] : memref<4x16x32xf32, #tpu.memory_space<vmem>>, vector<1x2x32xf32>
    %99 = vector.shape_cast %98 : vector<1x2x32xf32> to vector<2x32xf32>
    %c1_82 = arith.constant 1 : index
    %c0_83 = arith.constant 0 : index
    %c0_84 = arith.constant 0 : index
    %100 = vector.load %arg3[%c1_82, %c0_83, %c0_84] : memref<4x32x32xbf16, #tpu.memory_space<vmem>>, vector<1x32x32xbf16>
    %101 = vector.shape_cast %100 : vector<1x32x32xbf16> to vector<32x32xbf16>
    %cst_85 = arith.constant dense<0.000000e+00> : vector<2x32xf32>
    %102 = tpu.matmul %91, %101, %cst_85 {dimension_numbers = #tpu.dot_dimension_numbers<[1], [0], [0], [1], [0, 0, 1, 1], [], []>} : vector<2x32xbf16>, vector<32x32xbf16>, vector<2x32xf32> -> vector<2x32xf32>
    %103 = arith.addf %99, %102 : vector<2x32xf32>
    %c2_86 = arith.constant 2 : index
    %c2_87 = arith.constant 2 : index
    %c0_88 = arith.constant 0 : index
    %104 = vector.load %arg16[%c2_86, %c2_87, %c0_88] : memref<4x16x32xf32, #tpu.memory_space<vmem>>, vector<1x2x32xf32>
    %105 = vector.shape_cast %104 : vector<1x2x32xf32> to vector<2x32xf32>
    %c2_89 = arith.constant 2 : index
    %c0_90 = arith.constant 0 : index
    %c0_91 = arith.constant 0 : index
    %106 = vector.load %arg3[%c2_89, %c0_90, %c0_91] : memref<4x32x32xbf16, #tpu.memory_space<vmem>>, vector<1x32x32xbf16>
    %107 = vector.shape_cast %106 : vector<1x32x32xbf16> to vector<32x32xbf16>
    %cst_92 = arith.constant dense<0.000000e+00> : vector<2x32xf32>
    %108 = tpu.matmul %91, %107, %cst_92 {dimension_numbers = #tpu.dot_dimension_numbers<[1], [0], [0], [1], [0, 0, 1, 1], [], []>} : vector<2x32xbf16>, vector<32x32xbf16>, vector<2x32xf32> -> vector<2x32xf32>
    %109 = arith.addf %105, %108 : vector<2x32xf32>
    %c3_93 = arith.constant 3 : index
    %c2_94 = arith.constant 2 : index
    %c0_95 = arith.constant 0 : index
    %110 = vector.load %arg16[%c3_93, %c2_94, %c0_95] : memref<4x16x32xf32, #tpu.memory_space<vmem>>, vector<1x2x32xf32>
    %111 = vector.shape_cast %110 : vector<1x2x32xf32> to vector<2x32xf32>
    %c3_96 = arith.constant 3 : index
    %c0_97 = arith.constant 0 : index
    %c0_98 = arith.constant 0 : index
    %112 = vector.load %arg3[%c3_96, %c0_97, %c0_98] : memref<4x32x32xbf16, #tpu.memory_space<vmem>>, vector<1x32x32xbf16>
    %113 = vector.shape_cast %112 : vector<1x32x32xbf16> to vector<32x32xbf16>
    %cst_99 = arith.constant dense<0.000000e+00> : vector<2x32xf32>
    %114 = tpu.matmul %91, %113, %cst_99 {dimension_numbers = #tpu.dot_dimension_numbers<[1], [0], [0], [1], [0, 0, 1, 1], [], []>} : vector<2x32xbf16>, vector<32x32xbf16>, vector<2x32xf32> -> vector<2x32xf32>
    %115 = arith.addf %111, %114 : vector<2x32xf32>
    %116 = arith.negf %97 : vector<2x32xf32>
    %117 = math.exp %116 : vector<2x32xf32>
    %cst_100 = arith.constant 1.000000e+00 : f32
    %118 = vector.broadcast %cst_100 : f32 to vector<2x32xf32>
    %119 = arith.addf %118, %117 : vector<2x32xf32>
    %120 = arith.divf %118, %119 : vector<2x32xf32>
    %121 = arith.negf %103 : vector<2x32xf32>
    %122 = math.exp %121 : vector<2x32xf32>
    %cst_101 = arith.constant 1.000000e+00 : f32
    %123 = vector.broadcast %cst_101 : f32 to vector<2x32xf32>
    %124 = arith.addf %123, %122 : vector<2x32xf32>
    %125 = arith.divf %123, %124 : vector<2x32xf32>
    %126 = math.tanh %109 : vector<2x32xf32>
    %127 = arith.negf %115 : vector<2x32xf32>
    %128 = math.exp %127 : vector<2x32xf32>
    %cst_102 = arith.constant 1.000000e+00 : f32
    %129 = vector.broadcast %cst_102 : f32 to vector<2x32xf32>
    %130 = arith.addf %129, %128 : vector<2x32xf32>
    %131 = arith.divf %129, %130 : vector<2x32xf32>
    %132 = arith.mulf %125, %87 : vector<2x32xf32>
    %133 = arith.mulf %120, %126 : vector<2x32xf32>
    %134 = arith.addf %132, %133 : vector<2x32xf32>
    %135 = math.tanh %134 : vector<2x32xf32>
    %136 = arith.mulf %131, %135 : vector<2x32xf32>
    %c2_103 = arith.constant 2 : index
    %c0_104 = arith.constant 0 : index
    %137 = vector.load %arg15[%c2_103, %c0_104] : memref<16x32xf32, #tpu.memory_space<vmem>>, vector<2x32xf32>
    tpu.vector_store %arg15[%c2_103, %c0_104], %136 {strides = array<i32>} : memref<16x32xf32, #tpu.memory_space<vmem>>, vector<2x32xf32>,
    %138 = arith.truncf %136 : vector<2x32xf32> to vector<2x32xbf16>
    %c0_105 = arith.constant 0 : index
    %c4 = arith.constant 4 : index
    %c0_106 = arith.constant 0 : index
    %139 = vector.load %arg16[%c0_105, %c4, %c0_106] : memref<4x16x32xf32, #tpu.memory_space<vmem>>, vector<1x2x32xf32>
    %140 = vector.shape_cast %139 : vector<1x2x32xf32> to vector<2x32xf32>
    %c0_107 = arith.constant 0 : index
    %c0_108 = arith.constant 0 : index
    %c0_109 = arith.constant 0 : index
    %141 = vector.load %arg3[%c0_107, %c0_108, %c0_109] : memref<4x32x32xbf16, #tpu.memory_space<vmem>>, vector<1x32x32xbf16>
    %142 = vector.shape_cast %141 : vector<1x32x32xbf16> to vector<32x32xbf16>
    %cst_110 = arith.constant dense<0.000000e+00> : vector<2x32xf32>
    %143 = tpu.matmul %138, %142, %cst_110 {dimension_numbers = #tpu.dot_dimension_numbers<[1], [0], [0], [1], [0, 0, 1, 1], [], []>} : vector<2x32xbf16>, vector<32x32xbf16>, vector<2x32xf32> -> vector<2x32xf32>
    %144 = arith.addf %140, %143 : vector<2x32xf32>
    %c1_111 = arith.constant 1 : index
    %c4_112 = arith.constant 4 : index
    %c0_113 = arith.constant 0 : index
    %145 = vector.load %arg16[%c1_111, %c4_112, %c0_113] : memref<4x16x32xf32, #tpu.memory_space<vmem>>, vector<1x2x32xf32>
    %146 = vector.shape_cast %145 : vector<1x2x32xf32> to vector<2x32xf32>
    %c1_114 = arith.constant 1 : index
    %c0_115 = arith.constant 0 : index
    %c0_116 = arith.constant 0 : index
    %147 = vector.load %arg3[%c1_114, %c0_115, %c0_116] : memref<4x32x32xbf16, #tpu.memory_space<vmem>>, vector<1x32x32xbf16>
    %148 = vector.shape_cast %147 : vector<1x32x32xbf16> to vector<32x32xbf16>
    %cst_117 = arith.constant dense<0.000000e+00> : vector<2x32xf32>
    %149 = tpu.matmul %138, %148, %cst_117 {dimension_numbers = #tpu.dot_dimension_numbers<[1], [0], [0], [1], [0, 0, 1, 1], [], []>} : vector<2x32xbf16>, vector<32x32xbf16>, vector<2x32xf32> -> vector<2x32xf32>
    %150 = arith.addf %146, %149 : vector<2x32xf32>
    %c2_118 = arith.constant 2 : index
    %c4_119 = arith.constant 4 : index
    %c0_120 = arith.constant 0 : index
    %151 = vector.load %arg16[%c2_118, %c4_119, %c0_120] : memref<4x16x32xf32, #tpu.memory_space<vmem>>, vector<1x2x32xf32>
    %152 = vector.shape_cast %151 : vector<1x2x32xf32> to vector<2x32xf32>
    %c2_121 = arith.constant 2 : index
    %c0_122 = arith.constant 0 : index
    %c0_123 = arith.constant 0 : index
    %153 = vector.load %arg3[%c2_121, %c0_122, %c0_123] : memref<4x32x32xbf16, #tpu.memory_space<vmem>>, vector<1x32x32xbf16>
    %154 = vector.shape_cast %153 : vector<1x32x32xbf16> to vector<32x32xbf16>
    %cst_124 = arith.constant dense<0.000000e+00> : vector<2x32xf32>
    %155 = tpu.matmul %138, %154, %cst_124 {dimension_numbers = #tpu.dot_dimension_numbers<[1], [0], [0], [1], [0, 0, 1, 1], [], []>} : vector<2x32xbf16>, vector<32x32xbf16>, vector<2x32xf32> -> vector<2x32xf32>
    %156 = arith.addf %152, %155 : vector<2x32xf32>
    %c3_125 = arith.constant 3 : index
    %c4_126 = arith.constant 4 : index
    %c0_127 = arith.constant 0 : index
    %157 = vector.load %arg16[%c3_125, %c4_126, %c0_127] : memref<4x16x32xf32, #tpu.memory_space<vmem>>, vector<1x2x32xf32>
    %158 = vector.shape_cast %157 : vector<1x2x32xf32> to vector<2x32xf32>
    %c3_128 = arith.constant 3 : index
    %c0_129 = arith.constant 0 : index
    %c0_130 = arith.constant 0 : index
    %159 = vector.load %arg3[%c3_128, %c0_129, %c0_130] : memref<4x32x32xbf16, #tpu.memory_space<vmem>>, vector<1x32x32xbf16>
    %160 = vector.shape_cast %159 : vector<1x32x32xbf16> to vector<32x32xbf16>
    %cst_131 = arith.constant dense<0.000000e+00> : vector<2x32xf32>
    %161 = tpu.matmul %138, %160, %cst_131 {dimension_numbers = #tpu.dot_dimension_numbers<[1], [0], [0], [1], [0, 0, 1, 1], [], []>} : vector<2x32xbf16>, vector<32x32xbf16>, vector<2x32xf32> -> vector<2x32xf32>
    %162 = arith.addf %158, %161 : vector<2x32xf32>
    %163 = arith.negf %144 : vector<2x32xf32>
    %164 = math.exp %163 : vector<2x32xf32>
    %cst_132 = arith.constant 1.000000e+00 : f32
    %165 = vector.broadcast %cst_132 : f32 to vector<2x32xf32>
    %166 = arith.addf %165, %164 : vector<2x32xf32>
    %167 = arith.divf %165, %166 : vector<2x32xf32>
    %168 = arith.negf %150 : vector<2x32xf32>
    %169 = math.exp %168 : vector<2x32xf32>
    %cst_133 = arith.constant 1.000000e+00 : f32
    %170 = vector.broadcast %cst_133 : f32 to vector<2x32xf32>
    %171 = arith.addf %170, %169 : vector<2x32xf32>
    %172 = arith.divf %170, %171 : vector<2x32xf32>
    %173 = math.tanh %156 : vector<2x32xf32>
    %174 = arith.negf %162 : vector<2x32xf32>
    %175 = math.exp %174 : vector<2x32xf32>
    %cst_134 = arith.constant 1.000000e+00 : f32
    %176 = vector.broadcast %cst_134 : f32 to vector<2x32xf32>
    %177 = arith.addf %176, %175 : vector<2x32xf32>
    %178 = arith.divf %176, %177 : vector<2x32xf32>
    %179 = arith.mulf %172, %134 : vector<2x32xf32>
    %180 = arith.mulf %167, %173 : vector<2x32xf32>
    %181 = arith.addf %179, %180 : vector<2x32xf32>
    %182 = math.tanh %181 : vector<2x32xf32>
    %183 = arith.mulf %178, %182 : vector<2x32xf32>
    %c4_135 = arith.constant 4 : index
    %c0_136 = arith.constant 0 : index
    %184 = vector.load %arg15[%c4_135, %c0_136] : memref<16x32xf32, #tpu.memory_space<vmem>>, vector<2x32xf32>
    tpu.vector_store %arg15[%c4_135, %c0_136], %183 {strides = array<i32>} : memref<16x32xf32, #tpu.memory_space<vmem>>, vector<2x32xf32>,
    %185 = arith.truncf %183 : vector<2x32xf32> to vector<2x32xbf16>
    %c0_137 = arith.constant 0 : index
    %c6 = arith.constant 6 : index
    %c0_138 = arith.constant 0 : index
    %186 = vector.load %arg16[%c0_137, %c6, %c0_138] : memref<4x16x32xf32, #tpu.memory_space<vmem>>, vector<1x2x32xf32>
    %187 = vector.shape_cast %186 : vector<1x2x32xf32> to vector<2x32xf32>
    %c0_139 = arith.constant 0 : index
    %c0_140 = arith.constant 0 : index
    %c0_141 = arith.constant 0 : index
    %188 = vector.load %arg3[%c0_139, %c0_140, %c0_141] : memref<4x32x32xbf16, #tpu.memory_space<vmem>>, vector<1x32x32xbf16>
    %189 = vector.shape_cast %188 : vector<1x32x32xbf16> to vector<32x32xbf16>
    %cst_142 = arith.constant dense<0.000000e+00> : vector<2x32xf32>
    %190 = tpu.matmul %185, %189, %cst_142 {dimension_numbers = #tpu.dot_dimension_numbers<[1], [0], [0], [1], [0, 0, 1, 1], [], []>} : vector<2x32xbf16>, vector<32x32xbf16>, vector<2x32xf32> -> vector<2x32xf32>
    %191 = arith.addf %187, %190 : vector<2x32xf32>
    %c1_143 = arith.constant 1 : index
    %c6_144 = arith.constant 6 : index
    %c0_145 = arith.constant 0 : index
    %192 = vector.load %arg16[%c1_143, %c6_144, %c0_145] : memref<4x16x32xf32, #tpu.memory_space<vmem>>, vector<1x2x32xf32>
    %193 = vector.shape_cast %192 : vector<1x2x32xf32> to vector<2x32xf32>
    %c1_146 = arith.constant 1 : index
    %c0_147 = arith.constant 0 : index
    %c0_148 = arith.constant 0 : index
    %194 = vector.load %arg3[%c1_146, %c0_147, %c0_148] : memref<4x32x32xbf16, #tpu.memory_space<vmem>>, vector<1x32x32xbf16>
    %195 = vector.shape_cast %194 : vector<1x32x32xbf16> to vector<32x32xbf16>
    %cst_149 = arith.constant dense<0.000000e+00> : vector<2x32xf32>
    %196 = tpu.matmul %185, %195, %cst_149 {dimension_numbers = #tpu.dot_dimension_numbers<[1], [0], [0], [1], [0, 0, 1, 1], [], []>} : vector<2x32xbf16>, vector<32x32xbf16>, vector<2x32xf32> -> vector<2x32xf32>
    %197 = arith.addf %193, %196 : vector<2x32xf32>
    %c2_150 = arith.constant 2 : index
    %c6_151 = arith.constant 6 : index
    %c0_152 = arith.constant 0 : index
    %198 = vector.load %arg16[%c2_150, %c6_151, %c0_152] : memref<4x16x32xf32, #tpu.memory_space<vmem>>, vector<1x2x32xf32>
    %199 = vector.shape_cast %198 : vector<1x2x32xf32> to vector<2x32xf32>
    %c2_153 = arith.constant 2 : index
    %c0_154 = arith.constant 0 : index
    %c0_155 = arith.constant 0 : index
    %200 = vector.load %arg3[%c2_153, %c0_154, %c0_155] : memref<4x32x32xbf16, #tpu.memory_space<vmem>>, vector<1x32x32xbf16>
    %201 = vector.shape_cast %200 : vector<1x32x32xbf16> to vector<32x32xbf16>
    %cst_156 = arith.constant dense<0.000000e+00> : vector<2x32xf32>
    %202 = tpu.matmul %185, %201, %cst_156 {dimension_numbers = #tpu.dot_dimension_numbers<[1], [0], [0], [1], [0, 0, 1, 1], [], []>} : vector<2x32xbf16>, vector<32x32xbf16>, vector<2x32xf32> -> vector<2x32xf32>
    %203 = arith.addf %199, %202 : vector<2x32xf32>
    %c3_157 = arith.constant 3 : index
    %c6_158 = arith.constant 6 : index
    %c0_159 = arith.constant 0 : index
    %204 = vector.load %arg16[%c3_157, %c6_158, %c0_159] : memref<4x16x32xf32, #tpu.memory_space<vmem>>, vector<1x2x32xf32>
    %205 = vector.shape_cast %204 : vector<1x2x32xf32> to vector<2x32xf32>
    %c3_160 = arith.constant 3 : index
    %c0_161 = arith.constant 0 : index
    %c0_162 = arith.constant 0 : index
    %206 = vector.load %arg3[%c3_160, %c0_161, %c0_162] : memref<4x32x32xbf16, #tpu.memory_space<vmem>>, vector<1x32x32xbf16>
    %207 = vector.shape_cast %206 : vector<1x32x32xbf16> to vector<32x32xbf16>
    %cst_163 = arith.constant dense<0.000000e+00> : vector<2x32xf32>
    %208 = tpu.matmul %185, %207, %cst_163 {dimension_numbers = #tpu.dot_dimension_numbers<[1], [0], [0], [1], [0, 0, 1, 1], [], []>} : vector<2x32xbf16>, vector<32x32xbf16>, vector<2x32xf32> -> vector<2x32xf32>
    %209 = arith.addf %205, %208 : vector<2x32xf32>
    %210 = arith.negf %191 : vector<2x32xf32>
    %211 = math.exp %210 : vector<2x32xf32>
    %cst_164 = arith.constant 1.000000e+00 : f32
    %212 = vector.broadcast %cst_164 : f32 to vector<2x32xf32>
    %213 = arith.addf %212, %211 : vector<2x32xf32>
    %214 = arith.divf %212, %213 : vector<2x32xf32>
    %215 = arith.negf %197 : vector<2x32xf32>
    %216 = math.exp %215 : vector<2x32xf32>
    %cst_165 = arith.constant 1.000000e+00 : f32
    %217 = vector.broadcast %cst_165 : f32 to vector<2x32xf32>
    %218 = arith.addf %217, %216 : vector<2x32xf32>
    %219 = arith.divf %217, %218 : vector<2x32xf32>
    %220 = math.tanh %203 : vector<2x32xf32>
    %221 = arith.negf %209 : vector<2x32xf32>
    %222 = math.exp %221 : vector<2x32xf32>
    %cst_166 = arith.constant 1.000000e+00 : f32
    %223 = vector.broadcast %cst_166 : f32 to vector<2x32xf32>
    %224 = arith.addf %223, %222 : vector<2x32xf32>
    %225 = arith.divf %223, %224 : vector<2x32xf32>
    %226 = arith.mulf %219, %181 : vector<2x32xf32>
    %227 = arith.mulf %214, %220 : vector<2x32xf32>
    %228 = arith.addf %226, %227 : vector<2x32xf32>
    %229 = math.tanh %228 : vector<2x32xf32>
    %230 = arith.mulf %225, %229 : vector<2x32xf32>
    %c6_167 = arith.constant 6 : index
    %c0_168 = arith.constant 0 : index
    %231 = vector.load %arg15[%c6_167, %c0_168] : memref<16x32xf32, #tpu.memory_space<vmem>>, vector<2x32xf32>
    tpu.vector_store %arg15[%c6_167, %c0_168], %230 {strides = array<i32>} : memref<16x32xf32, #tpu.memory_space<vmem>>, vector<2x32xf32>,
    %232 = arith.truncf %230 : vector<2x32xf32> to vector<2x32xbf16>
    %c0_169 = arith.constant 0 : index
    %c8 = arith.constant 8 : index
    %c0_170 = arith.constant 0 : index
    %233 = vector.load %arg16[%c0_169, %c8, %c0_170] : memref<4x16x32xf32, #tpu.memory_space<vmem>>, vector<1x2x32xf32>
    %234 = vector.shape_cast %233 : vector<1x2x32xf32> to vector<2x32xf32>
    %c0_171 = arith.constant 0 : index
    %c0_172 = arith.constant 0 : index
    %c0_173 = arith.constant 0 : index
    %235 = vector.load %arg3[%c0_171, %c0_172, %c0_173] : memref<4x32x32xbf16, #tpu.memory_space<vmem>>, vector<1x32x32xbf16>
    %236 = vector.shape_cast %235 : vector<1x32x32xbf16> to vector<32x32xbf16>
    %cst_174 = arith.constant dense<0.000000e+00> : vector<2x32xf32>
    %237 = tpu.matmul %232, %236, %cst_174 {dimension_numbers = #tpu.dot_dimension_numbers<[1], [0], [0], [1], [0, 0, 1, 1], [], []>} : vector<2x32xbf16>, vector<32x32xbf16>, vector<2x32xf32> -> vector<2x32xf32>
    %238 = arith.addf %234, %237 : vector<2x32xf32>
    %c1_175 = arith.constant 1 : index
    %c8_176 = arith.constant 8 : index
    %c0_177 = arith.constant 0 : index
    %239 = vector.load %arg16[%c1_175, %c8_176, %c0_177] : memref<4x16x32xf32, #tpu.memory_space<vmem>>, vector<1x2x32xf32>
    %240 = vector.shape_cast %239 : vector<1x2x32xf32> to vector<2x32xf32>
    %c1_178 = arith.constant 1 : index
    %c0_179 = arith.constant 0 : index
    %c0_180 = arith.constant 0 : index
    %241 = vector.load %arg3[%c1_178, %c0_179, %c0_180] : memref<4x32x32xbf16, #tpu.memory_space<vmem>>, vector<1x32x32xbf16>
    %242 = vector.shape_cast %241 : vector<1x32x32xbf16> to vector<32x32xbf16>
    %cst_181 = arith.constant dense<0.000000e+00> : vector<2x32xf32>
    %243 = tpu.matmul %232, %242, %cst_181 {dimension_numbers = #tpu.dot_dimension_numbers<[1], [0], [0], [1], [0, 0, 1, 1], [], []>} : vector<2x32xbf16>, vector<32x32xbf16>, vector<2x32xf32> -> vector<2x32xf32>
    %244 = arith.addf %240, %243 : vector<2x32xf32>
    %c2_182 = arith.constant 2 : index
    %c8_183 = arith.constant 8 : index
    %c0_184 = arith.constant 0 : index
    %245 = vector.load %arg16[%c2_182, %c8_183, %c0_184] : memref<4x16x32xf32, #tpu.memory_space<vmem>>, vector<1x2x32xf32>
    %246 = vector.shape_cast %245 : vector<1x2x32xf32> to vector<2x32xf32>
    %c2_185 = arith.constant 2 : index
    %c0_186 = arith.constant 0 : index
    %c0_187 = arith.constant 0 : index
    %247 = vector.load %arg3[%c2_185, %c0_186, %c0_187] : memref<4x32x32xbf16, #tpu.memory_space<vmem>>, vector<1x32x32xbf16>
    %248 = vector.shape_cast %247 : vector<1x32x32xbf16> to vector<32x32xbf16>
    %cst_188 = arith.constant dense<0.000000e+00> : vector<2x32xf32>
    %249 = tpu.matmul %232, %248, %cst_188 {dimension_numbers = #tpu.dot_dimension_numbers<[1], [0], [0], [1], [0, 0, 1, 1], [], []>} : vector<2x32xbf16>, vector<32x32xbf16>, vector<2x32xf32> -> vector<2x32xf32>
    %250 = arith.addf %246, %249 : vector<2x32xf32>
    %c3_189 = arith.constant 3 : index
    %c8_190 = arith.constant 8 : index
    %c0_191 = arith.constant 0 : index
    %251 = vector.load %arg16[%c3_189, %c8_190, %c0_191] : memref<4x16x32xf32, #tpu.memory_space<vmem>>, vector<1x2x32xf32>
    %252 = vector.shape_cast %251 : vector<1x2x32xf32> to vector<2x32xf32>
    %c3_192 = arith.constant 3 : index
    %c0_193 = arith.constant 0 : index
    %c0_194 = arith.constant 0 : index
    %253 = vector.load %arg3[%c3_192, %c0_193, %c0_194] : memref<4x32x32xbf16, #tpu.memory_space<vmem>>, vector<1x32x32xbf16>
    %254 = vector.shape_cast %253 : vector<1x32x32xbf16> to vector<32x32xbf16>
    %cst_195 = arith.constant dense<0.000000e+00> : vector<2x32xf32>
    %255 = tpu.matmul %232, %254, %cst_195 {dimension_numbers = #tpu.dot_dimension_numbers<[1], [0], [0], [1], [0, 0, 1, 1], [], []>} : vector<2x32xbf16>, vector<32x32xbf16>, vector<2x32xf32> -> vector<2x32xf32>
    %256 = arith.addf %252, %255 : vector<2x32xf32>
    %257 = arith.negf %238 : vector<2x32xf32>
    %258 = math.exp %257 : vector<2x32xf32>
    %cst_196 = arith.constant 1.000000e+00 : f32
    %259 = vector.broadcast %cst_196 : f32 to vector<2x32xf32>
    %260 = arith.addf %259, %258 : vector<2x32xf32>
    %261 = arith.divf %259, %260 : vector<2x32xf32>
    %262 = arith.negf %244 : vector<2x32xf32>
    %263 = math.exp %262 : vector<2x32xf32>
    %cst_197 = arith.constant 1.000000e+00 : f32
    %264 = vector.broadcast %cst_197 : f32 to vector<2x32xf32>
    %265 = arith.addf %264, %263 : vector<2x32xf32>
    %266 = arith.divf %264, %265 : vector<2x32xf32>
    %267 = math.tanh %250 : vector<2x32xf32>
    %268 = arith.negf %256 : vector<2x32xf32>
    %269 = math.exp %268 : vector<2x32xf32>
    %cst_198 = arith.constant 1.000000e+00 : f32
    %270 = vector.broadcast %cst_198 : f32 to vector<2x32xf32>
    %271 = arith.addf %270, %269 : vector<2x32xf32>
    %272 = arith.divf %270, %271 : vector<2x32xf32>
    %273 = arith.mulf %266, %228 : vector<2x32xf32>
    %274 = arith.mulf %261, %267 : vector<2x32xf32>
    %275 = arith.addf %273, %274 : vector<2x32xf32>
    %276 = math.tanh %275 : vector<2x32xf32>
    %277 = arith.mulf %272, %276 : vector<2x32xf32>
    %c8_199 = arith.constant 8 : index
    %c0_200 = arith.constant 0 : index
    %278 = vector.load %arg15[%c8_199, %c0_200] : memref<16x32xf32, #tpu.memory_space<vmem>>, vector<2x32xf32>
    tpu.vector_store %arg15[%c8_199, %c0_200], %277 {strides = array<i32>} : memref<16x32xf32, #tpu.memory_space<vmem>>, vector<2x32xf32>,
    %279 = arith.truncf %277 : vector<2x32xf32> to vector<2x32xbf16>
    %c0_201 = arith.constant 0 : index
    %c10 = arith.constant 10 : index
    %c0_202 = arith.constant 0 : index
    %280 = vector.load %arg16[%c0_201, %c10, %c0_202] : memref<4x16x32xf32, #tpu.memory_space<vmem>>, vector<1x2x32xf32>
    %281 = vector.shape_cast %280 : vector<1x2x32xf32> to vector<2x32xf32>
    %c0_203 = arith.constant 0 : index
    %c0_204 = arith.constant 0 : index
    %c0_205 = arith.constant 0 : index
    %282 = vector.load %arg3[%c0_203, %c0_204, %c0_205] : memref<4x32x32xbf16, #tpu.memory_space<vmem>>, vector<1x32x32xbf16>
    %283 = vector.shape_cast %282 : vector<1x32x32xbf16> to vector<32x32xbf16>
    %cst_206 = arith.constant dense<0.000000e+00> : vector<2x32xf32>
    %284 = tpu.matmul %279, %283, %cst_206 {dimension_numbers = #tpu.dot_dimension_numbers<[1], [0], [0], [1], [0, 0, 1, 1], [], []>} : vector<2x32xbf16>, vector<32x32xbf16>, vector<2x32xf32> -> vector<2x32xf32>
    %285 = arith.addf %281, %284 : vector<2x32xf32>
    %c1_207 = arith.constant 1 : index
    %c10_208 = arith.constant 10 : index
    %c0_209 = arith.constant 0 : index
    %286 = vector.load %arg16[%c1_207, %c10_208, %c0_209] : memref<4x16x32xf32, #tpu.memory_space<vmem>>, vector<1x2x32xf32>
    %287 = vector.shape_cast %286 : vector<1x2x32xf32> to vector<2x32xf32>
    %c1_210 = arith.constant 1 : index
    %c0_211 = arith.constant 0 : index
    %c0_212 = arith.constant 0 : index
    %288 = vector.load %arg3[%c1_210, %c0_211, %c0_212] : memref<4x32x32xbf16, #tpu.memory_space<vmem>>, vector<1x32x32xbf16>
    %289 = vector.shape_cast %288 : vector<1x32x32xbf16> to vector<32x32xbf16>
    %cst_213 = arith.constant dense<0.000000e+00> : vector<2x32xf32>
    %290 = tpu.matmul %279, %289, %cst_213 {dimension_numbers = #tpu.dot_dimension_numbers<[1], [0], [0], [1], [0, 0, 1, 1], [], []>} : vector<2x32xbf16>, vector<32x32xbf16>, vector<2x32xf32> -> vector<2x32xf32>
    %291 = arith.addf %287, %290 : vector<2x32xf32>
    %c2_214 = arith.constant 2 : index
    %c10_215 = arith.constant 10 : index
    %c0_216 = arith.constant 0 : index
    %292 = vector.load %arg16[%c2_214, %c10_215, %c0_216] : memref<4x16x32xf32, #tpu.memory_space<vmem>>, vector<1x2x32xf32>
    %293 = vector.shape_cast %292 : vector<1x2x32xf32> to vector<2x32xf32>
    %c2_217 = arith.constant 2 : index
    %c0_218 = arith.constant 0 : index
    %c0_219 = arith.constant 0 : index
    %294 = vector.load %arg3[%c2_217, %c0_218, %c0_219] : memref<4x32x32xbf16, #tpu.memory_space<vmem>>, vector<1x32x32xbf16>
    %295 = vector.shape_cast %294 : vector<1x32x32xbf16> to vector<32x32xbf16>
    %cst_220 = arith.constant dense<0.000000e+00> : vector<2x32xf32>
    %296 = tpu.matmul %279, %295, %cst_220 {dimension_numbers = #tpu.dot_dimension_numbers<[1], [0], [0], [1], [0, 0, 1, 1], [], []>} : vector<2x32xbf16>, vector<32x32xbf16>, vector<2x32xf32> -> vector<2x32xf32>
    %297 = arith.addf %293, %296 : vector<2x32xf32>
    %c3_221 = arith.constant 3 : index
    %c10_222 = arith.constant 10 : index
    %c0_223 = arith.constant 0 : index
    %298 = vector.load %arg16[%c3_221, %c10_222, %c0_223] : memref<4x16x32xf32, #tpu.memory_space<vmem>>, vector<1x2x32xf32>
    %299 = vector.shape_cast %298 : vector<1x2x32xf32> to vector<2x32xf32>
    %c3_224 = arith.constant 3 : index
    %c0_225 = arith.constant 0 : index
    %c0_226 = arith.constant 0 : index
    %300 = vector.load %arg3[%c3_224, %c0_225, %c0_226] : memref<4x32x32xbf16, #tpu.memory_space<vmem>>, vector<1x32x32xbf16>
    %301 = vector.shape_cast %300 : vector<1x32x32xbf16> to vector<32x32xbf16>
    %cst_227 = arith.constant dense<0.000000e+00> : vector<2x32xf32>
    %302 = tpu.matmul %279, %301, %cst_227 {dimension_numbers = #tpu.dot_dimension_numbers<[1], [0], [0], [1], [0, 0, 1, 1], [], []>} : vector<2x32xbf16>, vector<32x32xbf16>, vector<2x32xf32> -> vector<2x32xf32>
    %303 = arith.addf %299, %302 : vector<2x32xf32>
    %304 = arith.negf %285 : vector<2x32xf32>
    %305 = math.exp %304 : vector<2x32xf32>
    %cst_228 = arith.constant 1.000000e+00 : f32
    %306 = vector.broadcast %cst_228 : f32 to vector<2x32xf32>
    %307 = arith.addf %306, %305 : vector<2x32xf32>
    %308 = arith.divf %306, %307 : vector<2x32xf32>
    %309 = arith.negf %291 : vector<2x32xf32>
    %310 = math.exp %309 : vector<2x32xf32>
    %cst_229 = arith.constant 1.000000e+00 : f32
    %311 = vector.broadcast %cst_229 : f32 to vector<2x32xf32>
    %312 = arith.addf %311, %310 : vector<2x32xf32>
    %313 = arith.divf %311, %312 : vector<2x32xf32>
    %314 = math.tanh %297 : vector<2x32xf32>
    %315 = arith.negf %303 : vector<2x32xf32>
    %316 = math.exp %315 : vector<2x32xf32>
    %cst_230 = arith.constant 1.000000e+00 : f32
    %317 = vector.broadcast %cst_230 : f32 to vector<2x32xf32>
    %318 = arith.addf %317, %316 : vector<2x32xf32>
    %319 = arith.divf %317, %318 : vector<2x32xf32>
    %320 = arith.mulf %313, %275 : vector<2x32xf32>
    %321 = arith.mulf %308, %314 : vector<2x32xf32>
    %322 = arith.addf %320, %321 : vector<2x32xf32>
    %323 = math.tanh %322 : vector<2x32xf32>
    %324 = arith.mulf %319, %323 : vector<2x32xf32>
    %c10_231 = arith.constant 10 : index
    %c0_232 = arith.constant 0 : index
    %325 = vector.load %arg15[%c10_231, %c0_232] : memref<16x32xf32, #tpu.memory_space<vmem>>, vector<2x32xf32>
    tpu.vector_store %arg15[%c10_231, %c0_232], %324 {strides = array<i32>} : memref<16x32xf32, #tpu.memory_space<vmem>>, vector<2x32xf32>,
    %326 = arith.truncf %324 : vector<2x32xf32> to vector<2x32xbf16>
    %c0_233 = arith.constant 0 : index
    %c12 = arith.constant 12 : index
    %c0_234 = arith.constant 0 : index
    %327 = vector.load %arg16[%c0_233, %c12, %c0_234] : memref<4x16x32xf32, #tpu.memory_space<vmem>>, vector<1x2x32xf32>
    %328 = vector.shape_cast %327 : vector<1x2x32xf32> to vector<2x32xf32>
    %c0_235 = arith.constant 0 : index
    %c0_236 = arith.constant 0 : index
    %c0_237 = arith.constant 0 : index
    %329 = vector.load %arg3[%c0_235, %c0_236, %c0_237] : memref<4x32x32xbf16, #tpu.memory_space<vmem>>, vector<1x32x32xbf16>
    %330 = vector.shape_cast %329 : vector<1x32x32xbf16> to vector<32x32xbf16>
    %cst_238 = arith.constant dense<0.000000e+00> : vector<2x32xf32>
    %331 = tpu.matmul %326, %330, %cst_238 {dimension_numbers = #tpu.dot_dimension_numbers<[1], [0], [0], [1], [0, 0, 1, 1], [], []>} : vector<2x32xbf16>, vector<32x32xbf16>, vector<2x32xf32> -> vector<2x32xf32>
    %332 = arith.addf %328, %331 : vector<2x32xf32>
    %c1_239 = arith.constant 1 : index
    %c12_240 = arith.constant 12 : index
    %c0_241 = arith.constant 0 : index
    %333 = vector.load %arg16[%c1_239, %c12_240, %c0_241] : memref<4x16x32xf32, #tpu.memory_space<vmem>>, vector<1x2x32xf32>
    %334 = vector.shape_cast %333 : vector<1x2x32xf32> to vector<2x32xf32>
    %c1_242 = arith.constant 1 : index
    %c0_243 = arith.constant 0 : index
    %c0_244 = arith.constant 0 : index
    %335 = vector.load %arg3[%c1_242, %c0_243, %c0_244] : memref<4x32x32xbf16, #tpu.memory_space<vmem>>, vector<1x32x32xbf16>
    %336 = vector.shape_cast %335 : vector<1x32x32xbf16> to vector<32x32xbf16>
    %cst_245 = arith.constant dense<0.000000e+00> : vector<2x32xf32>
    %337 = tpu.matmul %326, %336, %cst_245 {dimension_numbers = #tpu.dot_dimension_numbers<[1], [0], [0], [1], [0, 0, 1, 1], [], []>} : vector<2x32xbf16>, vector<32x32xbf16>, vector<2x32xf32> -> vector<2x32xf32>
    %338 = arith.addf %334, %337 : vector<2x32xf32>
    %c2_246 = arith.constant 2 : index
    %c12_247 = arith.constant 12 : index
    %c0_248 = arith.constant 0 : index
    %339 = vector.load %arg16[%c2_246, %c12_247, %c0_248] : memref<4x16x32xf32, #tpu.memory_space<vmem>>, vector<1x2x32xf32>
    %340 = vector.shape_cast %339 : vector<1x2x32xf32> to vector<2x32xf32>
    %c2_249 = arith.constant 2 : index
    %c0_250 = arith.constant 0 : index
    %c0_251 = arith.constant 0 : index
    %341 = vector.load %arg3[%c2_249, %c0_250, %c0_251] : memref<4x32x32xbf16, #tpu.memory_space<vmem>>, vector<1x32x32xbf16>
    %342 = vector.shape_cast %341 : vector<1x32x32xbf16> to vector<32x32xbf16>
    %cst_252 = arith.constant dense<0.000000e+00> : vector<2x32xf32>
    %343 = tpu.matmul %326, %342, %cst_252 {dimension_numbers = #tpu.dot_dimension_numbers<[1], [0], [0], [1], [0, 0, 1, 1], [], []>} : vector<2x32xbf16>, vector<32x32xbf16>, vector<2x32xf32> -> vector<2x32xf32>
    %344 = arith.addf %340, %343 : vector<2x32xf32>
    %c3_253 = arith.constant 3 : index
    %c12_254 = arith.constant 12 : index
    %c0_255 = arith.constant 0 : index
    %345 = vector.load %arg16[%c3_253, %c12_254, %c0_255] : memref<4x16x32xf32, #tpu.memory_space<vmem>>, vector<1x2x32xf32>
    %346 = vector.shape_cast %345 : vector<1x2x32xf32> to vector<2x32xf32>
    %c3_256 = arith.constant 3 : index
    %c0_257 = arith.constant 0 : index
    %c0_258 = arith.constant 0 : index
    %347 = vector.load %arg3[%c3_256, %c0_257, %c0_258] : memref<4x32x32xbf16, #tpu.memory_space<vmem>>, vector<1x32x32xbf16>
    %348 = vector.shape_cast %347 : vector<1x32x32xbf16> to vector<32x32xbf16>
    %cst_259 = arith.constant dense<0.000000e+00> : vector<2x32xf32>
    %349 = tpu.matmul %326, %348, %cst_259 {dimension_numbers = #tpu.dot_dimension_numbers<[1], [0], [0], [1], [0, 0, 1, 1], [], []>} : vector<2x32xbf16>, vector<32x32xbf16>, vector<2x32xf32> -> vector<2x32xf32>
    %350 = arith.addf %346, %349 : vector<2x32xf32>
    %351 = arith.negf %332 : vector<2x32xf32>
    %352 = math.exp %351 : vector<2x32xf32>
    %cst_260 = arith.constant 1.000000e+00 : f32
    %353 = vector.broadcast %cst_260 : f32 to vector<2x32xf32>
    %354 = arith.addf %353, %352 : vector<2x32xf32>
    %355 = arith.divf %353, %354 : vector<2x32xf32>
    %356 = arith.negf %338 : vector<2x32xf32>
    %357 = math.exp %356 : vector<2x32xf32>
    %cst_261 = arith.constant 1.000000e+00 : f32
    %358 = vector.broadcast %cst_261 : f32 to vector<2x32xf32>
    %359 = arith.addf %358, %357 : vector<2x32xf32>
    %360 = arith.divf %358, %359 : vector<2x32xf32>
    %361 = math.tanh %344 : vector<2x32xf32>
    %362 = arith.negf %350 : vector<2x32xf32>
    %363 = math.exp %362 : vector<2x32xf32>
    %cst_262 = arith.constant 1.000000e+00 : f32
    %364 = vector.broadcast %cst_262 : f32 to vector<2x32xf32>
    %365 = arith.addf %364, %363 : vector<2x32xf32>
    %366 = arith.divf %364, %365 : vector<2x32xf32>
    %367 = arith.mulf %360, %322 : vector<2x32xf32>
    %368 = arith.mulf %355, %361 : vector<2x32xf32>
    %369 = arith.addf %367, %368 : vector<2x32xf32>
    %370 = math.tanh %369 : vector<2x32xf32>
    %371 = arith.mulf %366, %370 : vector<2x32xf32>
    %c12_263 = arith.constant 12 : index
    %c0_264 = arith.constant 0 : index
    %372 = vector.load %arg15[%c12_263, %c0_264] : memref<16x32xf32, #tpu.memory_space<vmem>>, vector<2x32xf32>
    tpu.vector_store %arg15[%c12_263, %c0_264], %371 {strides = array<i32>} : memref<16x32xf32, #tpu.memory_space<vmem>>, vector<2x32xf32>,
    %373 = arith.truncf %371 : vector<2x32xf32> to vector<2x32xbf16>
    %c0_265 = arith.constant 0 : index
    %c14 = arith.constant 14 : index
    %c0_266 = arith.constant 0 : index
    %374 = vector.load %arg16[%c0_265, %c14, %c0_266] : memref<4x16x32xf32, #tpu.memory_space<vmem>>, vector<1x2x32xf32>
    %375 = vector.shape_cast %374 : vector<1x2x32xf32> to vector<2x32xf32>
    %c0_267 = arith.constant 0 : index
    %c0_268 = arith.constant 0 : index
    %c0_269 = arith.constant 0 : index
    %376 = vector.load %arg3[%c0_267, %c0_268, %c0_269] : memref<4x32x32xbf16, #tpu.memory_space<vmem>>, vector<1x32x32xbf16>
    %377 = vector.shape_cast %376 : vector<1x32x32xbf16> to vector<32x32xbf16>
    %cst_270 = arith.constant dense<0.000000e+00> : vector<2x32xf32>
    %378 = tpu.matmul %373, %377, %cst_270 {dimension_numbers = #tpu.dot_dimension_numbers<[1], [0], [0], [1], [0, 0, 1, 1], [], []>} : vector<2x32xbf16>, vector<32x32xbf16>, vector<2x32xf32> -> vector<2x32xf32>
    %379 = arith.addf %375, %378 : vector<2x32xf32>
    %c1_271 = arith.constant 1 : index
    %c14_272 = arith.constant 14 : index
    %c0_273 = arith.constant 0 : index
    %380 = vector.load %arg16[%c1_271, %c14_272, %c0_273] : memref<4x16x32xf32, #tpu.memory_space<vmem>>, vector<1x2x32xf32>
    %381 = vector.shape_cast %380 : vector<1x2x32xf32> to vector<2x32xf32>
    %c1_274 = arith.constant 1 : index
    %c0_275 = arith.constant 0 : index
    %c0_276 = arith.constant 0 : index
    %382 = vector.load %arg3[%c1_274, %c0_275, %c0_276] : memref<4x32x32xbf16, #tpu.memory_space<vmem>>, vector<1x32x32xbf16>
    %383 = vector.shape_cast %382 : vector<1x32x32xbf16> to vector<32x32xbf16>
    %cst_277 = arith.constant dense<0.000000e+00> : vector<2x32xf32>
    %384 = tpu.matmul %373, %383, %cst_277 {dimension_numbers = #tpu.dot_dimension_numbers<[1], [0], [0], [1], [0, 0, 1, 1], [], []>} : vector<2x32xbf16>, vector<32x32xbf16>, vector<2x32xf32> -> vector<2x32xf32>
    %385 = arith.addf %381, %384 : vector<2x32xf32>
    %c2_278 = arith.constant 2 : index
    %c14_279 = arith.constant 14 : index
    %c0_280 = arith.constant 0 : index
    %386 = vector.load %arg16[%c2_278, %c14_279, %c0_280] : memref<4x16x32xf32, #tpu.memory_space<vmem>>, vector<1x2x32xf32>
    %387 = vector.shape_cast %386 : vector<1x2x32xf32> to vector<2x32xf32>
    %c2_281 = arith.constant 2 : index
    %c0_282 = arith.constant 0 : index
    %c0_283 = arith.constant 0 : index
    %388 = vector.load %arg3[%c2_281, %c0_282, %c0_283] : memref<4x32x32xbf16, #tpu.memory_space<vmem>>, vector<1x32x32xbf16>
    %389 = vector.shape_cast %388 : vector<1x32x32xbf16> to vector<32x32xbf16>
    %cst_284 = arith.constant dense<0.000000e+00> : vector<2x32xf32>
    %390 = tpu.matmul %373, %389, %cst_284 {dimension_numbers = #tpu.dot_dimension_numbers<[1], [0], [0], [1], [0, 0, 1, 1], [], []>} : vector<2x32xbf16>, vector<32x32xbf16>, vector<2x32xf32> -> vector<2x32xf32>
    %391 = arith.addf %387, %390 : vector<2x32xf32>
    %c3_285 = arith.constant 3 : index
    %c14_286 = arith.constant 14 : index
    %c0_287 = arith.constant 0 : index
    %392 = vector.load %arg16[%c3_285, %c14_286, %c0_287] : memref<4x16x32xf32, #tpu.memory_space<vmem>>, vector<1x2x32xf32>
    %393 = vector.shape_cast %392 : vector<1x2x32xf32> to vector<2x32xf32>
    %c3_288 = arith.constant 3 : index
    %c0_289 = arith.constant 0 : index
    %c0_290 = arith.constant 0 : index
    %394 = vector.load %arg3[%c3_288, %c0_289, %c0_290] : memref<4x32x32xbf16, #tpu.memory_space<vmem>>, vector<1x32x32xbf16>
    %395 = vector.shape_cast %394 : vector<1x32x32xbf16> to vector<32x32xbf16>
    %cst_291 = arith.constant dense<0.000000e+00> : vector<2x32xf32>
    %396 = tpu.matmul %373, %395, %cst_291 {dimension_numbers = #tpu.dot_dimension_numbers<[1], [0], [0], [1], [0, 0, 1, 1], [], []>} : vector<2x32xbf16>, vector<32x32xbf16>, vector<2x32xf32> -> vector<2x32xf32>
    %397 = arith.addf %393, %396 : vector<2x32xf32>
    %398 = arith.negf %379 : vector<2x32xf32>
    %399 = math.exp %398 : vector<2x32xf32>
    %cst_292 = arith.constant 1.000000e+00 : f32
    %400 = vector.broadcast %cst_292 : f32 to vector<2x32xf32>
    %401 = arith.addf %400, %399 : vector<2x32xf32>
    %402 = arith.divf %400, %401 : vector<2x32xf32>
    %403 = arith.negf %385 : vector<2x32xf32>
    %404 = math.exp %403 : vector<2x32xf32>
    %cst_293 = arith.constant 1.000000e+00 : f32
    %405 = vector.broadcast %cst_293 : f32 to vector<2x32xf32>
    %406 = arith.addf %405, %404 : vector<2x32xf32>
    %407 = arith.divf %405, %406 : vector<2x32xf32>
    %408 = math.tanh %391 : vector<2x32xf32>
    %409 = arith.negf %397 : vector<2x32xf32>
    %410 = math.exp %409 : vector<2x32xf32>
    %cst_294 = arith.constant 1.000000e+00 : f32
    %411 = vector.broadcast %cst_294 : f32 to vector<2x32xf32>
    %412 = arith.addf %411, %410 : vector<2x32xf32>
    %413 = arith.divf %411, %412 : vector<2x32xf32>
    %414 = arith.mulf %407, %369 : vector<2x32xf32>
    %415 = arith.mulf %402, %408 : vector<2x32xf32>
    %416 = arith.addf %414, %415 : vector<2x32xf32>
    %417 = math.tanh %416 : vector<2x32xf32>
    %418 = arith.mulf %413, %417 : vector<2x32xf32>
    %c14_295 = arith.constant 14 : index
    %c0_296 = arith.constant 0 : index
    %419 = vector.load %arg15[%c14_295, %c0_296] : memref<16x32xf32, #tpu.memory_space<vmem>>, vector<2x32xf32>
    tpu.vector_store %arg15[%c14_295, %c0_296], %418 {strides = array<i32>} : memref<16x32xf32, #tpu.memory_space<vmem>>, vector<2x32xf32>,
    %c0_297 = arith.constant 0 : index
    %c0_298 = arith.constant 0 : index
    %420 = vector.load %arg15[%c0_297, %c0_298] : memref<16x32xf32, #tpu.memory_space<vmem>>, vector<16x32xf32>
    %421 = arith.truncf %420 : vector<16x32xf32> to vector<16x32xbf16>
    %c0_299 = arith.constant 0 : index
    %c0_300 = arith.constant 0 : index
    %c0_301 = arith.constant 0 : index
    %422 = vector.load %arg5[%c0_299, %c0_300, %c0_301] : memref<4x32x32xbf16, #tpu.memory_space<vmem>>, vector<1x32x32xbf16>
    %423 = vector.shape_cast %422 : vector<1x32x32xbf16> to vector<32x32xbf16>
    %cst_302 = arith.constant dense<0.000000e+00> : vector<16x32xf32>
    %424 = tpu.matmul %421, %423, %cst_302 {dimension_numbers = #tpu.dot_dimension_numbers<[1], [0], [0], [1], [0, 0, 1, 1], [], []>} : vector<16x32xbf16>, vector<32x32xbf16>, vector<16x32xf32> -> vector<16x32xf32>
    %c0_303 = arith.constant 0 : index
    %c0_304 = arith.constant 0 : index
    %c0_305 = arith.constant 0 : index
    %425 = vector.load %arg7[%c0_303, %c0_304, %c0_305] : memref<4x1x32xf32, #tpu.memory_space<vmem>>, vector<1x1x32xf32>
    %426 = vector.shape_cast %425 : vector<1x1x32xf32> to vector<1x32xf32>
    %427 = vector.broadcast %426 : vector<1x32xf32> to vector<16x32xf32>
    %428 = arith.addf %424, %427 : vector<16x32xf32>
    %c0_306 = arith.constant 0 : index
    %c0_307 = arith.constant 0 : index
    %c0_308 = arith.constant 0 : index
    %429 = vector.load %arg16[%c0_306, %c0_307, %c0_308] : memref<4x16x32xf32, #tpu.memory_space<vmem>>, vector<1x16x32xf32>
    %430 = vector.shape_cast %429 : vector<1x16x32xf32> to vector<16x32xf32>
    %431 = vector.shape_cast %428 : vector<16x32xf32> to vector<1x16x32xf32>
    tpu.vector_store %arg16[%c0_306, %c0_307, %c0_308], %431 {strides = array<i32>} : memref<4x16x32xf32, #tpu.memory_space<vmem>>, vector<1x16x32xf32>,
    %c1_309 = arith.constant 1 : index
    %c0_310 = arith.constant 0 : index
    %c0_311 = arith.constant 0 : index
    %432 = vector.load %arg5[%c1_309, %c0_310, %c0_311] : memref<4x32x32xbf16, #tpu.memory_space<vmem>>, vector<1x32x32xbf16>
    %433 = vector.shape_cast %432 : vector<1x32x32xbf16> to vector<32x32xbf16>
    %cst_312 = arith.constant dense<0.000000e+00> : vector<16x32xf32>
    %434 = tpu.matmul %421, %433, %cst_312 {dimension_numbers = #tpu.dot_dimension_numbers<[1], [0], [0], [1], [0, 0, 1, 1], [], []>} : vector<16x32xbf16>, vector<32x32xbf16>, vector<16x32xf32> -> vector<16x32xf32>
    %c1_313 = arith.constant 1 : index
    %c0_314 = arith.constant 0 : index
    %c0_315 = arith.constant 0 : index
    %435 = vector.load %arg7[%c1_313, %c0_314, %c0_315] : memref<4x1x32xf32, #tpu.memory_space<vmem>>, vector<1x1x32xf32>
    %436 = vector.shape_cast %435 : vector<1x1x32xf32> to vector<1x32xf32>
    %437 = vector.broadcast %436 : vector<1x32xf32> to vector<16x32xf32>
    %438 = arith.addf %434, %437 : vector<16x32xf32>
    %c1_316 = arith.constant 1 : index
    %c0_317 = arith.constant 0 : index
    %c0_318 = arith.constant 0 : index
    %439 = vector.load %arg16[%c1_316, %c0_317, %c0_318] : memref<4x16x32xf32, #tpu.memory_space<vmem>>, vector<1x16x32xf32>
    %440 = vector.shape_cast %439 : vector<1x16x32xf32> to vector<16x32xf32>
    %441 = vector.shape_cast %438 : vector<16x32xf32> to vector<1x16x32xf32>
    tpu.vector_store %arg16[%c1_316, %c0_317, %c0_318], %441 {strides = array<i32>} : memref<4x16x32xf32, #tpu.memory_space<vmem>>, vector<1x16x32xf32>,
    %c2_319 = arith.constant 2 : index
    %c0_320 = arith.constant 0 : index
    %c0_321 = arith.constant 0 : index
    %442 = vector.load %arg5[%c2_319, %c0_320, %c0_321] : memref<4x32x32xbf16, #tpu.memory_space<vmem>>, vector<1x32x32xbf16>
    %443 = vector.shape_cast %442 : vector<1x32x32xbf16> to vector<32x32xbf16>
    %cst_322 = arith.constant dense<0.000000e+00> : vector<16x32xf32>
    %444 = tpu.matmul %421, %443, %cst_322 {dimension_numbers = #tpu.dot_dimension_numbers<[1], [0], [0], [1], [0, 0, 1, 1], [], []>} : vector<16x32xbf16>, vector<32x32xbf16>, vector<16x32xf32> -> vector<16x32xf32>
    %c2_323 = arith.constant 2 : index
    %c0_324 = arith.constant 0 : index
    %c0_325 = arith.constant 0 : index
    %445 = vector.load %arg7[%c2_323, %c0_324, %c0_325] : memref<4x1x32xf32, #tpu.memory_space<vmem>>, vector<1x1x32xf32>
    %446 = vector.shape_cast %445 : vector<1x1x32xf32> to vector<1x32xf32>
    %447 = vector.broadcast %446 : vector<1x32xf32> to vector<16x32xf32>
    %448 = arith.addf %444, %447 : vector<16x32xf32>
    %c2_326 = arith.constant 2 : index
    %c0_327 = arith.constant 0 : index
    %c0_328 = arith.constant 0 : index
    %449 = vector.load %arg16[%c2_326, %c0_327, %c0_328] : memref<4x16x32xf32, #tpu.memory_space<vmem>>, vector<1x16x32xf32>
    %450 = vector.shape_cast %449 : vector<1x16x32xf32> to vector<16x32xf32>
    %451 = vector.shape_cast %448 : vector<16x32xf32> to vector<1x16x32xf32>
    tpu.vector_store %arg16[%c2_326, %c0_327, %c0_328], %451 {strides = array<i32>} : memref<4x16x32xf32, #tpu.memory_space<vmem>>, vector<1x16x32xf32>,
    %c3_329 = arith.constant 3 : index
    %c0_330 = arith.constant 0 : index
    %c0_331 = arith.constant 0 : index
    %452 = vector.load %arg5[%c3_329, %c0_330, %c0_331] : memref<4x32x32xbf16, #tpu.memory_space<vmem>>, vector<1x32x32xbf16>
    %453 = vector.shape_cast %452 : vector<1x32x32xbf16> to vector<32x32xbf16>
    %cst_332 = arith.constant dense<0.000000e+00> : vector<16x32xf32>
    %454 = tpu.matmul %421, %453, %cst_332 {dimension_numbers = #tpu.dot_dimension_numbers<[1], [0], [0], [1], [0, 0, 1, 1], [], []>} : vector<16x32xbf16>, vector<32x32xbf16>, vector<16x32xf32> -> vector<16x32xf32>
    %c3_333 = arith.constant 3 : index
    %c0_334 = arith.constant 0 : index
    %c0_335 = arith.constant 0 : index
    %455 = vector.load %arg7[%c3_333, %c0_334, %c0_335] : memref<4x1x32xf32, #tpu.memory_space<vmem>>, vector<1x1x32xf32>
    %456 = vector.shape_cast %455 : vector<1x1x32xf32> to vector<1x32xf32>
    %457 = vector.broadcast %456 : vector<1x32xf32> to vector<16x32xf32>
    %458 = arith.addf %454, %457 : vector<16x32xf32>
    %c3_336 = arith.constant 3 : index
    %c0_337 = arith.constant 0 : index
    %c0_338 = arith.constant 0 : index
    %459 = vector.load %arg16[%c3_336, %c0_337, %c0_338] : memref<4x16x32xf32, #tpu.memory_space<vmem>>, vector<1x16x32xf32>
    %460 = vector.shape_cast %459 : vector<1x16x32xf32> to vector<16x32xf32>
    %461 = vector.shape_cast %458 : vector<16x32xf32> to vector<1x16x32xf32>
    tpu.vector_store %arg16[%c3_336, %c0_337, %c0_338], %461 {strides = array<i32>} : memref<4x16x32xf32, #tpu.memory_space<vmem>>, vector<1x16x32xf32>,
    %cst_339 = arith.constant 0.000000e+00 : f32
    %462 = vector.broadcast %cst_339 : f32 to vector<2x32xf32>
    %cst_340 = arith.constant 0.000000e+00 : f32
    %463 = vector.broadcast %cst_340 : f32 to vector<2x32xf32>
    %464 = arith.truncf %462 : vector<2x32xf32> to vector<2x32xbf16>
    %c0_341 = arith.constant 0 : index
    %c0_342 = arith.constant 0 : index
    %c0_343 = arith.constant 0 : index
    %465 = vector.load %arg16[%c0_341, %c0_342, %c0_343] : memref<4x16x32xf32, #tpu.memory_space<vmem>>, vector<1x2x32xf32>
    %466 = vector.shape_cast %465 : vector<1x2x32xf32> to vector<2x32xf32>
    %c0_344 = arith.constant 0 : index
    %c0_345 = arith.constant 0 : index
    %c0_346 = arith.constant 0 : index
    %467 = vector.load %arg6[%c0_344, %c0_345, %c0_346] : memref<4x32x32xbf16, #tpu.memory_space<vmem>>, vector<1x32x32xbf16>
    %468 = vector.shape_cast %467 : vector<1x32x32xbf16> to vector<32x32xbf16>
    %cst_347 = arith.constant dense<0.000000e+00> : vector<2x32xf32>
    %469 = tpu.matmul %464, %468, %cst_347 {dimension_numbers = #tpu.dot_dimension_numbers<[1], [0], [0], [1], [0, 0, 1, 1], [], []>} : vector<2x32xbf16>, vector<32x32xbf16>, vector<2x32xf32> -> vector<2x32xf32>
    %470 = arith.addf %466, %469 : vector<2x32xf32>
    %c1_348 = arith.constant 1 : index
    %c0_349 = arith.constant 0 : index
    %c0_350 = arith.constant 0 : index
    %471 = vector.load %arg16[%c1_348, %c0_349, %c0_350] : memref<4x16x32xf32, #tpu.memory_space<vmem>>, vector<1x2x32xf32>
    %472 = vector.shape_cast %471 : vector<1x2x32xf32> to vector<2x32xf32>
    %c1_351 = arith.constant 1 : index
    %c0_352 = arith.constant 0 : index
    %c0_353 = arith.constant 0 : index
    %473 = vector.load %arg6[%c1_351, %c0_352, %c0_353] : memref<4x32x32xbf16, #tpu.memory_space<vmem>>, vector<1x32x32xbf16>
    %474 = vector.shape_cast %473 : vector<1x32x32xbf16> to vector<32x32xbf16>
    %cst_354 = arith.constant dense<0.000000e+00> : vector<2x32xf32>
    %475 = tpu.matmul %464, %474, %cst_354 {dimension_numbers = #tpu.dot_dimension_numbers<[1], [0], [0], [1], [0, 0, 1, 1], [], []>} : vector<2x32xbf16>, vector<32x32xbf16>, vector<2x32xf32> -> vector<2x32xf32>
    %476 = arith.addf %472, %475 : vector<2x32xf32>
    %c2_355 = arith.constant 2 : index
    %c0_356 = arith.constant 0 : index
    %c0_357 = arith.constant 0 : index
    %477 = vector.load %arg16[%c2_355, %c0_356, %c0_357] : memref<4x16x32xf32, #tpu.memory_space<vmem>>, vector<1x2x32xf32>
    %478 = vector.shape_cast %477 : vector<1x2x32xf32> to vector<2x32xf32>
    %c2_358 = arith.constant 2 : index
    %c0_359 = arith.constant 0 : index
    %c0_360 = arith.constant 0 : index
    %479 = vector.load %arg6[%c2_358, %c0_359, %c0_360] : memref<4x32x32xbf16, #tpu.memory_space<vmem>>, vector<1x32x32xbf16>
    %480 = vector.shape_cast %479 : vector<1x32x32xbf16> to vector<32x32xbf16>
    %cst_361 = arith.constant dense<0.000000e+00> : vector<2x32xf32>
    %481 = tpu.matmul %464, %480, %cst_361 {dimension_numbers = #tpu.dot_dimension_numbers<[1], [0], [0], [1], [0, 0, 1, 1], [], []>} : vector<2x32xbf16>, vector<32x32xbf16>, vector<2x32xf32> -> vector<2x32xf32>
    %482 = arith.addf %478, %481 : vector<2x32xf32>
    %c3_362 = arith.constant 3 : index
    %c0_363 = arith.constant 0 : index
    %c0_364 = arith.constant 0 : index
    %483 = vector.load %arg16[%c3_362, %c0_363, %c0_364] : memref<4x16x32xf32, #tpu.memory_space<vmem>>, vector<1x2x32xf32>
    %484 = vector.shape_cast %483 : vector<1x2x32xf32> to vector<2x32xf32>
    %c3_365 = arith.constant 3 : index
    %c0_366 = arith.constant 0 : index
    %c0_367 = arith.constant 0 : index
    %485 = vector.load %arg6[%c3_365, %c0_366, %c0_367] : memref<4x32x32xbf16, #tpu.memory_space<vmem>>, vector<1x32x32xbf16>
    %486 = vector.shape_cast %485 : vector<1x32x32xbf16> to vector<32x32xbf16>
    %cst_368 = arith.constant dense<0.000000e+00> : vector<2x32xf32>
    %487 = tpu.matmul %464, %486, %cst_368 {dimension_numbers = #tpu.dot_dimension_numbers<[1], [0], [0], [1], [0, 0, 1, 1], [], []>} : vector<2x32xbf16>, vector<32x32xbf16>, vector<2x32xf32> -> vector<2x32xf32>
    %488 = arith.addf %484, %487 : vector<2x32xf32>
    %489 = arith.negf %470 : vector<2x32xf32>
    %490 = math.exp %489 : vector<2x32xf32>
    %cst_369 = arith.constant 1.000000e+00 : f32
    %491 = vector.broadcast %cst_369 : f32 to vector<2x32xf32>
    %492 = arith.addf %491, %490 : vector<2x32xf32>
    %493 = arith.divf %491, %492 : vector<2x32xf32>
    %494 = arith.negf %476 : vector<2x32xf32>
    %495 = math.exp %494 : vector<2x32xf32>
    %cst_370 = arith.constant 1.000000e+00 : f32
    %496 = vector.broadcast %cst_370 : f32 to vector<2x32xf32>
    %497 = arith.addf %496, %495 : vector<2x32xf32>
    %498 = arith.divf %496, %497 : vector<2x32xf32>
    %499 = math.tanh %482 : vector<2x32xf32>
    %500 = arith.negf %488 : vector<2x32xf32>
    %501 = math.exp %500 : vector<2x32xf32>
    %cst_371 = arith.constant 1.000000e+00 : f32
    %502 = vector.broadcast %cst_371 : f32 to vector<2x32xf32>
    %503 = arith.addf %502, %501 : vector<2x32xf32>
    %504 = arith.divf %502, %503 : vector<2x32xf32>
    %505 = arith.mulf %498, %463 : vector<2x32xf32>
    %506 = arith.mulf %493, %499 : vector<2x32xf32>
    %507 = arith.addf %505, %506 : vector<2x32xf32>
    %508 = math.tanh %507 : vector<2x32xf32>
    %509 = arith.mulf %504, %508 : vector<2x32xf32>
    %c0_372 = arith.constant 0 : index
    %c0_373 = arith.constant 0 : index
    %510 = vector.load %arg15[%c0_372, %c0_373] : memref<16x32xf32, #tpu.memory_space<vmem>>, vector<2x32xf32>
    tpu.vector_store %arg15[%c0_372, %c0_373], %509 {strides = array<i32>} : memref<16x32xf32, #tpu.memory_space<vmem>>, vector<2x32xf32>,
    %511 = arith.truncf %509 : vector<2x32xf32> to vector<2x32xbf16>
    %c0_374 = arith.constant 0 : index
    %c2_375 = arith.constant 2 : index
    %c0_376 = arith.constant 0 : index
    %512 = vector.load %arg16[%c0_374, %c2_375, %c0_376] : memref<4x16x32xf32, #tpu.memory_space<vmem>>, vector<1x2x32xf32>
    %513 = vector.shape_cast %512 : vector<1x2x32xf32> to vector<2x32xf32>
    %c0_377 = arith.constant 0 : index
    %c0_378 = arith.constant 0 : index
    %c0_379 = arith.constant 0 : index
    %514 = vector.load %arg6[%c0_377, %c0_378, %c0_379] : memref<4x32x32xbf16, #tpu.memory_space<vmem>>, vector<1x32x32xbf16>
    %515 = vector.shape_cast %514 : vector<1x32x32xbf16> to vector<32x32xbf16>
    %cst_380 = arith.constant dense<0.000000e+00> : vector<2x32xf32>
    %516 = tpu.matmul %511, %515, %cst_380 {dimension_numbers = #tpu.dot_dimension_numbers<[1], [0], [0], [1], [0, 0, 1, 1], [], []>} : vector<2x32xbf16>, vector<32x32xbf16>, vector<2x32xf32> -> vector<2x32xf32>
    %517 = arith.addf %513, %516 : vector<2x32xf32>
    %c1_381 = arith.constant 1 : index
    %c2_382 = arith.constant 2 : index
    %c0_383 = arith.constant 0 : index
    %518 = vector.load %arg16[%c1_381, %c2_382, %c0_383] : memref<4x16x32xf32, #tpu.memory_space<vmem>>, vector<1x2x32xf32>
    %519 = vector.shape_cast %518 : vector<1x2x32xf32> to vector<2x32xf32>
    %c1_384 = arith.constant 1 : index
    %c0_385 = arith.constant 0 : index
    %c0_386 = arith.constant 0 : index
    %520 = vector.load %arg6[%c1_384, %c0_385, %c0_386] : memref<4x32x32xbf16, #tpu.memory_space<vmem>>, vector<1x32x32xbf16>
    %521 = vector.shape_cast %520 : vector<1x32x32xbf16> to vector<32x32xbf16>
    %cst_387 = arith.constant dense<0.000000e+00> : vector<2x32xf32>
    %522 = tpu.matmul %511, %521, %cst_387 {dimension_numbers = #tpu.dot_dimension_numbers<[1], [0], [0], [1], [0, 0, 1, 1], [], []>} : vector<2x32xbf16>, vector<32x32xbf16>, vector<2x32xf32> -> vector<2x32xf32>
    %523 = arith.addf %519, %522 : vector<2x32xf32>
    %c2_388 = arith.constant 2 : index
    %c2_389 = arith.constant 2 : index
    %c0_390 = arith.constant 0 : index
    %524 = vector.load %arg16[%c2_388, %c2_389, %c0_390] : memref<4x16x32xf32, #tpu.memory_space<vmem>>, vector<1x2x32xf32>
    %525 = vector.shape_cast %524 : vector<1x2x32xf32> to vector<2x32xf32>
    %c2_391 = arith.constant 2 : index
    %c0_392 = arith.constant 0 : index
    %c0_393 = arith.constant 0 : index
    %526 = vector.load %arg6[%c2_391, %c0_392, %c0_393] : memref<4x32x32xbf16, #tpu.memory_space<vmem>>, vector<1x32x32xbf16>
    %527 = vector.shape_cast %526 : vector<1x32x32xbf16> to vector<32x32xbf16>
    %cst_394 = arith.constant dense<0.000000e+00> : vector<2x32xf32>
    %528 = tpu.matmul %511, %527, %cst_394 {dimension_numbers = #tpu.dot_dimension_numbers<[1], [0], [0], [1], [0, 0, 1, 1], [], []>} : vector<2x32xbf16>, vector<32x32xbf16>, vector<2x32xf32> -> vector<2x32xf32>
    %529 = arith.addf %525, %528 : vector<2x32xf32>
    %c3_395 = arith.constant 3 : index
    %c2_396 = arith.constant 2 : index
    %c0_397 = arith.constant 0 : index
    %530 = vector.load %arg16[%c3_395, %c2_396, %c0_397] : memref<4x16x32xf32, #tpu.memory_space<vmem>>, vector<1x2x32xf32>
    %531 = vector.shape_cast %530 : vector<1x2x32xf32> to vector<2x32xf32>
    %c3_398 = arith.constant 3 : index
    %c0_399 = arith.constant 0 : index
    %c0_400 = arith.constant 0 : index
    %532 = vector.load %arg6[%c3_398, %c0_399, %c0_400] : memref<4x32x32xbf16, #tpu.memory_space<vmem>>, vector<1x32x32xbf16>
    %533 = vector.shape_cast %532 : vector<1x32x32xbf16> to vector<32x32xbf16>
    %cst_401 = arith.constant dense<0.000000e+00> : vector<2x32xf32>
    %534 = tpu.matmul %511, %533, %cst_401 {dimension_numbers = #tpu.dot_dimension_numbers<[1], [0], [0], [1], [0, 0, 1, 1], [], []>} : vector<2x32xbf16>, vector<32x32xbf16>, vector<2x32xf32> -> vector<2x32xf32>
    %535 = arith.addf %531, %534 : vector<2x32xf32>
    %536 = arith.negf %517 : vector<2x32xf32>
    %537 = math.exp %536 : vector<2x32xf32>
    %cst_402 = arith.constant 1.000000e+00 : f32
    %538 = vector.broadcast %cst_402 : f32 to vector<2x32xf32>
    %539 = arith.addf %538, %537 : vector<2x32xf32>
    %540 = arith.divf %538, %539 : vector<2x32xf32>
    %541 = arith.negf %523 : vector<2x32xf32>
    %542 = math.exp %541 : vector<2x32xf32>
    %cst_403 = arith.constant 1.000000e+00 : f32
    %543 = vector.broadcast %cst_403 : f32 to vector<2x32xf32>
    %544 = arith.addf %543, %542 : vector<2x32xf32>
    %545 = arith.divf %543, %544 : vector<2x32xf32>
    %546 = math.tanh %529 : vector<2x32xf32>
    %547 = arith.negf %535 : vector<2x32xf32>
    %548 = math.exp %547 : vector<2x32xf32>
    %cst_404 = arith.constant 1.000000e+00 : f32
    %549 = vector.broadcast %cst_404 : f32 to vector<2x32xf32>
    %550 = arith.addf %549, %548 : vector<2x32xf32>
    %551 = arith.divf %549, %550 : vector<2x32xf32>
    %552 = arith.mulf %545, %507 : vector<2x32xf32>
    %553 = arith.mulf %540, %546 : vector<2x32xf32>
    %554 = arith.addf %552, %553 : vector<2x32xf32>
    %555 = math.tanh %554 : vector<2x32xf32>
    %556 = arith.mulf %551, %555 : vector<2x32xf32>
    %c2_405 = arith.constant 2 : index
    %c0_406 = arith.constant 0 : index
    %557 = vector.load %arg15[%c2_405, %c0_406] : memref<16x32xf32, #tpu.memory_space<vmem>>, vector<2x32xf32>
    tpu.vector_store %arg15[%c2_405, %c0_406], %556 {strides = array<i32>} : memref<16x32xf32, #tpu.memory_space<vmem>>, vector<2x32xf32>,
    %558 = arith.truncf %556 : vector<2x32xf32> to vector<2x32xbf16>
    %c0_407 = arith.constant 0 : index
    %c4_408 = arith.constant 4 : index
    %c0_409 = arith.constant 0 : index
    %559 = vector.load %arg16[%c0_407, %c4_408, %c0_409] : memref<4x16x32xf32, #tpu.memory_space<vmem>>, vector<1x2x32xf32>
    %560 = vector.shape_cast %559 : vector<1x2x32xf32> to vector<2x32xf32>
    %c0_410 = arith.constant 0 : index
    %c0_411 = arith.constant 0 : index
    %c0_412 = arith.constant 0 : index
    %561 = vector.load %arg6[%c0_410, %c0_411, %c0_412] : memref<4x32x32xbf16, #tpu.memory_space<vmem>>, vector<1x32x32xbf16>
    %562 = vector.shape_cast %561 : vector<1x32x32xbf16> to vector<32x32xbf16>
    %cst_413 = arith.constant dense<0.000000e+00> : vector<2x32xf32>
    %563 = tpu.matmul %558, %562, %cst_413 {dimension_numbers = #tpu.dot_dimension_numbers<[1], [0], [0], [1], [0, 0, 1, 1], [], []>} : vector<2x32xbf16>, vector<32x32xbf16>, vector<2x32xf32> -> vector<2x32xf32>
    %564 = arith.addf %560, %563 : vector<2x32xf32>
    %c1_414 = arith.constant 1 : index
    %c4_415 = arith.constant 4 : index
    %c0_416 = arith.constant 0 : index
    %565 = vector.load %arg16[%c1_414, %c4_415, %c0_416] : memref<4x16x32xf32, #tpu.memory_space<vmem>>, vector<1x2x32xf32>
    %566 = vector.shape_cast %565 : vector<1x2x32xf32> to vector<2x32xf32>
    %c1_417 = arith.constant 1 : index
    %c0_418 = arith.constant 0 : index
    %c0_419 = arith.constant 0 : index
    %567 = vector.load %arg6[%c1_417, %c0_418, %c0_419] : memref<4x32x32xbf16, #tpu.memory_space<vmem>>, vector<1x32x32xbf16>
    %568 = vector.shape_cast %567 : vector<1x32x32xbf16> to vector<32x32xbf16>
    %cst_420 = arith.constant dense<0.000000e+00> : vector<2x32xf32>
    %569 = tpu.matmul %558, %568, %cst_420 {dimension_numbers = #tpu.dot_dimension_numbers<[1], [0], [0], [1], [0, 0, 1, 1], [], []>} : vector<2x32xbf16>, vector<32x32xbf16>, vector<2x32xf32> -> vector<2x32xf32>
    %570 = arith.addf %566, %569 : vector<2x32xf32>
    %c2_421 = arith.constant 2 : index
    %c4_422 = arith.constant 4 : index
    %c0_423 = arith.constant 0 : index
    %571 = vector.load %arg16[%c2_421, %c4_422, %c0_423] : memref<4x16x32xf32, #tpu.memory_space<vmem>>, vector<1x2x32xf32>
    %572 = vector.shape_cast %571 : vector<1x2x32xf32> to vector<2x32xf32>
    %c2_424 = arith.constant 2 : index
    %c0_425 = arith.constant 0 : index
    %c0_426 = arith.constant 0 : index
    %573 = vector.load %arg6[%c2_424, %c0_425, %c0_426] : memref<4x32x32xbf16, #tpu.memory_space<vmem>>, vector<1x32x32xbf16>
    %574 = vector.shape_cast %573 : vector<1x32x32xbf16> to vector<32x32xbf16>
    %cst_427 = arith.constant dense<0.000000e+00> : vector<2x32xf32>
    %575 = tpu.matmul %558, %574, %cst_427 {dimension_numbers = #tpu.dot_dimension_numbers<[1], [0], [0], [1], [0, 0, 1, 1], [], []>} : vector<2x32xbf16>, vector<32x32xbf16>, vector<2x32xf32> -> vector<2x32xf32>
    %576 = arith.addf %572, %575 : vector<2x32xf32>
    %c3_428 = arith.constant 3 : index
    %c4_429 = arith.constant 4 : index
    %c0_430 = arith.constant 0 : index
    %577 = vector.load %arg16[%c3_428, %c4_429, %c0_430] : memref<4x16x32xf32, #tpu.memory_space<vmem>>, vector<1x2x32xf32>
    %578 = vector.shape_cast %577 : vector<1x2x32xf32> to vector<2x32xf32>
    %c3_431 = arith.constant 3 : index
    %c0_432 = arith.constant 0 : index
    %c0_433 = arith.constant 0 : index
    %579 = vector.load %arg6[%c3_431, %c0_432, %c0_433] : memref<4x32x32xbf16, #tpu.memory_space<vmem>>, vector<1x32x32xbf16>
    %580 = vector.shape_cast %579 : vector<1x32x32xbf16> to vector<32x32xbf16>
    %cst_434 = arith.constant dense<0.000000e+00> : vector<2x32xf32>
    %581 = tpu.matmul %558, %580, %cst_434 {dimension_numbers = #tpu.dot_dimension_numbers<[1], [0], [0], [1], [0, 0, 1, 1], [], []>} : vector<2x32xbf16>, vector<32x32xbf16>, vector<2x32xf32> -> vector<2x32xf32>
    %582 = arith.addf %578, %581 : vector<2x32xf32>
    %583 = arith.negf %564 : vector<2x32xf32>
    %584 = math.exp %583 : vector<2x32xf32>
    %cst_435 = arith.constant 1.000000e+00 : f32
    %585 = vector.broadcast %cst_435 : f32 to vector<2x32xf32>
    %586 = arith.addf %585, %584 : vector<2x32xf32>
    %587 = arith.divf %585, %586 : vector<2x32xf32>
    %588 = arith.negf %570 : vector<2x32xf32>
    %589 = math.exp %588 : vector<2x32xf32>
    %cst_436 = arith.constant 1.000000e+00 : f32
    %590 = vector.broadcast %cst_436 : f32 to vector<2x32xf32>
    %591 = arith.addf %590, %589 : vector<2x32xf32>
    %592 = arith.divf %590, %591 : vector<2x32xf32>
    %593 = math.tanh %576 : vector<2x32xf32>
    %594 = arith.negf %582 : vector<2x32xf32>
    %595 = math.exp %594 : vector<2x32xf32>
    %cst_437 = arith.constant 1.000000e+00 : f32
    %596 = vector.broadcast %cst_437 : f32 to vector<2x32xf32>
    %597 = arith.addf %596, %595 : vector<2x32xf32>
    %598 = arith.divf %596, %597 : vector<2x32xf32>
    %599 = arith.mulf %592, %554 : vector<2x32xf32>
    %600 = arith.mulf %587, %593 : vector<2x32xf32>
    %601 = arith.addf %599, %600 : vector<2x32xf32>
    %602 = math.tanh %601 : vector<2x32xf32>
    %603 = arith.mulf %598, %602 : vector<2x32xf32>
    %c4_438 = arith.constant 4 : index
    %c0_439 = arith.constant 0 : index
    %604 = vector.load %arg15[%c4_438, %c0_439] : memref<16x32xf32, #tpu.memory_space<vmem>>, vector<2x32xf32>
    tpu.vector_store %arg15[%c4_438, %c0_439], %603 {strides = array<i32>} : memref<16x32xf32, #tpu.memory_space<vmem>>, vector<2x32xf32>,
    %605 = arith.truncf %603 : vector<2x32xf32> to vector<2x32xbf16>
    %c0_440 = arith.constant 0 : index
    %c6_441 = arith.constant 6 : index
    %c0_442 = arith.constant 0 : index
    %606 = vector.load %arg16[%c0_440, %c6_441, %c0_442] : memref<4x16x32xf32, #tpu.memory_space<vmem>>, vector<1x2x32xf32>
    %607 = vector.shape_cast %606 : vector<1x2x32xf32> to vector<2x32xf32>
    %c0_443 = arith.constant 0 : index
    %c0_444 = arith.constant 0 : index
    %c0_445 = arith.constant 0 : index
    %608 = vector.load %arg6[%c0_443, %c0_444, %c0_445] : memref<4x32x32xbf16, #tpu.memory_space<vmem>>, vector<1x32x32xbf16>
    %609 = vector.shape_cast %608 : vector<1x32x32xbf16> to vector<32x32xbf16>
    %cst_446 = arith.constant dense<0.000000e+00> : vector<2x32xf32>
    %610 = tpu.matmul %605, %609, %cst_446 {dimension_numbers = #tpu.dot_dimension_numbers<[1], [0], [0], [1], [0, 0, 1, 1], [], []>} : vector<2x32xbf16>, vector<32x32xbf16>, vector<2x32xf32> -> vector<2x32xf32>
    %611 = arith.addf %607, %610 : vector<2x32xf32>
    %c1_447 = arith.constant 1 : index
    %c6_448 = arith.constant 6 : index
    %c0_449 = arith.constant 0 : index
    %612 = vector.load %arg16[%c1_447, %c6_448, %c0_449] : memref<4x16x32xf32, #tpu.memory_space<vmem>>, vector<1x2x32xf32>
    %613 = vector.shape_cast %612 : vector<1x2x32xf32> to vector<2x32xf32>
    %c1_450 = arith.constant 1 : index
    %c0_451 = arith.constant 0 : index
    %c0_452 = arith.constant 0 : index
    %614 = vector.load %arg6[%c1_450, %c0_451, %c0_452] : memref<4x32x32xbf16, #tpu.memory_space<vmem>>, vector<1x32x32xbf16>
    %615 = vector.shape_cast %614 : vector<1x32x32xbf16> to vector<32x32xbf16>
    %cst_453 = arith.constant dense<0.000000e+00> : vector<2x32xf32>
    %616 = tpu.matmul %605, %615, %cst_453 {dimension_numbers = #tpu.dot_dimension_numbers<[1], [0], [0], [1], [0, 0, 1, 1], [], []>} : vector<2x32xbf16>, vector<32x32xbf16>, vector<2x32xf32> -> vector<2x32xf32>
    %617 = arith.addf %613, %616 : vector<2x32xf32>
    %c2_454 = arith.constant 2 : index
    %c6_455 = arith.constant 6 : index
    %c0_456 = arith.constant 0 : index
    %618 = vector.load %arg16[%c2_454, %c6_455, %c0_456] : memref<4x16x32xf32, #tpu.memory_space<vmem>>, vector<1x2x32xf32>
    %619 = vector.shape_cast %618 : vector<1x2x32xf32> to vector<2x32xf32>
    %c2_457 = arith.constant 2 : index
    %c0_458 = arith.constant 0 : index
    %c0_459 = arith.constant 0 : index
    %620 = vector.load %arg6[%c2_457, %c0_458, %c0_459] : memref<4x32x32xbf16, #tpu.memory_space<vmem>>, vector<1x32x32xbf16>
    %621 = vector.shape_cast %620 : vector<1x32x32xbf16> to vector<32x32xbf16>
    %cst_460 = arith.constant dense<0.000000e+00> : vector<2x32xf32>
    %622 = tpu.matmul %605, %621, %cst_460 {dimension_numbers = #tpu.dot_dimension_numbers<[1], [0], [0], [1], [0, 0, 1, 1], [], []>} : vector<2x32xbf16>, vector<32x32xbf16>, vector<2x32xf32> -> vector<2x32xf32>
    %623 = arith.addf %619, %622 : vector<2x32xf32>
    %c3_461 = arith.constant 3 : index
    %c6_462 = arith.constant 6 : index
    %c0_463 = arith.constant 0 : index
    %624 = vector.load %arg16[%c3_461, %c6_462, %c0_463] : memref<4x16x32xf32, #tpu.memory_space<vmem>>, vector<1x2x32xf32>
    %625 = vector.shape_cast %624 : vector<1x2x32xf32> to vector<2x32xf32>
    %c3_464 = arith.constant 3 : index
    %c0_465 = arith.constant 0 : index
    %c0_466 = arith.constant 0 : index
    %626 = vector.load %arg6[%c3_464, %c0_465, %c0_466] : memref<4x32x32xbf16, #tpu.memory_space<vmem>>, vector<1x32x32xbf16>
    %627 = vector.shape_cast %626 : vector<1x32x32xbf16> to vector<32x32xbf16>
    %cst_467 = arith.constant dense<0.000000e+00> : vector<2x32xf32>
    %628 = tpu.matmul %605, %627, %cst_467 {dimension_numbers = #tpu.dot_dimension_numbers<[1], [0], [0], [1], [0, 0, 1, 1], [], []>} : vector<2x32xbf16>, vector<32x32xbf16>, vector<2x32xf32> -> vector<2x32xf32>
    %629 = arith.addf %625, %628 : vector<2x32xf32>
    %630 = arith.negf %611 : vector<2x32xf32>
    %631 = math.exp %630 : vector<2x32xf32>
    %cst_468 = arith.constant 1.000000e+00 : f32
    %632 = vector.broadcast %cst_468 : f32 to vector<2x32xf32>
    %633 = arith.addf %632, %631 : vector<2x32xf32>
    %634 = arith.divf %632, %633 : vector<2x32xf32>
    %635 = arith.negf %617 : vector<2x32xf32>
    %636 = math.exp %635 : vector<2x32xf32>
    %cst_469 = arith.constant 1.000000e+00 : f32
    %637 = vector.broadcast %cst_469 : f32 to vector<2x32xf32>
    %638 = arith.addf %637, %636 : vector<2x32xf32>
    %639 = arith.divf %637, %638 : vector<2x32xf32>
    %640 = math.tanh %623 : vector<2x32xf32>
    %641 = arith.negf %629 : vector<2x32xf32>
    %642 = math.exp %641 : vector<2x32xf32>
    %cst_470 = arith.constant 1.000000e+00 : f32
    %643 = vector.broadcast %cst_470 : f32 to vector<2x32xf32>
    %644 = arith.addf %643, %642 : vector<2x32xf32>
    %645 = arith.divf %643, %644 : vector<2x32xf32>
    %646 = arith.mulf %639, %601 : vector<2x32xf32>
    %647 = arith.mulf %634, %640 : vector<2x32xf32>
    %648 = arith.addf %646, %647 : vector<2x32xf32>
    %649 = math.tanh %648 : vector<2x32xf32>
    %650 = arith.mulf %645, %649 : vector<2x32xf32>
    %c6_471 = arith.constant 6 : index
    %c0_472 = arith.constant 0 : index
    %651 = vector.load %arg15[%c6_471, %c0_472] : memref<16x32xf32, #tpu.memory_space<vmem>>, vector<2x32xf32>
    tpu.vector_store %arg15[%c6_471, %c0_472], %650 {strides = array<i32>} : memref<16x32xf32, #tpu.memory_space<vmem>>, vector<2x32xf32>,
    %652 = arith.truncf %650 : vector<2x32xf32> to vector<2x32xbf16>
    %c0_473 = arith.constant 0 : index
    %c8_474 = arith.constant 8 : index
    %c0_475 = arith.constant 0 : index
    %653 = vector.load %arg16[%c0_473, %c8_474, %c0_475] : memref<4x16x32xf32, #tpu.memory_space<vmem>>, vector<1x2x32xf32>
    %654 = vector.shape_cast %653 : vector<1x2x32xf32> to vector<2x32xf32>
    %c0_476 = arith.constant 0 : index
    %c0_477 = arith.constant 0 : index
    %c0_478 = arith.constant 0 : index
    %655 = vector.load %arg6[%c0_476, %c0_477, %c0_478] : memref<4x32x32xbf16, #tpu.memory_space<vmem>>, vector<1x32x32xbf16>
    %656 = vector.shape_cast %655 : vector<1x32x32xbf16> to vector<32x32xbf16>
    %cst_479 = arith.constant dense<0.000000e+00> : vector<2x32xf32>
    %657 = tpu.matmul %652, %656, %cst_479 {dimension_numbers = #tpu.dot_dimension_numbers<[1], [0], [0], [1], [0, 0, 1, 1], [], []>} : vector<2x32xbf16>, vector<32x32xbf16>, vector<2x32xf32> -> vector<2x32xf32>
    %658 = arith.addf %654, %657 : vector<2x32xf32>
    %c1_480 = arith.constant 1 : index
    %c8_481 = arith.constant 8 : index
    %c0_482 = arith.constant 0 : index
    %659 = vector.load %arg16[%c1_480, %c8_481, %c0_482] : memref<4x16x32xf32, #tpu.memory_space<vmem>>, vector<1x2x32xf32>
    %660 = vector.shape_cast %659 : vector<1x2x32xf32> to vector<2x32xf32>
    %c1_483 = arith.constant 1 : index
    %c0_484 = arith.constant 0 : index
    %c0_485 = arith.constant 0 : index
    %661 = vector.load %arg6[%c1_483, %c0_484, %c0_485] : memref<4x32x32xbf16, #tpu.memory_space<vmem>>, vector<1x32x32xbf16>
    %662 = vector.shape_cast %661 : vector<1x32x32xbf16> to vector<32x32xbf16>
    %cst_486 = arith.constant dense<0.000000e+00> : vector<2x32xf32>
    %663 = tpu.matmul %652, %662, %cst_486 {dimension_numbers = #tpu.dot_dimension_numbers<[1], [0], [0], [1], [0, 0, 1, 1], [], []>} : vector<2x32xbf16>, vector<32x32xbf16>, vector<2x32xf32> -> vector<2x32xf32>
    %664 = arith.addf %660, %663 : vector<2x32xf32>
    %c2_487 = arith.constant 2 : index
    %c8_488 = arith.constant 8 : index
    %c0_489 = arith.constant 0 : index
    %665 = vector.load %arg16[%c2_487, %c8_488, %c0_489] : memref<4x16x32xf32, #tpu.memory_space<vmem>>, vector<1x2x32xf32>
    %666 = vector.shape_cast %665 : vector<1x2x32xf32> to vector<2x32xf32>
    %c2_490 = arith.constant 2 : index
    %c0_491 = arith.constant 0 : index
    %c0_492 = arith.constant 0 : index
    %667 = vector.load %arg6[%c2_490, %c0_491, %c0_492] : memref<4x32x32xbf16, #tpu.memory_space<vmem>>, vector<1x32x32xbf16>
    %668 = vector.shape_cast %667 : vector<1x32x32xbf16> to vector<32x32xbf16>
    %cst_493 = arith.constant dense<0.000000e+00> : vector<2x32xf32>
    %669 = tpu.matmul %652, %668, %cst_493 {dimension_numbers = #tpu.dot_dimension_numbers<[1], [0], [0], [1], [0, 0, 1, 1], [], []>} : vector<2x32xbf16>, vector<32x32xbf16>, vector<2x32xf32> -> vector<2x32xf32>
    %670 = arith.addf %666, %669 : vector<2x32xf32>
    %c3_494 = arith.constant 3 : index
    %c8_495 = arith.constant 8 : index
    %c0_496 = arith.constant 0 : index
    %671 = vector.load %arg16[%c3_494, %c8_495, %c0_496] : memref<4x16x32xf32, #tpu.memory_space<vmem>>, vector<1x2x32xf32>
    %672 = vector.shape_cast %671 : vector<1x2x32xf32> to vector<2x32xf32>
    %c3_497 = arith.constant 3 : index
    %c0_498 = arith.constant 0 : index
    %c0_499 = arith.constant 0 : index
    %673 = vector.load %arg6[%c3_497, %c0_498, %c0_499] : memref<4x32x32xbf16, #tpu.memory_space<vmem>>, vector<1x32x32xbf16>
    %674 = vector.shape_cast %673 : vector<1x32x32xbf16> to vector<32x32xbf16>
    %cst_500 = arith.constant dense<0.000000e+00> : vector<2x32xf32>
    %675 = tpu.matmul %652, %674, %cst_500 {dimension_numbers = #tpu.dot_dimension_numbers<[1], [0], [0], [1], [0, 0, 1, 1], [], []>} : vector<2x32xbf16>, vector<32x32xbf16>, vector<2x32xf32> -> vector<2x32xf32>
    %676 = arith.addf %672, %675 : vector<2x32xf32>
    %677 = arith.negf %658 : vector<2x32xf32>
    %678 = math.exp %677 : vector<2x32xf32>
    %cst_501 = arith.constant 1.000000e+00 : f32
    %679 = vector.broadcast %cst_501 : f32 to vector<2x32xf32>
    %680 = arith.addf %679, %678 : vector<2x32xf32>
    %681 = arith.divf %679, %680 : vector<2x32xf32>
    %682 = arith.negf %664 : vector<2x32xf32>
    %683 = math.exp %682 : vector<2x32xf32>
    %cst_502 = arith.constant 1.000000e+00 : f32
    %684 = vector.broadcast %cst_502 : f32 to vector<2x32xf32>
    %685 = arith.addf %684, %683 : vector<2x32xf32>
    %686 = arith.divf %684, %685 : vector<2x32xf32>
    %687 = math.tanh %670 : vector<2x32xf32>
    %688 = arith.negf %676 : vector<2x32xf32>
    %689 = math.exp %688 : vector<2x32xf32>
    %cst_503 = arith.constant 1.000000e+00 : f32
    %690 = vector.broadcast %cst_503 : f32 to vector<2x32xf32>
    %691 = arith.addf %690, %689 : vector<2x32xf32>
    %692 = arith.divf %690, %691 : vector<2x32xf32>
    %693 = arith.mulf %686, %648 : vector<2x32xf32>
    %694 = arith.mulf %681, %687 : vector<2x32xf32>
    %695 = arith.addf %693, %694 : vector<2x32xf32>
    %696 = math.tanh %695 : vector<2x32xf32>
    %697 = arith.mulf %692, %696 : vector<2x32xf32>
    %c8_504 = arith.constant 8 : index
    %c0_505 = arith.constant 0 : index
    %698 = vector.load %arg15[%c8_504, %c0_505] : memref<16x32xf32, #tpu.memory_space<vmem>>, vector<2x32xf32>
    tpu.vector_store %arg15[%c8_504, %c0_505], %697 {strides = array<i32>} : memref<16x32xf32, #tpu.memory_space<vmem>>, vector<2x32xf32>,
    %699 = arith.truncf %697 : vector<2x32xf32> to vector<2x32xbf16>
    %c0_506 = arith.constant 0 : index
    %c10_507 = arith.constant 10 : index
    %c0_508 = arith.constant 0 : index
    %700 = vector.load %arg16[%c0_506, %c10_507, %c0_508] : memref<4x16x32xf32, #tpu.memory_space<vmem>>, vector<1x2x32xf32>
    %701 = vector.shape_cast %700 : vector<1x2x32xf32> to vector<2x32xf32>
    %c0_509 = arith.constant 0 : index
    %c0_510 = arith.constant 0 : index
    %c0_511 = arith.constant 0 : index
    %702 = vector.load %arg6[%c0_509, %c0_510, %c0_511] : memref<4x32x32xbf16, #tpu.memory_space<vmem>>, vector<1x32x32xbf16>
    %703 = vector.shape_cast %702 : vector<1x32x32xbf16> to vector<32x32xbf16>
    %cst_512 = arith.constant dense<0.000000e+00> : vector<2x32xf32>
    %704 = tpu.matmul %699, %703, %cst_512 {dimension_numbers = #tpu.dot_dimension_numbers<[1], [0], [0], [1], [0, 0, 1, 1], [], []>} : vector<2x32xbf16>, vector<32x32xbf16>, vector<2x32xf32> -> vector<2x32xf32>
    %705 = arith.addf %701, %704 : vector<2x32xf32>
    %c1_513 = arith.constant 1 : index
    %c10_514 = arith.constant 10 : index
    %c0_515 = arith.constant 0 : index
    %706 = vector.load %arg16[%c1_513, %c10_514, %c0_515] : memref<4x16x32xf32, #tpu.memory_space<vmem>>, vector<1x2x32xf32>
    %707 = vector.shape_cast %706 : vector<1x2x32xf32> to vector<2x32xf32>
    %c1_516 = arith.constant 1 : index
    %c0_517 = arith.constant 0 : index
    %c0_518 = arith.constant 0 : index
    %708 = vector.load %arg6[%c1_516, %c0_517, %c0_518] : memref<4x32x32xbf16, #tpu.memory_space<vmem>>, vector<1x32x32xbf16>
    %709 = vector.shape_cast %708 : vector<1x32x32xbf16> to vector<32x32xbf16>
    %cst_519 = arith.constant dense<0.000000e+00> : vector<2x32xf32>
    %710 = tpu.matmul %699, %709, %cst_519 {dimension_numbers = #tpu.dot_dimension_numbers<[1], [0], [0], [1], [0, 0, 1, 1], [], []>} : vector<2x32xbf16>, vector<32x32xbf16>, vector<2x32xf32> -> vector<2x32xf32>
    %711 = arith.addf %707, %710 : vector<2x32xf32>
    %c2_520 = arith.constant 2 : index
    %c10_521 = arith.constant 10 : index
    %c0_522 = arith.constant 0 : index
    %712 = vector.load %arg16[%c2_520, %c10_521, %c0_522] : memref<4x16x32xf32, #tpu.memory_space<vmem>>, vector<1x2x32xf32>
    %713 = vector.shape_cast %712 : vector<1x2x32xf32> to vector<2x32xf32>
    %c2_523 = arith.constant 2 : index
    %c0_524 = arith.constant 0 : index
    %c0_525 = arith.constant 0 : index
    %714 = vector.load %arg6[%c2_523, %c0_524, %c0_525] : memref<4x32x32xbf16, #tpu.memory_space<vmem>>, vector<1x32x32xbf16>
    %715 = vector.shape_cast %714 : vector<1x32x32xbf16> to vector<32x32xbf16>
    %cst_526 = arith.constant dense<0.000000e+00> : vector<2x32xf32>
    %716 = tpu.matmul %699, %715, %cst_526 {dimension_numbers = #tpu.dot_dimension_numbers<[1], [0], [0], [1], [0, 0, 1, 1], [], []>} : vector<2x32xbf16>, vector<32x32xbf16>, vector<2x32xf32> -> vector<2x32xf32>
    %717 = arith.addf %713, %716 : vector<2x32xf32>
    %c3_527 = arith.constant 3 : index
    %c10_528 = arith.constant 10 : index
    %c0_529 = arith.constant 0 : index
    %718 = vector.load %arg16[%c3_527, %c10_528, %c0_529] : memref<4x16x32xf32, #tpu.memory_space<vmem>>, vector<1x2x32xf32>
    %719 = vector.shape_cast %718 : vector<1x2x32xf32> to vector<2x32xf32>
    %c3_530 = arith.constant 3 : index
    %c0_531 = arith.constant 0 : index
    %c0_532 = arith.constant 0 : index
    %720 = vector.load %arg6[%c3_530, %c0_531, %c0_532] : memref<4x32x32xbf16, #tpu.memory_space<vmem>>, vector<1x32x32xbf16>
    %721 = vector.shape_cast %720 : vector<1x32x32xbf16> to vector<32x32xbf16>
    %cst_533 = arith.constant dense<0.000000e+00> : vector<2x32xf32>
    %722 = tpu.matmul %699, %721, %cst_533 {dimension_numbers = #tpu.dot_dimension_numbers<[1], [0], [0], [1], [0, 0, 1, 1], [], []>} : vector<2x32xbf16>, vector<32x32xbf16>, vector<2x32xf32> -> vector<2x32xf32>
    %723 = arith.addf %719, %722 : vector<2x32xf32>
    %724 = arith.negf %705 : vector<2x32xf32>
    %725 = math.exp %724 : vector<2x32xf32>
    %cst_534 = arith.constant 1.000000e+00 : f32
    %726 = vector.broadcast %cst_534 : f32 to vector<2x32xf32>
    %727 = arith.addf %726, %725 : vector<2x32xf32>
    %728 = arith.divf %726, %727 : vector<2x32xf32>
    %729 = arith.negf %711 : vector<2x32xf32>
    %730 = math.exp %729 : vector<2x32xf32>
    %cst_535 = arith.constant 1.000000e+00 : f32
    %731 = vector.broadcast %cst_535 : f32 to vector<2x32xf32>
    %732 = arith.addf %731, %730 : vector<2x32xf32>
    %733 = arith.divf %731, %732 : vector<2x32xf32>
    %734 = math.tanh %717 : vector<2x32xf32>
    %735 = arith.negf %723 : vector<2x32xf32>
    %736 = math.exp %735 : vector<2x32xf32>
    %cst_536 = arith.constant 1.000000e+00 : f32
    %737 = vector.broadcast %cst_536 : f32 to vector<2x32xf32>
    %738 = arith.addf %737, %736 : vector<2x32xf32>
    %739 = arith.divf %737, %738 : vector<2x32xf32>
    %740 = arith.mulf %733, %695 : vector<2x32xf32>
    %741 = arith.mulf %728, %734 : vector<2x32xf32>
    %742 = arith.addf %740, %741 : vector<2x32xf32>
    %743 = math.tanh %742 : vector<2x32xf32>
    %744 = arith.mulf %739, %743 : vector<2x32xf32>
    %c10_537 = arith.constant 10 : index
    %c0_538 = arith.constant 0 : index
    %745 = vector.load %arg15[%c10_537, %c0_538] : memref<16x32xf32, #tpu.memory_space<vmem>>, vector<2x32xf32>
    tpu.vector_store %arg15[%c10_537, %c0_538], %744 {strides = array<i32>} : memref<16x32xf32, #tpu.memory_space<vmem>>, vector<2x32xf32>,
    %746 = arith.truncf %744 : vector<2x32xf32> to vector<2x32xbf16>
    %c0_539 = arith.constant 0 : index
    %c12_540 = arith.constant 12 : index
    %c0_541 = arith.constant 0 : index
    %747 = vector.load %arg16[%c0_539, %c12_540, %c0_541] : memref<4x16x32xf32, #tpu.memory_space<vmem>>, vector<1x2x32xf32>
    %748 = vector.shape_cast %747 : vector<1x2x32xf32> to vector<2x32xf32>
    %c0_542 = arith.constant 0 : index
    %c0_543 = arith.constant 0 : index
    %c0_544 = arith.constant 0 : index
    %749 = vector.load %arg6[%c0_542, %c0_543, %c0_544] : memref<4x32x32xbf16, #tpu.memory_space<vmem>>, vector<1x32x32xbf16>
    %750 = vector.shape_cast %749 : vector<1x32x32xbf16> to vector<32x32xbf16>
    %cst_545 = arith.constant dense<0.000000e+00> : vector<2x32xf32>
    %751 = tpu.matmul %746, %750, %cst_545 {dimension_numbers = #tpu.dot_dimension_numbers<[1], [0], [0], [1], [0, 0, 1, 1], [], []>} : vector<2x32xbf16>, vector<32x32xbf16>, vector<2x32xf32> -> vector<2x32xf32>
    %752 = arith.addf %748, %751 : vector<2x32xf32>
    %c1_546 = arith.constant 1 : index
    %c12_547 = arith.constant 12 : index
    %c0_548 = arith.constant 0 : index
    %753 = vector.load %arg16[%c1_546, %c12_547, %c0_548] : memref<4x16x32xf32, #tpu.memory_space<vmem>>, vector<1x2x32xf32>
    %754 = vector.shape_cast %753 : vector<1x2x32xf32> to vector<2x32xf32>
    %c1_549 = arith.constant 1 : index
    %c0_550 = arith.constant 0 : index
    %c0_551 = arith.constant 0 : index
    %755 = vector.load %arg6[%c1_549, %c0_550, %c0_551] : memref<4x32x32xbf16, #tpu.memory_space<vmem>>, vector<1x32x32xbf16>
    %756 = vector.shape_cast %755 : vector<1x32x32xbf16> to vector<32x32xbf16>
    %cst_552 = arith.constant dense<0.000000e+00> : vector<2x32xf32>
    %757 = tpu.matmul %746, %756, %cst_552 {dimension_numbers = #tpu.dot_dimension_numbers<[1], [0], [0], [1], [0, 0, 1, 1], [], []>} : vector<2x32xbf16>, vector<32x32xbf16>, vector<2x32xf32> -> vector<2x32xf32>
    %758 = arith.addf %754, %757 : vector<2x32xf32>
    %c2_553 = arith.constant 2 : index
    %c12_554 = arith.constant 12 : index
    %c0_555 = arith.constant 0 : index
    %759 = vector.load %arg16[%c2_553, %c12_554, %c0_555] : memref<4x16x32xf32, #tpu.memory_space<vmem>>, vector<1x2x32xf32>
    %760 = vector.shape_cast %759 : vector<1x2x32xf32> to vector<2x32xf32>
    %c2_556 = arith.constant 2 : index
    %c0_557 = arith.constant 0 : index
    %c0_558 = arith.constant 0 : index
    %761 = vector.load %arg6[%c2_556, %c0_557, %c0_558] : memref<4x32x32xbf16, #tpu.memory_space<vmem>>, vector<1x32x32xbf16>
    %762 = vector.shape_cast %761 : vector<1x32x32xbf16> to vector<32x32xbf16>
    %cst_559 = arith.constant dense<0.000000e+00> : vector<2x32xf32>
    %763 = tpu.matmul %746, %762, %cst_559 {dimension_numbers = #tpu.dot_dimension_numbers<[1], [0], [0], [1], [0, 0, 1, 1], [], []>} : vector<2x32xbf16>, vector<32x32xbf16>, vector<2x32xf32> -> vector<2x32xf32>
    %764 = arith.addf %760, %763 : vector<2x32xf32>
    %c3_560 = arith.constant 3 : index
    %c12_561 = arith.constant 12 : index
    %c0_562 = arith.constant 0 : index
    %765 = vector.load %arg16[%c3_560, %c12_561, %c0_562] : memref<4x16x32xf32, #tpu.memory_space<vmem>>, vector<1x2x32xf32>
    %766 = vector.shape_cast %765 : vector<1x2x32xf32> to vector<2x32xf32>
    %c3_563 = arith.constant 3 : index
    %c0_564 = arith.constant 0 : index
    %c0_565 = arith.constant 0 : index
    %767 = vector.load %arg6[%c3_563, %c0_564, %c0_565] : memref<4x32x32xbf16, #tpu.memory_space<vmem>>, vector<1x32x32xbf16>
    %768 = vector.shape_cast %767 : vector<1x32x32xbf16> to vector<32x32xbf16>
    %cst_566 = arith.constant dense<0.000000e+00> : vector<2x32xf32>
    %769 = tpu.matmul %746, %768, %cst_566 {dimension_numbers = #tpu.dot_dimension_numbers<[1], [0], [0], [1], [0, 0, 1, 1], [], []>} : vector<2x32xbf16>, vector<32x32xbf16>, vector<2x32xf32> -> vector<2x32xf32>
    %770 = arith.addf %766, %769 : vector<2x32xf32>
    %771 = arith.negf %752 : vector<2x32xf32>
    %772 = math.exp %771 : vector<2x32xf32>
    %cst_567 = arith.constant 1.000000e+00 : f32
    %773 = vector.broadcast %cst_567 : f32 to vector<2x32xf32>
    %774 = arith.addf %773, %772 : vector<2x32xf32>
    %775 = arith.divf %773, %774 : vector<2x32xf32>
    %776 = arith.negf %758 : vector<2x32xf32>
    %777 = math.exp %776 : vector<2x32xf32>
    %cst_568 = arith.constant 1.000000e+00 : f32
    %778 = vector.broadcast %cst_568 : f32 to vector<2x32xf32>
    %779 = arith.addf %778, %777 : vector<2x32xf32>
    %780 = arith.divf %778, %779 : vector<2x32xf32>
    %781 = math.tanh %764 : vector<2x32xf32>
    %782 = arith.negf %770 : vector<2x32xf32>
    %783 = math.exp %782 : vector<2x32xf32>
    %cst_569 = arith.constant 1.000000e+00 : f32
    %784 = vector.broadcast %cst_569 : f32 to vector<2x32xf32>
    %785 = arith.addf %784, %783 : vector<2x32xf32>
    %786 = arith.divf %784, %785 : vector<2x32xf32>
    %787 = arith.mulf %780, %742 : vector<2x32xf32>
    %788 = arith.mulf %775, %781 : vector<2x32xf32>
    %789 = arith.addf %787, %788 : vector<2x32xf32>
    %790 = math.tanh %789 : vector<2x32xf32>
    %791 = arith.mulf %786, %790 : vector<2x32xf32>
    %c12_570 = arith.constant 12 : index
    %c0_571 = arith.constant 0 : index
    %792 = vector.load %arg15[%c12_570, %c0_571] : memref<16x32xf32, #tpu.memory_space<vmem>>, vector<2x32xf32>
    tpu.vector_store %arg15[%c12_570, %c0_571], %791 {strides = array<i32>} : memref<16x32xf32, #tpu.memory_space<vmem>>, vector<2x32xf32>,
    %793 = arith.truncf %791 : vector<2x32xf32> to vector<2x32xbf16>
    %c0_572 = arith.constant 0 : index
    %c14_573 = arith.constant 14 : index
    %c0_574 = arith.constant 0 : index
    %794 = vector.load %arg16[%c0_572, %c14_573, %c0_574] : memref<4x16x32xf32, #tpu.memory_space<vmem>>, vector<1x2x32xf32>
    %795 = vector.shape_cast %794 : vector<1x2x32xf32> to vector<2x32xf32>
    %c0_575 = arith.constant 0 : index
    %c0_576 = arith.constant 0 : index
    %c0_577 = arith.constant 0 : index
    %796 = vector.load %arg6[%c0_575, %c0_576, %c0_577] : memref<4x32x32xbf16, #tpu.memory_space<vmem>>, vector<1x32x32xbf16>
    %797 = vector.shape_cast %796 : vector<1x32x32xbf16> to vector<32x32xbf16>
    %cst_578 = arith.constant dense<0.000000e+00> : vector<2x32xf32>
    %798 = tpu.matmul %793, %797, %cst_578 {dimension_numbers = #tpu.dot_dimension_numbers<[1], [0], [0], [1], [0, 0, 1, 1], [], []>} : vector<2x32xbf16>, vector<32x32xbf16>, vector<2x32xf32> -> vector<2x32xf32>
    %799 = arith.addf %795, %798 : vector<2x32xf32>
    %c1_579 = arith.constant 1 : index
    %c14_580 = arith.constant 14 : index
    %c0_581 = arith.constant 0 : index
    %800 = vector.load %arg16[%c1_579, %c14_580, %c0_581] : memref<4x16x32xf32, #tpu.memory_space<vmem>>, vector<1x2x32xf32>
    %801 = vector.shape_cast %800 : vector<1x2x32xf32> to vector<2x32xf32>
    %c1_582 = arith.constant 1 : index
    %c0_583 = arith.constant 0 : index
    %c0_584 = arith.constant 0 : index
    %802 = vector.load %arg6[%c1_582, %c0_583, %c0_584] : memref<4x32x32xbf16, #tpu.memory_space<vmem>>, vector<1x32x32xbf16>
    %803 = vector.shape_cast %802 : vector<1x32x32xbf16> to vector<32x32xbf16>
    %cst_585 = arith.constant dense<0.000000e+00> : vector<2x32xf32>
    %804 = tpu.matmul %793, %803, %cst_585 {dimension_numbers = #tpu.dot_dimension_numbers<[1], [0], [0], [1], [0, 0, 1, 1], [], []>} : vector<2x32xbf16>, vector<32x32xbf16>, vector<2x32xf32> -> vector<2x32xf32>
    %805 = arith.addf %801, %804 : vector<2x32xf32>
    %c2_586 = arith.constant 2 : index
    %c14_587 = arith.constant 14 : index
    %c0_588 = arith.constant 0 : index
    %806 = vector.load %arg16[%c2_586, %c14_587, %c0_588] : memref<4x16x32xf32, #tpu.memory_space<vmem>>, vector<1x2x32xf32>
    %807 = vector.shape_cast %806 : vector<1x2x32xf32> to vector<2x32xf32>
    %c2_589 = arith.constant 2 : index
    %c0_590 = arith.constant 0 : index
    %c0_591 = arith.constant 0 : index
    %808 = vector.load %arg6[%c2_589, %c0_590, %c0_591] : memref<4x32x32xbf16, #tpu.memory_space<vmem>>, vector<1x32x32xbf16>
    %809 = vector.shape_cast %808 : vector<1x32x32xbf16> to vector<32x32xbf16>
    %cst_592 = arith.constant dense<0.000000e+00> : vector<2x32xf32>
    %810 = tpu.matmul %793, %809, %cst_592 {dimension_numbers = #tpu.dot_dimension_numbers<[1], [0], [0], [1], [0, 0, 1, 1], [], []>} : vector<2x32xbf16>, vector<32x32xbf16>, vector<2x32xf32> -> vector<2x32xf32>
    %811 = arith.addf %807, %810 : vector<2x32xf32>
    %c3_593 = arith.constant 3 : index
    %c14_594 = arith.constant 14 : index
    %c0_595 = arith.constant 0 : index
    %812 = vector.load %arg16[%c3_593, %c14_594, %c0_595] : memref<4x16x32xf32, #tpu.memory_space<vmem>>, vector<1x2x32xf32>
    %813 = vector.shape_cast %812 : vector<1x2x32xf32> to vector<2x32xf32>
    %c3_596 = arith.constant 3 : index
    %c0_597 = arith.constant 0 : index
    %c0_598 = arith.constant 0 : index
    %814 = vector.load %arg6[%c3_596, %c0_597, %c0_598] : memref<4x32x32xbf16, #tpu.memory_space<vmem>>, vector<1x32x32xbf16>
    %815 = vector.shape_cast %814 : vector<1x32x32xbf16> to vector<32x32xbf16>
    %cst_599 = arith.constant dense<0.000000e+00> : vector<2x32xf32>
    %816 = tpu.matmul %793, %815, %cst_599 {dimension_numbers = #tpu.dot_dimension_numbers<[1], [0], [0], [1], [0, 0, 1, 1], [], []>} : vector<2x32xbf16>, vector<32x32xbf16>, vector<2x32xf32> -> vector<2x32xf32>
    %817 = arith.addf %813, %816 : vector<2x32xf32>
    %818 = arith.negf %799 : vector<2x32xf32>
    %819 = math.exp %818 : vector<2x32xf32>
    %cst_600 = arith.constant 1.000000e+00 : f32
    %820 = vector.broadcast %cst_600 : f32 to vector<2x32xf32>
    %821 = arith.addf %820, %819 : vector<2x32xf32>
    %822 = arith.divf %820, %821 : vector<2x32xf32>
    %823 = arith.negf %805 : vector<2x32xf32>
    %824 = math.exp %823 : vector<2x32xf32>
    %cst_601 = arith.constant 1.000000e+00 : f32
    %825 = vector.broadcast %cst_601 : f32 to vector<2x32xf32>
    %826 = arith.addf %825, %824 : vector<2x32xf32>
    %827 = arith.divf %825, %826 : vector<2x32xf32>
    %828 = math.tanh %811 : vector<2x32xf32>
    %829 = arith.negf %817 : vector<2x32xf32>
    %830 = math.exp %829 : vector<2x32xf32>
    %cst_602 = arith.constant 1.000000e+00 : f32
    %831 = vector.broadcast %cst_602 : f32 to vector<2x32xf32>
    %832 = arith.addf %831, %830 : vector<2x32xf32>
    %833 = arith.divf %831, %832 : vector<2x32xf32>
    %834 = arith.mulf %827, %789 : vector<2x32xf32>
    %835 = arith.mulf %822, %828 : vector<2x32xf32>
    %836 = arith.addf %834, %835 : vector<2x32xf32>
    %837 = math.tanh %836 : vector<2x32xf32>
    %838 = arith.mulf %833, %837 : vector<2x32xf32>
    %c14_603 = arith.constant 14 : index
    %c0_604 = arith.constant 0 : index
    %839 = vector.load %arg15[%c14_603, %c0_604] : memref<16x32xf32, #tpu.memory_space<vmem>>, vector<2x32xf32>
    tpu.vector_store %arg15[%c14_603, %c0_604], %838 {strides = array<i32>} : memref<16x32xf32, #tpu.memory_space<vmem>>, vector<2x32xf32>,
    %c0_605 = arith.constant 0 : index
    %c0_606 = arith.constant 0 : index
    %840 = vector.load %arg15[%c0_605, %c0_606] : memref<16x32xf32, #tpu.memory_space<vmem>>, vector<16x32xf32>
    %841 = arith.truncf %840 : vector<16x32xf32> to vector<16x32xbf16>
    %c0_607 = arith.constant 0 : index
    %c0_608 = arith.constant 0 : index
    %842 = vector.load %arg8[%c0_607, %c0_608] : memref<32x32xbf16, #tpu.memory_space<vmem>>, vector<32x32xbf16>
    %cst_609 = arith.constant dense<0.000000e+00> : vector<16x32xf32>
    %843 = tpu.matmul %841, %842, %cst_609 {dimension_numbers = #tpu.dot_dimension_numbers<[1], [0], [0], [1], [0, 0, 1, 1], [], []>} : vector<16x32xbf16>, vector<32x32xbf16>, vector<16x32xf32> -> vector<16x32xf32>
    %c0_610 = arith.constant 0 : index
    %c0_611 = arith.constant 0 : index
    %844 = vector.load %arg9[%c0_610, %c0_611] : memref<1x32xf32, #tpu.memory_space<vmem>>, vector<1x32xf32>
    %845 = vector.broadcast %844 : vector<1x32xf32> to vector<16x32xf32>
    %846 = arith.addf %843, %845 : vector<16x32xf32>
    %cst_612 = arith.constant 0.000000e+00 : f32
    %847 = vector.broadcast %cst_612 : f32 to vector<16x32xf32>
    %848 = arith.maximumf %846, %847 : vector<16x32xf32>
    %849 = arith.truncf %848 : vector<16x32xf32> to vector<16x32xbf16>
    %c0_613 = arith.constant 0 : index
    %c0_614 = arith.constant 0 : index
    %850 = vector.load %arg10[%c0_613, %c0_614] : memref<32x4xbf16, #tpu.memory_space<vmem>>, vector<32x4xbf16>
    %cst_615 = arith.constant dense<0.000000e+00> : vector<16x4xf32>
    %851 = tpu.matmul %849, %850, %cst_615 {dimension_numbers = #tpu.dot_dimension_numbers<[1], [0], [0], [1], [0, 0, 1, 1], [], []>} : vector<16x32xbf16>, vector<32x4xbf16>, vector<16x4xf32> -> vector<16x4xf32>
    %c0_616 = arith.constant 0 : index
    %c0_617 = arith.constant 0 : index
    %852 = vector.load %arg11[%c0_616, %c0_617] : memref<1x4xf32, #tpu.memory_space<vmem>>, vector<1x4xf32>
    %853 = vector.broadcast %852 : vector<1x4xf32> to vector<16x4xf32>
    %854 = arith.addf %851, %853 : vector<16x4xf32>
    %c0_618 = arith.constant 0 : index
    %c0_619 = arith.constant 0 : index
    %855 = vector.load %arg13[%c0_618, %c0_619] : memref<1x4xf32, #tpu.memory_space<vmem>>, vector<1x4xf32>
    %c0_620 = arith.constant 0 : index
    %c0_621 = arith.constant 0 : index
    %856 = vector.load %arg12[%c0_620, %c0_621] : memref<1x4xf32, #tpu.memory_space<vmem>>, vector<1x4xf32>
    %c0_622 = arith.constant 0 : index
    %c0_623 = arith.constant 0 : index
    %857 = vector.load %arg13[%c0_622, %c0_623] : memref<1x4xf32, #tpu.memory_space<vmem>>, vector<1x4xf32>
    %858 = arith.subf %856, %857 : vector<1x4xf32>
    %859 = arith.negf %854 : vector<16x4xf32>
    %860 = math.exp %859 : vector<16x4xf32>
    %cst_624 = arith.constant 1.000000e+00 : f32
    %861 = vector.broadcast %cst_624 : f32 to vector<16x4xf32>
    %862 = arith.addf %861, %860 : vector<16x4xf32>
    %863 = arith.divf %861, %862 : vector<16x4xf32>
    %864 = vector.broadcast %858 : vector<1x4xf32> to vector<16x4xf32>
    %865 = arith.mulf %864, %863 : vector<16x4xf32>
    %866 = vector.broadcast %855 : vector<1x4xf32> to vector<16x4xf32>
    %867 = arith.addf %866, %865 : vector<16x4xf32>
    %c0_625 = arith.constant 0 : index
    %c0_626 = arith.constant 0 : index
    %868 = vector.load %arg14[%c0_625, %c0_626] : memref<16x4xf32, #tpu.memory_space<vmem>>, vector<16x4xf32>
    tpu.vector_store %arg14[%c0_625, %c0_626], %867 {strides = array<i32>} : memref<16x4xf32, #tpu.memory_space<vmem>>, vector<16x4xf32>,
    return
  }
  func.func @transform_0(%arg0: i32) -> (i32, i32) {
    %c0_i32 = arith.constant 0 : i32
    %c0_i32_0 = arith.constant 0 : i32
    %c0_i32_1 = arith.constant 0 : i32
    return %c0_i32, %c0_i32_0 : i32, i32
  }
  func.func @transform_1(%arg0: i32) -> (i32, i32, i32) {
    %c0_i32 = arith.constant 0 : i32
    %c0_i32_0 = arith.constant 0 : i32
    %c0_i32_1 = arith.constant 0 : i32
    %c0_i32_2 = arith.constant 0 : i32
    return %c0_i32, %c0_i32_0, %c0_i32_1 : i32, i32, i32
  }
  func.func @transform_2(%arg0: i32) -> (i32, i32, i32) {
    %c0_i32 = arith.constant 0 : i32
    %c0_i32_0 = arith.constant 0 : i32
    %c0_i32_1 = arith.constant 0 : i32
    %c0_i32_2 = arith.constant 0 : i32
    return %c0_i32, %c0_i32_0, %c0_i32_1 : i32, i32, i32
  }
  func.func @transform_3(%arg0: i32) -> (i32, i32, i32) {
    %c0_i32 = arith.constant 0 : i32
    %c0_i32_0 = arith.constant 0 : i32
    %c0_i32_1 = arith.constant 0 : i32
    %c0_i32_2 = arith.constant 0 : i32
    return %c0_i32, %c0_i32_0, %c0_i32_1 : i32, i32, i32
  }
  func.func @transform_4(%arg0: i32) -> (i32, i32, i32) {
    %c0_i32 = arith.constant 0 : i32
    %c0_i32_0 = arith.constant 0 : i32
    %c0_i32_1 = arith.constant 0 : i32
    %c0_i32_2 = arith.constant 0 : i32
    return %c0_i32, %c0_i32_0, %c0_i32_1 : i32, i32, i32
  }
  func.func @transform_5(%arg0: i32) -> (i32, i32, i32) {
    %c0_i32 = arith.constant 0 : i32
    %c0_i32_0 = arith.constant 0 : i32
    %c0_i32_1 = arith.constant 0 : i32
    %c0_i32_2 = arith.constant 0 : i32
    return %c0_i32, %c0_i32_0, %c0_i32_1 : i32, i32, i32
  }
  func.func @transform_6(%arg0: i32) -> (i32, i32, i32) {
    %c0_i32 = arith.constant 0 : i32
    %c0_i32_0 = arith.constant 0 : i32
    %c0_i32_1 = arith.constant 0 : i32
    %c0_i32_2 = arith.constant 0 : i32
    return %c0_i32, %c0_i32_0, %c0_i32_1 : i32, i32, i32
  }
  func.func @transform_7(%arg0: i32) -> (i32, i32) {
    %c0_i32 = arith.constant 0 : i32
    %c0_i32_0 = arith.constant 0 : i32
    %c0_i32_1 = arith.constant 0 : i32
    return %c0_i32, %c0_i32_0 : i32, i32
  }
  func.func @transform_8(%arg0: i32) -> (i32, i32) {
    %c0_i32 = arith.constant 0 : i32
    %c0_i32_0 = arith.constant 0 : i32
    %c0_i32_1 = arith.constant 0 : i32
    return %c0_i32, %c0_i32_0 : i32, i32
  }
  func.func @transform_9(%arg0: i32) -> (i32, i32) {
    %c0_i32 = arith.constant 0 : i32
    %c0_i32_0 = arith.constant 0 : i32
    %c0_i32_1 = arith.constant 0 : i32
    return %c0_i32, %c0_i32_0 : i32, i32
  }
  func.func @transform_10(%arg0: i32) -> (i32, i32) {
    %c0_i32 = arith.constant 0 : i32
    %c0_i32_0 = arith.constant 0 : i32
    %c0_i32_1 = arith.constant 0 : i32
    return %c0_i32, %c0_i32_0 : i32, i32
  }
  func.func @transform_11(%arg0: i32) -> (i32, i32) {
    %c0_i32 = arith.constant 0 : i32
    %c0_i32_0 = arith.constant 0 : i32
    %c0_i32_1 = arith.constant 0 : i32
    return %c0_i32, %c0_i32_0 : i32, i32
  }
  func.func @transform_12(%arg0: i32) -> (i32, i32) {
    %c0_i32 = arith.constant 0 : i32
    %c0_i32_0 = arith.constant 0 : i32
    %c0_i32_1 = arith.constant 0 : i32
    return %c0_i32, %c0_i32_0 : i32, i32
  }
  func.func @transform_13(%arg0: i32) -> (i32, i32) {
    %c0_i32 = arith.constant 0 : i32
    %c0_i32_0 = arith.constant 0 : i32
    %c0_i32_1 = arith.constant 0 : i32
    return %c0_i32, %c0_i32_0 : i32, i32
  }
}

</mosaic_0001>

<llo_original>
// kernel: tpu_custom_call.1
$region0: #{tpu_custom_call.1}
  #allocation0 [shape = 'u32[]', space=smem, size = 0x4, offset = 0x4, fixed_abs, tag = 'smem constant byte address 0x4 - core index']
  #allocation1 [shape = 'u32[144,128]{1,0:T(1,128)}', space=vmem, size = 0x12000, scoped, tag = 'internal scratch']
  #allocation2 [shape = 'f32[16,32]{1,0:T(8,128)}', space=vmem, size = 0x2000, scoped, tag = 'scratch operand']
  #allocation3 [shape = 'f32[4,16,32]{2,1,0:T(8,128)}', space=vmem, size = 0x8000, scoped, tag = 'scratch operand']
  %s0 = inlined_call_operand.vmem [shape: f32[16,8], index: 0, kind: input, shape index: {}]
  %s1 = inlined_call_operand.vmem [shape: bf16[4,8,32], index: 1, kind: input, shape index: {}]
  %s2 = inlined_call_operand.hbm [shape: bf16[4,32,32], index: 2, kind: input, shape index: {}]
  %s3 = inlined_call_operand.vmem [shape: f32[4,1,32], index: 3, kind: input, shape index: {}]
  %s4 = inlined_call_operand.hbm [shape: bf16[4,32,32], index: 4, kind: input, shape index: {}]
  %s5 = inlined_call_operand.hbm [shape: bf16[4,32,32], index: 5, kind: input, shape index: {}]
  %s6 = inlined_call_operand.vmem [shape: f32[4,1,32], index: 6, kind: input, shape index: {}]
  %s7 = inlined_call_operand.vmem [shape: bf16[32,32], index: 7, kind: input, shape index: {}]
  %s8 = inlined_call_operand.vmem [shape: f32[1,32], index: 8, kind: input, shape index: {}]
  %s9 = inlined_call_operand.vmem [shape: bf16[32,4], index: 9, kind: input, shape index: {}]
  %s10 = inlined_call_operand.vmem [shape: f32[1,4], index: 10, kind: input, shape index: {}]
  %s11 = inlined_call_operand.vmem [shape: f32[1,4], index: 11, kind: input, shape index: {}]
  %s12 = inlined_call_operand.vmem [shape: f32[1,4], index: 12, kind: input, shape index: {}]
  %s13 = inlined_call_operand.vmem [shape: f32[16,4], index: 13, kind: output, shape index: {}]
  %s14 = sld [smem:[#allocation0]]
  $region74: #{tpu_custom_call.1} parent=0
    _
  %s16 = ssub.s32 1, %s14
  %s17 = scalar_select 0, %s16, %s14
  $region1: #{tpu_custom_call.1} parent=0
    #allocation4 [shape = 'u8[32768]{0}', space=vmem, size = 0x8000, scoped, tag = 'input window, operand 2, single buffered']
    #allocation5 [shape = 's32[1]{0}', space=sflag, size = 0x4, scoped, tag = 'scoped memory for tpu_custom_call.1']
    #allocation6 [shape = 'u8[32768]{0}', space=vmem, size = 0x8000, scoped, tag = 'input window, operand 4, single buffered']
    #allocation7 [shape = 's32[1]{0}', space=sflag, size = 0x4, scoped, tag = 'scoped memory for tpu_custom_call.1']
    #allocation8 [shape = 'u8[32768]{0}', space=vmem, size = 0x8000, scoped, tag = 'input window, operand 5, single buffered']
    %18 = vsyncpa [#allocation5], 0
    %19 = vsyncpa [#allocation7], 0
    // Predicated region
    $region2: #{tpu_custom_call.1} parent=1 // pred_check
      _
    $region3: #{tpu_custom_call.1} parent=1 // pred_check_branch
      %21 = sbr.rel (0) target = $region5
    $region4: #{tpu_custom_call.1} parent=1 // pred_region
      _
    $region5: #{tpu_custom_call.1} parent=1 // pred_fallthru
      _
    // Predicated region
    $region6: #{tpu_custom_call.1} parent=1 // pred_check
      _
    $region7: #{tpu_custom_call.1} parent=1 // pred_check_branch
      %23 = sbr.rel (0) target = $region9
    $region8: #{tpu_custom_call.1} parent=1 // pred_region
      _
    $region9: #{tpu_custom_call.1} parent=1 // pred_fallthru
      _
    // Predicated region
    $region10: #{tpu_custom_call.1} parent=1 // pred_check
      _
    $region11: #{tpu_custom_call.1} parent=1 // pred_check_branch
      %25 = sbr.rel (0) target = $region13
    $region12: #{tpu_custom_call.1} parent=1 // pred_region
      %s27 = ssub.s32 1024, 1024
      %28 = vsyncadd [#allocation5], %s27
      %s29 = sshll.u32 [#allocation4], 4
      %s30 = int_to_ptr.vmem [resolvable:$true] %s29
      %35 = dma.hbm_to_vmem [thread:$0]  %s2, 1024, %s30, [#allocation5], 64, 64, 4
    $region13: #{tpu_custom_call.1} parent=1 // pred_fallthru
      _
    // Predicated region
    $region14: #{tpu_custom_call.1} parent=1 // pred_check
      _
    $region15: #{tpu_custom_call.1} parent=1 // pred_check_branch
      %37 = sbr.rel (0) target = $region17
    $region16: #{tpu_custom_call.1} parent=1 // pred_region
      _
    $region17: #{tpu_custom_call.1} parent=1 // pred_fallthru
      _
    // Predicated region
    $region18: #{tpu_custom_call.1} parent=1 // pred_check
      _
    $region19: #{tpu_custom_call.1} parent=1 // pred_check_branch
      %39 = sbr.rel (0) target = $region21
    $region20: #{tpu_custom_call.1} parent=1 // pred_region
      %s41 = ssub.s32 1024, 1024
      %42 = vsyncadd [#allocation7], %s41
      %s43 = sshll.u32 [#allocation6], 4
      %s44 = int_to_ptr.vmem [resolvable:$true] %s43
      %49 = dma.hbm_to_vmem [thread:$0]  %s4, 1024, %s44, [#allocation7], 64, 64, 4
    $region21: #{tpu_custom_call.1} parent=1 // pred_fallthru
      _
    // Predicated region
    $region22: #{tpu_custom_call.1} parent=1 // pred_check
      _
    $region23: #{tpu_custom_call.1} parent=1 // pred_check_branch
      %51 = sbr.rel (0) target = $region25
    $region24: #{tpu_custom_call.1} parent=1 // pred_region
      %s53 = ssub.s32 1024, 1024
      %54 = vsyncadd [#allocation7], %s53
      %s55 = sshll.u32 [#allocation8], 4
      %s56 = int_to_ptr.vmem [resolvable:$true] %s55
      %61 = dma.hbm_to_vmem [thread:$0]  %s5, 1024, %s56, [#allocation7], 64, 64, 4
    $region25: #{tpu_custom_call.1} parent=1 // pred_fallthru
      _
    // Predicated region
    $region26: #{tpu_custom_call.1} parent=1 // pred_check
      _
    $region27: #{tpu_custom_call.1} parent=1 // pred_check_branch
      %63 = sbr.rel (0) target = $region29
    $region28: #{tpu_custom_call.1} parent=1 // pred_region
      _
    $region29: #{tpu_custom_call.1} parent=1 // pred_fallthru
      _
    // Predicated region
    $region30: #{tpu_custom_call.1} parent=1 // pred_check
      _
    $region31: #{tpu_custom_call.1} parent=1 // pred_check_branch
      %65 = sbr.rel (0) target = $region33
    $region32: #{tpu_custom_call.1} parent=1 // pred_region
      _
    $region33: #{tpu_custom_call.1} parent=1 // pred_fallthru
      _
    // Predicated region
    $region34: #{tpu_custom_call.1} parent=1 // pred_check
      _
    $region35: #{tpu_custom_call.1} parent=1 // pred_check_branch
      %67 = sbr.rel (0) target = $region37
    $region36: #{tpu_custom_call.1} parent=1 // pred_region
      _
    $region37: #{tpu_custom_call.1} parent=1 // pred_fallthru
      _
    // Predicated region
    $region38: #{tpu_custom_call.1} parent=1 // pred_check
      _
    $region39: #{tpu_custom_call.1} parent=1 // pred_check_branch
      %69 = sbr.rel (0) target = $region41
    $region40: #{tpu_custom_call.1} parent=1 // pred_region
      _
    $region41: #{tpu_custom_call.1} parent=1 // pred_fallthru
      _
    // Predicated region
    $region42: #{tpu_custom_call.1} parent=1 // pred_check
      _
    $region43: #{tpu_custom_call.1} parent=1 // pred_check_branch
      %71 = sbr.rel (0) target = $region45
    $region44: #{tpu_custom_call.1} parent=1 // pred_region
      _
    $region45: #{tpu_custom_call.1} parent=1 // pred_fallthru
      _
    // Predicated region
    $region46: #{tpu_custom_call.1} parent=1 // pred_check
      _
    $region47: #{tpu_custom_call.1} parent=1 // pred_check_branch
      %73 = sbr.rel (0) target = $region49
    $region48: #{tpu_custom_call.1} parent=1 // pred_region
      _
    $region49: #{tpu_custom_call.1} parent=1 // pred_fallthru
      _
    // Predicated region
    $region50: #{tpu_custom_call.1} parent=1 // pred_check
      _
    $region51: #{tpu_custom_call.1} parent=1 // pred_check_branch
      %75 = sbr.rel (0) target = $region53
    $region52: #{tpu_custom_call.1} parent=1 // pred_region
      _
    $region53: #{tpu_custom_call.1} parent=1 // pred_fallthru
      _
    // Predicated region
    $region54: #{tpu_custom_call.1} parent=1 // pred_check
      _
    $region55: #{tpu_custom_call.1} parent=1 // pred_check_branch
      %77 = sbr.rel (0) target = $region57
    $region56: #{tpu_custom_call.1} parent=1 // pred_region
      %78 = dma.done [#allocation5], 1024
    $region57: #{tpu_custom_call.1} parent=1 // pred_fallthru
      _
    // Predicated region
    $region58: #{tpu_custom_call.1} parent=1 // pred_check
      _
    $region59: #{tpu_custom_call.1} parent=1 // pred_check_branch
      %80 = sbr.rel (0) target = $region61
    $region60: #{tpu_custom_call.1} parent=1 // pred_region
      %81 = dma.done [#allocation7], 1024
    $region61: #{tpu_custom_call.1} parent=1 // pred_fallthru
      _
    // Predicated region
    $region62: #{tpu_custom_call.1} parent=1 // pred_check
      _
    $region63: #{tpu_custom_call.1} parent=1 // pred_check_branch
      %83 = sbr.rel (0) target = $region65
    $region64: #{tpu_custom_call.1} parent=1 // pred_region
      %84 = dma.done [#allocation7], 1024
    $region65: #{tpu_custom_call.1} parent=1 // pred_fallthru
      _
    %v86 = vld [vmem:[%s0] sm:$0xff]
    %v87 = vld [vmem:[%s0 + $0x8] sm:$0xff]
    %v88 = vpack.c.bf16 %v87, %v86
    %v89 = vld [vmem:[%s1] sm:$0xf]
    %v90 = vld [vmem:[%s3] sm:$0x1]
    %v92 = vlaneseq
    %v93 = vshrl.u32 %v92, 7
    %v94 = vsub.s32 0, %v93
    %v95 = vrot.slane %v90, %v94
    %vm97 = vcmask 64512
    %v99 = vsel %vm97, %v88, 0
    %vm101 = vcmask 1043456
    %v103 = vsel %vm101, %v89, 0
    %105 = vmatprep.subr.bf16.mxu0 0
    %106 = vmatpush1.bf16.msra.mxu0 0
    %107 = vmatprep.subr.bf16.mxu0 0
    %108 = vmatpush1.bf16.msra.mxu0 0
    %109 = vmatprep.subr.bf16.mxu0 0
    %110 = vmatpush1.bf16.msra.mxu0 0
    %111 = vmatprep.subr.bf16.mxu0 0
    %112 = vmatpush1.bf16.msra.mxu0 0
    %113 = vmatprep.subr.bf16.mxu0 0
    %114 = vmatpush1.bf16.msra.mxu0 0
    %115 = vmatprep.subr.bf16.mxu0 0
    %116 = vmatpush1.bf16.msra.mxu0 0
    %117 = vmatprep.subr.bf16.mxu0 0
    %118 = vmatpush1.bf16.msra.mxu0 0
    %119 = vmatprep.subr.bf16.mxu0 0
    %120 = vmatpush1.bf16.msra.mxu0 %v103
    %121 = vmatprep.subr.bf16.mxu0 0
    %122 = vmatpush2.bf16.msra.mxu0 0
    %123 = vmatprep.subr.bf16.mxu0 0
    %124 = vmatpush2.bf16.msra.mxu0 0
    %125 = vmatprep.subr.bf16.mxu0 0
    %126 = vmatpush2.bf16.msra.mxu0 0
    %127 = vmatprep.subr.bf16.mxu0 0
    %128 = vmatpush2.bf16.msra.mxu0 0
    %129 = vmatprep.subr.bf16.mxu0 0
    %130 = vmatpush2.bf16.msra.mxu0 0
    %131 = vmatprep.subr.bf16.mxu0 0
    %132 = vmatpush2.bf16.msra.mxu0 0
    %133 = vmatprep.subr.bf16.mxu0 0
    %134 = vmatpush2.bf16.msra.mxu0 0
    %135 = vmatprep.subr.bf16.mxu0 0
    %136 = vmatpush2.bf16.msra.mxu0 0
    %137 = vmatprep.mubr.bf16.mxu0 0
    %138 = vmatmul.mubr.bf16.gmra.mxu0 %v99
    %v139 = vpop.f32.mrf.mxu0
    %v140 = vadd.f32 %v95, %v139
    %v141 = vpop.f32.mrf.mxu0
    %v142 = vpop.f32.mrf.mxu0
    %v143 = vadd.f32 %v95, %v142
    %v144 = vpop.f32.mrf.mxu0
    %145 = vdwg.mxu0
    %vm146 = vcmask 261120
    %147 = vst.msk [vmem:[#allocation3] sm:$0xff] %vm146, %v140
    %148 = vst.msk [vmem:[#allocation3 + $0x8] sm:$0xff] %vm146, %v143
    %s149 = scalar_lea.vmem %s1, 4
    %v150 = vld [vmem:[%s149] sm:$0xf]
    %s151 = scalar_lea.vmem %s3, 1
    %v152 = vld [vmem:[%s151] sm:$0x1]
    %v154 = vlaneseq
    %v155 = vshrl.u32 %v154, 7
    %v156 = vsub.s32 0, %v155
    %v157 = vrot.slane %v152, %v156
    %v160 = vsel %vm101, %v150, 0
    %162 = vmatprep.subr.bf16.mxu0 0
    %163 = vmatpush1.bf16.msra.mxu0 0
    %164 = vmatprep.subr.bf16.mxu0 0
    %165 = vmatpush1.bf16.msra.mxu0 0
    %166 = vmatprep.subr.bf16.mxu0 0
    %167 = vmatpush1.bf16.msra.mxu0 0
    %168 = vmatprep.subr.bf16.mxu0 0
    %169 = vmatpush1.bf16.msra.mxu0 0
    %170 = vmatprep.subr.bf16.mxu0 0
    %171 = vmatpush1.bf16.msra.mxu0 0
    %172 = vmatprep.subr.bf16.mxu0 0
    %173 = vmatpush1.bf16.msra.mxu0 0
    %174 = vmatprep.subr.bf16.mxu0 0
    %175 = vmatpush1.bf16.msra.mxu0 0
    %176 = vmatprep.subr.bf16.mxu0 0
    %177 = vmatpush1.bf16.msra.mxu0 %v160
    %178 = vmatprep.subr.bf16.mxu0 0
    %179 = vmatpush2.bf16.msra.mxu0 0
    %180 = vmatprep.subr.bf16.mxu0 0
    %181 = vmatpush2.bf16.msra.mxu0 0
    %182 = vmatprep.subr.bf16.mxu0 0
    %183 = vmatpush2.bf16.msra.mxu0 0
    %184 = vmatprep.subr.bf16.mxu0 0
    %185 = vmatpush2.bf16.msra.mxu0 0
    %186 = vmatprep.subr.bf16.mxu0 0
    %187 = vmatpush2.bf16.msra.mxu0 0
    %188 = vmatprep.subr.bf16.mxu0 0
    %189 = vmatpush2.bf16.msra.mxu0 0
    %190 = vmatprep.subr.bf16.mxu0 0
    %191 = vmatpush2.bf16.msra.mxu0 0
    %192 = vmatprep.subr.bf16.mxu0 0
    %193 = vmatpush2.bf16.msra.mxu0 0
    %194 = vmatprep.mubr.bf16.mxu0 0
    %195 = vmatmul.mubr.bf16.gmra.mxu0 %v99
    %v196 = vpop.f32.mrf.mxu0
    %v197 = vadd.f32 %v157, %v196
    %v198 = vpop.f32.mrf.mxu0
    %v199 = vpop.f32.mrf.mxu0
    %v200 = vadd.f32 %v157, %v199
    %v201 = vpop.f32.mrf.mxu0
    %202 = vdwg.mxu0
    %s203 = scalar_lea.vmem [#allocation3], 16
    %204 = vst.msk [vmem:[%s203] sm:$0xff] %vm146, %v197
    %205 = vst.msk [vmem:[%s203 + $0x8] sm:$0xff] %vm146, %v200
    %s206 = scalar_lea.vmem %s1, 8
    %v207 = vld [vmem:[%s206] sm:$0xf]
    %s208 = scalar_lea.vmem %s3, 2
    %v209 = vld [vmem:[%s208] sm:$0x1]
    %v211 = vlaneseq
    %v212 = vshrl.u32 %v211, 7
    %v213 = vsub.s32 0, %v212
    %v214 = vrot.slane %v209, %v213
    %v217 = vsel %vm101, %v207, 0
    %219 = vmatprep.subr.bf16.mxu0 0
    %220 = vmatpush1.bf16.msra.mxu0 0
    %221 = vmatprep.subr.bf16.mxu0 0
    %222 = vmatpush1.bf16.msra.mxu0 0
    %223 = vmatprep.subr.bf16.mxu0 0
    %224 = vmatpush1.bf16.msra.mxu0 0
    %225 = vmatprep.subr.bf16.mxu0 0
    %226 = vmatpush1.bf16.msra.mxu0 0
    %227 = vmatprep.subr.bf16.mxu0 0
    %228 = vmatpush1.bf16.msra.mxu0 0
    %229 = vmatprep.subr.bf16.mxu0 0
    %230 = vmatpush1.bf16.msra.mxu0 0
    %231 = vmatprep.subr.bf16.mxu0 0
    %232 = vmatpush1.bf16.msra.mxu0 0
    %233 = vmatprep.subr.bf16.mxu0 0
    %234 = vmatpush1.bf16.msra.mxu0 %v217
    %235 = vmatprep.subr.bf16.mxu0 0
    %236 = vmatpush2.bf16.msra.mxu0 0
    %237 = vmatprep.subr.bf16.mxu0 0
    %238 = vmatpush2.bf16.msra.mxu0 0
    %239 = vmatprep.subr.bf16.mxu0 0
    %240 = vmatpush2.bf16.msra.mxu0 0
    %241 = vmatprep.subr.bf16.mxu0 0
    %242 = vmatpush2.bf16.msra.mxu0 0
    %243 = vmatprep.subr.bf16.mxu0 0
    %244 = vmatpush2.bf16.msra.mxu0 0
    %245 = vmatprep.subr.bf16.mxu0 0
    %246 = vmatpush2.bf16.msra.mxu0 0
    %247 = vmatprep.subr.bf16.mxu0 0
    %248 = vmatpush2.bf16.msra.mxu0 0
    %249 = vmatprep.subr.bf16.mxu0 0
    %250 = vmatpush2.bf16.msra.mxu0 0
    %251 = vmatprep.mubr.bf16.mxu0 0
    %252 = vmatmul.mubr.bf16.gmra.mxu0 %v99
    %v253 = vpop.f32.mrf.mxu0
    %v254 = vadd.f32 %v214, %v253
    %v255 = vpop.f32.mrf.mxu0
    %v256 = vpop.f32.mrf.mxu0
    %v257 = vadd.f32 %v214, %v256
    %v258 = vpop.f32.mrf.mxu0
    %259 = vdwg.mxu0
    %s260 = scalar_lea.vmem [#allocation3], 32
    %261 = vst.msk [vmem:[%s260] sm:$0xff] %vm146, %v254
    %262 = vst.msk [vmem:[%s260 + $0x8] sm:$0xff] %vm146, %v257
    %s263 = scalar_lea.vmem %s1, 12
    %v264 = vld [vmem:[%s263] sm:$0xf]
    %s265 = scalar_lea.vmem %s3, 3
    %v266 = vld [vmem:[%s265] sm:$0x1]
    %v268 = vlaneseq
    %v269 = vshrl.u32 %v268, 7
    %v270 = vsub.s32 0, %v269
    %v271 = vrot.slane %v266, %v270
    %v274 = vsel %vm101, %v264, 0
    %276 = vmatprep.subr.bf16.mxu0 0
    %277 = vmatpush1.bf16.msra.mxu0 0
    %278 = vmatprep.subr.bf16.mxu0 0
    %279 = vmatpush1.bf16.msra.mxu0 0
    %280 = vmatprep.subr.bf16.mxu0 0
    %281 = vmatpush1.bf16.msra.mxu0 0
    %282 = vmatprep.subr.bf16.mxu0 0
    %283 = vmatpush1.bf16.msra.mxu0 0
    %284 = vmatprep.subr.bf16.mxu0 0
    %285 = vmatpush1.bf16.msra.mxu0 0
    %286 = vmatprep.subr.bf16.mxu0 0
    %287 = vmatpush1.bf16.msra.mxu0 0
    %288 = vmatprep.subr.bf16.mxu0 0
    %289 = vmatpush1.bf16.msra.mxu0 0
    %290 = vmatprep.subr.bf16.mxu0 0
    %291 = vmatpush1.bf16.msra.mxu0 %v274
    %292 = vmatprep.subr.bf16.mxu0 0
    %293 = vmatpush2.bf16.msra.mxu0 0
    %294 = vmatprep.subr.bf16.mxu0 0
    %295 = vmatpush2.bf16.msra.mxu0 0
    %296 = vmatprep.subr.bf16.mxu0 0
    %297 = vmatpush2.bf16.msra.mxu0 0
    %298 = vmatprep.subr.bf16.mxu0 0
    %299 = vmatpush2.bf16.msra.mxu0 0
    %300 = vmatprep.subr.bf16.mxu0 0
    %301 = vmatpush2.bf16.msra.mxu0 0
    %302 = vmatprep.subr.bf16.mxu0 0
    %303 = vmatpush2.bf16.msra.mxu0 0
    %304 = vmatprep.subr.bf16.mxu0 0
    %305 = vmatpush2.bf16.msra.mxu0 0
    %306 = vmatprep.subr.bf16.mxu0 0
    %307 = vmatpush2.bf16.msra.mxu0 0
    %308 = vmatprep.mubr.bf16.mxu0 0
    %309 = vmatmul.mubr.bf16.gmra.mxu0 %v99
    %v310 = vpop.f32.mrf.mxu0
    %v311 = vadd.f32 %v271, %v310
    %v312 = vpop.f32.mrf.mxu0
    %v313 = vpop.f32.mrf.mxu0
    %v314 = vadd.f32 %v271, %v313
    %v315 = vpop.f32.mrf.mxu0
    %316 = vdwg.mxu0
    %s317 = scalar_lea.vmem [#allocation3], 48
    %318 = vst.msk [vmem:[%s317] sm:$0xff] %vm146, %v311
    %319 = vst.msk [vmem:[%s317 + $0x8] sm:$0xff] %vm146, %v314
    %v320 = vld [vmem:[#allocation3] sm:$0x3]
    %v321 = vld [vmem:[#allocation4] sm:$0xf]
    %v322 = vld [vmem:[#allocation4 + $0x4] sm:$0xf]
    %v323 = vld [vmem:[#allocation4 + $0x8] sm:$0xf]
    %v324 = vld [vmem:[#allocation4 + $0xc] sm:$0xf]
    %v329 = vunpack.c.l.b16 %v321
    %v330 = vunpack.c.l.b16 %v322
    %v331 = vunpack.c.l.b16 %v323
    %v332 = vunpack.c.l.b16 %v324
    %v333 = vpack.c.b16 %v330, %v329
    %v334 = vpack.c.b16 %v332, %v331
    %v338 = vsel %vm146, 0, 0
    %340 = vmatprep.subr.bf16.mxu0 0
    %341 = vmatpush1.bf16.msra.mxu0 0
    %342 = vmatprep.subr.bf16.mxu0 0
    %343 = vmatpush1.bf16.msra.mxu0 0
    %344 = vmatprep.subr.bf16.mxu0 0
    %345 = vmatpush1.bf16.msra.mxu0 0
    %346 = vmatprep.subr.bf16.mxu0 0
    %347 = vmatpush1.bf16.msra.mxu0 0
    %348 = vmatprep.subr.bf16.mxu0 0
    %349 = vmatpush1.bf16.msra.mxu0 0
    %350 = vmatprep.subr.bf16.mxu0 0
    %351 = vmatpush1.bf16.msra.mxu0 0
    %352 = vmatprep.subr.bf16.mxu0 0
    %353 = vmatpush1.bf16.msra.mxu0 %v334
    %354 = vmatprep.subr.bf16.mxu0 0
    %355 = vmatpush1.bf16.msra.mxu0 %v333
    %356 = vmatprep.subr.bf16.mxu0 0
    %357 = vmatpush2.bf16.msra.mxu0 0
    %358 = vmatprep.subr.bf16.mxu0 0
    %359 = vmatpush2.bf16.msra.mxu0 0
    %360 = vmatprep.subr.bf16.mxu0 0
    %361 = vmatpush2.bf16.msra.mxu0 0
    %362 = vmatprep.subr.bf16.mxu0 0
    %363 = vmatpush2.bf16.msra.mxu0 0
    %364 = vmatprep.subr.bf16.mxu0 0
    %365 = vmatpush2.bf16.msra.mxu0 0
    %366 = vmatprep.subr.bf16.mxu0 0
    %367 = vmatpush2.bf16.msra.mxu0 0
    %368 = vmatprep.subr.bf16.mxu0 0
    %369 = vmatpush2.bf16.msra.mxu0 0
    %370 = vmatprep.subr.bf16.mxu0 0
    %371 = vmatpush2.bf16.msra.mxu0 0
    %372 = vmatprep.mubr.bf16.mxu0 0
    %373 = vmatmul.mubr.bf16.gmra.mxu0 %v338
    %v374 = vpop.f32.mrf.mxu0
    %v375 = vadd.f32 0.0, %v374
    %v376 = vpop.f32.mrf.mxu0
    %v377 = vpop.f32.mrf.mxu0
    %v378 = vpop.f32.mrf.mxu0
    %379 = vdwg.mxu0
    %v380 = vadd.f32 %v320, %v375
    %v381 = vld [vmem:[%s203] sm:$0x3]
    %s382 = scalar_lea.vmem [#allocation4], 16
    %v383 = vld [vmem:[%s382] sm:$0xf]
    %v384 = vld [vmem:[%s382 + $0x4] sm:$0xf]
    %v385 = vld [vmem:[%s382 + $0x8] sm:$0xf]
    %v386 = vld [vmem:[%s382 + $0xc] sm:$0xf]
    %v391 = vunpack.c.l.b16 %v383
    %v392 = vunpack.c.l.b16 %v384
    %v393 = vunpack.c.l.b16 %v385
    %v394 = vunpack.c.l.b16 %v386
    %v395 = vpack.c.b16 %v392, %v391
    %v396 = vpack.c.b16 %v394, %v393
    %399 = vmatprep.subr.bf16.mxu0 0
    %400 = vmatpush1.bf16.msra.mxu0 0
    %401 = vmatprep.subr.bf16.mxu0 0
    %402 = vmatpush1.bf16.msra.mxu0 0
    %403 = vmatprep.subr.bf16.mxu0 0
    %404 = vmatpush1.bf16.msra.mxu0 0
    %405 = vmatprep.subr.bf16.mxu0 0
    %406 = vmatpush1.bf16.msra.mxu0 0
    %407 = vmatprep.subr.bf16.mxu0 0
    %408 = vmatpush1.bf16.msra.mxu0 0
    %409 = vmatprep.subr.bf16.mxu0 0
    %410 = vmatpush1.bf16.msra.mxu0 0
    %411 = vmatprep.subr.bf16.mxu0 0
    %412 = vmatpush1.bf16.msra.mxu0 %v396
    %413 = vmatprep.subr.bf16.mxu0 0
    %414 = vmatpush1.bf16.msra.mxu0 %v395
    %415 = vmatprep.subr.bf16.mxu0 0
    %416 = vmatpush2.bf16.msra.mxu0 0
    %417 = vmatprep.subr.bf16.mxu0 0
    %418 = vmatpush2.bf16.msra.mxu0 0
    %419 = vmatprep.subr.bf16.mxu0 0
    %420 = vmatpush2.bf16.msra.mxu0 0
    %421 = vmatprep.subr.bf16.mxu0 0
    %422 = vmatpush2.bf16.msra.mxu0 0
    %423 = vmatprep.subr.bf16.mxu0 0
    %424 = vmatpush2.bf16.msra.mxu0 0
    %425 = vmatprep.subr.bf16.mxu0 0
    %426 = vmatpush2.bf16.msra.mxu0 0
    %427 = vmatprep.subr.bf16.mxu0 0
    %428 = vmatpush2.bf16.msra.mxu0 0
    %429 = vmatprep.subr.bf16.mxu0 0
    %430 = vmatpush2.bf16.msra.mxu0 0
    %431 = vmatprep.mubr.bf16.mxu0 0
    %432 = vmatmul.mubr.bf16.gmra.mxu0 %v338
    %v433 = vpop.f32.mrf.mxu0
    %v434 = vadd.f32 0.0, %v433
    %v435 = vpop.f32.mrf.mxu0
    %v436 = vpop.f32.mrf.mxu0
    %v437 = vpop.f32.mrf.mxu0
    %438 = vdwg.mxu0
    %v439 = vadd.f32 %v381, %v434
    %v440 = vld [vmem:[%s260] sm:$0x3]
    %s441 = scalar_lea.vmem [#allocation4], 32
    %v442 = vld [vmem:[%s441] sm:$0xf]
    %v443 = vld [vmem:[%s441 + $0x4] sm:$0xf]
    %v444 = vld [vmem:[%s441 + $0x8] sm:$0xf]
    %v445 = vld [vmem:[%s441 + $0xc] sm:$0xf]
    %v450 = vunpack.c.l.b16 %v442
    %v451 = vunpack.c.l.b16 %v443
    %v452 = vunpack.c.l.b16 %v444
    %v453 = vunpack.c.l.b16 %v445
    %v454 = vpack.c.b16 %v451, %v450
    %v455 = vpack.c.b16 %v453, %v452
    %458 = vmatprep.subr.bf16.mxu0 0
    %459 = vmatpush1.bf16.msra.mxu0 0
    %460 = vmatprep.subr.bf16.mxu0 0
    %461 = vmatpush1.bf16.msra.mxu0 0
    %462 = vmatprep.subr.bf16.mxu0 0
    %463 = vmatpush1.bf16.msra.mxu0 0
    %464 = vmatprep.subr.bf16.mxu0 0
    %465 = vmatpush1.bf16.msra.mxu0 0
    %466 = vmatprep.subr.bf16.mxu0 0
    %467 = vmatpush1.bf16.msra.mxu0 0
    %468 = vmatprep.subr.bf16.mxu0 0
    %469 = vmatpush1.bf16.msra.mxu0 0
    %470 = vmatprep.subr.bf16.mxu0 0
    %471 = vmatpush1.bf16.msra.mxu0 %v455
    %472 = vmatprep.subr.bf16.mxu0 0
    %473 = vmatpush1.bf16.msra.mxu0 %v454
    %474 = vmatprep.subr.bf16.mxu0 0
    %475 = vmatpush2.bf16.msra.mxu0 0
    %476 = vmatprep.subr.bf16.mxu0 0
    %477 = vmatpush2.bf16.msra.mxu0 0
    %478 = vmatprep.subr.bf16.mxu0 0
    %479 = vmatpush2.bf16.msra.mxu0 0
    %480 = vmatprep.subr.bf16.mxu0 0
    %481 = vmatpush2.bf16.msra.mxu0 0
    %482 = vmatprep.subr.bf16.mxu0 0
    %483 = vmatpush2.bf16.msra.mxu0 0
    %484 = vmatprep.subr.bf16.mxu0 0
    %485 = vmatpush2.bf16.msra.mxu0 0
    %486 = vmatprep.subr.bf16.mxu0 0
    %487 = vmatpush2.bf16.msra.mxu0 0
    %488 = vmatprep.subr.bf16.mxu0 0
    %489 = vmatpush2.bf16.msra.mxu0 0
    %490 = vmatprep.mubr.bf16.mxu0 0
    %491 = vmatmul.mubr.bf16.gmra.mxu0 %v338
    %v492 = vpop.f32.mrf.mxu0
    %v493 = vadd.f32 0.0, %v492
    %v494 = vpop.f32.mrf.mxu0
    %v495 = vpop.f32.mrf.mxu0
    %v496 = vpop.f32.mrf.mxu0
    %497 = vdwg.mxu0
    %v498 = vadd.f32 %v440, %v493
    %v499 = vld [vmem:[%s317] sm:$0x3]
    %s500 = scalar_lea.vmem [#allocation4], 48
    %v501 = vld [vmem:[%s500] sm:$0xf]
    %v502 = vld [vmem:[%s500 + $0x4] sm:$0xf]
    %v503 = vld [vmem:[%s500 + $0x8] sm:$0xf]
    %v504 = vld [vmem:[%s500 + $0xc] sm:$0xf]
    %v509 = vunpack.c.l.b16 %v501
    %v510 = vunpack.c.l.b16 %v502
    %v511 = vunpack.c.l.b16 %v503
    %v512 = vunpack.c.l.b16 %v504
    %v513 = vpack.c.b16 %v510, %v509
    %v514 = vpack.c.b16 %v512, %v511
    %517 = vmatprep.subr.bf16.mxu0 0
    %518 = vmatpush1.bf16.msra.mxu0 0
    %519 = vmatprep.subr.bf16.mxu0 0
    %520 = vmatpush1.bf16.msra.mxu0 0
    %521 = vmatprep.subr.bf16.mxu0 0
    %522 = vmatpush1.bf16.msra.mxu0 0
    %523 = vmatprep.subr.bf16.mxu0 0
    %524 = vmatpush1.bf16.msra.mxu0 0
    %525 = vmatprep.subr.bf16.mxu0 0
    %526 = vmatpush1.bf16.msra.mxu0 0
    %527 = vmatprep.subr.bf16.mxu0 0
    %528 = vmatpush1.bf16.msra.mxu0 0
    %529 = vmatprep.subr.bf16.mxu0 0
    %530 = vmatpush1.bf16.msra.mxu0 %v514
    %531 = vmatprep.subr.bf16.mxu0 0
    %532 = vmatpush1.bf16.msra.mxu0 %v513
    %533 = vmatprep.subr.bf16.mxu0 0
    %534 = vmatpush2.bf16.msra.mxu0 0
    %535 = vmatprep.subr.bf16.mxu0 0
    %536 = vmatpush2.bf16.msra.mxu0 0
    %537 = vmatprep.subr.bf16.mxu0 0
    %538 = vmatpush2.bf16.msra.mxu0 0
    %539 = vmatprep.subr.bf16.mxu0 0
    %540 = vmatpush2.bf16.msra.mxu0 0
    %541 = vmatprep.subr.bf16.mxu0 0
    %542 = vmatpush2.bf16.msra.mxu0 0
    %543 = vmatprep.subr.bf16.mxu0 0
    %544 = vmatpush2.bf16.msra.mxu0 0
    %545 = vmatprep.subr.bf16.mxu0 0
    %546 = vmatpush2.bf16.msra.mxu0 0
    %547 = vmatprep.subr.bf16.mxu0 0
    %548 = vmatpush2.bf16.msra.mxu0 0
    %549 = vmatprep.mubr.bf16.mxu0 0
    %550 = vmatmul.mubr.bf16.gmra.mxu0 %v338
    %v551 = vpop.f32.mrf.mxu0
    %v552 = vadd.f32 0.0, %v551
    %v553 = vpop.f32.mrf.mxu0
    %v554 = vpop.f32.mrf.mxu0
    %v555 = vpop.f32.mrf.mxu0
    %556 = vdwg.mxu0
    %v557 = vadd.f32 %v499, %v552
    %v558 = vxor.u32 %v380, 2147483648
    %v559 = vmul.f32 %v558, 1.442695
    %v560 = vpow.pop %v559
    %v561 = vadd.f32 %v560, 1.0
    %v562 = vrcp.pop %v561
    %v563 = vmul.f32 1.0, %v562
    %v564 = vxor.u32 %v439, 2147483648
    %v565 = vmul.f32 %v564, 1.442695
    %v566 = vpow.pop %v565
    %v567 = vadd.f32 %v566, 1.0
    %v568 = vrcp.pop %v567
    %v569 = vmul.f32 1.0, %v568
    %v570 = vtanh.pop %v498
    %v571 = vxor.u32 %v557, 2147483648
    %v572 = vmul.f32 %v571, 1.442695
    %v573 = vpow.pop %v572
    %v574 = vadd.f32 %v573, 1.0
    %v575 = vrcp.pop %v574
    %v576 = vmul.f32 1.0, %v575
    %v577 = vmul.f32 %v569, 0.0
    %v578 = vmul.f32 %v563, %v570
    %v579 = vadd.f32 %v577, %v578
    %v580 = vtanh.pop %v579
    %v581 = vmul.f32 %v576, %v580
    %vm582 = vcmask 254976
    %583 = vst.msk [vmem:[#allocation2] sm:$0x3] %vm582, %v581
    %v584 = vpack.c.bf16 %v581, %v581
    %v585 = vld [vmem:[#allocation3 + $0x2] sm:$0x3]
    %v586 = vld [vmem:[#allocation4] sm:$0xf]
    %v587 = vld [vmem:[#allocation4 + $0x4] sm:$0xf]
    %v588 = vld [vmem:[#allocation4 + $0x8] sm:$0xf]
    %v589 = vld [vmem:[#allocation4 + $0xc] sm:$0xf]
    %v594 = vunpack.c.l.b16 %v586
    %v595 = vunpack.c.l.b16 %v587
    %v596 = vunpack.c.l.b16 %v588
    %v597 = vunpack.c.l.b16 %v589
    %v598 = vpack.c.b16 %v595, %v594
    %v599 = vpack.c.b16 %v597, %v596
    %v603 = vsel %vm146, %v584, 0
    %605 = vmatprep.subr.bf16.mxu0 0
    %606 = vmatpush1.bf16.msra.mxu0 0
    %607 = vmatprep.subr.bf16.mxu0 0
    %608 = vmatpush1.bf16.msra.mxu0 0
    %609 = vmatprep.subr.bf16.mxu0 0
    %610 = vmatpush1.bf16.msra.mxu0 0
    %611 = vmatprep.subr.bf16.mxu0 0
    %612 = vmatpush1.bf16.msra.mxu0 0
    %613 = vmatprep.subr.bf16.mxu0 0
    %614 = vmatpush1.bf16.msra.mxu0 0
    %615 = vmatprep.subr.bf16.mxu0 0
    %616 = vmatpush1.bf16.msra.mxu0 0
    %617 = vmatprep.subr.bf16.mxu0 0
    %618 = vmatpush1.bf16.msra.mxu0 %v599
    %619 = vmatprep.subr.bf16.mxu0 0
    %620 = vmatpush1.bf16.msra.mxu0 %v598
    %621 = vmatprep.subr.bf16.mxu0 0
    %622 = vmatpush2.bf16.msra.mxu0 0
    %623 = vmatprep.subr.bf16.mxu0 0
    %624 = vmatpush2.bf16.msra.mxu0 0
    %625 = vmatprep.subr.bf16.mxu0 0
    %626 = vmatpush2.bf16.msra.mxu0 0
    %627 = vmatprep.subr.bf16.mxu0 0
    %628 = vmatpush2.bf16.msra.mxu0 0
    %629 = vmatprep.subr.bf16.mxu0 0
    %630 = vmatpush2.bf16.msra.mxu0 0
    %631 = vmatprep.subr.bf16.mxu0 0
    %632 = vmatpush2.bf16.msra.mxu0 0
    %633 = vmatprep.subr.bf16.mxu0 0
    %634 = vmatpush2.bf16.msra.mxu0 0
    %635 = vmatprep.subr.bf16.mxu0 0
    %636 = vmatpush2.bf16.msra.mxu0 0
    %637 = vmatprep.mubr.bf16.mxu0 0
    %638 = vmatmul.mubr.bf16.gmra.mxu0 %v603
    %v639 = vpop.f32.mrf.mxu0
    %v640 = vadd.f32 0.0, %v639
    %v641 = vpop.f32.mrf.mxu0
    %v642 = vpop.f32.mrf.mxu0
    %v643 = vpop.f32.mrf.mxu0
    %644 = vdwg.mxu0
    %v645 = vadd.f32 %v585, %v640
    %v646 = vld [vmem:[%s203 + $0x2] sm:$0x3]
    %v647 = vld [vmem:[%s382] sm:$0xf]
    %v648 = vld [vmem:[%s382 + $0x4] sm:$0xf]
    %v649 = vld [vmem:[%s382 + $0x8] sm:$0xf]
    %v650 = vld [vmem:[%s382 + $0xc] sm:$0xf]
    %v655 = vunpack.c.l.b16 %v647
    %v656 = vunpack.c.l.b16 %v648
    %v657 = vunpack.c.l.b16 %v649
    %v658 = vunpack.c.l.b16 %v650
    %v659 = vpack.c.b16 %v656, %v655
    %v660 = vpack.c.b16 %v658, %v657
    %663 = vmatprep.subr.bf16.mxu0 0
    %664 = vmatpush1.bf16.msra.mxu0 0
    %665 = vmatprep.subr.bf16.mxu0 0
    %666 = vmatpush1.bf16.msra.mxu0 0
    %667 = vmatprep.subr.bf16.mxu0 0
    %668 = vmatpush1.bf16.msra.mxu0 0
    %669 = vmatprep.subr.bf16.mxu0 0
    %670 = vmatpush1.bf16.msra.mxu0 0
    %671 = vmatprep.subr.bf16.mxu0 0
    %672 = vmatpush1.bf16.msra.mxu0 0
    %673 = vmatprep.subr.bf16.mxu0 0
    %674 = vmatpush1.bf16.msra.mxu0 0
    %675 = vmatprep.subr.bf16.mxu0 0
    %676 = vmatpush1.bf16.msra.mxu0 %v660
    %677 = vmatprep.subr.bf16.mxu0 0
    %678 = vmatpush1.bf16.msra.mxu0 %v659
    %679 = vmatprep.subr.bf16.mxu0 0
    %680 = vmatpush2.bf16.msra.mxu0 0
    %681 = vmatprep.subr.bf16.mxu0 0
    %682 = vmatpush2.bf16.msra.mxu0 0
    %683 = vmatprep.subr.bf16.mxu0 0
    %684 = vmatpush2.bf16.msra.mxu0 0
    %685 = vmatprep.subr.bf16.mxu0 0
    %686 = vmatpush2.bf16.msra.mxu0 0
    %687 = vmatprep.subr.bf16.mxu0 0
    %688 = vmatpush2.bf16.msra.mxu0 0
    %689 = vmatprep.subr.bf16.mxu0 0
    %690 = vmatpush2.bf16.msra.mxu0 0
    %691 = vmatprep.subr.bf16.mxu0 0
    %692 = vmatpush2.bf16.msra.mxu0 0
    %693 = vmatprep.subr.bf16.mxu0 0
    %694 = vmatpush2.bf16.msra.mxu0 0
    %695 = vmatprep.mubr.bf16.mxu0 0
    %696 = vmatmul.mubr.bf16.gmra.mxu0 %v603
    %v697 = vpop.f32.mrf.mxu0
    %v698 = vadd.f32 0.0, %v697
    %v699 = vpop.f32.mrf.mxu0
    %v700 = vpop.f32.mrf.mxu0
    %v701 = vpop.f32.mrf.mxu0
    %702 = vdwg.mxu0
    %v703 = vadd.f32 %v646, %v698
    %v704 = vld [vmem:[%s260 + $0x2] sm:$0x3]
    %v705 = vld [vmem:[%s441] sm:$0xf]
    %v706 = vld [vmem:[%s441 + $0x4] sm:$0xf]
    %v707 = vld [vmem:[%s441 + $0x8] sm:$0xf]
    %v708 = vld [vmem:[%s441 + $0xc] sm:$0xf]
    %v713 = vunpack.c.l.b16 %v705
    %v714 = vunpack.c.l.b16 %v706
    %v715 = vunpack.c.l.b16 %v707
    %v716 = vunpack.c.l.b16 %v708
    %v717 = vpack.c.b16 %v714, %v713
    %v718 = vpack.c.b16 %v716, %v715
    %721 = vmatprep.subr.bf16.mxu0 0
    %722 = vmatpush1.bf16.msra.mxu0 0
    %723 = vmatprep.subr.bf16.mxu0 0
    %724 = vmatpush1.bf16.msra.mxu0 0
    %725 = vmatprep.subr.bf16.mxu0 0
    %726 = vmatpush1.bf16.msra.mxu0 0
    %727 = vmatprep.subr.bf16.mxu0 0
    %728 = vmatpush1.bf16.msra.mxu0 0
    %729 = vmatprep.subr.bf16.mxu0 0
    %730 = vmatpush1.bf16.msra.mxu0 0
    %731 = vmatprep.subr.bf16.mxu0 0
    %732 = vmatpush1.bf16.msra.mxu0 0
    %733 = vmatprep.subr.bf16.mxu0 0
    %734 = vmatpush1.bf16.msra.mxu0 %v718
    %735 = vmatprep.subr.bf16.mxu0 0
    %736 = vmatpush1.bf16.msra.mxu0 %v717
    %737 = vmatprep.subr.bf16.mxu0 0
    %738 = vmatpush2.bf16.msra.mxu0 0
    %739 = vmatprep.subr.bf16.mxu0 0
    %740 = vmatpush2.bf16.msra.mxu0 0
    %741 = vmatprep.subr.bf16.mxu0 0
    %742 = vmatpush2.bf16.msra.mxu0 0
    %743 = vmatprep.subr.bf16.mxu0 0
    %744 = vmatpush2.bf16.msra.mxu0 0
    %745 = vmatprep.subr.bf16.mxu0 0
    %746 = vmatpush2.bf16.msra.mxu0 0
    %747 = vmatprep.subr.bf16.mxu0 0
    %748 = vmatpush2.bf16.msra.mxu0 0
    %749 = vmatprep.subr.bf16.mxu0 0
    %750 = vmatpush2.bf16.msra.mxu0 0
    %751 = vmatprep.subr.bf16.mxu0 0
    %752 = vmatpush2.bf16.msra.mxu0 0
    %753 = vmatprep.mubr.bf16.mxu0 0
    %754 = vmatmul.mubr.bf16.gmra.mxu0 %v603
    %v755 = vpop.f32.mrf.mxu0
    %v756 = vadd.f32 0.0, %v755
    %v757 = vpop.f32.mrf.mxu0
    %v758 = vpop.f32.mrf.mxu0
    %v759 = vpop.f32.mrf.mxu0
    %760 = vdwg.mxu0
    %v761 = vadd.f32 %v704, %v756
    %v762 = vld [vmem:[%s317 + $0x2] sm:$0x3]
    %v763 = vld [vmem:[%s500] sm:$0xf]
    %v764 = vld [vmem:[%s500 + $0x4] sm:$0xf]
    %v765 = vld [vmem:[%s500 + $0x8] sm:$0xf]
    %v766 = vld [vmem:[%s500 + $0xc] sm:$0xf]
    %v771 = vunpack.c.l.b16 %v763
    %v772 = vunpack.c.l.b16 %v764
    %v773 = vunpack.c.l.b16 %v765
    %v774 = vunpack.c.l.b16 %v766
    %v775 = vpack.c.b16 %v772, %v771
    %v776 = vpack.c.b16 %v774, %v773
    %779 = vmatprep.subr.bf16.mxu0 0
    %780 = vmatpush1.bf16.msra.mxu0 0
    %781 = vmatprep.subr.bf16.mxu0 0
    %782 = vmatpush1.bf16.msra.mxu0 0
    %783 = vmatprep.subr.bf16.mxu0 0
    %784 = vmatpush1.bf16.msra.mxu0 0
    %785 = vmatprep.subr.bf16.mxu0 0
    %786 = vmatpush1.bf16.msra.mxu0 0
    %787 = vmatprep.subr.bf16.mxu0 0
    %788 = vmatpush1.bf16.msra.mxu0 0
    %789 = vmatprep.subr.bf16.mxu0 0
    %790 = vmatpush1.bf16.msra.mxu0 0
    %791 = vmatprep.subr.bf16.mxu0 0
    %792 = vmatpush1.bf16.msra.mxu0 %v776
    %793 = vmatprep.subr.bf16.mxu0 0
    %794 = vmatpush1.bf16.msra.mxu0 %v775
    %795 = vmatprep.subr.bf16.mxu0 0
    %796 = vmatpush2.bf16.msra.mxu0 0
    %797 = vmatprep.subr.bf16.mxu0 0
    %798 = vmatpush2.bf16.msra.mxu0 0
    %799 = vmatprep.subr.bf16.mxu0 0
    %800 = vmatpush2.bf16.msra.mxu0 0
    %801 = vmatprep.subr.bf16.mxu0 0
    %802 = vmatpush2.bf16.msra.mxu0 0
    %803 = vmatprep.subr.bf16.mxu0 0
    %804 = vmatpush2.bf16.msra.mxu0 0
    %805 = vmatprep.subr.bf16.mxu0 0
    %806 = vmatpush2.bf16.msra.mxu0 0
    %807 = vmatprep.subr.bf16.mxu0 0
    %808 = vmatpush2.bf16.msra.mxu0 0
    %809 = vmatprep.subr.bf16.mxu0 0
    %810 = vmatpush2.bf16.msra.mxu0 0
    %811 = vmatprep.mubr.bf16.mxu0 0
    %812 = vmatmul.mubr.bf16.gmra.mxu0 %v603
    %v813 = vpop.f32.mrf.mxu0
    %v814 = vadd.f32 0.0, %v813
    %v815 = vpop.f32.mrf.mxu0
    %v816 = vpop.f32.mrf.mxu0
    %v817 = vpop.f32.mrf.mxu0
    %818 = vdwg.mxu0
    %v819 = vadd.f32 %v762, %v814
    %v820 = vxor.u32 %v645, 2147483648
    %v821 = vmul.f32 %v820, 1.442695
    %v822 = vpow.pop %v821
    %v823 = vadd.f32 %v822, 1.0
    %v824 = vrcp.pop %v823
    %v825 = vmul.f32 1.0, %v824
    %v826 = vxor.u32 %v703, 2147483648
    %v827 = vmul.f32 %v826, 1.442695
    %v828 = vpow.pop %v827
    %v829 = vadd.f32 %v828, 1.0
    %v830 = vrcp.pop %v829
    %v831 = vmul.f32 1.0, %v830
    %v832 = vtanh.pop %v761
    %v833 = vxor.u32 %v819, 2147483648
    %v834 = vmul.f32 %v833, 1.442695
    %v835 = vpow.pop %v834
    %v836 = vadd.f32 %v835, 1.0
    %v837 = vrcp.pop %v836
    %v838 = vmul.f32 1.0, %v837
    %v839 = vmul.f32 %v831, %v579
    %v840 = vmul.f32 %v825, %v832
    %v841 = vadd.f32 %v839, %v840
    %v842 = vtanh.pop %v841
    %v843 = vmul.f32 %v838, %v842
    %844 = vst.msk [vmem:[#allocation2 + $0x2] sm:$0x3] %vm582, %v843
    %v845 = vpack.c.bf16 %v843, %v843
    %v846 = vld [vmem:[#allocation3 + $0x4] sm:$0x3]
    %v847 = vld [vmem:[#allocation4] sm:$0xf]
    %v848 = vld [vmem:[#allocation4 + $0x4] sm:$0xf]
    %v849 = vld [vmem:[#allocation4 + $0x8] sm:$0xf]
    %v850 = vld [vmem:[#allocation4 + $0xc] sm:$0xf]
    %v855 = vunpack.c.l.b16 %v847
    %v856 = vunpack.c.l.b16 %v848
    %v857 = vunpack.c.l.b16 %v849
    %v858 = vunpack.c.l.b16 %v850
    %v859 = vpack.c.b16 %v856, %v855
    %v860 = vpack.c.b16 %v858, %v857
    %v864 = vsel %vm146, %v845, 0
    %866 = vmatprep.subr.bf16.mxu0 0
    %867 = vmatpush1.bf16.msra.mxu0 0
    %868 = vmatprep.subr.bf16.mxu0 0
    %869 = vmatpush1.bf16.msra.mxu0 0
    %870 = vmatprep.subr.bf16.mxu0 0
    %871 = vmatpush1.bf16.msra.mxu0 0
    %872 = vmatprep.subr.bf16.mxu0 0
    %873 = vmatpush1.bf16.msra.mxu0 0
    %874 = vmatprep.subr.bf16.mxu0 0
    %875 = vmatpush1.bf16.msra.mxu0 0
    %876 = vmatprep.subr.bf16.mxu0 0
    %877 = vmatpush1.bf16.msra.mxu0 0
    %878 = vmatprep.subr.bf16.mxu0 0
    %879 = vmatpush1.bf16.msra.mxu0 %v860
    %880 = vmatprep.subr.bf16.mxu0 0
    %881 = vmatpush1.bf16.msra.mxu0 %v859
    %882 = vmatprep.subr.bf16.mxu0 0
    %883 = vmatpush2.bf16.msra.mxu0 0
    %884 = vmatprep.subr.bf16.mxu0 0
    %885 = vmatpush2.bf16.msra.mxu0 0
    %886 = vmatprep.subr.bf16.mxu0 0
    %887 = vmatpush2.bf16.msra.mxu0 0
    %888 = vmatprep.subr.bf16.mxu0 0
    %889 = vmatpush2.bf16.msra.mxu0 0
    %890 = vmatprep.subr.bf16.mxu0 0
    %891 = vmatpush2.bf16.msra.mxu0 0
    %892 = vmatprep.subr.bf16.mxu0 0
    %893 = vmatpush2.bf16.msra.mxu0 0
    %894 = vmatprep.subr.bf16.mxu0 0
    %895 = vmatpush2.bf16.msra.mxu0 0
    %896 = vmatprep.subr.bf16.mxu0 0
    %897 = vmatpush2.bf16.msra.mxu0 0
    %898 = vmatprep.mubr.bf16.mxu0 0
    %899 = vmatmul.mubr.bf16.gmra.mxu0 %v864
    %v900 = vpop.f32.mrf.mxu0
    %v901 = vadd.f32 0.0, %v900
    %v902 = vpop.f32.mrf.mxu0
    %v903 = vpop.f32.mrf.mxu0
    %v904 = vpop.f32.mrf.mxu0
    %905 = vdwg.mxu0
    %v906 = vadd.f32 %v846, %v901
    %v907 = vld [vmem:[%s203 + $0x4] sm:$0x3]
    %v908 = vld [vmem:[%s382] sm:$0xf]
    %v909 = vld [vmem:[%s382 + $0x4] sm:$0xf]
    %v910 = vld [vmem:[%s382 + $0x8] sm:$0xf]
    %v911 = vld [vmem:[%s382 + $0xc] sm:$0xf]
    %v916 = vunpack.c.l.b16 %v908
    %v917 = vunpack.c.l.b16 %v909
    %v918 = vunpack.c.l.b16 %v910
    %v919 = vunpack.c.l.b16 %v911
    %v920 = vpack.c.b16 %v917, %v916
    %v921 = vpack.c.b16 %v919, %v918
    %924 = vmatprep.subr.bf16.mxu0 0
    %925 = vmatpush1.bf16.msra.mxu0 0
    %926 = vmatprep.subr.bf16.mxu0 0
    %927 = vmatpush1.bf16.msra.mxu0 0
    %928 = vmatprep.subr.bf16.mxu0 0
    %929 = vmatpush1.bf16.msra.mxu0 0
    %930 = vmatprep.subr.bf16.mxu0 0
    %931 = vmatpush1.bf16.msra.mxu0 0
    %932 = vmatprep.subr.bf16.mxu0 0
    %933 = vmatpush1.bf16.msra.mxu0 0
    %934 = vmatprep.subr.bf16.mxu0 0
    %935 = vmatpush1.bf16.msra.mxu0 0
    %936 = vmatprep.subr.bf16.mxu0 0
    %937 = vmatpush1.bf16.msra.mxu0 %v921
    %938 = vmatprep.subr.bf16.mxu0 0
    %939 = vmatpush1.bf16.msra.mxu0 %v920
    %940 = vmatprep.subr.bf16.mxu0 0
    %941 = vmatpush2.bf16.msra.mxu0 0
    %942 = vmatprep.subr.bf16.mxu0 0
    %943 = vmatpush2.bf16.msra.mxu0 0
    %944 = vmatprep.subr.bf16.mxu0 0
    %945 = vmatpush2.bf16.msra.mxu0 0
    %946 = vmatprep.subr.bf16.mxu0 0
    %947 = vmatpush2.bf16.msra.mxu0 0
    %948 = vmatprep.subr.bf16.mxu0 0
    %949 = vmatpush2.bf16.msra.mxu0 0
    %950 = vmatprep.subr.bf16.mxu0 0
    %951 = vmatpush2.bf16.msra.mxu0 0
    %952 = vmatprep.subr.bf16.mxu0 0
    %953 = vmatpush2.bf16.msra.mxu0 0
    %954 = vmatprep.subr.bf16.mxu0 0
    %955 = vmatpush2.bf16.msra.mxu0 0
    %956 = vmatprep.mubr.bf16.mxu0 0
    %957 = vmatmul.mubr.bf16.gmra.mxu0 %v864
    %v958 = vpop.f32.mrf.mxu0
    %v959 = vadd.f32 0.0, %v958
    %v960 = vpop.f32.mrf.mxu0
    %v961 = vpop.f32.mrf.mxu0
    %v962 = vpop.f32.mrf.mxu0
    %963 = vdwg.mxu0
    %v964 = vadd.f32 %v907, %v959
    %v965 = vld [vmem:[%s260 + $0x4] sm:$0x3]
    %v966 = vld [vmem:[%s441] sm:$0xf]
    %v967 = vld [vmem:[%s441 + $0x4] sm:$0xf]
    %v968 = vld [vmem:[%s441 + $0x8] sm:$0xf]
    %v969 = vld [vmem:[%s441 + $0xc] sm:$0xf]
    %v974 = vunpack.c.l.b16 %v966
    %v975 = vunpack.c.l.b16 %v967
    %v976 = vunpack.c.l.b16 %v968
    %v977 = vunpack.c.l.b16 %v969
    %v978 = vpack.c.b16 %v975, %v974
    %v979 = vpack.c.b16 %v977, %v976
    %982 = vmatprep.subr.bf16.mxu0 0
    %983 = vmatpush1.bf16.msra.mxu0 0
    %984 = vmatprep.subr.bf16.mxu0 0
    %985 = vmatpush1.bf16.msra.mxu0 0
    %986 = vmatprep.subr.bf16.mxu0 0
    %987 = vmatpush1.bf16.msra.mxu0 0
    %988 = vmatprep.subr.bf16.mxu0 0
    %989 = vmatpush1.bf16.msra.mxu0 0
    %990 = vmatprep.subr.bf16.mxu0 0
    %991 = vmatpush1.bf16.msra.mxu0 0
    %992 = vmatprep.subr.bf16.mxu0 0
    %993 = vmatpush1.bf16.msra.mxu0 0
    %994 = vmatprep.subr.bf16.mxu0 0
    %995 = vmatpush1.bf16.msra.mxu0 %v979
    %996 = vmatprep.subr.bf16.mxu0 0
    %997 = vmatpush1.bf16.msra.mxu0 %v978
    %998 = vmatprep.subr.bf16.mxu0 0
    %999 = vmatpush2.bf16.msra.mxu0 0
    %1000 = vmatprep.subr.bf16.mxu0 0
    %1001 = vmatpush2.bf16.msra.mxu0 0
    %1002 = vmatprep.subr.bf16.mxu0 0
    %1003 = vmatpush2.bf16.msra.mxu0 0
    %1004 = vmatprep.subr.bf16.mxu0 0
    %1005 = vmatpush2.bf16.msra.mxu0 0
    %1006 = vmatprep.subr.bf16.mxu0 0
    %1007 = vmatpush2.bf16.msra.mxu0 0
    %1008 = vmatprep.subr.bf16.mxu0 0
    %1009 = vmatpush2.bf16.msra.mxu0 0
    %1010 = vmatprep.subr.bf16.mxu0 0
    %1011 = vmatpush2.bf16.msra.mxu0 0
    %1012 = vmatprep.subr.bf16.mxu0 0
    %1013 = vmatpush2.bf16.msra.mxu0 0
    %1014 = vmatprep.mubr.bf16.mxu0 0
    %1015 = vmatmul.mubr.bf16.gmra.mxu0 %v864
    %v1016 = vpop.f32.mrf.mxu0
    %v1017 = vadd.f32 0.0, %v1016
    %v1018 = vpop.f32.mrf.mxu0
    %v1019 = vpop.f32.mrf.mxu0
    %v1020 = vpop.f32.mrf.mxu0
    %1021 = vdwg.mxu0
    %v1022 = vadd.f32 %v965, %v1017
    %v1023 = vld [vmem:[%s317 + $0x4] sm:$0x3]
    %v1024 = vld [vmem:[%s500] sm:$0xf]
    %v1025 = vld [vmem:[%s500 + $0x4] sm:$0xf]
    %v1026 = vld [vmem:[%s500 + $0x8] sm:$0xf]
    %v1027 = vld [vmem:[%s500 + $0xc] sm:$0xf]
    %v1032 = vunpack.c.l.b16 %v1024
    %v1033 = vunpack.c.l.b16 %v1025
    %v1034 = vunpack.c.l.b16 %v1026
    %v1035 = vunpack.c.l.b16 %v1027
    %v1036 = vpack.c.b16 %v1033, %v1032
    %v1037 = vpack.c.b16 %v1035, %v1034
    %1040 = vmatprep.subr.bf16.mxu0 0
    %1041 = vmatpush1.bf16.msra.mxu0 0
    %1042 = vmatprep.subr.bf16.mxu0 0
    %1043 = vmatpush1.bf16.msra.mxu0 0
    %1044 = vmatprep.subr.bf16.mxu0 0
    %1045 = vmatpush1.bf16.msra.mxu0 0
    %1046 = vmatprep.subr.bf16.mxu0 0
    %1047 = vmatpush1.bf16.msra.mxu0 0
    %1048 = vmatprep.subr.bf16.mxu0 0
    %1049 = vmatpush1.bf16.msra.mxu0 0
    %1050 = vmatprep.subr.bf16.mxu0 0
    %1051 = vmatpush1.bf16.msra.mxu0 0
    %1052 = vmatprep.subr.bf16.mxu0 0
    %1053 = vmatpush1.bf16.msra.mxu0 %v1037
    %1054 = vmatprep.subr.bf16.mxu0 0
    %1055 = vmatpush1.bf16.msra.mxu0 %v1036
    %1056 = vmatprep.subr.bf16.mxu0 0
    %1057 = vmatpush2.bf16.msra.mxu0 0
    %1058 = vmatprep.subr.bf16.mxu0 0
    %1059 = vmatpush2.bf16.msra.mxu0 0
    %1060 = vmatprep.subr.bf16.mxu0 0
    %1061 = vmatpush2.bf16.msra.mxu0 0
    %1062 = vmatprep.subr.bf16.mxu0 0
    %1063 = vmatpush2.bf16.msra.mxu0 0
    %1064 = vmatprep.subr.bf16.mxu0 0
    %1065 = vmatpush2.bf16.msra.mxu0 0
    %1066 = vmatprep.subr.bf16.mxu0 0
    %1067 = vmatpush2.bf16.msra.mxu0 0
    %1068 = vmatprep.subr.bf16.mxu0 0
    %1069 = vmatpush2.bf16.msra.mxu0 0
    %1070 = vmatprep.subr.bf16.mxu0 0
    %1071 = vmatpush2.bf16.msra.mxu0 0
    %1072 = vmatprep.mubr.bf16.mxu0 0
    %1073 = vmatmul.mubr.bf16.gmra.mxu0 %v864
    %v1074 = vpop.f32.mrf.mxu0
    %v1075 = vadd.f32 0.0, %v1074
    %v1076 = vpop.f32.mrf.mxu0
    %v1077 = vpop.f32.mrf.mxu0
    %v1078 = vpop.f32.mrf.mxu0
    %1079 = vdwg.mxu0
    %v1080 = vadd.f32 %v1023, %v1075
    %v1081 = vxor.u32 %v906, 2147483648
    %v1082 = vmul.f32 %v1081, 1.442695
    %v1083 = vpow.pop %v1082
    %v1084 = vadd.f32 %v1083, 1.0
    %v1085 = vrcp.pop %v1084
    %v1086 = vmul.f32 1.0, %v1085
    %v1087 = vxor.u32 %v964, 2147483648
    %v1088 = vmul.f32 %v1087, 1.442695
    %v1089 = vpow.pop %v1088
    %v1090 = vadd.f32 %v1089, 1.0
    %v1091 = vrcp.pop %v1090
    %v1092 = vmul.f32 1.0, %v1091
    %v1093 = vtanh.pop %v1022
    %v1094 = vxor.u32 %v1080, 2147483648
    %v1095 = vmul.f32 %v1094, 1.442695
    %v1096 = vpow.pop %v1095
    %v1097 = vadd.f32 %v1096, 1.0
    %v1098 = vrcp.pop %v1097
    %v1099 = vmul.f32 1.0, %v1098
    %v1100 = vmul.f32 %v1092, %v841
    %v1101 = vmul.f32 %v1086, %v1093
    %v1102 = vadd.f32 %v1100, %v1101
    %v1103 = vtanh.pop %v1102
    %v1104 = vmul.f32 %v1099, %v1103
    %1105 = vst.msk [vmem:[#allocation2 + $0x4] sm:$0x3] %vm582, %v1104
    %v1106 = vpack.c.bf16 %v1104, %v1104
    %v1107 = vld [vmem:[#allocation3 + $0x6] sm:$0x3]
    %v1108 = vld [vmem:[#allocation4] sm:$0xf]
    %v1109 = vld [vmem:[#allocation4 + $0x4] sm:$0xf]
    %v1110 = vld [vmem:[#allocation4 + $0x8] sm:$0xf]
    %v1111 = vld [vmem:[#allocation4 + $0xc] sm:$0xf]
    %v1116 = vunpack.c.l.b16 %v1108
    %v1117 = vunpack.c.l.b16 %v1109
    %v1118 = vunpack.c.l.b16 %v1110
    %v1119 = vunpack.c.l.b16 %v1111
    %v1120 = vpack.c.b16 %v1117, %v1116
    %v1121 = vpack.c.b16 %v1119, %v1118
    %v1125 = vsel %vm146, %v1106, 0
    %1127 = vmatprep.subr.bf16.mxu0 0
    %1128 = vmatpush1.bf16.msra.mxu0 0
    %1129 = vmatprep.subr.bf16.mxu0 0
    %1130 = vmatpush1.bf16.msra.mxu0 0
    %1131 = vmatprep.subr.bf16.mxu0 0
    %1132 = vmatpush1.bf16.msra.mxu0 0
    %1133 = vmatprep.subr.bf16.mxu0 0
    %1134 = vmatpush1.bf16.msra.mxu0 0
    %1135 = vmatprep.subr.bf16.mxu0 0
    %1136 = vmatpush1.bf16.msra.mxu0 0
    %1137 = vmatprep.subr.bf16.mxu0 0
    %1138 = vmatpush1.bf16.msra.mxu0 0
    %1139 = vmatprep.subr.bf16.mxu0 0
    %1140 = vmatpush1.bf16.msra.mxu0 %v1121
    %1141 = vmatprep.subr.bf16.mxu0 0
    %1142 = vmatpush1.bf16.msra.mxu0 %v1120
    %1143 = vmatprep.subr.bf16.mxu0 0
    %1144 = vmatpush2.bf16.msra.mxu0 0
    %1145 = vmatprep.subr.bf16.mxu0 0
    %1146 = vmatpush2.bf16.msra.mxu0 0
    %1147 = vmatprep.subr.bf16.mxu0 0
    %1148 = vmatpush2.bf16.msra.mxu0 0
    %1149 = vmatprep.subr.bf16.mxu0 0
    %1150 = vmatpush2.bf16.msra.mxu0 0
    %1151 = vmatprep.subr.bf16.mxu0 0
    %1152 = vmatpush2.bf16.msra.mxu0 0
    %1153 = vmatprep.subr.bf16.mxu0 0
    %1154 = vmatpush2.bf16.msra.mxu0 0
    %1155 = vmatprep.subr.bf16.mxu0 0
    %1156 = vmatpush2.bf16.msra.mxu0 0
    %1157 = vmatprep.subr.bf16.mxu0 0
    %1158 = vmatpush2.bf16.msra.mxu0 0
    %1159 = vmatprep.mubr.bf16.mxu0 0
    %1160 = vmatmul.mubr.bf16.gmra.mxu0 %v1125
    %v1161 = vpop.f32.mrf.mxu0
    %v1162 = vadd.f32 0.0, %v1161
    %v1163 = vpop.f32.mrf.mxu0
    %v1164 = vpop.f32.mrf.mxu0
    %v1165 = vpop.f32.mrf.mxu0
    %1166 = vdwg.mxu0
    %v1167 = vadd.f32 %v1107, %v1162
    %v1168 = vld [vmem:[%s203 + $0x6] sm:$0x3]
    %v1169 = vld [vmem:[%s382] sm:$0xf]
    %v1170 = vld [vmem:[%s382 + $0x4] sm:$0xf]
    %v1171 = vld [vmem:[%s382 + $0x8] sm:$0xf]
    %v1172 = vld [vmem:[%s382 + $0xc] sm:$0xf]
    %v1177 = vunpack.c.l.b16 %v1169
    %v1178 = vunpack.c.l.b16 %v1170
    %v1179 = vunpack.c.l.b16 %v1171
    %v1180 = vunpack.c.l.b16 %v1172
    %v1181 = vpack.c.b16 %v1178, %v1177
    %v1182 = vpack.c.b16 %v1180, %v1179
    %1185 = vmatprep.subr.bf16.mxu0 0
    %1186 = vmatpush1.bf16.msra.mxu0 0
    %1187 = vmatprep.subr.bf16.mxu0 0
    %1188 = vmatpush1.bf16.msra.mxu0 0
    %1189 = vmatprep.subr.bf16.mxu0 0
    %1190 = vmatpush1.bf16.msra.mxu0 0
    %1191 = vmatprep.subr.bf16.mxu0 0
    %1192 = vmatpush1.bf16.msra.mxu0 0
    %1193 = vmatprep.subr.bf16.mxu0 0
    %1194 = vmatpush1.bf16.msra.mxu0 0
    %1195 = vmatprep.subr.bf16.mxu0 0
    %1196 = vmatpush1.bf16.msra.mxu0 0
    %1197 = vmatprep.subr.bf16.mxu0 0
    %1198 = vmatpush1.bf16.msra.mxu0 %v1182
    %1199 = vmatprep.subr.bf16.mxu0 0
    %1200 = vmatpush1.bf16.msra.mxu0 %v1181
    %1201 = vmatprep.subr.bf16.mxu0 0
    %1202 = vmatpush2.bf16.msra.mxu0 0
    %1203 = vmatprep.subr.bf16.mxu0 0
    %1204 = vmatpush2.bf16.msra.mxu0 0
    %1205 = vmatprep.subr.bf16.mxu0 0
    %1206 = vmatpush2.bf16.msra.mxu0 0
    %1207 = vmatprep.subr.bf16.mxu0 0
    %1208 = vmatpush2.bf16.msra.mxu0 0
    %1209 = vmatprep.subr.bf16.mxu0 0
    %1210 = vmatpush2.bf16.msra.mxu0 0
    %1211 = vmatprep.subr.bf16.mxu0 0
    %1212 = vmatpush2.bf16.msra.mxu0 0
    %1213 = vmatprep.subr.bf16.mxu0 0
    %1214 = vmatpush2.bf16.msra.mxu0 0
    %1215 = vmatprep.subr.bf16.mxu0 0
    %1216 = vmatpush2.bf16.msra.mxu0 0
    %1217 = vmatprep.mubr.bf16.mxu0 0
    %1218 = vmatmul.mubr.bf16.gmra.mxu0 %v1125
    %v1219 = vpop.f32.mrf.mxu0
    %v1220 = vadd.f32 0.0, %v1219
    %v1221 = vpop.f32.mrf.mxu0
    %v1222 = vpop.f32.mrf.mxu0
    %v1223 = vpop.f32.mrf.mxu0
    %1224 = vdwg.mxu0
    %v1225 = vadd.f32 %v1168, %v1220
    %v1226 = vld [vmem:[%s260 + $0x6] sm:$0x3]
    %v1227 = vld [vmem:[%s441] sm:$0xf]
    %v1228 = vld [vmem:[%s441 + $0x4] sm:$0xf]
    %v1229 = vld [vmem:[%s441 + $0x8] sm:$0xf]
    %v1230 = vld [vmem:[%s441 + $0xc] sm:$0xf]
    %v1235 = vunpack.c.l.b16 %v1227
    %v1236 = vunpack.c.l.b16 %v1228
    %v1237 = vunpack.c.l.b16 %v1229
    %v1238 = vunpack.c.l.b16 %v1230
    %v1239 = vpack.c.b16 %v1236, %v1235
    %v1240 = vpack.c.b16 %v1238, %v1237
    %1243 = vmatprep.subr.bf16.mxu0 0
    %1244 = vmatpush1.bf16.msra.mxu0 0
    %1245 = vmatprep.subr.bf16.mxu0 0
    %1246 = vmatpush1.bf16.msra.mxu0 0
    %1247 = vmatprep.subr.bf16.mxu0 0
    %1248 = vmatpush1.bf16.msra.mxu0 0
    %1249 = vmatprep.subr.bf16.mxu0 0
    %1250 = vmatpush1.bf16.msra.mxu0 0
    %1251 = vmatprep.subr.bf16.mxu0 0
    %1252 = vmatpush1.bf16.msra.mxu0 0
    %1253 = vmatprep.subr.bf16.mxu0 0
    %1254 = vmatpush1.bf16.msra.mxu0 0
    %1255 = vmatprep.subr.bf16.mxu0 0
    %1256 = vmatpush1.bf16.msra.mxu0 %v1240
    %1257 = vmatprep.subr.bf16.mxu0 0
    %1258 = vmatpush1.bf16.msra.mxu0 %v1239
    %1259 = vmatprep.subr.bf16.mxu0 0
    %1260 = vmatpush2.bf16.msra.mxu0 0
    %1261 = vmatprep.subr.bf16.mxu0 0
    %1262 = vmatpush2.bf16.msra.mxu0 0
    %1263 = vmatprep.subr.bf16.mxu0 0
    %1264 = vmatpush2.bf16.msra.mxu0 0
    %1265 = vmatprep.subr.bf16.mxu0 0
    %1266 = vmatpush2.bf16.msra.mxu0 0
    %1267 = vmatprep.subr.bf16.mxu0 0
    %1268 = vmatpush2.bf16.msra.mxu0 0
    %1269 = vmatprep.subr.bf16.mxu0 0
    %1270 = vmatpush2.bf16.msra.mxu0 0
    %1271 = vmatprep.subr.bf16.mxu0 0
    %1272 = vmatpush2.bf16.msra.mxu0 0
    %1273 = vmatprep.subr.bf16.mxu0 0
    %1274 = vmatpush2.bf16.msra.mxu0 0
    %1275 = vmatprep.mubr.bf16.mxu0 0
    %1276 = vmatmul.mubr.bf16.gmra.mxu0 %v1125
    %v1277 = vpop.f32.mrf.mxu0
    %v1278 = vadd.f32 0.0, %v1277
    %v1279 = vpop.f32.mrf.mxu0
    %v1280 = vpop.f32.mrf.mxu0
    %v1281 = vpop.f32.mrf.mxu0
    %1282 = vdwg.mxu0
    %v1283 = vadd.f32 %v1226, %v1278
    %v1284 = vld [vmem:[%s317 + $0x6] sm:$0x3]
    %v1285 = vld [vmem:[%s500] sm:$0xf]
    %v1286 = vld [vmem:[%s500 + $0x4] sm:$0xf]
    %v1287 = vld [vmem:[%s500 + $0x8] sm:$0xf]
    %v1288 = vld [vmem:[%s500 + $0xc] sm:$0xf]
    %v1293 = vunpack.c.l.b16 %v1285
    %v1294 = vunpack.c.l.b16 %v1286
    %v1295 = vunpack.c.l.b16 %v1287
    %v1296 = vunpack.c.l.b16 %v1288
    %v1297 = vpack.c.b16 %v1294, %v1293
    %v1298 = vpack.c.b16 %v1296, %v1295
    %1301 = vmatprep.subr.bf16.mxu0 0
    %1302 = vmatpush1.bf16.msra.mxu0 0
    %1303 = vmatprep.subr.bf16.mxu0 0
    %1304 = vmatpush1.bf16.msra.mxu0 0
    %1305 = vmatprep.subr.bf16.mxu0 0
    %1306 = vmatpush1.bf16.msra.mxu0 0
    %1307 = vmatprep.subr.bf16.mxu0 0
    %1308 = vmatpush1.bf16.msra.mxu0 0
    %1309 = vmatprep.subr.bf16.mxu0 0
    %1310 = vmatpush1.bf16.msra.mxu0 0
    %1311 = vmatprep.subr.bf16.mxu0 0
    %1312 = vmatpush1.bf16.msra.mxu0 0
    %1313 = vmatprep.subr.bf16.mxu0 0
    %1314 = vmatpush1.bf16.msra.mxu0 %v1298
    %1315 = vmatprep.subr.bf16.mxu0 0
    %1316 = vmatpush1.bf16.msra.mxu0 %v1297
    %1317 = vmatprep.subr.bf16.mxu0 0
    %1318 = vmatpush2.bf16.msra.mxu0 0
    %1319 = vmatprep.subr.bf16.mxu0 0
    %1320 = vmatpush2.bf16.msra.mxu0 0
    %1321 = vmatprep.subr.bf16.mxu0 0
    %1322 = vmatpush2.bf16.msra.mxu0 0
    %1323 = vmatprep.subr.bf16.mxu0 0
    %1324 = vmatpush2.bf16.msra.mxu0 0
    %1325 = vmatprep.subr.bf16.mxu0 0
    %1326 = vmatpush2.bf16.msra.mxu0 0
    %1327 = vmatprep.subr.bf16.mxu0 0
    %1328 = vmatpush2.bf16.msra.mxu0 0
    %1329 = vmatprep.subr.bf16.mxu0 0
    %1330 = vmatpush2.bf16.msra.mxu0 0
    %1331 = vmatprep.subr.bf16.mxu0 0
    %1332 = vmatpush2.bf16.msra.mxu0 0
    %1333 = vmatprep.mubr.bf16.mxu0 0
    %1334 = vmatmul.mubr.bf16.gmra.mxu0 %v1125
    %v1335 = vpop.f32.mrf.mxu0
    %v1336 = vadd.f32 0.0, %v1335
    %v1337 = vpop.f32.mrf.mxu0
    %v1338 = vpop.f32.mrf.mxu0
    %v1339 = vpop.f32.mrf.mxu0
    %1340 = vdwg.mxu0
    %v1341 = vadd.f32 %v1284, %v1336
    %v1342 = vxor.u32 %v1167, 2147483648
    %v1343 = vmul.f32 %v1342, 1.442695
    %v1344 = vpow.pop %v1343
    %v1345 = vadd.f32 %v1344, 1.0
    %v1346 = vrcp.pop %v1345
    %v1347 = vmul.f32 1.0, %v1346
    %v1348 = vxor.u32 %v1225, 2147483648
    %v1349 = vmul.f32 %v1348, 1.442695
    %v1350 = vpow.pop %v1349
    %v1351 = vadd.f32 %v1350, 1.0
    %v1352 = vrcp.pop %v1351
    %v1353 = vmul.f32 1.0, %v1352
    %v1354 = vtanh.pop %v1283
    %v1355 = vxor.u32 %v1341, 2147483648
    %v1356 = vmul.f32 %v1355, 1.442695
    %v1357 = vpow.pop %v1356
    %v1358 = vadd.f32 %v1357, 1.0
    %v1359 = vrcp.pop %v1358
    %v1360 = vmul.f32 1.0, %v1359
    %v1361 = vmul.f32 %v1353, %v1102
    %v1362 = vmul.f32 %v1347, %v1354
    %v1363 = vadd.f32 %v1361, %v1362
    %v1364 = vtanh.pop %v1363
    %v1365 = vmul.f32 %v1360, %v1364
    %1366 = vst.msk [vmem:[#allocation2 + $0x6] sm:$0x3] %vm582, %v1365
    %v1367 = vpack.c.bf16 %v1365, %v1365
    %v1368 = vld [vmem:[#allocation3 + $0x8] sm:$0x3]
    %v1369 = vld [vmem:[#allocation4] sm:$0xf]
    %v1370 = vld [vmem:[#allocation4 + $0x4] sm:$0xf]
    %v1371 = vld [vmem:[#allocation4 + $0x8] sm:$0xf]
    %v1372 = vld [vmem:[#allocation4 + $0xc] sm:$0xf]
    %v1377 = vunpack.c.l.b16 %v1369
    %v1378 = vunpack.c.l.b16 %v1370
    %v1379 = vunpack.c.l.b16 %v1371
    %v1380 = vunpack.c.l.b16 %v1372
    %v1381 = vpack.c.b16 %v1378, %v1377
    %v1382 = vpack.c.b16 %v1380, %v1379
    %v1386 = vsel %vm146, %v1367, 0
    %1388 = vmatprep.subr.bf16.mxu0 0
    %1389 = vmatpush1.bf16.msra.mxu0 0
    %1390 = vmatprep.subr.bf16.mxu0 0
    %1391 = vmatpush1.bf16.msra.mxu0 0
    %1392 = vmatprep.subr.bf16.mxu0 0
    %1393 = vmatpush1.bf16.msra.mxu0 0
    %1394 = vmatprep.subr.bf16.mxu0 0
    %1395 = vmatpush1.bf16.msra.mxu0 0
    %1396 = vmatprep.subr.bf16.mxu0 0
    %1397 = vmatpush1.bf16.msra.mxu0 0
    %1398 = vmatprep.subr.bf16.mxu0 0
    %1399 = vmatpush1.bf16.msra.mxu0 0
    %1400 = vmatprep.subr.bf16.mxu0 0
    %1401 = vmatpush1.bf16.msra.mxu0 %v1382
    %1402 = vmatprep.subr.bf16.mxu0 0
    %1403 = vmatpush1.bf16.msra.mxu0 %v1381
    %1404 = vmatprep.subr.bf16.mxu0 0
    %1405 = vmatpush2.bf16.msra.mxu0 0
    %1406 = vmatprep.subr.bf16.mxu0 0
    %1407 = vmatpush2.bf16.msra.mxu0 0
    %1408 = vmatprep.subr.bf16.mxu0 0
    %1409 = vmatpush2.bf16.msra.mxu0 0
    %1410 = vmatprep.subr.bf16.mxu0 0
    %1411 = vmatpush2.bf16.msra.mxu0 0
    %1412 = vmatprep.subr.bf16.mxu0 0
    %1413 = vmatpush2.bf16.msra.mxu0 0
    %1414 = vmatprep.subr.bf16.mxu0 0
    %1415 = vmatpush2.bf16.msra.mxu0 0
    %1416 = vmatprep.subr.bf16.mxu0 0
    %1417 = vmatpush2.bf16.msra.mxu0 0
    %1418 = vmatprep.subr.bf16.mxu0 0
    %1419 = vmatpush2.bf16.msra.mxu0 0
    %1420 = vmatprep.mubr.bf16.mxu0 0
    %1421 = vmatmul.mubr.bf16.gmra.mxu0 %v1386
    %v1422 = vpop.f32.mrf.mxu0
    %v1423 = vadd.f32 0.0, %v1422
    %v1424 = vpop.f32.mrf.mxu0
    %v1425 = vpop.f32.mrf.mxu0
    %v1426 = vpop.f32.mrf.mxu0
    %1427 = vdwg.mxu0
    %v1428 = vadd.f32 %v1368, %v1423
    %v1429 = vld [vmem:[%s203 + $0x8] sm:$0x3]
    %v1430 = vld [vmem:[%s382] sm:$0xf]
    %v1431 = vld [vmem:[%s382 + $0x4] sm:$0xf]
    %v1432 = vld [vmem:[%s382 + $0x8] sm:$0xf]
    %v1433 = vld [vmem:[%s382 + $0xc] sm:$0xf]
    %v1438 = vunpack.c.l.b16 %v1430
    %v1439 = vunpack.c.l.b16 %v1431
    %v1440 = vunpack.c.l.b16 %v1432
    %v1441 = vunpack.c.l.b16 %v1433
    %v1442 = vpack.c.b16 %v1439, %v1438
    %v1443 = vpack.c.b16 %v1441, %v1440
    %1446 = vmatprep.subr.bf16.mxu0 0
    %1447 = vmatpush1.bf16.msra.mxu0 0
    %1448 = vmatprep.subr.bf16.mxu0 0
    %1449 = vmatpush1.bf16.msra.mxu0 0
    %1450 = vmatprep.subr.bf16.mxu0 0
    %1451 = vmatpush1.bf16.msra.mxu0 0
    %1452 = vmatprep.subr.bf16.mxu0 0
    %1453 = vmatpush1.bf16.msra.mxu0 0
    %1454 = vmatprep.subr.bf16.mxu0 0
    %1455 = vmatpush1.bf16.msra.mxu0 0
    %1456 = vmatprep.subr.bf16.mxu0 0
    %1457 = vmatpush1.bf16.msra.mxu0 0
    %1458 = vmatprep.subr.bf16.mxu0 0
    %1459 = vmatpush1.bf16.msra.mxu0 %v1443
    %1460 = vmatprep.subr.bf16.mxu0 0
    %1461 = vmatpush1.bf16.msra.mxu0 %v1442
    %1462 = vmatprep.subr.bf16.mxu0 0
    %1463 = vmatpush2.bf16.msra.mxu0 0
    %1464 = vmatprep.subr.bf16.mxu0 0
    %1465 = vmatpush2.bf16.msra.mxu0 0
    %1466 = vmatprep.subr.bf16.mxu0 0
    %1467 = vmatpush2.bf16.msra.mxu0 0
    %1468 = vmatprep.subr.bf16.mxu0 0
    %1469 = vmatpush2.bf16.msra.mxu0 0
    %1470 = vmatprep.subr.bf16.mxu0 0
    %1471 = vmatpush2.bf16.msra.mxu0 0
    %1472 = vmatprep.subr.bf16.mxu0 0
    %1473 = vmatpush2.bf16.msra.mxu0 0
    %1474 = vmatprep.subr.bf16.mxu0 0
    %1475 = vmatpush2.bf16.msra.mxu0 0
    %1476 = vmatprep.subr.bf16.mxu0 0
    %1477 = vmatpush2.bf16.msra.mxu0 0
    %1478 = vmatprep.mubr.bf16.mxu0 0
    %1479 = vmatmul.mubr.bf16.gmra.mxu0 %v1386
    %v1480 = vpop.f32.mrf.mxu0
    %v1481 = vadd.f32 0.0, %v1480
    %v1482 = vpop.f32.mrf.mxu0
    %v1483 = vpop.f32.mrf.mxu0
    %v1484 = vpop.f32.mrf.mxu0
    %1485 = vdwg.mxu0
    %v1486 = vadd.f32 %v1429, %v1481
    %v1487 = vld [vmem:[%s260 + $0x8] sm:$0x3]
    %v1488 = vld [vmem:[%s441] sm:$0xf]
    %v1489 = vld [vmem:[%s441 + $0x4] sm:$0xf]
    %v1490 = vld [vmem:[%s441 + $0x8] sm:$0xf]
    %v1491 = vld [vmem:[%s441 + $0xc] sm:$0xf]
    %v1496 = vunpack.c.l.b16 %v1488
    %v1497 = vunpack.c.l.b16 %v1489
    %v1498 = vunpack.c.l.b16 %v1490
    %v1499 = vunpack.c.l.b16 %v1491
    %v1500 = vpack.c.b16 %v1497, %v1496
    %v1501 = vpack.c.b16 %v1499, %v1498
    %1504 = vmatprep.subr.bf16.mxu0 0
    %1505 = vmatpush1.bf16.msra.mxu0 0
    %1506 = vmatprep.subr.bf16.mxu0 0
    %1507 = vmatpush1.bf16.msra.mxu0 0
    %1508 = vmatprep.subr.bf16.mxu0 0
    %1509 = vmatpush1.bf16.msra.mxu0 0
    %1510 = vmatprep.subr.bf16.mxu0 0
    %1511 = vmatpush1.bf16.msra.mxu0 0
    %1512 = vmatprep.subr.bf16.mxu0 0
    %1513 = vmatpush1.bf16.msra.mxu0 0
    %1514 = vmatprep.subr.bf16.mxu0 0
    %1515 = vmatpush1.bf16.msra.mxu0 0
    %1516 = vmatprep.subr.bf16.mxu0 0
    %1517 = vmatpush1.bf16.msra.mxu0 %v1501
    %1518 = vmatprep.subr.bf16.mxu0 0
    %1519 = vmatpush1.bf16.msra.mxu0 %v1500
    %1520 = vmatprep.subr.bf16.mxu0 0
    %1521 = vmatpush2.bf16.msra.mxu0 0
    %1522 = vmatprep.subr.bf16.mxu0 0
    %1523 = vmatpush2.bf16.msra.mxu0 0
    %1524 = vmatprep.subr.bf16.mxu0 0
    %1525 = vmatpush2.bf16.msra.mxu0 0
    %1526 = vmatprep.subr.bf16.mxu0 0
    %1527 = vmatpush2.bf16.msra.mxu0 0
    %1528 = vmatprep.subr.bf16.mxu0 0
    %1529 = vmatpush2.bf16.msra.mxu0 0
    %1530 = vmatprep.subr.bf16.mxu0 0
    %1531 = vmatpush2.bf16.msra.mxu0 0
    %1532 = vmatprep.subr.bf16.mxu0 0
    %1533 = vmatpush2.bf16.msra.mxu0 0
    %1534 = vmatprep.subr.bf16.mxu0 0
    %1535 = vmatpush2.bf16.msra.mxu0 0
    %1536 = vmatprep.mubr.bf16.mxu0 0
    %1537 = vmatmul.mubr.bf16.gmra.mxu0 %v1386
    %v1538 = vpop.f32.mrf.mxu0
    %v1539 = vadd.f32 0.0, %v1538
    %v1540 = vpop.f32.mrf.mxu0
    %v1541 = vpop.f32.mrf.mxu0
    %v1542 = vpop.f32.mrf.mxu0
    %1543 = vdwg.mxu0
    %v1544 = vadd.f32 %v1487, %v1539
    %v1545 = vld [vmem:[%s317 + $0x8] sm:$0x3]
    %v1546 = vld [vmem:[%s500] sm:$0xf]
    %v1547 = vld [vmem:[%s500 + $0x4] sm:$0xf]
    %v1548 = vld [vmem:[%s500 + $0x8] sm:$0xf]
    %v1549 = vld [vmem:[%s500 + $0xc] sm:$0xf]
    %v1554 = vunpack.c.l.b16 %v1546
    %v1555 = vunpack.c.l.b16 %v1547
    %v1556 = vunpack.c.l.b16 %v1548
    %v1557 = vunpack.c.l.b16 %v1549
    %v1558 = vpack.c.b16 %v1555, %v1554
    %v1559 = vpack.c.b16 %v1557, %v1556
    %1562 = vmatprep.subr.bf16.mxu0 0
    %1563 = vmatpush1.bf16.msra.mxu0 0
    %1564 = vmatprep.subr.bf16.mxu0 0
    %1565 = vmatpush1.bf16.msra.mxu0 0
    %1566 = vmatprep.subr.bf16.mxu0 0
    %1567 = vmatpush1.bf16.msra.mxu0 0
    %1568 = vmatprep.subr.bf16.mxu0 0
    %1569 = vmatpush1.bf16.msra.mxu0 0
    %1570 = vmatprep.subr.bf16.mxu0 0
    %1571 = vmatpush1.bf16.msra.mxu0 0
    %1572 = vmatprep.subr.bf16.mxu0 0
    %1573 = vmatpush1.bf16.msra.mxu0 0
    %1574 = vmatprep.subr.bf16.mxu0 0
    %1575 = vmatpush1.bf16.msra.mxu0 %v1559
    %1576 = vmatprep.subr.bf16.mxu0 0
    %1577 = vmatpush1.bf16.msra.mxu0 %v1558
    %1578 = vmatprep.subr.bf16.mxu0 0
    %1579 = vmatpush2.bf16.msra.mxu0 0
    %1580 = vmatprep.subr.bf16.mxu0 0
    %1581 = vmatpush2.bf16.msra.mxu0 0
    %1582 = vmatprep.subr.bf16.mxu0 0
    %1583 = vmatpush2.bf16.msra.mxu0 0
    %1584 = vmatprep.subr.bf16.mxu0 0
    %1585 = vmatpush2.bf16.msra.mxu0 0
    %1586 = vmatprep.subr.bf16.mxu0 0
    %1587 = vmatpush2.bf16.msra.mxu0 0
    %1588 = vmatprep.subr.bf16.mxu0 0
    %1589 = vmatpush2.bf16.msra.mxu0 0
    %1590 = vmatprep.subr.bf16.mxu0 0
    %1591 = vmatpush2.bf16.msra.mxu0 0
    %1592 = vmatprep.subr.bf16.mxu0 0
    %1593 = vmatpush2.bf16.msra.mxu0 0
    %1594 = vmatprep.mubr.bf16.mxu0 0
    %1595 = vmatmul.mubr.bf16.gmra.mxu0 %v1386
    %v1596 = vpop.f32.mrf.mxu0
    %v1597 = vadd.f32 0.0, %v1596
    %v1598 = vpop.f32.mrf.mxu0
    %v1599 = vpop.f32.mrf.mxu0
    %v1600 = vpop.f32.mrf.mxu0
    %1601 = vdwg.mxu0
    %v1602 = vadd.f32 %v1545, %v1597
    %v1603 = vxor.u32 %v1428, 2147483648
    %v1604 = vmul.f32 %v1603, 1.442695
    %v1605 = vpow.pop %v1604
    %v1606 = vadd.f32 %v1605, 1.0
    %v1607 = vrcp.pop %v1606
    %v1608 = vmul.f32 1.0, %v1607
    %v1609 = vxor.u32 %v1486, 2147483648
    %v1610 = vmul.f32 %v1609, 1.442695
    %v1611 = vpow.pop %v1610
    %v1612 = vadd.f32 %v1611, 1.0
    %v1613 = vrcp.pop %v1612
    %v1614 = vmul.f32 1.0, %v1613
    %v1615 = vtanh.pop %v1544
    %v1616 = vxor.u32 %v1602, 2147483648
    %v1617 = vmul.f32 %v1616, 1.442695
    %v1618 = vpow.pop %v1617
    %v1619 = vadd.f32 %v1618, 1.0
    %v1620 = vrcp.pop %v1619
    %v1621 = vmul.f32 1.0, %v1620
    %v1622 = vmul.f32 %v1614, %v1363
    %v1623 = vmul.f32 %v1608, %v1615
    %v1624 = vadd.f32 %v1622, %v1623
    %v1625 = vtanh.pop %v1624
    %v1626 = vmul.f32 %v1621, %v1625
    %1627 = vst.msk [vmem:[#allocation2 + $0x8] sm:$0x3] %vm582, %v1626
    %v1628 = vpack.c.bf16 %v1626, %v1626
    %v1629 = vld [vmem:[#allocation3 + $0xa] sm:$0x3]
    %v1630 = vld [vmem:[#allocation4] sm:$0xf]
    %v1631 = vld [vmem:[#allocation4 + $0x4] sm:$0xf]
    %v1632 = vld [vmem:[#allocation4 + $0x8] sm:$0xf]
    %v1633 = vld [vmem:[#allocation4 + $0xc] sm:$0xf]
    %v1638 = vunpack.c.l.b16 %v1630
    %v1639 = vunpack.c.l.b16 %v1631
    %v1640 = vunpack.c.l.b16 %v1632
    %v1641 = vunpack.c.l.b16 %v1633
    %v1642 = vpack.c.b16 %v1639, %v1638
    %v1643 = vpack.c.b16 %v1641, %v1640
    %v1647 = vsel %vm146, %v1628, 0
    %1649 = vmatprep.subr.bf16.mxu0 0
    %1650 = vmatpush1.bf16.msra.mxu0 0
    %1651 = vmatprep.subr.bf16.mxu0 0
    %1652 = vmatpush1.bf16.msra.mxu0 0
    %1653 = vmatprep.subr.bf16.mxu0 0
    %1654 = vmatpush1.bf16.msra.mxu0 0
    %1655 = vmatprep.subr.bf16.mxu0 0
    %1656 = vmatpush1.bf16.msra.mxu0 0
    %1657 = vmatprep.subr.bf16.mxu0 0
    %1658 = vmatpush1.bf16.msra.mxu0 0
    %1659 = vmatprep.subr.bf16.mxu0 0
    %1660 = vmatpush1.bf16.msra.mxu0 0
    %1661 = vmatprep.subr.bf16.mxu0 0
    %1662 = vmatpush1.bf16.msra.mxu0 %v1643
    %1663 = vmatprep.subr.bf16.mxu0 0
    %1664 = vmatpush1.bf16.msra.mxu0 %v1642
    %1665 = vmatprep.subr.bf16.mxu0 0
    %1666 = vmatpush2.bf16.msra.mxu0 0
    %1667 = vmatprep.subr.bf16.mxu0 0
    %1668 = vmatpush2.bf16.msra.mxu0 0
    %1669 = vmatprep.subr.bf16.mxu0 0
    %1670 = vmatpush2.bf16.msra.mxu0 0
    %1671 = vmatprep.subr.bf16.mxu0 0
    %1672 = vmatpush2.bf16.msra.mxu0 0
    %1673 = vmatprep.subr.bf16.mxu0 0
    %1674 = vmatpush2.bf16.msra.mxu0 0
    %1675 = vmatprep.subr.bf16.mxu0 0
    %1676 = vmatpush2.bf16.msra.mxu0 0
    %1677 = vmatprep.subr.bf16.mxu0 0
    %1678 = vmatpush2.bf16.msra.mxu0 0
    %1679 = vmatprep.subr.bf16.mxu0 0
    %1680 = vmatpush2.bf16.msra.mxu0 0
    %1681 = vmatprep.mubr.bf16.mxu0 0
    %1682 = vmatmul.mubr.bf16.gmra.mxu0 %v1647
    %v1683 = vpop.f32.mrf.mxu0
    %v1684 = vadd.f32 0.0, %v1683
    %v1685 = vpop.f32.mrf.mxu0
    %v1686 = vpop.f32.mrf.mxu0
    %v1687 = vpop.f32.mrf.mxu0
    %1688 = vdwg.mxu0
    %v1689 = vadd.f32 %v1629, %v1684
    %v1690 = vld [vmem:[%s203 + $0xa] sm:$0x3]
    %v1691 = vld [vmem:[%s382] sm:$0xf]
    %v1692 = vld [vmem:[%s382 + $0x4] sm:$0xf]
    %v1693 = vld [vmem:[%s382 + $0x8] sm:$0xf]
    %v1694 = vld [vmem:[%s382 + $0xc] sm:$0xf]
    %v1699 = vunpack.c.l.b16 %v1691
    %v1700 = vunpack.c.l.b16 %v1692
    %v1701 = vunpack.c.l.b16 %v1693
    %v1702 = vunpack.c.l.b16 %v1694
    %v1703 = vpack.c.b16 %v1700, %v1699
    %v1704 = vpack.c.b16 %v1702, %v1701
    %1707 = vmatprep.subr.bf16.mxu0 0
    %1708 = vmatpush1.bf16.msra.mxu0 0
    %1709 = vmatprep.subr.bf16.mxu0 0
    %1710 = vmatpush1.bf16.msra.mxu0 0
    %1711 = vmatprep.subr.bf16.mxu0 0
    %1712 = vmatpush1.bf16.msra.mxu0 0
    %1713 = vmatprep.subr.bf16.mxu0 0
    %1714 = vmatpush1.bf16.msra.mxu0 0
    %1715 = vmatprep.subr.bf16.mxu0 0
    %1716 = vmatpush1.bf16.msra.mxu0 0
    %1717 = vmatprep.subr.bf16.mxu0 0
    %1718 = vmatpush1.bf16.msra.mxu0 0
    %1719 = vmatprep.subr.bf16.mxu0 0
    %1720 = vmatpush1.bf16.msra.mxu0 %v1704
    %1721 = vmatprep.subr.bf16.mxu0 0
    %1722 = vmatpush1.bf16.msra.mxu0 %v1703
    %1723 = vmatprep.subr.bf16.mxu0 0
    %1724 = vmatpush2.bf16.msra.mxu0 0
    %1725 = vmatprep.subr.bf16.mxu0 0
    %1726 = vmatpush2.bf16.msra.mxu0 0
    %1727 = vmatprep.subr.bf16.mxu0 0
    %1728 = vmatpush2.bf16.msra.mxu0 0
    %1729 = vmatprep.subr.bf16.mxu0 0
    %1730 = vmatpush2.bf16.msra.mxu0 0
    %1731 = vmatprep.subr.bf16.mxu0 0
    %1732 = vmatpush2.bf16.msra.mxu0 0
    %1733 = vmatprep.subr.bf16.mxu0 0
    %1734 = vmatpush2.bf16.msra.mxu0 0
    %1735 = vmatprep.subr.bf16.mxu0 0
    %1736 = vmatpush2.bf16.msra.mxu0 0
    %1737 = vmatprep.subr.bf16.mxu0 0
    %1738 = vmatpush2.bf16.msra.mxu0 0
    %1739 = vmatprep.mubr.bf16.mxu0 0
    %1740 = vmatmul.mubr.bf16.gmra.mxu0 %v1647
    %v1741 = vpop.f32.mrf.mxu0
    %v1742 = vadd.f32 0.0, %v1741
    %v1743 = vpop.f32.mrf.mxu0
    %v1744 = vpop.f32.mrf.mxu0
    %v1745 = vpop.f32.mrf.mxu0
    %1746 = vdwg.mxu0
    %v1747 = vadd.f32 %v1690, %v1742
    %v1748 = vld [vmem:[%s260 + $0xa] sm:$0x3]
    %v1749 = vld [vmem:[%s441] sm:$0xf]
    %v1750 = vld [vmem:[%s441 + $0x4] sm:$0xf]
    %v1751 = vld [vmem:[%s441 + $0x8] sm:$0xf]
    %v1752 = vld [vmem:[%s441 + $0xc] sm:$0xf]
    %v1757 = vunpack.c.l.b16 %v1749
    %v1758 = vunpack.c.l.b16 %v1750
    %v1759 = vunpack.c.l.b16 %v1751
    %v1760 = vunpack.c.l.b16 %v1752
    %v1761 = vpack.c.b16 %v1758, %v1757
    %v1762 = vpack.c.b16 %v1760, %v1759
    %1765 = vmatprep.subr.bf16.mxu0 0
    %1766 = vmatpush1.bf16.msra.mxu0 0
    %1767 = vmatprep.subr.bf16.mxu0 0
    %1768 = vmatpush1.bf16.msra.mxu0 0
    %1769 = vmatprep.subr.bf16.mxu0 0
    %1770 = vmatpush1.bf16.msra.mxu0 0
    %1771 = vmatprep.subr.bf16.mxu0 0
    %1772 = vmatpush1.bf16.msra.mxu0 0
    %1773 = vmatprep.subr.bf16.mxu0 0
    %1774 = vmatpush1.bf16.msra.mxu0 0
    %1775 = vmatprep.subr.bf16.mxu0 0
    %1776 = vmatpush1.bf16.msra.mxu0 0
    %1777 = vmatprep.subr.bf16.mxu0 0
    %1778 = vmatpush1.bf16.msra.mxu0 %v1762
    %1779 = vmatprep.subr.bf16.mxu0 0
    %1780 = vmatpush1.bf16.msra.mxu0 %v1761
    %1781 = vmatprep.subr.bf16.mxu0 0
    %1782 = vmatpush2.bf16.msra.mxu0 0
    %1783 = vmatprep.subr.bf16.mxu0 0
    %1784 = vmatpush2.bf16.msra.mxu0 0
    %1785 = vmatprep.subr.bf16.mxu0 0
    %1786 = vmatpush2.bf16.msra.mxu0 0
    %1787 = vmatprep.subr.bf16.mxu0 0
    %1788 = vmatpush2.bf16.msra.mxu0 0
    %1789 = vmatprep.subr.bf16.mxu0 0
    %1790 = vmatpush2.bf16.msra.mxu0 0
    %1791 = vmatprep.subr.bf16.mxu0 0
    %1792 = vmatpush2.bf16.msra.mxu0 0
    %1793 = vmatprep.subr.bf16.mxu0 0
    %1794 = vmatpush2.bf16.msra.mxu0 0
    %1795 = vmatprep.subr.bf16.mxu0 0
    %1796 = vmatpush2.bf16.msra.mxu0 0
    %1797 = vmatprep.mubr.bf16.mxu0 0
    %1798 = vmatmul.mubr.bf16.gmra.mxu0 %v1647
    %v1799 = vpop.f32.mrf.mxu0
    %v1800 = vadd.f32 0.0, %v1799
    %v1801 = vpop.f32.mrf.mxu0
    %v1802 = vpop.f32.mrf.mxu0
    %v1803 = vpop.f32.mrf.mxu0
    %1804 = vdwg.mxu0
    %v1805 = vadd.f32 %v1748, %v1800
    %v1806 = vld [vmem:[%s317 + $0xa] sm:$0x3]
    %v1807 = vld [vmem:[%s500] sm:$0xf]
    %v1808 = vld [vmem:[%s500 + $0x4] sm:$0xf]
    %v1809 = vld [vmem:[%s500 + $0x8] sm:$0xf]
    %v1810 = vld [vmem:[%s500 + $0xc] sm:$0xf]
    %v1815 = vunpack.c.l.b16 %v1807
    %v1816 = vunpack.c.l.b16 %v1808
    %v1817 = vunpack.c.l.b16 %v1809
    %v1818 = vunpack.c.l.b16 %v1810
    %v1819 = vpack.c.b16 %v1816, %v1815
    %v1820 = vpack.c.b16 %v1818, %v1817
    %1823 = vmatprep.subr.bf16.mxu0 0
    %1824 = vmatpush1.bf16.msra.mxu0 0
    %1825 = vmatprep.subr.bf16.mxu0 0
    %1826 = vmatpush1.bf16.msra.mxu0 0
    %1827 = vmatprep.subr.bf16.mxu0 0
    %1828 = vmatpush1.bf16.msra.mxu0 0
    %1829 = vmatprep.subr.bf16.mxu0 0
    %1830 = vmatpush1.bf16.msra.mxu0 0
    %1831 = vmatprep.subr.bf16.mxu0 0
    %1832 = vmatpush1.bf16.msra.mxu0 0
    %1833 = vmatprep.subr.bf16.mxu0 0
    %1834 = vmatpush1.bf16.msra.mxu0 0
    %1835 = vmatprep.subr.bf16.mxu0 0
    %1836 = vmatpush1.bf16.msra.mxu0 %v1820
    %1837 = vmatprep.subr.bf16.mxu0 0
    %1838 = vmatpush1.bf16.msra.mxu0 %v1819
    %1839 = vmatprep.subr.bf16.mxu0 0
    %1840 = vmatpush2.bf16.msra.mxu0 0
    %1841 = vmatprep.subr.bf16.mxu0 0
    %1842 = vmatpush2.bf16.msra.mxu0 0
    %1843 = vmatprep.subr.bf16.mxu0 0
    %1844 = vmatpush2.bf16.msra.mxu0 0
    %1845 = vmatprep.subr.bf16.mxu0 0
    %1846 = vmatpush2.bf16.msra.mxu0 0
    %1847 = vmatprep.subr.bf16.mxu0 0
    %1848 = vmatpush2.bf16.msra.mxu0 0
    %1849 = vmatprep.subr.bf16.mxu0 0
    %1850 = vmatpush2.bf16.msra.mxu0 0
    %1851 = vmatprep.subr.bf16.mxu0 0
    %1852 = vmatpush2.bf16.msra.mxu0 0
    %1853 = vmatprep.subr.bf16.mxu0 0
    %1854 = vmatpush2.bf16.msra.mxu0 0
    %1855 = vmatprep.mubr.bf16.mxu0 0
    %1856 = vmatmul.mubr.bf16.gmra.mxu0 %v1647
    %v1857 = vpop.f32.mrf.mxu0
    %v1858 = vadd.f32 0.0, %v1857
    %v1859 = vpop.f32.mrf.mxu0
    %v1860 = vpop.f32.mrf.mxu0
    %v1861 = vpop.f32.mrf.mxu0
    %1862 = vdwg.mxu0
    %v1863 = vadd.f32 %v1806, %v1858
    %v1864 = vxor.u32 %v1689, 2147483648
    %v1865 = vmul.f32 %v1864, 1.442695
    %v1866 = vpow.pop %v1865
    %v1867 = vadd.f32 %v1866, 1.0
    %v1868 = vrcp.pop %v1867
    %v1869 = vmul.f32 1.0, %v1868
    %v1870 = vxor.u32 %v1747, 2147483648
    %v1871 = vmul.f32 %v1870, 1.442695
    %v1872 = vpow.pop %v1871
    %v1873 = vadd.f32 %v1872, 1.0
    %v1874 = vrcp.pop %v1873
    %v1875 = vmul.f32 1.0, %v1874
    %v1876 = vtanh.pop %v1805
    %v1877 = vxor.u32 %v1863, 2147483648
    %v1878 = vmul.f32 %v1877, 1.442695
    %v1879 = vpow.pop %v1878
    %v1880 = vadd.f32 %v1879, 1.0
    %v1881 = vrcp.pop %v1880
    %v1882 = vmul.f32 1.0, %v1881
    %v1883 = vmul.f32 %v1875, %v1624
    %v1884 = vmul.f32 %v1869, %v1876
    %v1885 = vadd.f32 %v1883, %v1884
    %v1886 = vtanh.pop %v1885
    %v1887 = vmul.f32 %v1882, %v1886
    %1888 = vst.msk [vmem:[#allocation2 + $0xa] sm:$0x3] %vm582, %v1887
    %v1889 = vpack.c.bf16 %v1887, %v1887
    %v1890 = vld [vmem:[#allocation3 + $0xc] sm:$0x3]
    %v1891 = vld [vmem:[#allocation4] sm:$0xf]
    %v1892 = vld [vmem:[#allocation4 + $0x4] sm:$0xf]
    %v1893 = vld [vmem:[#allocation4 + $0x8] sm:$0xf]
    %v1894 = vld [vmem:[#allocation4 + $0xc] sm:$0xf]
    %v1899 = vunpack.c.l.b16 %v1891
    %v1900 = vunpack.c.l.b16 %v1892
    %v1901 = vunpack.c.l.b16 %v1893
    %v1902 = vunpack.c.l.b16 %v1894
    %v1903 = vpack.c.b16 %v1900, %v1899
    %v1904 = vpack.c.b16 %v1902, %v1901
    %v1908 = vsel %vm146, %v1889, 0
    %1910 = vmatprep.subr.bf16.mxu0 0
    %1911 = vmatpush1.bf16.msra.mxu0 0
    %1912 = vmatprep.subr.bf16.mxu0 0
    %1913 = vmatpush1.bf16.msra.mxu0 0
    %1914 = vmatprep.subr.bf16.mxu0 0
    %1915 = vmatpush1.bf16.msra.mxu0 0
    %1916 = vmatprep.subr.bf16.mxu0 0
    %1917 = vmatpush1.bf16.msra.mxu0 0
    %1918 = vmatprep.subr.bf16.mxu0 0
    %1919 = vmatpush1.bf16.msra.mxu0 0
    %1920 = vmatprep.subr.bf16.mxu0 0
    %1921 = vmatpush1.bf16.msra.mxu0 0
    %1922 = vmatprep.subr.bf16.mxu0 0
    %1923 = vmatpush1.bf16.msra.mxu0 %v1904
    %1924 = vmatprep.subr.bf16.mxu0 0
    %1925 = vmatpush1.bf16.msra.mxu0 %v1903
    %1926 = vmatprep.subr.bf16.mxu0 0
    %1927 = vmatpush2.bf16.msra.mxu0 0
    %1928 = vmatprep.subr.bf16.mxu0 0
    %1929 = vmatpush2.bf16.msra.mxu0 0
    %1930 = vmatprep.subr.bf16.mxu0 0
    %1931 = vmatpush2.bf16.msra.mxu0 0
    %1932 = vmatprep.subr.bf16.mxu0 0
    %1933 = vmatpush2.bf16.msra.mxu0 0
    %1934 = vmatprep.subr.bf16.mxu0 0
    %1935 = vmatpush2.bf16.msra.mxu0 0
    %1936 = vmatprep.subr.bf16.mxu0 0
    %1937 = vmatpush2.bf16.msra.mxu0 0
    %1938 = vmatprep.subr.bf16.mxu0 0
    %1939 = vmatpush2.bf16.msra.mxu0 0
    %1940 = vmatprep.subr.bf16.mxu0 0
    %1941 = vmatpush2.bf16.msra.mxu0 0
    %1942 = vmatprep.mubr.bf16.mxu0 0
    %1943 = vmatmul.mubr.bf16.gmra.mxu0 %v1908
    %v1944 = vpop.f32.mrf.mxu0
    %v1945 = vadd.f32 0.0, %v1944
    %v1946 = vpop.f32.mrf.mxu0
    %v1947 = vpop.f32.mrf.mxu0
    %v1948 = vpop.f32.mrf.mxu0
    %1949 = vdwg.mxu0
    %v1950 = vadd.f32 %v1890, %v1945
    %v1951 = vld [vmem:[%s203 + $0xc] sm:$0x3]
    %v1952 = vld [vmem:[%s382] sm:$0xf]
    %v1953 = vld [vmem:[%s382 + $0x4] sm:$0xf]
    %v1954 = vld [vmem:[%s382 + $0x8] sm:$0xf]
    %v1955 = vld [vmem:[%s382 + $0xc] sm:$0xf]
    %v1960 = vunpack.c.l.b16 %v1952
    %v1961 = vunpack.c.l.b16 %v1953
    %v1962 = vunpack.c.l.b16 %v1954
    %v1963 = vunpack.c.l.b16 %v1955
    %v1964 = vpack.c.b16 %v1961, %v1960
    %v1965 = vpack.c.b16 %v1963, %v1962
    %1968 = vmatprep.subr.bf16.mxu0 0
    %1969 = vmatpush1.bf16.msra.mxu0 0
    %1970 = vmatprep.subr.bf16.mxu0 0
    %1971 = vmatpush1.bf16.msra.mxu0 0
    %1972 = vmatprep.subr.bf16.mxu0 0
    %1973 = vmatpush1.bf16.msra.mxu0 0
    %1974 = vmatprep.subr.bf16.mxu0 0
    %1975 = vmatpush1.bf16.msra.mxu0 0
    %1976 = vmatprep.subr.bf16.mxu0 0
    %1977 = vmatpush1.bf16.msra.mxu0 0
    %1978 = vmatprep.subr.bf16.mxu0 0
    %1979 = vmatpush1.bf16.msra.mxu0 0
    %1980 = vmatprep.subr.bf16.mxu0 0
    %1981 = vmatpush1.bf16.msra.mxu0 %v1965
    %1982 = vmatprep.subr.bf16.mxu0 0
    %1983 = vmatpush1.bf16.msra.mxu0 %v1964
    %1984 = vmatprep.subr.bf16.mxu0 0
    %1985 = vmatpush2.bf16.msra.mxu0 0
    %1986 = vmatprep.subr.bf16.mxu0 0
    %1987 = vmatpush2.bf16.msra.mxu0 0
    %1988 = vmatprep.subr.bf16.mxu0 0
    %1989 = vmatpush2.bf16.msra.mxu0 0
    %1990 = vmatprep.subr.bf16.mxu0 0
    %1991 = vmatpush2.bf16.msra.mxu0 0
    %1992 = vmatprep.subr.bf16.mxu0 0
    %1993 = vmatpush2.bf16.msra.mxu0 0
    %1994 = vmatprep.subr.bf16.mxu0 0
    %1995 = vmatpush2.bf16.msra.mxu0 0
    %1996 = vmatprep.subr.bf16.mxu0 0
    %1997 = vmatpush2.bf16.msra.mxu0 0
    %1998 = vmatprep.subr.bf16.mxu0 0
    %1999 = vmatpush2.bf16.msra.mxu0 0
    %2000 = vmatprep.mubr.bf16.mxu0 0
    %2001 = vmatmul.mubr.bf16.gmra.mxu0 %v1908
    %v2002 = vpop.f32.mrf.mxu0
    %v2003 = vadd.f32 0.0, %v2002
    %v2004 = vpop.f32.mrf.mxu0
    %v2005 = vpop.f32.mrf.mxu0
    %v2006 = vpop.f32.mrf.mxu0
    %2007 = vdwg.mxu0
    %v2008 = vadd.f32 %v1951, %v2003
    %v2009 = vld [vmem:[%s260 + $0xc] sm:$0x3]
    %v2010 = vld [vmem:[%s441] sm:$0xf]
    %v2011 = vld [vmem:[%s441 + $0x4] sm:$0xf]
    %v2012 = vld [vmem:[%s441 + $0x8] sm:$0xf]
    %v2013 = vld [vmem:[%s441 + $0xc] sm:$0xf]
    %v2018 = vunpack.c.l.b16 %v2010
    %v2019 = vunpack.c.l.b16 %v2011
    %v2020 = vunpack.c.l.b16 %v2012
    %v2021 = vunpack.c.l.b16 %v2013
    %v2022 = vpack.c.b16 %v2019, %v2018
    %v2023 = vpack.c.b16 %v2021, %v2020
    %2026 = vmatprep.subr.bf16.mxu0 0
    %2027 = vmatpush1.bf16.msra.mxu0 0
    %2028 = vmatprep.subr.bf16.mxu0 0
    %2029 = vmatpush1.bf16.msra.mxu0 0
    %2030 = vmatprep.subr.bf16.mxu0 0
    %2031 = vmatpush1.bf16.msra.mxu0 0
    %2032 = vmatprep.subr.bf16.mxu0 0
    %2033 = vmatpush1.bf16.msra.mxu0 0
    %2034 = vmatprep.subr.bf16.mxu0 0
    %2035 = vmatpush1.bf16.msra.mxu0 0
    %2036 = vmatprep.subr.bf16.mxu0 0
    %2037 = vmatpush1.bf16.msra.mxu0 0
    %2038 = vmatprep.subr.bf16.mxu0 0
    %2039 = vmatpush1.bf16.msra.mxu0 %v2023
    %2040 = vmatprep.subr.bf16.mxu0 0
    %2041 = vmatpush1.bf16.msra.mxu0 %v2022
    %2042 = vmatprep.subr.bf16.mxu0 0
    %2043 = vmatpush2.bf16.msra.mxu0 0
    %2044 = vmatprep.subr.bf16.mxu0 0
    %2045 = vmatpush2.bf16.msra.mxu0 0
    %2046 = vmatprep.subr.bf16.mxu0 0
    %2047 = vmatpush2.bf16.msra.mxu0 0
    %2048 = vmatprep.subr.bf16.mxu0 0
    %2049 = vmatpush2.bf16.msra.mxu0 0
    %2050 = vmatprep.subr.bf16.mxu0 0
    %2051 = vmatpush2.bf16.msra.mxu0 0
    %2052 = vmatprep.subr.bf16.mxu0 0
    %2053 = vmatpush2.bf16.msra.mxu0 0
    %2054 = vmatprep.subr.bf16.mxu0 0
    %2055 = vmatpush2.bf16.msra.mxu0 0
    %2056 = vmatprep.subr.bf16.mxu0 0
    %2057 = vmatpush2.bf16.msra.mxu0 0
    %2058 = vmatprep.mubr.bf16.mxu0 0
    %2059 = vmatmul.mubr.bf16.gmra.mxu0 %v1908
    %v2060 = vpop.f32.mrf.mxu0
    %v2061 = vadd.f32 0.0, %v2060
    %v2062 = vpop.f32.mrf.mxu0
    %v2063 = vpop.f32.mrf.mxu0
    %v2064 = vpop.f32.mrf.mxu0
    %2065 = vdwg.mxu0
    %v2066 = vadd.f32 %v2009, %v2061
    %v2067 = vld [vmem:[%s317 + $0xc] sm:$0x3]
    %v2068 = vld [vmem:[%s500] sm:$0xf]
    %v2069 = vld [vmem:[%s500 + $0x4] sm:$0xf]
    %v2070 = vld [vmem:[%s500 + $0x8] sm:$0xf]
    %v2071 = vld [vmem:[%s500 + $0xc] sm:$0xf]
    %v2076 = vunpack.c.l.b16 %v2068
    %v2077 = vunpack.c.l.b16 %v2069
    %v2078 = vunpack.c.l.b16 %v2070
    %v2079 = vunpack.c.l.b16 %v2071
    %v2080 = vpack.c.b16 %v2077, %v2076
    %v2081 = vpack.c.b16 %v2079, %v2078
    %2084 = vmatprep.subr.bf16.mxu0 0
    %2085 = vmatpush1.bf16.msra.mxu0 0
    %2086 = vmatprep.subr.bf16.mxu0 0
    %2087 = vmatpush1.bf16.msra.mxu0 0
    %2088 = vmatprep.subr.bf16.mxu0 0
    %2089 = vmatpush1.bf16.msra.mxu0 0
    %2090 = vmatprep.subr.bf16.mxu0 0
    %2091 = vmatpush1.bf16.msra.mxu0 0
    %2092 = vmatprep.subr.bf16.mxu0 0
    %2093 = vmatpush1.bf16.msra.mxu0 0
    %2094 = vmatprep.subr.bf16.mxu0 0
    %2095 = vmatpush1.bf16.msra.mxu0 0
    %2096 = vmatprep.subr.bf16.mxu0 0
    %2097 = vmatpush1.bf16.msra.mxu0 %v2081
    %2098 = vmatprep.subr.bf16.mxu0 0
    %2099 = vmatpush1.bf16.msra.mxu0 %v2080
    %2100 = vmatprep.subr.bf16.mxu0 0
    %2101 = vmatpush2.bf16.msra.mxu0 0
    %2102 = vmatprep.subr.bf16.mxu0 0
    %2103 = vmatpush2.bf16.msra.mxu0 0
    %2104 = vmatprep.subr.bf16.mxu0 0
    %2105 = vmatpush2.bf16.msra.mxu0 0
    %2106 = vmatprep.subr.bf16.mxu0 0
    %2107 = vmatpush2.bf16.msra.mxu0 0
    %2108 = vmatprep.subr.bf16.mxu0 0
    %2109 = vmatpush2.bf16.msra.mxu0 0
    %2110 = vmatprep.subr.bf16.mxu0 0
    %2111 = vmatpush2.bf16.msra.mxu0 0
    %2112 = vmatprep.subr.bf16.mxu0 0
    %2113 = vmatpush2.bf16.msra.mxu0 0
    %2114 = vmatprep.subr.bf16.mxu0 0
    %2115 = vmatpush2.bf16.msra.mxu0 0
    %2116 = vmatprep.mubr.bf16.mxu0 0
    %2117 = vmatmul.mubr.bf16.gmra.mxu0 %v1908
    %v2118 = vpop.f32.mrf.mxu0
    %v2119 = vadd.f32 0.0, %v2118
    %v2120 = vpop.f32.mrf.mxu0
    %v2121 = vpop.f32.mrf.mxu0
    %v2122 = vpop.f32.mrf.mxu0
    %2123 = vdwg.mxu0
    %v2124 = vadd.f32 %v2067, %v2119
    %v2125 = vxor.u32 %v1950, 2147483648
    %v2126 = vmul.f32 %v2125, 1.442695
    %v2127 = vpow.pop %v2126
    %v2128 = vadd.f32 %v2127, 1.0
    %v2129 = vrcp.pop %v2128
    %v2130 = vmul.f32 1.0, %v2129
    %v2131 = vxor.u32 %v2008, 2147483648
    %v2132 = vmul.f32 %v2131, 1.442695
    %v2133 = vpow.pop %v2132
    %v2134 = vadd.f32 %v2133, 1.0
    %v2135 = vrcp.pop %v2134
    %v2136 = vmul.f32 1.0, %v2135
    %v2137 = vtanh.pop %v2066
    %v2138 = vxor.u32 %v2124, 2147483648
    %v2139 = vmul.f32 %v2138, 1.442695
    %v2140 = vpow.pop %v2139
    %v2141 = vadd.f32 %v2140, 1.0
    %v2142 = vrcp.pop %v2141
    %v2143 = vmul.f32 1.0, %v2142
    %v2144 = vmul.f32 %v2136, %v1885
    %v2145 = vmul.f32 %v2130, %v2137
    %v2146 = vadd.f32 %v2144, %v2145
    %v2147 = vtanh.pop %v2146
    %v2148 = vmul.f32 %v2143, %v2147
    %2149 = vst.msk [vmem:[#allocation2 + $0xc] sm:$0x3] %vm582, %v2148
    %v2150 = vpack.c.bf16 %v2148, %v2148
    %v2151 = vld [vmem:[#allocation3 + $0xe] sm:$0x3]
    %v2152 = vld [vmem:[#allocation4] sm:$0xf]
    %v2153 = vld [vmem:[#allocation4 + $0x4] sm:$0xf]
    %v2154 = vld [vmem:[#allocation4 + $0x8] sm:$0xf]
    %v2155 = vld [vmem:[#allocation4 + $0xc] sm:$0xf]
    %v2160 = vunpack.c.l.b16 %v2152
    %v2161 = vunpack.c.l.b16 %v2153
    %v2162 = vunpack.c.l.b16 %v2154
    %v2163 = vunpack.c.l.b16 %v2155
    %v2164 = vpack.c.b16 %v2161, %v2160
    %v2165 = vpack.c.b16 %v2163, %v2162
    %v2169 = vsel %vm146, %v2150, 0
    %2171 = vmatprep.subr.bf16.mxu0 0
    %2172 = vmatpush1.bf16.msra.mxu0 0
    %2173 = vmatprep.subr.bf16.mxu0 0
    %2174 = vmatpush1.bf16.msra.mxu0 0
    %2175 = vmatprep.subr.bf16.mxu0 0
    %2176 = vmatpush1.bf16.msra.mxu0 0
    %2177 = vmatprep.subr.bf16.mxu0 0
    %2178 = vmatpush1.bf16.msra.mxu0 0
    %2179 = vmatprep.subr.bf16.mxu0 0
    %2180 = vmatpush1.bf16.msra.mxu0 0
    %2181 = vmatprep.subr.bf16.mxu0 0
    %2182 = vmatpush1.bf16.msra.mxu0 0
    %2183 = vmatprep.subr.bf16.mxu0 0
    %2184 = vmatpush1.bf16.msra.mxu0 %v2165
    %2185 = vmatprep.subr.bf16.mxu0 0
    %2186 = vmatpush1.bf16.msra.mxu0 %v2164
    %2187 = vmatprep.subr.bf16.mxu0 0
    %2188 = vmatpush2.bf16.msra.mxu0 0
    %2189 = vmatprep.subr.bf16.mxu0 0
    %2190 = vmatpush2.bf16.msra.mxu0 0
    %2191 = vmatprep.subr.bf16.mxu0 0
    %2192 = vmatpush2.bf16.msra.mxu0 0
    %2193 = vmatprep.subr.bf16.mxu0 0
    %2194 = vmatpush2.bf16.msra.mxu0 0
    %2195 = vmatprep.subr.bf16.mxu0 0
    %2196 = vmatpush2.bf16.msra.mxu0 0
    %2197 = vmatprep.subr.bf16.mxu0 0
    %2198 = vmatpush2.bf16.msra.mxu0 0
    %2199 = vmatprep.subr.bf16.mxu0 0
    %2200 = vmatpush2.bf16.msra.mxu0 0
    %2201 = vmatprep.subr.bf16.mxu0 0
    %2202 = vmatpush2.bf16.msra.mxu0 0
    %2203 = vmatprep.mubr.bf16.mxu0 0
    %2204 = vmatmul.mubr.bf16.gmra.mxu0 %v2169
    %v2205 = vpop.f32.mrf.mxu0
    %v2206 = vadd.f32 0.0, %v2205
    %v2207 = vpop.f32.mrf.mxu0
    %v2208 = vpop.f32.mrf.mxu0
    %v2209 = vpop.f32.mrf.mxu0
    %2210 = vdwg.mxu0
    %v2211 = vadd.f32 %v2151, %v2206
    %v2212 = vld [vmem:[%s203 + $0xe] sm:$0x3]
    %v2213 = vld [vmem:[%s382] sm:$0xf]
    %v2214 = vld [vmem:[%s382 + $0x4] sm:$0xf]
    %v2215 = vld [vmem:[%s382 + $0x8] sm:$0xf]
    %v2216 = vld [vmem:[%s382 + $0xc] sm:$0xf]
    %v2221 = vunpack.c.l.b16 %v2213
    %v2222 = vunpack.c.l.b16 %v2214
    %v2223 = vunpack.c.l.b16 %v2215
    %v2224 = vunpack.c.l.b16 %v2216
    %v2225 = vpack.c.b16 %v2222, %v2221
    %v2226 = vpack.c.b16 %v2224, %v2223
    %2229 = vmatprep.subr.bf16.mxu0 0
    %2230 = vmatpush1.bf16.msra.mxu0 0
    %2231 = vmatprep.subr.bf16.mxu0 0
    %2232 = vmatpush1.bf16.msra.mxu0 0
    %2233 = vmatprep.subr.bf16.mxu0 0
    %2234 = vmatpush1.bf16.msra.mxu0 0
    %2235 = vmatprep.subr.bf16.mxu0 0
    %2236 = vmatpush1.bf16.msra.mxu0 0
    %2237 = vmatprep.subr.bf16.mxu0 0
    %2238 = vmatpush1.bf16.msra.mxu0 0
    %2239 = vmatprep.subr.bf16.mxu0 0
    %2240 = vmatpush1.bf16.msra.mxu0 0
    %2241 = vmatprep.subr.bf16.mxu0 0
    %2242 = vmatpush1.bf16.msra.mxu0 %v2226
    %2243 = vmatprep.subr.bf16.mxu0 0
    %2244 = vmatpush1.bf16.msra.mxu0 %v2225
    %2245 = vmatprep.subr.bf16.mxu0 0
    %2246 = vmatpush2.bf16.msra.mxu0 0
    %2247 = vmatprep.subr.bf16.mxu0 0
    %2248 = vmatpush2.bf16.msra.mxu0 0
    %2249 = vmatprep.subr.bf16.mxu0 0
    %2250 = vmatpush2.bf16.msra.mxu0 0
    %2251 = vmatprep.subr.bf16.mxu0 0
    %2252 = vmatpush2.bf16.msra.mxu0 0
    %2253 = vmatprep.subr.bf16.mxu0 0
    %2254 = vmatpush2.bf16.msra.mxu0 0
    %2255 = vmatprep.subr.bf16.mxu0 0
    %2256 = vmatpush2.bf16.msra.mxu0 0
    %2257 = vmatprep.subr.bf16.mxu0 0
    %2258 = vmatpush2.bf16.msra.mxu0 0
    %2259 = vmatprep.subr.bf16.mxu0 0
    %2260 = vmatpush2.bf16.msra.mxu0 0
    %2261 = vmatprep.mubr.bf16.mxu0 0
    %2262 = vmatmul.mubr.bf16.gmra.mxu0 %v2169
    %v2263 = vpop.f32.mrf.mxu0
    %v2264 = vadd.f32 0.0, %v2263
    %v2265 = vpop.f32.mrf.mxu0
    %v2266 = vpop.f32.mrf.mxu0
    %v2267 = vpop.f32.mrf.mxu0
    %2268 = vdwg.mxu0
    %v2269 = vadd.f32 %v2212, %v2264
    %v2270 = vld [vmem:[%s260 + $0xe] sm:$0x3]
    %v2271 = vld [vmem:[%s441] sm:$0xf]
    %v2272 = vld [vmem:[%s441 + $0x4] sm:$0xf]
    %v2273 = vld [vmem:[%s441 + $0x8] sm:$0xf]
    %v2274 = vld [vmem:[%s441 + $0xc] sm:$0xf]
    %v2279 = vunpack.c.l.b16 %v2271
    %v2280 = vunpack.c.l.b16 %v2272
    %v2281 = vunpack.c.l.b16 %v2273
    %v2282 = vunpack.c.l.b16 %v2274
    %v2283 = vpack.c.b16 %v2280, %v2279
    %v2284 = vpack.c.b16 %v2282, %v2281
    %2287 = vmatprep.subr.bf16.mxu0 0
    %2288 = vmatpush1.bf16.msra.mxu0 0
    %2289 = vmatprep.subr.bf16.mxu0 0
    %2290 = vmatpush1.bf16.msra.mxu0 0
    %2291 = vmatprep.subr.bf16.mxu0 0
    %2292 = vmatpush1.bf16.msra.mxu0 0
    %2293 = vmatprep.subr.bf16.mxu0 0
    %2294 = vmatpush1.bf16.msra.mxu0 0
    %2295 = vmatprep.subr.bf16.mxu0 0
    %2296 = vmatpush1.bf16.msra.mxu0 0
    %2297 = vmatprep.subr.bf16.mxu0 0
    %2298 = vmatpush1.bf16.msra.mxu0 0
    %2299 = vmatprep.subr.bf16.mxu0 0
    %2300 = vmatpush1.bf16.msra.mxu0 %v2284
    %2301 = vmatprep.subr.bf16.mxu0 0
    %2302 = vmatpush1.bf16.msra.mxu0 %v2283
    %2303 = vmatprep.subr.bf16.mxu0 0
    %2304 = vmatpush2.bf16.msra.mxu0 0
    %2305 = vmatprep.subr.bf16.mxu0 0
    %2306 = vmatpush2.bf16.msra.mxu0 0
    %2307 = vmatprep.subr.bf16.mxu0 0
    %2308 = vmatpush2.bf16.msra.mxu0 0
    %2309 = vmatprep.subr.bf16.mxu0 0
    %2310 = vmatpush2.bf16.msra.mxu0 0
    %2311 = vmatprep.subr.bf16.mxu0 0
    %2312 = vmatpush2.bf16.msra.mxu0 0
    %2313 = vmatprep.subr.bf16.mxu0 0
    %2314 = vmatpush2.bf16.msra.mxu0 0
    %2315 = vmatprep.subr.bf16.mxu0 0
    %2316 = vmatpush2.bf16.msra.mxu0 0
    %2317 = vmatprep.subr.bf16.mxu0 0
    %2318 = vmatpush2.bf16.msra.mxu0 0
    %2319 = vmatprep.mubr.bf16.mxu0 0
    %2320 = vmatmul.mubr.bf16.gmra.mxu0 %v2169
    %v2321 = vpop.f32.mrf.mxu0
    %v2322 = vadd.f32 0.0, %v2321
    %v2323 = vpop.f32.mrf.mxu0
    %v2324 = vpop.f32.mrf.mxu0
    %v2325 = vpop.f32.mrf.mxu0
    %2326 = vdwg.mxu0
    %v2327 = vadd.f32 %v2270, %v2322
    %v2328 = vld [vmem:[%s317 + $0xe] sm:$0x3]
    %v2329 = vld [vmem:[%s500] sm:$0xf]
    %v2330 = vld [vmem:[%s500 + $0x4] sm:$0xf]
    %v2331 = vld [vmem:[%s500 + $0x8] sm:$0xf]
    %v2332 = vld [vmem:[%s500 + $0xc] sm:$0xf]
    %v2337 = vunpack.c.l.b16 %v2329
    %v2338 = vunpack.c.l.b16 %v2330
    %v2339 = vunpack.c.l.b16 %v2331
    %v2340 = vunpack.c.l.b16 %v2332
    %v2341 = vpack.c.b16 %v2338, %v2337
    %v2342 = vpack.c.b16 %v2340, %v2339
    %2345 = vmatprep.subr.bf16.mxu0 0
    %2346 = vmatpush1.bf16.msra.mxu0 0
    %2347 = vmatprep.subr.bf16.mxu0 0
    %2348 = vmatpush1.bf16.msra.mxu0 0
    %2349 = vmatprep.subr.bf16.mxu0 0
    %2350 = vmatpush1.bf16.msra.mxu0 0
    %2351 = vmatprep.subr.bf16.mxu0 0
    %2352 = vmatpush1.bf16.msra.mxu0 0
    %2353 = vmatprep.subr.bf16.mxu0 0
    %2354 = vmatpush1.bf16.msra.mxu0 0
    %2355 = vmatprep.subr.bf16.mxu0 0
    %2356 = vmatpush1.bf16.msra.mxu0 0
    %2357 = vmatprep.subr.bf16.mxu0 0
    %2358 = vmatpush1.bf16.msra.mxu0 %v2342
    %2359 = vmatprep.subr.bf16.mxu0 0
    %2360 = vmatpush1.bf16.msra.mxu0 %v2341
    %2361 = vmatprep.subr.bf16.mxu0 0
    %2362 = vmatpush2.bf16.msra.mxu0 0
    %2363 = vmatprep.subr.bf16.mxu0 0
    %2364 = vmatpush2.bf16.msra.mxu0 0
    %2365 = vmatprep.subr.bf16.mxu0 0
    %2366 = vmatpush2.bf16.msra.mxu0 0
    %2367 = vmatprep.subr.bf16.mxu0 0
    %2368 = vmatpush2.bf16.msra.mxu0 0
    %2369 = vmatprep.subr.bf16.mxu0 0
    %2370 = vmatpush2.bf16.msra.mxu0 0
    %2371 = vmatprep.subr.bf16.mxu0 0
    %2372 = vmatpush2.bf16.msra.mxu0 0
    %2373 = vmatprep.subr.bf16.mxu0 0
    %2374 = vmatpush2.bf16.msra.mxu0 0
    %2375 = vmatprep.subr.bf16.mxu0 0
    %2376 = vmatpush2.bf16.msra.mxu0 0
    %2377 = vmatprep.mubr.bf16.mxu0 0
    %2378 = vmatmul.mubr.bf16.gmra.mxu0 %v2169
    %v2379 = vpop.f32.mrf.mxu0
    %v2380 = vadd.f32 0.0, %v2379
    %v2381 = vpop.f32.mrf.mxu0
    %v2382 = vpop.f32.mrf.mxu0
    %v2383 = vpop.f32.mrf.mxu0
    %2384 = vdwg.mxu0
    %v2385 = vadd.f32 %v2328, %v2380
    %v2386 = vxor.u32 %v2211, 2147483648
    %v2387 = vmul.f32 %v2386, 1.442695
    %v2388 = vpow.pop %v2387
    %v2389 = vadd.f32 %v2388, 1.0
    %v2390 = vrcp.pop %v2389
    %v2391 = vmul.f32 1.0, %v2390
    %v2392 = vxor.u32 %v2269, 2147483648
    %v2393 = vmul.f32 %v2392, 1.442695
    %v2394 = vpow.pop %v2393
    %v2395 = vadd.f32 %v2394, 1.0
    %v2396 = vrcp.pop %v2395
    %v2397 = vmul.f32 1.0, %v2396
    %v2398 = vtanh.pop %v2327
    %v2399 = vxor.u32 %v2385, 2147483648
    %v2400 = vmul.f32 %v2399, 1.442695
    %v2401 = vpow.pop %v2400
    %v2402 = vadd.f32 %v2401, 1.0
    %v2403 = vrcp.pop %v2402
    %v2404 = vmul.f32 1.0, %v2403
    %v2405 = vmul.f32 %v2397, %v2146
    %v2406 = vmul.f32 %v2391, %v2398
    %v2407 = vadd.f32 %v2405, %v2406
    %v2408 = vtanh.pop %v2407
    %v2409 = vmul.f32 %v2404, %v2408
    %2410 = vst.msk [vmem:[#allocation2 + $0xe] sm:$0x3] %vm582, %v2409
    %v2411 = vld [vmem:[#allocation2] sm:$0xff]
    %v2412 = vld [vmem:[#allocation2 + $0x8] sm:$0xff]
    %v2413 = vpack.c.bf16 %v2412, %v2411
    %v2414 = vld [vmem:[#allocation6] sm:$0xf]
    %v2415 = vld [vmem:[#allocation6 + $0x4] sm:$0xf]
    %v2416 = vld [vmem:[#allocation6 + $0x8] sm:$0xf]
    %v2417 = vld [vmem:[#allocation6 + $0xc] sm:$0xf]
    %v2418 = vld [vmem:[%s6] sm:$0x1]
    %v2420 = vlaneseq
    %v2421 = vshrl.u32 %v2420, 7
    %v2422 = vsub.s32 0, %v2421
    %v2423 = vrot.slane %v2418, %v2422
    %v2429 = vunpack.c.l.b16 %v2414
    %v2430 = vunpack.c.l.b16 %v2415
    %v2431 = vunpack.c.l.b16 %v2416
    %v2432 = vunpack.c.l.b16 %v2417
    %v2433 = vpack.c.b16 %v2430, %v2429
    %v2434 = vpack.c.b16 %v2432, %v2431
    %v2438 = vsel %vm146, %v2413, 0
    %2440 = vmatprep.subr.bf16.mxu0 0
    %2441 = vmatpush1.bf16.msra.mxu0 0
    %2442 = vmatprep.subr.bf16.mxu0 0
    %2443 = vmatpush1.bf16.msra.mxu0 0
    %2444 = vmatprep.subr.bf16.mxu0 0
    %2445 = vmatpush1.bf16.msra.mxu0 0
    %2446 = vmatprep.subr.bf16.mxu0 0
    %2447 = vmatpush1.bf16.msra.mxu0 0
    %2448 = vmatprep.subr.bf16.mxu0 0
    %2449 = vmatpush1.bf16.msra.mxu0 0
    %2450 = vmatprep.subr.bf16.mxu0 0
    %2451 = vmatpush1.bf16.msra.mxu0 0
    %2452 = vmatprep.subr.bf16.mxu0 0
    %2453 = vmatpush1.bf16.msra.mxu0 %v2434
    %2454 = vmatprep.subr.bf16.mxu0 0
    %2455 = vmatpush1.bf16.msra.mxu0 %v2433
    %2456 = vmatprep.subr.bf16.mxu0 0
    %2457 = vmatpush2.bf16.msra.mxu0 0
    %2458 = vmatprep.subr.bf16.mxu0 0
    %2459 = vmatpush2.bf16.msra.mxu0 0
    %2460 = vmatprep.subr.bf16.mxu0 0
    %2461 = vmatpush2.bf16.msra.mxu0 0
    %2462 = vmatprep.subr.bf16.mxu0 0
    %2463 = vmatpush2.bf16.msra.mxu0 0
    %2464 = vmatprep.subr.bf16.mxu0 0
    %2465 = vmatpush2.bf16.msra.mxu0 0
    %2466 = vmatprep.subr.bf16.mxu0 0
    %2467 = vmatpush2.bf16.msra.mxu0 0
    %2468 = vmatprep.subr.bf16.mxu0 0
    %2469 = vmatpush2.bf16.msra.mxu0 0
    %2470 = vmatprep.subr.bf16.mxu0 0
    %2471 = vmatpush2.bf16.msra.mxu0 0
    %2472 = vmatprep.mubr.bf16.mxu0 0
    %2473 = vmatmul.mubr.bf16.gmra.mxu0 %v2438
    %v2474 = vpop.f32.mrf.mxu0
    %v2475 = vadd.f32 %v2423, %v2474
    %v2476 = vpop.f32.mrf.mxu0
    %v2477 = vpop.f32.mrf.mxu0
    %v2478 = vadd.f32 %v2423, %v2477
    %v2479 = vpop.f32.mrf.mxu0
    %2480 = vdwg.mxu0
    %2481 = vst.msk [vmem:[#allocation3] sm:$0xff] %vm146, %v2475
    %2482 = vst.msk [vmem:[#allocation3 + $0x8] sm:$0xff] %vm146, %v2478
    %s2483 = scalar_lea.vmem [#allocation6], 16
    %v2484 = vld [vmem:[%s2483] sm:$0xf]
    %v2485 = vld [vmem:[%s2483 + $0x4] sm:$0xf]
    %v2486 = vld [vmem:[%s2483 + $0x8] sm:$0xf]
    %v2487 = vld [vmem:[%s2483 + $0xc] sm:$0xf]
    %s2488 = scalar_lea.vmem %s6, 1
    %v2489 = vld [vmem:[%s2488] sm:$0x1]
    %v2491 = vlaneseq
    %v2492 = vshrl.u32 %v2491, 7
    %v2493 = vsub.s32 0, %v2492
    %v2494 = vrot.slane %v2489, %v2493
    %v2500 = vunpack.c.l.b16 %v2484
    %v2501 = vunpack.c.l.b16 %v2485
    %v2502 = vunpack.c.l.b16 %v2486
    %v2503 = vunpack.c.l.b16 %v2487
    %v2504 = vpack.c.b16 %v2501, %v2500
    %v2505 = vpack.c.b16 %v2503, %v2502
    %2508 = vmatprep.subr.bf16.mxu0 0
    %2509 = vmatpush1.bf16.msra.mxu0 0
    %2510 = vmatprep.subr.bf16.mxu0 0
    %2511 = vmatpush1.bf16.msra.mxu0 0
    %2512 = vmatprep.subr.bf16.mxu0 0
    %2513 = vmatpush1.bf16.msra.mxu0 0
    %2514 = vmatprep.subr.bf16.mxu0 0
    %2515 = vmatpush1.bf16.msra.mxu0 0
    %2516 = vmatprep.subr.bf16.mxu0 0
    %2517 = vmatpush1.bf16.msra.mxu0 0
    %2518 = vmatprep.subr.bf16.mxu0 0
    %2519 = vmatpush1.bf16.msra.mxu0 0
    %2520 = vmatprep.subr.bf16.mxu0 0
    %2521 = vmatpush1.bf16.msra.mxu0 %v2505
    %2522 = vmatprep.subr.bf16.mxu0 0
    %2523 = vmatpush1.bf16.msra.mxu0 %v2504
    %2524 = vmatprep.subr.bf16.mxu0 0
    %2525 = vmatpush2.bf16.msra.mxu0 0
    %2526 = vmatprep.subr.bf16.mxu0 0
    %2527 = vmatpush2.bf16.msra.mxu0 0
    %2528 = vmatprep.subr.bf16.mxu0 0
    %2529 = vmatpush2.bf16.msra.mxu0 0
    %2530 = vmatprep.subr.bf16.mxu0 0
    %2531 = vmatpush2.bf16.msra.mxu0 0
    %2532 = vmatprep.subr.bf16.mxu0 0
    %2533 = vmatpush2.bf16.msra.mxu0 0
    %2534 = vmatprep.subr.bf16.mxu0 0
    %2535 = vmatpush2.bf16.msra.mxu0 0
    %2536 = vmatprep.subr.bf16.mxu0 0
    %2537 = vmatpush2.bf16.msra.mxu0 0
    %2538 = vmatprep.subr.bf16.mxu0 0
    %2539 = vmatpush2.bf16.msra.mxu0 0
    %2540 = vmatprep.mubr.bf16.mxu0 0
    %2541 = vmatmul.mubr.bf16.gmra.mxu0 %v2438
    %v2542 = vpop.f32.mrf.mxu0
    %v2543 = vadd.f32 %v2494, %v2542
    %v2544 = vpop.f32.mrf.mxu0
    %v2545 = vpop.f32.mrf.mxu0
    %v2546 = vadd.f32 %v2494, %v2545
    %v2547 = vpop.f32.mrf.mxu0
    %2548 = vdwg.mxu0
    %2549 = vst.msk [vmem:[%s203] sm:$0xff] %vm146, %v2543
    %2550 = vst.msk [vmem:[%s203 + $0x8] sm:$0xff] %vm146, %v2546
    %s2551 = scalar_lea.vmem [#allocation6], 32
    %v2552 = vld [vmem:[%s2551] sm:$0xf]
    %v2553 = vld [vmem:[%s2551 + $0x4] sm:$0xf]
    %v2554 = vld [vmem:[%s2551 + $0x8] sm:$0xf]
    %v2555 = vld [vmem:[%s2551 + $0xc] sm:$0xf]
    %s2556 = scalar_lea.vmem %s6, 2
    %v2557 = vld [vmem:[%s2556] sm:$0x1]
    %v2559 = vlaneseq
    %v2560 = vshrl.u32 %v2559, 7
    %v2561 = vsub.s32 0, %v2560
    %v2562 = vrot.slane %v2557, %v2561
    %v2568 = vunpack.c.l.b16 %v2552
    %v2569 = vunpack.c.l.b16 %v2553
    %v2570 = vunpack.c.l.b16 %v2554
    %v2571 = vunpack.c.l.b16 %v2555
    %v2572 = vpack.c.b16 %v2569, %v2568
    %v2573 = vpack.c.b16 %v2571, %v2570
    %2576 = vmatprep.subr.bf16.mxu0 0
    %2577 = vmatpush1.bf16.msra.mxu0 0
    %2578 = vmatprep.subr.bf16.mxu0 0
    %2579 = vmatpush1.bf16.msra.mxu0 0
    %2580 = vmatprep.subr.bf16.mxu0 0
    %2581 = vmatpush1.bf16.msra.mxu0 0
    %2582 = vmatprep.subr.bf16.mxu0 0
    %2583 = vmatpush1.bf16.msra.mxu0 0
    %2584 = vmatprep.subr.bf16.mxu0 0
    %2585 = vmatpush1.bf16.msra.mxu0 0
    %2586 = vmatprep.subr.bf16.mxu0 0
    %2587 = vmatpush1.bf16.msra.mxu0 0
    %2588 = vmatprep.subr.bf16.mxu0 0
    %2589 = vmatpush1.bf16.msra.mxu0 %v2573
    %2590 = vmatprep.subr.bf16.mxu0 0
    %2591 = vmatpush1.bf16.msra.mxu0 %v2572
    %2592 = vmatprep.subr.bf16.mxu0 0
    %2593 = vmatpush2.bf16.msra.mxu0 0
    %2594 = vmatprep.subr.bf16.mxu0 0
    %2595 = vmatpush2.bf16.msra.mxu0 0
    %2596 = vmatprep.subr.bf16.mxu0 0
    %2597 = vmatpush2.bf16.msra.mxu0 0
    %2598 = vmatprep.subr.bf16.mxu0 0
    %2599 = vmatpush2.bf16.msra.mxu0 0
    %2600 = vmatprep.subr.bf16.mxu0 0
    %2601 = vmatpush2.bf16.msra.mxu0 0
    %2602 = vmatprep.subr.bf16.mxu0 0
    %2603 = vmatpush2.bf16.msra.mxu0 0
    %2604 = vmatprep.subr.bf16.mxu0 0
    %2605 = vmatpush2.bf16.msra.mxu0 0
    %2606 = vmatprep.subr.bf16.mxu0 0
    %2607 = vmatpush2.bf16.msra.mxu0 0
    %2608 = vmatprep.mubr.bf16.mxu0 0
    %2609 = vmatmul.mubr.bf16.gmra.mxu0 %v2438
    %v2610 = vpop.f32.mrf.mxu0
    %v2611 = vadd.f32 %v2562, %v2610
    %v2612 = vpop.f32.mrf.mxu0
    %v2613 = vpop.f32.mrf.mxu0
    %v2614 = vadd.f32 %v2562, %v2613
    %v2615 = vpop.f32.mrf.mxu0
    %2616 = vdwg.mxu0
    %2617 = vst.msk [vmem:[%s260] sm:$0xff] %vm146, %v2611
    %2618 = vst.msk [vmem:[%s260 + $0x8] sm:$0xff] %vm146, %v2614
    %s2619 = scalar_lea.vmem [#allocation6], 48
    %v2620 = vld [vmem:[%s2619] sm:$0xf]
    %v2621 = vld [vmem:[%s2619 + $0x4] sm:$0xf]
    %v2622 = vld [vmem:[%s2619 + $0x8] sm:$0xf]
    %v2623 = vld [vmem:[%s2619 + $0xc] sm:$0xf]
    %s2624 = scalar_lea.vmem %s6, 3
    %v2625 = vld [vmem:[%s2624] sm:$0x1]
    %v2627 = vlaneseq
    %v2628 = vshrl.u32 %v2627, 7
    %v2629 = vsub.s32 0, %v2628
    %v2630 = vrot.slane %v2625, %v2629
    %v2636 = vunpack.c.l.b16 %v2620
    %v2637 = vunpack.c.l.b16 %v2621
    %v2638 = vunpack.c.l.b16 %v2622
    %v2639 = vunpack.c.l.b16 %v2623
    %v2640 = vpack.c.b16 %v2637, %v2636
    %v2641 = vpack.c.b16 %v2639, %v2638
    %2644 = vmatprep.subr.bf16.mxu0 0
    %2645 = vmatpush1.bf16.msra.mxu0 0
    %2646 = vmatprep.subr.bf16.mxu0 0
    %2647 = vmatpush1.bf16.msra.mxu0 0
    %2648 = vmatprep.subr.bf16.mxu0 0
    %2649 = vmatpush1.bf16.msra.mxu0 0
    %2650 = vmatprep.subr.bf16.mxu0 0
    %2651 = vmatpush1.bf16.msra.mxu0 0
    %2652 = vmatprep.subr.bf16.mxu0 0
    %2653 = vmatpush1.bf16.msra.mxu0 0
    %2654 = vmatprep.subr.bf16.mxu0 0
    %2655 = vmatpush1.bf16.msra.mxu0 0
    %2656 = vmatprep.subr.bf16.mxu0 0
    %2657 = vmatpush1.bf16.msra.mxu0 %v2641
    %2658 = vmatprep.subr.bf16.mxu0 0
    %2659 = vmatpush1.bf16.msra.mxu0 %v2640
    %2660 = vmatprep.subr.bf16.mxu0 0
    %2661 = vmatpush2.bf16.msra.mxu0 0
    %2662 = vmatprep.subr.bf16.mxu0 0
    %2663 = vmatpush2.bf16.msra.mxu0 0
    %2664 = vmatprep.subr.bf16.mxu0 0
    %2665 = vmatpush2.bf16.msra.mxu0 0
    %2666 = vmatprep.subr.bf16.mxu0 0
    %2667 = vmatpush2.bf16.msra.mxu0 0
    %2668 = vmatprep.subr.bf16.mxu0 0
    %2669 = vmatpush2.bf16.msra.mxu0 0
    %2670 = vmatprep.subr.bf16.mxu0 0
    %2671 = vmatpush2.bf16.msra.mxu0 0
    %2672 = vmatprep.subr.bf16.mxu0 0
    %2673 = vmatpush2.bf16.msra.mxu0 0
    %2674 = vmatprep.subr.bf16.mxu0 0
    %2675 = vmatpush2.bf16.msra.mxu0 0
    %2676 = vmatprep.mubr.bf16.mxu0 0
    %2677 = vmatmul.mubr.bf16.gmra.mxu0 %v2438
    %v2678 = vpop.f32.mrf.mxu0
    %v2679 = vadd.f32 %v2630, %v2678
    %v2680 = vpop.f32.mrf.mxu0
    %v2681 = vpop.f32.mrf.mxu0
    %v2682 = vadd.f32 %v2630, %v2681
    %v2683 = vpop.f32.mrf.mxu0
    %2684 = vdwg.mxu0
    %2685 = vst.msk [vmem:[%s317] sm:$0xff] %vm146, %v2679
    %2686 = vst.msk [vmem:[%s317 + $0x8] sm:$0xff] %vm146, %v2682
    %v2687 = vld [vmem:[#allocation3] sm:$0x3]
    %v2688 = vld [vmem:[#allocation8] sm:$0xf]
    %v2689 = vld [vmem:[#allocation8 + $0x4] sm:$0xf]
    %v2690 = vld [vmem:[#allocation8 + $0x8] sm:$0xf]
    %v2691 = vld [vmem:[#allocation8 + $0xc] sm:$0xf]
    %v2696 = vunpack.c.l.b16 %v2688
    %v2697 = vunpack.c.l.b16 %v2689
    %v2698 = vunpack.c.l.b16 %v2690
    %v2699 = vunpack.c.l.b16 %v2691
    %v2700 = vpack.c.b16 %v2697, %v2696
    %v2701 = vpack.c.b16 %v2699, %v2698
    %2704 = vmatprep.subr.bf16.mxu0 0
    %2705 = vmatpush1.bf16.msra.mxu0 0
    %2706 = vmatprep.subr.bf16.mxu0 0
    %2707 = vmatpush1.bf16.msra.mxu0 0
    %2708 = vmatprep.subr.bf16.mxu0 0
    %2709 = vmatpush1.bf16.msra.mxu0 0
    %2710 = vmatprep.subr.bf16.mxu0 0
    %2711 = vmatpush1.bf16.msra.mxu0 0
    %2712 = vmatprep.subr.bf16.mxu0 0
    %2713 = vmatpush1.bf16.msra.mxu0 0
    %2714 = vmatprep.subr.bf16.mxu0 0
    %2715 = vmatpush1.bf16.msra.mxu0 0
    %2716 = vmatprep.subr.bf16.mxu0 0
    %2717 = vmatpush1.bf16.msra.mxu0 %v2701
    %2718 = vmatprep.subr.bf16.mxu0 0
    %2719 = vmatpush1.bf16.msra.mxu0 %v2700
    %2720 = vmatprep.subr.bf16.mxu0 0
    %2721 = vmatpush2.bf16.msra.mxu0 0
    %2722 = vmatprep.subr.bf16.mxu0 0
    %2723 = vmatpush2.bf16.msra.mxu0 0
    %2724 = vmatprep.subr.bf16.mxu0 0
    %2725 = vmatpush2.bf16.msra.mxu0 0
    %2726 = vmatprep.subr.bf16.mxu0 0
    %2727 = vmatpush2.bf16.msra.mxu0 0
    %2728 = vmatprep.subr.bf16.mxu0 0
    %2729 = vmatpush2.bf16.msra.mxu0 0
    %2730 = vmatprep.subr.bf16.mxu0 0
    %2731 = vmatpush2.bf16.msra.mxu0 0
    %2732 = vmatprep.subr.bf16.mxu0 0
    %2733 = vmatpush2.bf16.msra.mxu0 0
    %2734 = vmatprep.subr.bf16.mxu0 0
    %2735 = vmatpush2.bf16.msra.mxu0 0
    %2736 = vmatprep.mubr.bf16.mxu0 0
    %2737 = vmatmul.mubr.bf16.gmra.mxu0 %v338
    %v2738 = vpop.f32.mrf.mxu0
    %v2739 = vadd.f32 0.0, %v2738
    %v2740 = vpop.f32.mrf.mxu0
    %v2741 = vpop.f32.mrf.mxu0
    %v2742 = vpop.f32.mrf.mxu0
    %2743 = vdwg.mxu0
    %v2744 = vadd.f32 %v2687, %v2739
    %v2745 = vld [vmem:[%s203] sm:$0x3]
    %s2746 = scalar_lea.vmem [#allocation8], 16
    %v2747 = vld [vmem:[%s2746] sm:$0xf]
    %v2748 = vld [vmem:[%s2746 + $0x4] sm:$0xf]
    %v2749 = vld [vmem:[%s2746 + $0x8] sm:$0xf]
    %v2750 = vld [vmem:[%s2746 + $0xc] sm:$0xf]
    %v2755 = vunpack.c.l.b16 %v2747
    %v2756 = vunpack.c.l.b16 %v2748
    %v2757 = vunpack.c.l.b16 %v2749
    %v2758 = vunpack.c.l.b16 %v2750
    %v2759 = vpack.c.b16 %v2756, %v2755
    %v2760 = vpack.c.b16 %v2758, %v2757
    %2763 = vmatprep.subr.bf16.mxu0 0
    %2764 = vmatpush1.bf16.msra.mxu0 0
    %2765 = vmatprep.subr.bf16.mxu0 0
    %2766 = vmatpush1.bf16.msra.mxu0 0
    %2767 = vmatprep.subr.bf16.mxu0 0
    %2768 = vmatpush1.bf16.msra.mxu0 0
    %2769 = vmatprep.subr.bf16.mxu0 0
    %2770 = vmatpush1.bf16.msra.mxu0 0
    %2771 = vmatprep.subr.bf16.mxu0 0
    %2772 = vmatpush1.bf16.msra.mxu0 0
    %2773 = vmatprep.subr.bf16.mxu0 0
    %2774 = vmatpush1.bf16.msra.mxu0 0
    %2775 = vmatprep.subr.bf16.mxu0 0
    %2776 = vmatpush1.bf16.msra.mxu0 %v2760
    %2777 = vmatprep.subr.bf16.mxu0 0
    %2778 = vmatpush1.bf16.msra.mxu0 %v2759
    %2779 = vmatprep.subr.bf16.mxu0 0
    %2780 = vmatpush2.bf16.msra.mxu0 0
    %2781 = vmatprep.subr.bf16.mxu0 0
    %2782 = vmatpush2.bf16.msra.mxu0 0
    %2783 = vmatprep.subr.bf16.mxu0 0
    %2784 = vmatpush2.bf16.msra.mxu0 0
    %2785 = vmatprep.subr.bf16.mxu0 0
    %2786 = vmatpush2.bf16.msra.mxu0 0
    %2787 = vmatprep.subr.bf16.mxu0 0
    %2788 = vmatpush2.bf16.msra.mxu0 0
    %2789 = vmatprep.subr.bf16.mxu0 0
    %2790 = vmatpush2.bf16.msra.mxu0 0
    %2791 = vmatprep.subr.bf16.mxu0 0
    %2792 = vmatpush2.bf16.msra.mxu0 0
    %2793 = vmatprep.subr.bf16.mxu0 0
    %2794 = vmatpush2.bf16.msra.mxu0 0
    %2795 = vmatprep.mubr.bf16.mxu0 0
    %2796 = vmatmul.mubr.bf16.gmra.mxu0 %v338
    %v2797 = vpop.f32.mrf.mxu0
    %v2798 = vadd.f32 0.0, %v2797
    %v2799 = vpop.f32.mrf.mxu0
    %v2800 = vpop.f32.mrf.mxu0
    %v2801 = vpop.f32.mrf.mxu0
    %2802 = vdwg.mxu0
    %v2803 = vadd.f32 %v2745, %v2798
    %v2804 = vld [vmem:[%s260] sm:$0x3]
    %s2805 = scalar_lea.vmem [#allocation8], 32
    %v2806 = vld [vmem:[%s2805] sm:$0xf]
    %v2807 = vld [vmem:[%s2805 + $0x4] sm:$0xf]
    %v2808 = vld [vmem:[%s2805 + $0x8] sm:$0xf]
    %v2809 = vld [vmem:[%s2805 + $0xc] sm:$0xf]
    %v2814 = vunpack.c.l.b16 %v2806
    %v2815 = vunpack.c.l.b16 %v2807
    %v2816 = vunpack.c.l.b16 %v2808
    %v2817 = vunpack.c.l.b16 %v2809
    %v2818 = vpack.c.b16 %v2815, %v2814
    %v2819 = vpack.c.b16 %v2817, %v2816
    %2822 = vmatprep.subr.bf16.mxu0 0
    %2823 = vmatpush1.bf16.msra.mxu0 0
    %2824 = vmatprep.subr.bf16.mxu0 0
    %2825 = vmatpush1.bf16.msra.mxu0 0
    %2826 = vmatprep.subr.bf16.mxu0 0
    %2827 = vmatpush1.bf16.msra.mxu0 0
    %2828 = vmatprep.subr.bf16.mxu0 0
    %2829 = vmatpush1.bf16.msra.mxu0 0
    %2830 = vmatprep.subr.bf16.mxu0 0
    %2831 = vmatpush1.bf16.msra.mxu0 0
    %2832 = vmatprep.subr.bf16.mxu0 0
    %2833 = vmatpush1.bf16.msra.mxu0 0
    %2834 = vmatprep.subr.bf16.mxu0 0
    %2835 = vmatpush1.bf16.msra.mxu0 %v2819
    %2836 = vmatprep.subr.bf16.mxu0 0
    %2837 = vmatpush1.bf16.msra.mxu0 %v2818
    %2838 = vmatprep.subr.bf16.mxu0 0
    %2839 = vmatpush2.bf16.msra.mxu0 0
    %2840 = vmatprep.subr.bf16.mxu0 0
    %2841 = vmatpush2.bf16.msra.mxu0 0
    %2842 = vmatprep.subr.bf16.mxu0 0
    %2843 = vmatpush2.bf16.msra.mxu0 0
    %2844 = vmatprep.subr.bf16.mxu0 0
    %2845 = vmatpush2.bf16.msra.mxu0 0
    %2846 = vmatprep.subr.bf16.mxu0 0
    %2847 = vmatpush2.bf16.msra.mxu0 0
    %2848 = vmatprep.subr.bf16.mxu0 0
    %2849 = vmatpush2.bf16.msra.mxu0 0
    %2850 = vmatprep.subr.bf16.mxu0 0
    %2851 = vmatpush2.bf16.msra.mxu0 0
    %2852 = vmatprep.subr.bf16.mxu0 0
    %2853 = vmatpush2.bf16.msra.mxu0 0
    %2854 = vmatprep.mubr.bf16.mxu0 0
    %2855 = vmatmul.mubr.bf16.gmra.mxu0 %v338
    %v2856 = vpop.f32.mrf.mxu0
    %v2857 = vadd.f32 0.0, %v2856
    %v2858 = vpop.f32.mrf.mxu0
    %v2859 = vpop.f32.mrf.mxu0
    %v2860 = vpop.f32.mrf.mxu0
    %2861 = vdwg.mxu0
    %v2862 = vadd.f32 %v2804, %v2857
    %v2863 = vld [vmem:[%s317] sm:$0x3]
    %s2864 = scalar_lea.vmem [#allocation8], 48
    %v2865 = vld [vmem:[%s2864] sm:$0xf]
    %v2866 = vld [vmem:[%s2864 + $0x4] sm:$0xf]
    %v2867 = vld [vmem:[%s2864 + $0x8] sm:$0xf]
    %v2868 = vld [vmem:[%s2864 + $0xc] sm:$0xf]
    %v2873 = vunpack.c.l.b16 %v2865
    %v2874 = vunpack.c.l.b16 %v2866
    %v2875 = vunpack.c.l.b16 %v2867
    %v2876 = vunpack.c.l.b16 %v2868
    %v2877 = vpack.c.b16 %v2874, %v2873
    %v2878 = vpack.c.b16 %v2876, %v2875
    %2881 = vmatprep.subr.bf16.mxu0 0
    %2882 = vmatpush1.bf16.msra.mxu0 0
    %2883 = vmatprep.subr.bf16.mxu0 0
    %2884 = vmatpush1.bf16.msra.mxu0 0
    %2885 = vmatprep.subr.bf16.mxu0 0
    %2886 = vmatpush1.bf16.msra.mxu0 0
    %2887 = vmatprep.subr.bf16.mxu0 0
    %2888 = vmatpush1.bf16.msra.mxu0 0
    %2889 = vmatprep.subr.bf16.mxu0 0
    %2890 = vmatpush1.bf16.msra.mxu0 0
    %2891 = vmatprep.subr.bf16.mxu0 0
    %2892 = vmatpush1.bf16.msra.mxu0 0
    %2893 = vmatprep.subr.bf16.mxu0 0
    %2894 = vmatpush1.bf16.msra.mxu0 %v2878
    %2895 = vmatprep.subr.bf16.mxu0 0
    %2896 = vmatpush1.bf16.msra.mxu0 %v2877
    %2897 = vmatprep.subr.bf16.mxu0 0
    %2898 = vmatpush2.bf16.msra.mxu0 0
    %2899 = vmatprep.subr.bf16.mxu0 0
    %2900 = vmatpush2.bf16.msra.mxu0 0
    %2901 = vmatprep.subr.bf16.mxu0 0
    %2902 = vmatpush2.bf16.msra.mxu0 0
    %2903 = vmatprep.subr.bf16.mxu0 0
    %2904 = vmatpush2.bf16.msra.mxu0 0
    %2905 = vmatprep.subr.bf16.mxu0 0
    %2906 = vmatpush2.bf16.msra.mxu0 0
    %2907 = vmatprep.subr.bf16.mxu0 0
    %2908 = vmatpush2.bf16.msra.mxu0 0
    %2909 = vmatprep.subr.bf16.mxu0 0
    %2910 = vmatpush2.bf16.msra.mxu0 0
    %2911 = vmatprep.subr.bf16.mxu0 0
    %2912 = vmatpush2.bf16.msra.mxu0 0
    %2913 = vmatprep.mubr.bf16.mxu0 0
    %2914 = vmatmul.mubr.bf16.gmra.mxu0 %v338
    %v2915 = vpop.f32.mrf.mxu0
    %v2916 = vadd.f32 0.0, %v2915
    %v2917 = vpop.f32.mrf.mxu0
    %v2918 = vpop.f32.mrf.mxu0
    %v2919 = vpop.f32.mrf.mxu0
    %2920 = vdwg.mxu0
    %v2921 = vadd.f32 %v2863, %v2916
    %v2922 = vxor.u32 %v2744, 2147483648
    %v2923 = vmul.f32 %v2922, 1.442695
    %v2924 = vpow.pop %v2923
    %v2925 = vadd.f32 %v2924, 1.0
    %v2926 = vrcp.pop %v2925
    %v2927 = vmul.f32 1.0, %v2926
    %v2928 = vxor.u32 %v2803, 2147483648
    %v2929 = vmul.f32 %v2928, 1.442695
    %v2930 = vpow.pop %v2929
    %v2931 = vadd.f32 %v2930, 1.0
    %v2932 = vrcp.pop %v2931
    %v2933 = vmul.f32 1.0, %v2932
    %v2934 = vtanh.pop %v2862
    %v2935 = vxor.u32 %v2921, 2147483648
    %v2936 = vmul.f32 %v2935, 1.442695
    %v2937 = vpow.pop %v2936
    %v2938 = vadd.f32 %v2937, 1.0
    %v2939 = vrcp.pop %v2938
    %v2940 = vmul.f32 1.0, %v2939
    %v2941 = vmul.f32 %v2933, 0.0
    %v2942 = vmul.f32 %v2927, %v2934
    %v2943 = vadd.f32 %v2941, %v2942
    %v2944 = vtanh.pop %v2943
    %v2945 = vmul.f32 %v2940, %v2944
    %2946 = vst.msk [vmem:[#allocation2] sm:$0x3] %vm582, %v2945
    %v2947 = vpack.c.bf16 %v2945, %v2945
    %v2948 = vld [vmem:[#allocation3 + $0x2] sm:$0x3]
    %v2949 = vld [vmem:[#allocation8] sm:$0xf]
    %v2950 = vld [vmem:[#allocation8 + $0x4] sm:$0xf]
    %v2951 = vld [vmem:[#allocation8 + $0x8] sm:$0xf]
    %v2952 = vld [vmem:[#allocation8 + $0xc] sm:$0xf]
    %v2957 = vunpack.c.l.b16 %v2949
    %v2958 = vunpack.c.l.b16 %v2950
    %v2959 = vunpack.c.l.b16 %v2951
    %v2960 = vunpack.c.l.b16 %v2952
    %v2961 = vpack.c.b16 %v2958, %v2957
    %v2962 = vpack.c.b16 %v2960, %v2959
    %v2966 = vsel %vm146, %v2947, 0
    %2968 = vmatprep.subr.bf16.mxu0 0
    %2969 = vmatpush1.bf16.msra.mxu0 0
    %2970 = vmatprep.subr.bf16.mxu0 0
    %2971 = vmatpush1.bf16.msra.mxu0 0
    %2972 = vmatprep.subr.bf16.mxu0 0
    %2973 = vmatpush1.bf16.msra.mxu0 0
    %2974 = vmatprep.subr.bf16.mxu0 0
    %2975 = vmatpush1.bf16.msra.mxu0 0
    %2976 = vmatprep.subr.bf16.mxu0 0
    %2977 = vmatpush1.bf16.msra.mxu0 0
    %2978 = vmatprep.subr.bf16.mxu0 0
    %2979 = vmatpush1.bf16.msra.mxu0 0
    %2980 = vmatprep.subr.bf16.mxu0 0
    %2981 = vmatpush1.bf16.msra.mxu0 %v2962
    %2982 = vmatprep.subr.bf16.mxu0 0
    %2983 = vmatpush1.bf16.msra.mxu0 %v2961
    %2984 = vmatprep.subr.bf16.mxu0 0
    %2985 = vmatpush2.bf16.msra.mxu0 0
    %2986 = vmatprep.subr.bf16.mxu0 0
    %2987 = vmatpush2.bf16.msra.mxu0 0
    %2988 = vmatprep.subr.bf16.mxu0 0
    %2989 = vmatpush2.bf16.msra.mxu0 0
    %2990 = vmatprep.subr.bf16.mxu0 0
    %2991 = vmatpush2.bf16.msra.mxu0 0
    %2992 = vmatprep.subr.bf16.mxu0 0
    %2993 = vmatpush2.bf16.msra.mxu0 0
    %2994 = vmatprep.subr.bf16.mxu0 0
    %2995 = vmatpush2.bf16.msra.mxu0 0
    %2996 = vmatprep.subr.bf16.mxu0 0
    %2997 = vmatpush2.bf16.msra.mxu0 0
    %2998 = vmatprep.subr.bf16.mxu0 0
    %2999 = vmatpush2.bf16.msra.mxu0 0
    %3000 = vmatprep.mubr.bf16.mxu0 0
    %3001 = vmatmul.mubr.bf16.gmra.mxu0 %v2966
    %v3002 = vpop.f32.mrf.mxu0
    %v3003 = vadd.f32 0.0, %v3002
    %v3004 = vpop.f32.mrf.mxu0
    %v3005 = vpop.f32.mrf.mxu0
    %v3006 = vpop.f32.mrf.mxu0
    %3007 = vdwg.mxu0
    %v3008 = vadd.f32 %v2948, %v3003
    %v3009 = vld [vmem:[%s203 + $0x2] sm:$0x3]
    %v3010 = vld [vmem:[%s2746] sm:$0xf]
    %v3011 = vld [vmem:[%s2746 + $0x4] sm:$0xf]
    %v3012 = vld [vmem:[%s2746 + $0x8] sm:$0xf]
    %v3013 = vld [vmem:[%s2746 + $0xc] sm:$0xf]
    %v3018 = vunpack.c.l.b16 %v3010
    %v3019 = vunpack.c.l.b16 %v3011
    %v3020 = vunpack.c.l.b16 %v3012
    %v3021 = vunpack.c.l.b16 %v3013
    %v3022 = vpack.c.b16 %v3019, %v3018
    %v3023 = vpack.c.b16 %v3021, %v3020
    %3026 = vmatprep.subr.bf16.mxu0 0
    %3027 = vmatpush1.bf16.msra.mxu0 0
    %3028 = vmatprep.subr.bf16.mxu0 0
    %3029 = vmatpush1.bf16.msra.mxu0 0
    %3030 = vmatprep.subr.bf16.mxu0 0
    %3031 = vmatpush1.bf16.msra.mxu0 0
    %3032 = vmatprep.subr.bf16.mxu0 0
    %3033 = vmatpush1.bf16.msra.mxu0 0
    %3034 = vmatprep.subr.bf16.mxu0 0
    %3035 = vmatpush1.bf16.msra.mxu0 0
    %3036 = vmatprep.subr.bf16.mxu0 0
    %3037 = vmatpush1.bf16.msra.mxu0 0
    %3038 = vmatprep.subr.bf16.mxu0 0
    %3039 = vmatpush1.bf16.msra.mxu0 %v3023
    %3040 = vmatprep.subr.bf16.mxu0 0
    %3041 = vmatpush1.bf16.msra.mxu0 %v3022
    %3042 = vmatprep.subr.bf16.mxu0 0
    %3043 = vmatpush2.bf16.msra.mxu0 0
    %3044 = vmatprep.subr.bf16.mxu0 0
    %3045 = vmatpush2.bf16.msra.mxu0 0
    %3046 = vmatprep.subr.bf16.mxu0 0
    %3047 = vmatpush2.bf16.msra.mxu0 0
    %3048 = vmatprep.subr.bf16.mxu0 0
    %3049 = vmatpush2.bf16.msra.mxu0 0
    %3050 = vmatprep.subr.bf16.mxu0 0
    %3051 = vmatpush2.bf16.msra.mxu0 0
    %3052 = vmatprep.subr.bf16.mxu0 0
    %3053 = vmatpush2.bf16.msra.mxu0 0
    %3054 = vmatprep.subr.bf16.mxu0 0
    %3055 = vmatpush2.bf16.msra.mxu0 0
    %3056 = vmatprep.subr.bf16.mxu0 0
    %3057 = vmatpush2.bf16.msra.mxu0 0
    %3058 = vmatprep.mubr.bf16.mxu0 0
    %3059 = vmatmul.mubr.bf16.gmra.mxu0 %v2966
    %v3060 = vpop.f32.mrf.mxu0
    %v3061 = vadd.f32 0.0, %v3060
    %v3062 = vpop.f32.mrf.mxu0
    %v3063 = vpop.f32.mrf.mxu0
    %v3064 = vpop.f32.mrf.mxu0
    %3065 = vdwg.mxu0
    %v3066 = vadd.f32 %v3009, %v3061
    %v3067 = vld [vmem:[%s260 + $0x2] sm:$0x3]
    %v3068 = vld [vmem:[%s2805] sm:$0xf]
    %v3069 = vld [vmem:[%s2805 + $0x4] sm:$0xf]
    %v3070 = vld [vmem:[%s2805 + $0x8] sm:$0xf]
    %v3071 = vld [vmem:[%s2805 + $0xc] sm:$0xf]
    %v3076 = vunpack.c.l.b16 %v3068
    %v3077 = vunpack.c.l.b16 %v3069
    %v3078 = vunpack.c.l.b16 %v3070
    %v3079 = vunpack.c.l.b16 %v3071
    %v3080 = vpack.c.b16 %v3077, %v3076
    %v3081 = vpack.c.b16 %v3079, %v3078
    %3084 = vmatprep.subr.bf16.mxu0 0
    %3085 = vmatpush1.bf16.msra.mxu0 0
    %3086 = vmatprep.subr.bf16.mxu0 0
    %3087 = vmatpush1.bf16.msra.mxu0 0
    %3088 = vmatprep.subr.bf16.mxu0 0
    %3089 = vmatpush1.bf16.msra.mxu0 0
    %3090 = vmatprep.subr.bf16.mxu0 0
    %3091 = vmatpush1.bf16.msra.mxu0 0
    %3092 = vmatprep.subr.bf16.mxu0 0
    %3093 = vmatpush1.bf16.msra.mxu0 0
    %3094 = vmatprep.subr.bf16.mxu0 0
    %3095 = vmatpush1.bf16.msra.mxu0 0
    %3096 = vmatprep.subr.bf16.mxu0 0
    %3097 = vmatpush1.bf16.msra.mxu0 %v3081
    %3098 = vmatprep.subr.bf16.mxu0 0
    %3099 = vmatpush1.bf16.msra.mxu0 %v3080
    %3100 = vmatprep.subr.bf16.mxu0 0
    %3101 = vmatpush2.bf16.msra.mxu0 0
    %3102 = vmatprep.subr.bf16.mxu0 0
    %3103 = vmatpush2.bf16.msra.mxu0 0
    %3104 = vmatprep.subr.bf16.mxu0 0
    %3105 = vmatpush2.bf16.msra.mxu0 0
    %3106 = vmatprep.subr.bf16.mxu0 0
    %3107 = vmatpush2.bf16.msra.mxu0 0
    %3108 = vmatprep.subr.bf16.mxu0 0
    %3109 = vmatpush2.bf16.msra.mxu0 0
    %3110 = vmatprep.subr.bf16.mxu0 0
    %3111 = vmatpush2.bf16.msra.mxu0 0
    %3112 = vmatprep.subr.bf16.mxu0 0
    %3113 = vmatpush2.bf16.msra.mxu0 0
    %3114 = vmatprep.subr.bf16.mxu0 0
    %3115 = vmatpush2.bf16.msra.mxu0 0
    %3116 = vmatprep.mubr.bf16.mxu0 0
    %3117 = vmatmul.mubr.bf16.gmra.mxu0 %v2966
    %v3118 = vpop.f32.mrf.mxu0
    %v3119 = vadd.f32 0.0, %v3118
    %v3120 = vpop.f32.mrf.mxu0
    %v3121 = vpop.f32.mrf.mxu0
    %v3122 = vpop.f32.mrf.mxu0
    %3123 = vdwg.mxu0
    %v3124 = vadd.f32 %v3067, %v3119
    %v3125 = vld [vmem:[%s317 + $0x2] sm:$0x3]
    %v3126 = vld [vmem:[%s2864] sm:$0xf]
    %v3127 = vld [vmem:[%s2864 + $0x4] sm:$0xf]
    %v3128 = vld [vmem:[%s2864 + $0x8] sm:$0xf]
    %v3129 = vld [vmem:[%s2864 + $0xc] sm:$0xf]
    %v3134 = vunpack.c.l.b16 %v3126
    %v3135 = vunpack.c.l.b16 %v3127
    %v3136 = vunpack.c.l.b16 %v3128
    %v3137 = vunpack.c.l.b16 %v3129
    %v3138 = vpack.c.b16 %v3135, %v3134
    %v3139 = vpack.c.b16 %v3137, %v3136
    %3142 = vmatprep.subr.bf16.mxu0 0
    %3143 = vmatpush1.bf16.msra.mxu0 0
    %3144 = vmatprep.subr.bf16.mxu0 0
    %3145 = vmatpush1.bf16.msra.mxu0 0
    %3146 = vmatprep.subr.bf16.mxu0 0
    %3147 = vmatpush1.bf16.msra.mxu0 0
    %3148 = vmatprep.subr.bf16.mxu0 0
    %3149 = vmatpush1.bf16.msra.mxu0 0
    %3150 = vmatprep.subr.bf16.mxu0 0
    %3151 = vmatpush1.bf16.msra.mxu0 0
    %3152 = vmatprep.subr.bf16.mxu0 0
    %3153 = vmatpush1.bf16.msra.mxu0 0
    %3154 = vmatprep.subr.bf16.mxu0 0
    %3155 = vmatpush1.bf16.msra.mxu0 %v3139
    %3156 = vmatprep.subr.bf16.mxu0 0
    %3157 = vmatpush1.bf16.msra.mxu0 %v3138
    %3158 = vmatprep.subr.bf16.mxu0 0
    %3159 = vmatpush2.bf16.msra.mxu0 0
    %3160 = vmatprep.subr.bf16.mxu0 0
    %3161 = vmatpush2.bf16.msra.mxu0 0
    %3162 = vmatprep.subr.bf16.mxu0 0
    %3163 = vmatpush2.bf16.msra.mxu0 0
    %3164 = vmatprep.subr.bf16.mxu0 0
    %3165 = vmatpush2.bf16.msra.mxu0 0
    %3166 = vmatprep.subr.bf16.mxu0 0
    %3167 = vmatpush2.bf16.msra.mxu0 0
    %3168 = vmatprep.subr.bf16.mxu0 0
    %3169 = vmatpush2.bf16.msra.mxu0 0
    %3170 = vmatprep.subr.bf16.mxu0 0
    %3171 = vmatpush2.bf16.msra.mxu0 0
    %3172 = vmatprep.subr.bf16.mxu0 0
    %3173 = vmatpush2.bf16.msra.mxu0 0
    %3174 = vmatprep.mubr.bf16.mxu0 0
    %3175 = vmatmul.mubr.bf16.gmra.mxu0 %v2966
    %v3176 = vpop.f32.mrf.mxu0
    %v3177 = vadd.f32 0.0, %v3176
    %v3178 = vpop.f32.mrf.mxu0
    %v3179 = vpop.f32.mrf.mxu0
    %v3180 = vpop.f32.mrf.mxu0
    %3181 = vdwg.mxu0
    %v3182 = vadd.f32 %v3125, %v3177
    %v3183 = vxor.u32 %v3008, 2147483648
    %v3184 = vmul.f32 %v3183, 1.442695
    %v3185 = vpow.pop %v3184
    %v3186 = vadd.f32 %v3185, 1.0
    %v3187 = vrcp.pop %v3186
    %v3188 = vmul.f32 1.0, %v3187
    %v3189 = vxor.u32 %v3066, 2147483648
    %v3190 = vmul.f32 %v3189, 1.442695
    %v3191 = vpow.pop %v3190
    %v3192 = vadd.f32 %v3191, 1.0
    %v3193 = vrcp.pop %v3192
    %v3194 = vmul.f32 1.0, %v3193
    %v3195 = vtanh.pop %v3124
    %v3196 = vxor.u32 %v3182, 2147483648
    %v3197 = vmul.f32 %v3196, 1.442695
    %v3198 = vpow.pop %v3197
    %v3199 = vadd.f32 %v3198, 1.0
    %v3200 = vrcp.pop %v3199
    %v3201 = vmul.f32 1.0, %v3200
    %v3202 = vmul.f32 %v3194, %v2943
    %v3203 = vmul.f32 %v3188, %v3195
    %v3204 = vadd.f32 %v3202, %v3203
    %v3205 = vtanh.pop %v3204
    %v3206 = vmul.f32 %v3201, %v3205
    %3207 = vst.msk [vmem:[#allocation2 + $0x2] sm:$0x3] %vm582, %v3206
    %v3208 = vpack.c.bf16 %v3206, %v3206
    %v3209 = vld [vmem:[#allocation3 + $0x4] sm:$0x3]
    %v3210 = vld [vmem:[#allocation8] sm:$0xf]
    %v3211 = vld [vmem:[#allocation8 + $0x4] sm:$0xf]
    %v3212 = vld [vmem:[#allocation8 + $0x8] sm:$0xf]
    %v3213 = vld [vmem:[#allocation8 + $0xc] sm:$0xf]
    %v3218 = vunpack.c.l.b16 %v3210
    %v3219 = vunpack.c.l.b16 %v3211
    %v3220 = vunpack.c.l.b16 %v3212
    %v3221 = vunpack.c.l.b16 %v3213
    %v3222 = vpack.c.b16 %v3219, %v3218
    %v3223 = vpack.c.b16 %v3221, %v3220
    %v3227 = vsel %vm146, %v3208, 0
    %3229 = vmatprep.subr.bf16.mxu0 0
    %3230 = vmatpush1.bf16.msra.mxu0 0
    %3231 = vmatprep.subr.bf16.mxu0 0
    %3232 = vmatpush1.bf16.msra.mxu0 0
    %3233 = vmatprep.subr.bf16.mxu0 0
    %3234 = vmatpush1.bf16.msra.mxu0 0
    %3235 = vmatprep.subr.bf16.mxu0 0
    %3236 = vmatpush1.bf16.msra.mxu0 0
    %3237 = vmatprep.subr.bf16.mxu0 0
    %3238 = vmatpush1.bf16.msra.mxu0 0
    %3239 = vmatprep.subr.bf16.mxu0 0
    %3240 = vmatpush1.bf16.msra.mxu0 0
    %3241 = vmatprep.subr.bf16.mxu0 0
    %3242 = vmatpush1.bf16.msra.mxu0 %v3223
    %3243 = vmatprep.subr.bf16.mxu0 0
    %3244 = vmatpush1.bf16.msra.mxu0 %v3222
    %3245 = vmatprep.subr.bf16.mxu0 0
    %3246 = vmatpush2.bf16.msra.mxu0 0
    %3247 = vmatprep.subr.bf16.mxu0 0
    %3248 = vmatpush2.bf16.msra.mxu0 0
    %3249 = vmatprep.subr.bf16.mxu0 0
    %3250 = vmatpush2.bf16.msra.mxu0 0
    %3251 = vmatprep.subr.bf16.mxu0 0
    %3252 = vmatpush2.bf16.msra.mxu0 0
    %3253 = vmatprep.subr.bf16.mxu0 0
    %3254 = vmatpush2.bf16.msra.mxu0 0
    %3255 = vmatprep.subr.bf16.mxu0 0
    %3256 = vmatpush2.bf16.msra.mxu0 0
    %3257 = vmatprep.subr.bf16.mxu0 0
    %3258 = vmatpush2.bf16.msra.mxu0 0
    %3259 = vmatprep.subr.bf16.mxu0 0
    %3260 = vmatpush2.bf16.msra.mxu0 0
    %3261 = vmatprep.mubr.bf16.mxu0 0
    %3262 = vmatmul.mubr.bf16.gmra.mxu0 %v3227
    %v3263 = vpop.f32.mrf.mxu0
    %v3264 = vadd.f32 0.0, %v3263
    %v3265 = vpop.f32.mrf.mxu0
    %v3266 = vpop.f32.mrf.mxu0
    %v3267 = vpop.f32.mrf.mxu0
    %3268 = vdwg.mxu0
    %v3269 = vadd.f32 %v3209, %v3264
    %v3270 = vld [vmem:[%s203 + $0x4] sm:$0x3]
    %v3271 = vld [vmem:[%s2746] sm:$0xf]
    %v3272 = vld [vmem:[%s2746 + $0x4] sm:$0xf]
    %v3273 = vld [vmem:[%s2746 + $0x8] sm:$0xf]
    %v3274 = vld [vmem:[%s2746 + $0xc] sm:$0xf]
    %v3279 = vunpack.c.l.b16 %v3271
    %v3280 = vunpack.c.l.b16 %v3272
    %v3281 = vunpack.c.l.b16 %v3273
    %v3282 = vunpack.c.l.b16 %v3274
    %v3283 = vpack.c.b16 %v3280, %v3279
    %v3284 = vpack.c.b16 %v3282, %v3281
    %3287 = vmatprep.subr.bf16.mxu0 0
    %3288 = vmatpush1.bf16.msra.mxu0 0
    %3289 = vmatprep.subr.bf16.mxu0 0
    %3290 = vmatpush1.bf16.msra.mxu0 0
    %3291 = vmatprep.subr.bf16.mxu0 0
    %3292 = vmatpush1.bf16.msra.mxu0 0
    %3293 = vmatprep.subr.bf16.mxu0 0
    %3294 = vmatpush1.bf16.msra.mxu0 0
    %3295 = vmatprep.subr.bf16.mxu0 0
    %3296 = vmatpush1.bf16.msra.mxu0 0
    %3297 = vmatprep.subr.bf16.mxu0 0
    %3298 = vmatpush1.bf16.msra.mxu0 0
    %3299 = vmatprep.subr.bf16.mxu0 0
    %3300 = vmatpush1.bf16.msra.mxu0 %v3284
    %3301 = vmatprep.subr.bf16.mxu0 0
    %3302 = vmatpush1.bf16.msra.mxu0 %v3283
    %3303 = vmatprep.subr.bf16.mxu0 0
    %3304 = vmatpush2.bf16.msra.mxu0 0
    %3305 = vmatprep.subr.bf16.mxu0 0
    %3306 = vmatpush2.bf16.msra.mxu0 0
    %3307 = vmatprep.subr.bf16.mxu0 0
    %3308 = vmatpush2.bf16.msra.mxu0 0
    %3309 = vmatprep.subr.bf16.mxu0 0
    %3310 = vmatpush2.bf16.msra.mxu0 0
    %3311 = vmatprep.subr.bf16.mxu0 0
    %3312 = vmatpush2.bf16.msra.mxu0 0
    %3313 = vmatprep.subr.bf16.mxu0 0
    %3314 = vmatpush2.bf16.msra.mxu0 0
    %3315 = vmatprep.subr.bf16.mxu0 0
    %3316 = vmatpush2.bf16.msra.mxu0 0
    %3317 = vmatprep.subr.bf16.mxu0 0
    %3318 = vmatpush2.bf16.msra.mxu0 0
    %3319 = vmatprep.mubr.bf16.mxu0 0
    %3320 = vmatmul.mubr.bf16.gmra.mxu0 %v3227
    %v3321 = vpop.f32.mrf.mxu0
    %v3322 = vadd.f32 0.0, %v3321
    %v3323 = vpop.f32.mrf.mxu0
    %v3324 = vpop.f32.mrf.mxu0
    %v3325 = vpop.f32.mrf.mxu0
    %3326 = vdwg.mxu0
    %v3327 = vadd.f32 %v3270, %v3322
    %v3328 = vld [vmem:[%s260 + $0x4] sm:$0x3]
    %v3329 = vld [vmem:[%s2805] sm:$0xf]
    %v3330 = vld [vmem:[%s2805 + $0x4] sm:$0xf]
    %v3331 = vld [vmem:[%s2805 + $0x8] sm:$0xf]
    %v3332 = vld [vmem:[%s2805 + $0xc] sm:$0xf]
    %v3337 = vunpack.c.l.b16 %v3329
    %v3338 = vunpack.c.l.b16 %v3330
    %v3339 = vunpack.c.l.b16 %v3331
    %v3340 = vunpack.c.l.b16 %v3332
    %v3341 = vpack.c.b16 %v3338, %v3337
    %v3342 = vpack.c.b16 %v3340, %v3339
    %3345 = vmatprep.subr.bf16.mxu0 0
    %3346 = vmatpush1.bf16.msra.mxu0 0
    %3347 = vmatprep.subr.bf16.mxu0 0
    %3348 = vmatpush1.bf16.msra.mxu0 0
    %3349 = vmatprep.subr.bf16.mxu0 0
    %3350 = vmatpush1.bf16.msra.mxu0 0
    %3351 = vmatprep.subr.bf16.mxu0 0
    %3352 = vmatpush1.bf16.msra.mxu0 0
    %3353 = vmatprep.subr.bf16.mxu0 0
    %3354 = vmatpush1.bf16.msra.mxu0 0
    %3355 = vmatprep.subr.bf16.mxu0 0
    %3356 = vmatpush1.bf16.msra.mxu0 0
    %3357 = vmatprep.subr.bf16.mxu0 0
    %3358 = vmatpush1.bf16.msra.mxu0 %v3342
    %3359 = vmatprep.subr.bf16.mxu0 0
    %3360 = vmatpush1.bf16.msra.mxu0 %v3341
    %3361 = vmatprep.subr.bf16.mxu0 0
    %3362 = vmatpush2.bf16.msra.mxu0 0
    %3363 = vmatprep.subr.bf16.mxu0 0
    %3364 = vmatpush2.bf16.msra.mxu0 0
    %3365 = vmatprep.subr.bf16.mxu0 0
    %3366 = vmatpush2.bf16.msra.mxu0 0
    %3367 = vmatprep.subr.bf16.mxu0 0
    %3368 = vmatpush2.bf16.msra.mxu0 0
    %3369 = vmatprep.subr.bf16.mxu0 0
    %3370 = vmatpush2.bf16.msra.mxu0 0
    %3371 = vmatprep.subr.bf16.mxu0 0
    %3372 = vmatpush2.bf16.msra.mxu0 0
    %3373 = vmatprep.subr.bf16.mxu0 0
    %3374 = vmatpush2.bf16.msra.mxu0 0
    %3375 = vmatprep.subr.bf16.mxu0 0
    %3376 = vmatpush2.bf16.msra.mxu0 0
    %3377 = vmatprep.mubr.bf16.mxu0 0
    %3378 = vmatmul.mubr.bf16.gmra.mxu0 %v3227
    %v3379 = vpop.f32.mrf.mxu0
    %v3380 = vadd.f32 0.0, %v3379
    %v3381 = vpop.f32.mrf.mxu0
    %v3382 = vpop.f32.mrf.mxu0
    %v3383 = vpop.f32.mrf.mxu0
    %3384 = vdwg.mxu0
    %v3385 = vadd.f32 %v3328, %v3380
    %v3386 = vld [vmem:[%s317 + $0x4] sm:$0x3]
    %v3387 = vld [vmem:[%s2864] sm:$0xf]
    %v3388 = vld [vmem:[%s2864 + $0x4] sm:$0xf]
    %v3389 = vld [vmem:[%s2864 + $0x8] sm:$0xf]
    %v3390 = vld [vmem:[%s2864 + $0xc] sm:$0xf]
    %v3395 = vunpack.c.l.b16 %v3387
    %v3396 = vunpack.c.l.b16 %v3388
    %v3397 = vunpack.c.l.b16 %v3389
    %v3398 = vunpack.c.l.b16 %v3390
    %v3399 = vpack.c.b16 %v3396, %v3395
    %v3400 = vpack.c.b16 %v3398, %v3397
    %3403 = vmatprep.subr.bf16.mxu0 0
    %3404 = vmatpush1.bf16.msra.mxu0 0
    %3405 = vmatprep.subr.bf16.mxu0 0
    %3406 = vmatpush1.bf16.msra.mxu0 0
    %3407 = vmatprep.subr.bf16.mxu0 0
    %3408 = vmatpush1.bf16.msra.mxu0 0
    %3409 = vmatprep.subr.bf16.mxu0 0
    %3410 = vmatpush1.bf16.msra.mxu0 0
    %3411 = vmatprep.subr.bf16.mxu0 0
    %3412 = vmatpush1.bf16.msra.mxu0 0
    %3413 = vmatprep.subr.bf16.mxu0 0
    %3414 = vmatpush1.bf16.msra.mxu0 0
    %3415 = vmatprep.subr.bf16.mxu0 0
    %3416 = vmatpush1.bf16.msra.mxu0 %v3400
    %3417 = vmatprep.subr.bf16.mxu0 0
    %3418 = vmatpush1.bf16.msra.mxu0 %v3399
    %3419 = vmatprep.subr.bf16.mxu0 0
    %3420 = vmatpush2.bf16.msra.mxu0 0
    %3421 = vmatprep.subr.bf16.mxu0 0
    %3422 = vmatpush2.bf16.msra.mxu0 0
    %3423 = vmatprep.subr.bf16.mxu0 0
    %3424 = vmatpush2.bf16.msra.mxu0 0
    %3425 = vmatprep.subr.bf16.mxu0 0
    %3426 = vmatpush2.bf16.msra.mxu0 0
    %3427 = vmatprep.subr.bf16.mxu0 0
    %3428 = vmatpush2.bf16.msra.mxu0 0
    %3429 = vmatprep.subr.bf16.mxu0 0
    %3430 = vmatpush2.bf16.msra.mxu0 0
    %3431 = vmatprep.subr.bf16.mxu0 0
    %3432 = vmatpush2.bf16.msra.mxu0 0
    %3433 = vmatprep.subr.bf16.mxu0 0
    %3434 = vmatpush2.bf16.msra.mxu0 0
    %3435 = vmatprep.mubr.bf16.mxu0 0
    %3436 = vmatmul.mubr.bf16.gmra.mxu0 %v3227
    %v3437 = vpop.f32.mrf.mxu0
    %v3438 = vadd.f32 0.0, %v3437
    %v3439 = vpop.f32.mrf.mxu0
    %v3440 = vpop.f32.mrf.mxu0
    %v3441 = vpop.f32.mrf.mxu0
    %3442 = vdwg.mxu0
    %v3443 = vadd.f32 %v3386, %v3438
    %v3444 = vxor.u32 %v3269, 2147483648
    %v3445 = vmul.f32 %v3444, 1.442695
    %v3446 = vpow.pop %v3445
    %v3447 = vadd.f32 %v3446, 1.0
    %v3448 = vrcp.pop %v3447
    %v3449 = vmul.f32 1.0, %v3448
    %v3450 = vxor.u32 %v3327, 2147483648
    %v3451 = vmul.f32 %v3450, 1.442695
    %v3452 = vpow.pop %v3451
    %v3453 = vadd.f32 %v3452, 1.0
    %v3454 = vrcp.pop %v3453
    %v3455 = vmul.f32 1.0, %v3454
    %v3456 = vtanh.pop %v3385
    %v3457 = vxor.u32 %v3443, 2147483648
    %v3458 = vmul.f32 %v3457, 1.442695
    %v3459 = vpow.pop %v3458
    %v3460 = vadd.f32 %v3459, 1.0
    %v3461 = vrcp.pop %v3460
    %v3462 = vmul.f32 1.0, %v3461
    %v3463 = vmul.f32 %v3455, %v3204
    %v3464 = vmul.f32 %v3449, %v3456
    %v3465 = vadd.f32 %v3463, %v3464
    %v3466 = vtanh.pop %v3465
    %v3467 = vmul.f32 %v3462, %v3466
    %3468 = vst.msk [vmem:[#allocation2 + $0x4] sm:$0x3] %vm582, %v3467
    %v3469 = vpack.c.bf16 %v3467, %v3467
    %v3470 = vld [vmem:[#allocation3 + $0x6] sm:$0x3]
    %v3471 = vld [vmem:[#allocation8] sm:$0xf]
    %v3472 = vld [vmem:[#allocation8 + $0x4] sm:$0xf]
    %v3473 = vld [vmem:[#allocation8 + $0x8] sm:$0xf]
    %v3474 = vld [vmem:[#allocation8 + $0xc] sm:$0xf]
    %v3479 = vunpack.c.l.b16 %v3471
    %v3480 = vunpack.c.l.b16 %v3472
    %v3481 = vunpack.c.l.b16 %v3473
    %v3482 = vunpack.c.l.b16 %v3474
    %v3483 = vpack.c.b16 %v3480, %v3479
    %v3484 = vpack.c.b16 %v3482, %v3481
    %v3488 = vsel %vm146, %v3469, 0
    %3490 = vmatprep.subr.bf16.mxu0 0
    %3491 = vmatpush1.bf16.msra.mxu0 0
    %3492 = vmatprep.subr.bf16.mxu0 0
    %3493 = vmatpush1.bf16.msra.mxu0 0
    %3494 = vmatprep.subr.bf16.mxu0 0
    %3495 = vmatpush1.bf16.msra.mxu0 0
    %3496 = vmatprep.subr.bf16.mxu0 0
    %3497 = vmatpush1.bf16.msra.mxu0 0
    %3498 = vmatprep.subr.bf16.mxu0 0
    %3499 = vmatpush1.bf16.msra.mxu0 0
    %3500 = vmatprep.subr.bf16.mxu0 0
    %3501 = vmatpush1.bf16.msra.mxu0 0
    %3502 = vmatprep.subr.bf16.mxu0 0
    %3503 = vmatpush1.bf16.msra.mxu0 %v3484
    %3504 = vmatprep.subr.bf16.mxu0 0
    %3505 = vmatpush1.bf16.msra.mxu0 %v3483
    %3506 = vmatprep.subr.bf16.mxu0 0
    %3507 = vmatpush2.bf16.msra.mxu0 0
    %3508 = vmatprep.subr.bf16.mxu0 0
    %3509 = vmatpush2.bf16.msra.mxu0 0
    %3510 = vmatprep.subr.bf16.mxu0 0
    %3511 = vmatpush2.bf16.msra.mxu0 0
    %3512 = vmatprep.subr.bf16.mxu0 0
    %3513 = vmatpush2.bf16.msra.mxu0 0
    %3514 = vmatprep.subr.bf16.mxu0 0
    %3515 = vmatpush2.bf16.msra.mxu0 0
    %3516 = vmatprep.subr.bf16.mxu0 0
    %3517 = vmatpush2.bf16.msra.mxu0 0
    %3518 = vmatprep.subr.bf16.mxu0 0
    %3519 = vmatpush2.bf16.msra.mxu0 0
    %3520 = vmatprep.subr.bf16.mxu0 0
    %3521 = vmatpush2.bf16.msra.mxu0 0
    %3522 = vmatprep.mubr.bf16.mxu0 0
    %3523 = vmatmul.mubr.bf16.gmra.mxu0 %v3488
    %v3524 = vpop.f32.mrf.mxu0
    %v3525 = vadd.f32 0.0, %v3524
    %v3526 = vpop.f32.mrf.mxu0
    %v3527 = vpop.f32.mrf.mxu0
    %v3528 = vpop.f32.mrf.mxu0
    %3529 = vdwg.mxu0
    %v3530 = vadd.f32 %v3470, %v3525
    %v3531 = vld [vmem:[%s203 + $0x6] sm:$0x3]
    %v3532 = vld [vmem:[%s2746] sm:$0xf]
    %v3533 = vld [vmem:[%s2746 + $0x4] sm:$0xf]
    %v3534 = vld [vmem:[%s2746 + $0x8] sm:$0xf]
    %v3535 = vld [vmem:[%s2746 + $0xc] sm:$0xf]
    %v3540 = vunpack.c.l.b16 %v3532
    %v3541 = vunpack.c.l.b16 %v3533
    %v3542 = vunpack.c.l.b16 %v3534
    %v3543 = vunpack.c.l.b16 %v3535
    %v3544 = vpack.c.b16 %v3541, %v3540
    %v3545 = vpack.c.b16 %v3543, %v3542
    %3548 = vmatprep.subr.bf16.mxu0 0
    %3549 = vmatpush1.bf16.msra.mxu0 0
    %3550 = vmatprep.subr.bf16.mxu0 0
    %3551 = vmatpush1.bf16.msra.mxu0 0
    %3552 = vmatprep.subr.bf16.mxu0 0
    %3553 = vmatpush1.bf16.msra.mxu0 0
    %3554 = vmatprep.subr.bf16.mxu0 0
    %3555 = vmatpush1.bf16.msra.mxu0 0
    %3556 = vmatprep.subr.bf16.mxu0 0
    %3557 = vmatpush1.bf16.msra.mxu0 0
    %3558 = vmatprep.subr.bf16.mxu0 0
    %3559 = vmatpush1.bf16.msra.mxu0 0
    %3560 = vmatprep.subr.bf16.mxu0 0
    %3561 = vmatpush1.bf16.msra.mxu0 %v3545
    %3562 = vmatprep.subr.bf16.mxu0 0
    %3563 = vmatpush1.bf16.msra.mxu0 %v3544
    %3564 = vmatprep.subr.bf16.mxu0 0
    %3565 = vmatpush2.bf16.msra.mxu0 0
    %3566 = vmatprep.subr.bf16.mxu0 0
    %3567 = vmatpush2.bf16.msra.mxu0 0
    %3568 = vmatprep.subr.bf16.mxu0 0
    %3569 = vmatpush2.bf16.msra.mxu0 0
    %3570 = vmatprep.subr.bf16.mxu0 0
    %3571 = vmatpush2.bf16.msra.mxu0 0
    %3572 = vmatprep.subr.bf16.mxu0 0
    %3573 = vmatpush2.bf16.msra.mxu0 0
    %3574 = vmatprep.subr.bf16.mxu0 0
    %3575 = vmatpush2.bf16.msra.mxu0 0
    %3576 = vmatprep.subr.bf16.mxu0 0
    %3577 = vmatpush2.bf16.msra.mxu0 0
    %3578 = vmatprep.subr.bf16.mxu0 0
    %3579 = vmatpush2.bf16.msra.mxu0 0
    %3580 = vmatprep.mubr.bf16.mxu0 0
    %3581 = vmatmul.mubr.bf16.gmra.mxu0 %v3488
    %v3582 = vpop.f32.mrf.mxu0
    %v3583 = vadd.f32 0.0, %v3582
    %v3584 = vpop.f32.mrf.mxu0
    %v3585 = vpop.f32.mrf.mxu0
    %v3586 = vpop.f32.mrf.mxu0
    %3587 = vdwg.mxu0
    %v3588 = vadd.f32 %v3531, %v3583
    %v3589 = vld [vmem:[%s260 + $0x6] sm:$0x3]
    %v3590 = vld [vmem:[%s2805] sm:$0xf]
    %v3591 = vld [vmem:[%s2805 + $0x4] sm:$0xf]
    %v3592 = vld [vmem:[%s2805 + $0x8] sm:$0xf]
    %v3593 = vld [vmem:[%s2805 + $0xc] sm:$0xf]
    %v3598 = vunpack.c.l.b16 %v3590
    %v3599 = vunpack.c.l.b16 %v3591
    %v3600 = vunpack.c.l.b16 %v3592
    %v3601 = vunpack.c.l.b16 %v3593
    %v3602 = vpack.c.b16 %v3599, %v3598
    %v3603 = vpack.c.b16 %v3601, %v3600
    %3606 = vmatprep.subr.bf16.mxu0 0
    %3607 = vmatpush1.bf16.msra.mxu0 0
    %3608 = vmatprep.subr.bf16.mxu0 0
    %3609 = vmatpush1.bf16.msra.mxu0 0
    %3610 = vmatprep.subr.bf16.mxu0 0
    %3611 = vmatpush1.bf16.msra.mxu0 0
    %3612 = vmatprep.subr.bf16.mxu0 0
    %3613 = vmatpush1.bf16.msra.mxu0 0
    %3614 = vmatprep.subr.bf16.mxu0 0
    %3615 = vmatpush1.bf16.msra.mxu0 0
    %3616 = vmatprep.subr.bf16.mxu0 0
    %3617 = vmatpush1.bf16.msra.mxu0 0
    %3618 = vmatprep.subr.bf16.mxu0 0
    %3619 = vmatpush1.bf16.msra.mxu0 %v3603
    %3620 = vmatprep.subr.bf16.mxu0 0
    %3621 = vmatpush1.bf16.msra.mxu0 %v3602
    %3622 = vmatprep.subr.bf16.mxu0 0
    %3623 = vmatpush2.bf16.msra.mxu0 0
    %3624 = vmatprep.subr.bf16.mxu0 0
    %3625 = vmatpush2.bf16.msra.mxu0 0
    %3626 = vmatprep.subr.bf16.mxu0 0
    %3627 = vmatpush2.bf16.msra.mxu0 0
    %3628 = vmatprep.subr.bf16.mxu0 0
    %3629 = vmatpush2.bf16.msra.mxu0 0
    %3630 = vmatprep.subr.bf16.mxu0 0
    %3631 = vmatpush2.bf16.msra.mxu0 0
    %3632 = vmatprep.subr.bf16.mxu0 0
    %3633 = vmatpush2.bf16.msra.mxu0 0
    %3634 = vmatprep.subr.bf16.mxu0 0
    %3635 = vmatpush2.bf16.msra.mxu0 0
    %3636 = vmatprep.subr.bf16.mxu0 0
    %3637 = vmatpush2.bf16.msra.mxu0 0
    %3638 = vmatprep.mubr.bf16.mxu0 0
    %3639 = vmatmul.mubr.bf16.gmra.mxu0 %v3488
    %v3640 = vpop.f32.mrf.mxu0
    %v3641 = vadd.f32 0.0, %v3640
    %v3642 = vpop.f32.mrf.mxu0
    %v3643 = vpop.f32.mrf.mxu0
    %v3644 = vpop.f32.mrf.mxu0
    %3645 = vdwg.mxu0
    %v3646 = vadd.f32 %v3589, %v3641
    %v3647 = vld [vmem:[%s317 + $0x6] sm:$0x3]
    %v3648 = vld [vmem:[%s2864] sm:$0xf]
    %v3649 = vld [vmem:[%s2864 + $0x4] sm:$0xf]
    %v3650 = vld [vmem:[%s2864 + $0x8] sm:$0xf]
    %v3651 = vld [vmem:[%s2864 + $0xc] sm:$0xf]
    %v3656 = vunpack.c.l.b16 %v3648
    %v3657 = vunpack.c.l.b16 %v3649
    %v3658 = vunpack.c.l.b16 %v3650
    %v3659 = vunpack.c.l.b16 %v3651
    %v3660 = vpack.c.b16 %v3657, %v3656
    %v3661 = vpack.c.b16 %v3659, %v3658
    %3664 = vmatprep.subr.bf16.mxu0 0
    %3665 = vmatpush1.bf16.msra.mxu0 0
    %3666 = vmatprep.subr.bf16.mxu0 0
    %3667 = vmatpush1.bf16.msra.mxu0 0
    %3668 = vmatprep.subr.bf16.mxu0 0
    %3669 = vmatpush1.bf16.msra.mxu0 0
    %3670 = vmatprep.subr.bf16.mxu0 0
    %3671 = vmatpush1.bf16.msra.mxu0 0
    %3672 = vmatprep.subr.bf16.mxu0 0
    %3673 = vmatpush1.bf16.msra.mxu0 0
    %3674 = vmatprep.subr.bf16.mxu0 0
    %3675 = vmatpush1.bf16.msra.mxu0 0
    %3676 = vmatprep.subr.bf16.mxu0 0
    %3677 = vmatpush1.bf16.msra.mxu0 %v3661
    %3678 = vmatprep.subr.bf16.mxu0 0
    %3679 = vmatpush1.bf16.msra.mxu0 %v3660
    %3680 = vmatprep.subr.bf16.mxu0 0
    %3681 = vmatpush2.bf16.msra.mxu0 0
    %3682 = vmatprep.subr.bf16.mxu0 0
    %3683 = vmatpush2.bf16.msra.mxu0 0
    %3684 = vmatprep.subr.bf16.mxu0 0
    %3685 = vmatpush2.bf16.msra.mxu0 0
    %3686 = vmatprep.subr.bf16.mxu0 0
    %3687 = vmatpush2.bf16.msra.mxu0 0
    %3688 = vmatprep.subr.bf16.mxu0 0
    %3689 = vmatpush2.bf16.msra.mxu0 0
    %3690 = vmatprep.subr.bf16.mxu0 0
    %3691 = vmatpush2.bf16.msra.mxu0 0
    %3692 = vmatprep.subr.bf16.mxu0 0
    %3693 = vmatpush2.bf16.msra.mxu0 0
    %3694 = vmatprep.subr.bf16.mxu0 0
    %3695 = vmatpush2.bf16.msra.mxu0 0
    %3696 = vmatprep.mubr.bf16.mxu0 0
    %3697 = vmatmul.mubr.bf16.gmra.mxu0 %v3488
    %v3698 = vpop.f32.mrf.mxu0
    %v3699 = vadd.f32 0.0, %v3698
    %v3700 = vpop.f32.mrf.mxu0
    %v3701 = vpop.f32.mrf.mxu0
    %v3702 = vpop.f32.mrf.mxu0
    %3703 = vdwg.mxu0
    %v3704 = vadd.f32 %v3647, %v3699
    %v3705 = vxor.u32 %v3530, 2147483648
    %v3706 = vmul.f32 %v3705, 1.442695
    %v3707 = vpow.pop %v3706
    %v3708 = vadd.f32 %v3707, 1.0
    %v3709 = vrcp.pop %v3708
    %v3710 = vmul.f32 1.0, %v3709
    %v3711 = vxor.u32 %v3588, 2147483648
    %v3712 = vmul.f32 %v3711, 1.442695
    %v3713 = vpow.pop %v3712
    %v3714 = vadd.f32 %v3713, 1.0
    %v3715 = vrcp.pop %v3714
    %v3716 = vmul.f32 1.0, %v3715
    %v3717 = vtanh.pop %v3646
    %v3718 = vxor.u32 %v3704, 2147483648
    %v3719 = vmul.f32 %v3718, 1.442695
    %v3720 = vpow.pop %v3719
    %v3721 = vadd.f32 %v3720, 1.0
    %v3722 = vrcp.pop %v3721
    %v3723 = vmul.f32 1.0, %v3722
    %v3724 = vmul.f32 %v3716, %v3465
    %v3725 = vmul.f32 %v3710, %v3717
    %v3726 = vadd.f32 %v3724, %v3725
    %v3727 = vtanh.pop %v3726
    %v3728 = vmul.f32 %v3723, %v3727
    %3729 = vst.msk [vmem:[#allocation2 + $0x6] sm:$0x3] %vm582, %v3728
    %v3730 = vpack.c.bf16 %v3728, %v3728
    %v3731 = vld [vmem:[#allocation3 + $0x8] sm:$0x3]
    %v3732 = vld [vmem:[#allocation8] sm:$0xf]
    %v3733 = vld [vmem:[#allocation8 + $0x4] sm:$0xf]
    %v3734 = vld [vmem:[#allocation8 + $0x8] sm:$0xf]
    %v3735 = vld [vmem:[#allocation8 + $0xc] sm:$0xf]
    %v3740 = vunpack.c.l.b16 %v3732
    %v3741 = vunpack.c.l.b16 %v3733
    %v3742 = vunpack.c.l.b16 %v3734
    %v3743 = vunpack.c.l.b16 %v3735
    %v3744 = vpack.c.b16 %v3741, %v3740
    %v3745 = vpack.c.b16 %v3743, %v3742
    %v3749 = vsel %vm146, %v3730, 0
    %3751 = vmatprep.subr.bf16.mxu0 0
    %3752 = vmatpush1.bf16.msra.mxu0 0
    %3753 = vmatprep.subr.bf16.mxu0 0
    %3754 = vmatpush1.bf16.msra.mxu0 0
    %3755 = vmatprep.subr.bf16.mxu0 0
    %3756 = vmatpush1.bf16.msra.mxu0 0
    %3757 = vmatprep.subr.bf16.mxu0 0
    %3758 = vmatpush1.bf16.msra.mxu0 0
    %3759 = vmatprep.subr.bf16.mxu0 0
    %3760 = vmatpush1.bf16.msra.mxu0 0
    %3761 = vmatprep.subr.bf16.mxu0 0
    %3762 = vmatpush1.bf16.msra.mxu0 0
    %3763 = vmatprep.subr.bf16.mxu0 0
    %3764 = vmatpush1.bf16.msra.mxu0 %v3745
    %3765 = vmatprep.subr.bf16.mxu0 0
    %3766 = vmatpush1.bf16.msra.mxu0 %v3744
    %3767 = vmatprep.subr.bf16.mxu0 0
    %3768 = vmatpush2.bf16.msra.mxu0 0
    %3769 = vmatprep.subr.bf16.mxu0 0
    %3770 = vmatpush2.bf16.msra.mxu0 0
    %3771 = vmatprep.subr.bf16.mxu0 0
    %3772 = vmatpush2.bf16.msra.mxu0 0
    %3773 = vmatprep.subr.bf16.mxu0 0
    %3774 = vmatpush2.bf16.msra.mxu0 0
    %3775 = vmatprep.subr.bf16.mxu0 0
    %3776 = vmatpush2.bf16.msra.mxu0 0
    %3777 = vmatprep.subr.bf16.mxu0 0
    %3778 = vmatpush2.bf16.msra.mxu0 0
    %3779 = vmatprep.subr.bf16.mxu0 0
    %3780 = vmatpush2.bf16.msra.mxu0 0
    %3781 = vmatprep.subr.bf16.mxu0 0
    %3782 = vmatpush2.bf16.msra.mxu0 0
    %3783 = vmatprep.mubr.bf16.mxu0 0
    %3784 = vmatmul.mubr.bf16.gmra.mxu0 %v3749
    %v3785 = vpop.f32.mrf.mxu0
    %v3786 = vadd.f32 0.0, %v3785
    %v3787 = vpop.f32.mrf.mxu0
    %v3788 = vpop.f32.mrf.mxu0
    %v3789 = vpop.f32.mrf.mxu0
    %3790 = vdwg.mxu0
    %v3791 = vadd.f32 %v3731, %v3786
    %v3792 = vld [vmem:[%s203 + $0x8] sm:$0x3]
    %v3793 = vld [vmem:[%s2746] sm:$0xf]
    %v3794 = vld [vmem:[%s2746 + $0x4] sm:$0xf]
    %v3795 = vld [vmem:[%s2746 + $0x8] sm:$0xf]
    %v3796 = vld [vmem:[%s2746 + $0xc] sm:$0xf]
    %v3801 = vunpack.c.l.b16 %v3793
    %v3802 = vunpack.c.l.b16 %v3794
    %v3803 = vunpack.c.l.b16 %v3795
    %v3804 = vunpack.c.l.b16 %v3796
    %v3805 = vpack.c.b16 %v3802, %v3801
    %v3806 = vpack.c.b16 %v3804, %v3803
    %3809 = vmatprep.subr.bf16.mxu0 0
    %3810 = vmatpush1.bf16.msra.mxu0 0
    %3811 = vmatprep.subr.bf16.mxu0 0
    %3812 = vmatpush1.bf16.msra.mxu0 0
    %3813 = vmatprep.subr.bf16.mxu0 0
    %3814 = vmatpush1.bf16.msra.mxu0 0
    %3815 = vmatprep.subr.bf16.mxu0 0
    %3816 = vmatpush1.bf16.msra.mxu0 0
    %3817 = vmatprep.subr.bf16.mxu0 0
    %3818 = vmatpush1.bf16.msra.mxu0 0
    %3819 = vmatprep.subr.bf16.mxu0 0
    %3820 = vmatpush1.bf16.msra.mxu0 0
    %3821 = vmatprep.subr.bf16.mxu0 0
    %3822 = vmatpush1.bf16.msra.mxu0 %v3806
    %3823 = vmatprep.subr.bf16.mxu0 0
    %3824 = vmatpush1.bf16.msra.mxu0 %v3805
    %3825 = vmatprep.subr.bf16.mxu0 0
    %3826 = vmatpush2.bf16.msra.mxu0 0
    %3827 = vmatprep.subr.bf16.mxu0 0
    %3828 = vmatpush2.bf16.msra.mxu0 0
    %3829 = vmatprep.subr.bf16.mxu0 0
    %3830 = vmatpush2.bf16.msra.mxu0 0
    %3831 = vmatprep.subr.bf16.mxu0 0
    %3832 = vmatpush2.bf16.msra.mxu0 0
    %3833 = vmatprep.subr.bf16.mxu0 0
    %3834 = vmatpush2.bf16.msra.mxu0 0
    %3835 = vmatprep.subr.bf16.mxu0 0
    %3836 = vmatpush2.bf16.msra.mxu0 0
    %3837 = vmatprep.subr.bf16.mxu0 0
    %3838 = vmatpush2.bf16.msra.mxu0 0
    %3839 = vmatprep.subr.bf16.mxu0 0
    %3840 = vmatpush2.bf16.msra.mxu0 0
    %3841 = vmatprep.mubr.bf16.mxu0 0
    %3842 = vmatmul.mubr.bf16.gmra.mxu0 %v3749
    %v3843 = vpop.f32.mrf.mxu0
    %v3844 = vadd.f32 0.0, %v3843
    %v3845 = vpop.f32.mrf.mxu0
    %v3846 = vpop.f32.mrf.mxu0
    %v3847 = vpop.f32.mrf.mxu0
    %3848 = vdwg.mxu0
    %v3849 = vadd.f32 %v3792, %v3844
    %v3850 = vld [vmem:[%s260 + $0x8] sm:$0x3]
    %v3851 = vld [vmem:[%s2805] sm:$0xf]
    %v3852 = vld [vmem:[%s2805 + $0x4] sm:$0xf]
    %v3853 = vld [vmem:[%s2805 + $0x8] sm:$0xf]
    %v3854 = vld [vmem:[%s2805 + $0xc] sm:$0xf]
    %v3859 = vunpack.c.l.b16 %v3851
    %v3860 = vunpack.c.l.b16 %v3852
    %v3861 = vunpack.c.l.b16 %v3853
    %v3862 = vunpack.c.l.b16 %v3854
    %v3863 = vpack.c.b16 %v3860, %v3859
    %v3864 = vpack.c.b16 %v3862, %v3861
    %3867 = vmatprep.subr.bf16.mxu0 0
    %3868 = vmatpush1.bf16.msra.mxu0 0
    %3869 = vmatprep.subr.bf16.mxu0 0
    %3870 = vmatpush1.bf16.msra.mxu0 0
    %3871 = vmatprep.subr.bf16.mxu0 0
    %3872 = vmatpush1.bf16.msra.mxu0 0
    %3873 = vmatprep.subr.bf16.mxu0 0
    %3874 = vmatpush1.bf16.msra.mxu0 0
    %3875 = vmatprep.subr.bf16.mxu0 0
    %3876 = vmatpush1.bf16.msra.mxu0 0
    %3877 = vmatprep.subr.bf16.mxu0 0
    %3878 = vmatpush1.bf16.msra.mxu0 0
    %3879 = vmatprep.subr.bf16.mxu0 0
    %3880 = vmatpush1.bf16.msra.mxu0 %v3864
    %3881 = vmatprep.subr.bf16.mxu0 0
    %3882 = vmatpush1.bf16.msra.mxu0 %v3863
    %3883 = vmatprep.subr.bf16.mxu0 0
    %3884 = vmatpush2.bf16.msra.mxu0 0
    %3885 = vmatprep.subr.bf16.mxu0 0
    %3886 = vmatpush2.bf16.msra.mxu0 0
    %3887 = vmatprep.subr.bf16.mxu0 0
    %3888 = vmatpush2.bf16.msra.mxu0 0
    %3889 = vmatprep.subr.bf16.mxu0 0
    %3890 = vmatpush2.bf16.msra.mxu0 0
    %3891 = vmatprep.subr.bf16.mxu0 0
    %3892 = vmatpush2.bf16.msra.mxu0 0
    %3893 = vmatprep.subr.bf16.mxu0 0
    %3894 = vmatpush2.bf16.msra.mxu0 0
    %3895 = vmatprep.subr.bf16.mxu0 0
    %3896 = vmatpush2.bf16.msra.mxu0 0
    %3897 = vmatprep.subr.bf16.mxu0 0
    %3898 = vmatpush2.bf16.msra.mxu0 0
    %3899 = vmatprep.mubr.bf16.mxu0 0
    %3900 = vmatmul.mubr.bf16.gmra.mxu0 %v3749
    %v3901 = vpop.f32.mrf.mxu0
    %v3902 = vadd.f32 0.0, %v3901
    %v3903 = vpop.f32.mrf.mxu0
    %v3904 = vpop.f32.mrf.mxu0
    %v3905 = vpop.f32.mrf.mxu0
    %3906 = vdwg.mxu0
    %v3907 = vadd.f32 %v3850, %v3902
    %v3908 = vld [vmem:[%s317 + $0x8] sm:$0x3]
    %v3909 = vld [vmem:[%s2864] sm:$0xf]
    %v3910 = vld [vmem:[%s2864 + $0x4] sm:$0xf]
    %v3911 = vld [vmem:[%s2864 + $0x8] sm:$0xf]
    %v3912 = vld [vmem:[%s2864 + $0xc] sm:$0xf]
    %v3917 = vunpack.c.l.b16 %v3909
    %v3918 = vunpack.c.l.b16 %v3910
    %v3919 = vunpack.c.l.b16 %v3911
    %v3920 = vunpack.c.l.b16 %v3912
    %v3921 = vpack.c.b16 %v3918, %v3917
    %v3922 = vpack.c.b16 %v3920, %v3919
    %3925 = vmatprep.subr.bf16.mxu0 0
    %3926 = vmatpush1.bf16.msra.mxu0 0
    %3927 = vmatprep.subr.bf16.mxu0 0
    %3928 = vmatpush1.bf16.msra.mxu0 0
    %3929 = vmatprep.subr.bf16.mxu0 0
    %3930 = vmatpush1.bf16.msra.mxu0 0
    %3931 = vmatprep.subr.bf16.mxu0 0
    %3932 = vmatpush1.bf16.msra.mxu0 0
    %3933 = vmatprep.subr.bf16.mxu0 0
    %3934 = vmatpush1.bf16.msra.mxu0 0
    %3935 = vmatprep.subr.bf16.mxu0 0
    %3936 = vmatpush1.bf16.msra.mxu0 0
    %3937 = vmatprep.subr.bf16.mxu0 0
    %3938 = vmatpush1.bf16.msra.mxu0 %v3922
    %3939 = vmatprep.subr.bf16.mxu0 0
    %3940 = vmatpush1.bf16.msra.mxu0 %v3921
    %3941 = vmatprep.subr.bf16.mxu0 0
    %3942 = vmatpush2.bf16.msra.mxu0 0
    %3943 = vmatprep.subr.bf16.mxu0 0
    %3944 = vmatpush2.bf16.msra.mxu0 0
    %3945 = vmatprep.subr.bf16.mxu0 0
    %3946 = vmatpush2.bf16.msra.mxu0 0
    %3947 = vmatprep.subr.bf16.mxu0 0
    %3948 = vmatpush2.bf16.msra.mxu0 0
    %3949 = vmatprep.subr.bf16.mxu0 0
    %3950 = vmatpush2.bf16.msra.mxu0 0
    %3951 = vmatprep.subr.bf16.mxu0 0
    %3952 = vmatpush2.bf16.msra.mxu0 0
    %3953 = vmatprep.subr.bf16.mxu0 0
    %3954 = vmatpush2.bf16.msra.mxu0 0
    %3955 = vmatprep.subr.bf16.mxu0 0
    %3956 = vmatpush2.bf16.msra.mxu0 0
    %3957 = vmatprep.mubr.bf16.mxu0 0
    %3958 = vmatmul.mubr.bf16.gmra.mxu0 %v3749
    %v3959 = vpop.f32.mrf.mxu0
    %v3960 = vadd.f32 0.0, %v3959
    %v3961 = vpop.f32.mrf.mxu0
    %v3962 = vpop.f32.mrf.mxu0
    %v3963 = vpop.f32.mrf.mxu0
    %3964 = vdwg.mxu0
    %v3965 = vadd.f32 %v3908, %v3960
    %v3966 = vxor.u32 %v3791, 2147483648
    %v3967 = vmul.f32 %v3966, 1.442695
    %v3968 = vpow.pop %v3967
    %v3969 = vadd.f32 %v3968, 1.0
    %v3970 = vrcp.pop %v3969
    %v3971 = vmul.f32 1.0, %v3970
    %v3972 = vxor.u32 %v3849, 2147483648
    %v3973 = vmul.f32 %v3972, 1.442695
    %v3974 = vpow.pop %v3973
    %v3975 = vadd.f32 %v3974, 1.0
    %v3976 = vrcp.pop %v3975
    %v3977 = vmul.f32 1.0, %v3976
    %v3978 = vtanh.pop %v3907
    %v3979 = vxor.u32 %v3965, 2147483648
    %v3980 = vmul.f32 %v3979, 1.442695
    %v3981 = vpow.pop %v3980
    %v3982 = vadd.f32 %v3981, 1.0
    %v3983 = vrcp.pop %v3982
    %v3984 = vmul.f32 1.0, %v3983
    %v3985 = vmul.f32 %v3977, %v3726
    %v3986 = vmul.f32 %v3971, %v3978
    %v3987 = vadd.f32 %v3985, %v3986
    %v3988 = vtanh.pop %v3987
    %v3989 = vmul.f32 %v3984, %v3988
    %3990 = vst.msk [vmem:[#allocation2 + $0x8] sm:$0x3] %vm582, %v3989
    %v3991 = vpack.c.bf16 %v3989, %v3989
    %v3992 = vld [vmem:[#allocation3 + $0xa] sm:$0x3]
    %v3993 = vld [vmem:[#allocation8] sm:$0xf]
    %v3994 = vld [vmem:[#allocation8 + $0x4] sm:$0xf]
    %v3995 = vld [vmem:[#allocation8 + $0x8] sm:$0xf]
    %v3996 = vld [vmem:[#allocation8 + $0xc] sm:$0xf]
    %v4001 = vunpack.c.l.b16 %v3993
    %v4002 = vunpack.c.l.b16 %v3994
    %v4003 = vunpack.c.l.b16 %v3995
    %v4004 = vunpack.c.l.b16 %v3996
    %v4005 = vpack.c.b16 %v4002, %v4001
    %v4006 = vpack.c.b16 %v4004, %v4003
    %v4010 = vsel %vm146, %v3991, 0
    %4012 = vmatprep.subr.bf16.mxu0 0
    %4013 = vmatpush1.bf16.msra.mxu0 0
    %4014 = vmatprep.subr.bf16.mxu0 0
    %4015 = vmatpush1.bf16.msra.mxu0 0
    %4016 = vmatprep.subr.bf16.mxu0 0
    %4017 = vmatpush1.bf16.msra.mxu0 0
    %4018 = vmatprep.subr.bf16.mxu0 0
    %4019 = vmatpush1.bf16.msra.mxu0 0
    %4020 = vmatprep.subr.bf16.mxu0 0
    %4021 = vmatpush1.bf16.msra.mxu0 0
    %4022 = vmatprep.subr.bf16.mxu0 0
    %4023 = vmatpush1.bf16.msra.mxu0 0
    %4024 = vmatprep.subr.bf16.mxu0 0
    %4025 = vmatpush1.bf16.msra.mxu0 %v4006
    %4026 = vmatprep.subr.bf16.mxu0 0
    %4027 = vmatpush1.bf16.msra.mxu0 %v4005
    %4028 = vmatprep.subr.bf16.mxu0 0
    %4029 = vmatpush2.bf16.msra.mxu0 0
    %4030 = vmatprep.subr.bf16.mxu0 0
    %4031 = vmatpush2.bf16.msra.mxu0 0
    %4032 = vmatprep.subr.bf16.mxu0 0
    %4033 = vmatpush2.bf16.msra.mxu0 0
    %4034 = vmatprep.subr.bf16.mxu0 0
    %4035 = vmatpush2.bf16.msra.mxu0 0
    %4036 = vmatprep.subr.bf16.mxu0 0
    %4037 = vmatpush2.bf16.msra.mxu0 0
    %4038 = vmatprep.subr.bf16.mxu0 0
    %4039 = vmatpush2.bf16.msra.mxu0 0
    %4040 = vmatprep.subr.bf16.mxu0 0
    %4041 = vmatpush2.bf16.msra.mxu0 0
    %4042 = vmatprep.subr.bf16.mxu0 0
    %4043 = vmatpush2.bf16.msra.mxu0 0
    %4044 = vmatprep.mubr.bf16.mxu0 0
    %4045 = vmatmul.mubr.bf16.gmra.mxu0 %v4010
    %v4046 = vpop.f32.mrf.mxu0
    %v4047 = vadd.f32 0.0, %v4046
    %v4048 = vpop.f32.mrf.mxu0
    %v4049 = vpop.f32.mrf.mxu0
    %v4050 = vpop.f32.mrf.mxu0
    %4051 = vdwg.mxu0
    %v4052 = vadd.f32 %v3992, %v4047
    %v4053 = vld [vmem:[%s203 + $0xa] sm:$0x3]
    %v4054 = vld [vmem:[%s2746] sm:$0xf]
    %v4055 = vld [vmem:[%s2746 + $0x4] sm:$0xf]
    %v4056 = vld [vmem:[%s2746 + $0x8] sm:$0xf]
    %v4057 = vld [vmem:[%s2746 + $0xc] sm:$0xf]
    %v4062 = vunpack.c.l.b16 %v4054
    %v4063 = vunpack.c.l.b16 %v4055
    %v4064 = vunpack.c.l.b16 %v4056
    %v4065 = vunpack.c.l.b16 %v4057
    %v4066 = vpack.c.b16 %v4063, %v4062
    %v4067 = vpack.c.b16 %v4065, %v4064
    %4070 = vmatprep.subr.bf16.mxu0 0
    %4071 = vmatpush1.bf16.msra.mxu0 0
    %4072 = vmatprep.subr.bf16.mxu0 0
    %4073 = vmatpush1.bf16.msra.mxu0 0
    %4074 = vmatprep.subr.bf16.mxu0 0
    %4075 = vmatpush1.bf16.msra.mxu0 0
    %4076 = vmatprep.subr.bf16.mxu0 0
    %4077 = vmatpush1.bf16.msra.mxu0 0
    %4078 = vmatprep.subr.bf16.mxu0 0
    %4079 = vmatpush1.bf16.msra.mxu0 0
    %4080 = vmatprep.subr.bf16.mxu0 0
    %4081 = vmatpush1.bf16.msra.mxu0 0
    %4082 = vmatprep.subr.bf16.mxu0 0
    %4083 = vmatpush1.bf16.msra.mxu0 %v4067
    %4084 = vmatprep.subr.bf16.mxu0 0
    %4085 = vmatpush1.bf16.msra.mxu0 %v4066
    %4086 = vmatprep.subr.bf16.mxu0 0
    %4087 = vmatpush2.bf16.msra.mxu0 0
    %4088 = vmatprep.subr.bf16.mxu0 0
    %4089 = vmatpush2.bf16.msra.mxu0 0
    %4090 = vmatprep.subr.bf16.mxu0 0
    %4091 = vmatpush2.bf16.msra.mxu0 0
    %4092 = vmatprep.subr.bf16.mxu0 0
    %4093 = vmatpush2.bf16.msra.mxu0 0
    %4094 = vmatprep.subr.bf16.mxu0 0
    %4095 = vmatpush2.bf16.msra.mxu0 0
    %4096 = vmatprep.subr.bf16.mxu0 0
    %4097 = vmatpush2.bf16.msra.mxu0 0
    %4098 = vmatprep.subr.bf16.mxu0 0
    %4099 = vmatpush2.bf16.msra.mxu0 0
    %4100 = vmatprep.subr.bf16.mxu0 0
    %4101 = vmatpush2.bf16.msra.mxu0 0
    %4102 = vmatprep.mubr.bf16.mxu0 0
    %4103 = vmatmul.mubr.bf16.gmra.mxu0 %v4010
    %v4104 = vpop.f32.mrf.mxu0
    %v4105 = vadd.f32 0.0, %v4104
    %v4106 = vpop.f32.mrf.mxu0
    %v4107 = vpop.f32.mrf.mxu0
    %v4108 = vpop.f32.mrf.mxu0
    %4109 = vdwg.mxu0
    %v4110 = vadd.f32 %v4053, %v4105
    %v4111 = vld [vmem:[%s260 + $0xa] sm:$0x3]
    %v4112 = vld [vmem:[%s2805] sm:$0xf]
    %v4113 = vld [vmem:[%s2805 + $0x4] sm:$0xf]
    %v4114 = vld [vmem:[%s2805 + $0x8] sm:$0xf]
    %v4115 = vld [vmem:[%s2805 + $0xc] sm:$0xf]
    %v4120 = vunpack.c.l.b16 %v4112
    %v4121 = vunpack.c.l.b16 %v4113
    %v4122 = vunpack.c.l.b16 %v4114
    %v4123 = vunpack.c.l.b16 %v4115
    %v4124 = vpack.c.b16 %v4121, %v4120
    %v4125 = vpack.c.b16 %v4123, %v4122
    %4128 = vmatprep.subr.bf16.mxu0 0
    %4129 = vmatpush1.bf16.msra.mxu0 0
    %4130 = vmatprep.subr.bf16.mxu0 0
    %4131 = vmatpush1.bf16.msra.mxu0 0
    %4132 = vmatprep.subr.bf16.mxu0 0
    %4133 = vmatpush1.bf16.msra.mxu0 0
    %4134 = vmatprep.subr.bf16.mxu0 0
    %4135 = vmatpush1.bf16.msra.mxu0 0
    %4136 = vmatprep.subr.bf16.mxu0 0
    %4137 = vmatpush1.bf16.msra.mxu0 0
    %4138 = vmatprep.subr.bf16.mxu0 0
    %4139 = vmatpush1.bf16.msra.mxu0 0
    %4140 = vmatprep.subr.bf16.mxu0 0
    %4141 = vmatpush1.bf16.msra.mxu0 %v4125
    %4142 = vmatprep.subr.bf16.mxu0 0
    %4143 = vmatpush1.bf16.msra.mxu0 %v4124
    %4144 = vmatprep.subr.bf16.mxu0 0
    %4145 = vmatpush2.bf16.msra.mxu0 0
    %4146 = vmatprep.subr.bf16.mxu0 0
    %4147 = vmatpush2.bf16.msra.mxu0 0
    %4148 = vmatprep.subr.bf16.mxu0 0
    %4149 = vmatpush2.bf16.msra.mxu0 0
    %4150 = vmatprep.subr.bf16.mxu0 0
    %4151 = vmatpush2.bf16.msra.mxu0 0
    %4152 = vmatprep.subr.bf16.mxu0 0
    %4153 = vmatpush2.bf16.msra.mxu0 0
    %4154 = vmatprep.subr.bf16.mxu0 0
    %4155 = vmatpush2.bf16.msra.mxu0 0
    %4156 = vmatprep.subr.bf16.mxu0 0
    %4157 = vmatpush2.bf16.msra.mxu0 0
    %4158 = vmatprep.subr.bf16.mxu0 0
    %4159 = vmatpush2.bf16.msra.mxu0 0
    %4160 = vmatprep.mubr.bf16.mxu0 0
    %4161 = vmatmul.mubr.bf16.gmra.mxu0 %v4010
    %v4162 = vpop.f32.mrf.mxu0
    %v4163 = vadd.f32 0.0, %v4162
    %v4164 = vpop.f32.mrf.mxu0
    %v4165 = vpop.f32.mrf.mxu0
    %v4166 = vpop.f32.mrf.mxu0
    %4167 = vdwg.mxu0
    %v4168 = vadd.f32 %v4111, %v4163
    %v4169 = vld [vmem:[%s317 + $0xa] sm:$0x3]
    %v4170 = vld [vmem:[%s2864] sm:$0xf]
    %v4171 = vld [vmem:[%s2864 + $0x4] sm:$0xf]
    %v4172 = vld [vmem:[%s2864 + $0x8] sm:$0xf]
    %v4173 = vld [vmem:[%s2864 + $0xc] sm:$0xf]
    %v4178 = vunpack.c.l.b16 %v4170
    %v4179 = vunpack.c.l.b16 %v4171
    %v4180 = vunpack.c.l.b16 %v4172
    %v4181 = vunpack.c.l.b16 %v4173
    %v4182 = vpack.c.b16 %v4179, %v4178
    %v4183 = vpack.c.b16 %v4181, %v4180
    %4186 = vmatprep.subr.bf16.mxu0 0
    %4187 = vmatpush1.bf16.msra.mxu0 0
    %4188 = vmatprep.subr.bf16.mxu0 0
    %4189 = vmatpush1.bf16.msra.mxu0 0
    %4190 = vmatprep.subr.bf16.mxu0 0
    %4191 = vmatpush1.bf16.msra.mxu0 0
    %4192 = vmatprep.subr.bf16.mxu0 0
    %4193 = vmatpush1.bf16.msra.mxu0 0
    %4194 = vmatprep.subr.bf16.mxu0 0
    %4195 = vmatpush1.bf16.msra.mxu0 0
    %4196 = vmatprep.subr.bf16.mxu0 0
    %4197 = vmatpush1.bf16.msra.mxu0 0
    %4198 = vmatprep.subr.bf16.mxu0 0
    %4199 = vmatpush1.bf16.msra.mxu0 %v4183
    %4200 = vmatprep.subr.bf16.mxu0 0
    %4201 = vmatpush1.bf16.msra.mxu0 %v4182
    %4202 = vmatprep.subr.bf16.mxu0 0
    %4203 = vmatpush2.bf16.msra.mxu0 0
    %4204 = vmatprep.subr.bf16.mxu0 0
    %4205 = vmatpush2.bf16.msra.mxu0 0
    %4206 = vmatprep.subr.bf16.mxu0 0
    %4207 = vmatpush2.bf16.msra.mxu0 0
    %4208 = vmatprep.subr.bf16.mxu0 0
    %4209 = vmatpush2.bf16.msra.mxu0 0
    %4210 = vmatprep.subr.bf16.mxu0 0
    %4211 = vmatpush2.bf16.msra.mxu0 0
    %4212 = vmatprep.subr.bf16.mxu0 0
    %4213 = vmatpush2.bf16.msra.mxu0 0
    %4214 = vmatprep.subr.bf16.mxu0 0
    %4215 = vmatpush2.bf16.msra.mxu0 0
    %4216 = vmatprep.subr.bf16.mxu0 0
    %4217 = vmatpush2.bf16.msra.mxu0 0
    %4218 = vmatprep.mubr.bf16.mxu0 0
    %4219 = vmatmul.mubr.bf16.gmra.mxu0 %v4010
    %v4220 = vpop.f32.mrf.mxu0
    %v4221 = vadd.f32 0.0, %v4220
    %v4222 = vpop.f32.mrf.mxu0
    %v4223 = vpop.f32.mrf.mxu0
    %v4224 = vpop.f32.mrf.mxu0
    %4225 = vdwg.mxu0
    %v4226 = vadd.f32 %v4169, %v4221
    %v4227 = vxor.u32 %v4052, 2147483648
    %v4228 = vmul.f32 %v4227, 1.442695
    %v4229 = vpow.pop %v4228
    %v4230 = vadd.f32 %v4229, 1.0
    %v4231 = vrcp.pop %v4230
    %v4232 = vmul.f32 1.0, %v4231
    %v4233 = vxor.u32 %v4110, 2147483648
    %v4234 = vmul.f32 %v4233, 1.442695
    %v4235 = vpow.pop %v4234
    %v4236 = vadd.f32 %v4235, 1.0
    %v4237 = vrcp.pop %v4236
    %v4238 = vmul.f32 1.0, %v4237
    %v4239 = vtanh.pop %v4168
    %v4240 = vxor.u32 %v4226, 2147483648
    %v4241 = vmul.f32 %v4240, 1.442695
    %v4242 = vpow.pop %v4241
    %v4243 = vadd.f32 %v4242, 1.0
    %v4244 = vrcp.pop %v4243
    %v4245 = vmul.f32 1.0, %v4244
    %v4246 = vmul.f32 %v4238, %v3987
    %v4247 = vmul.f32 %v4232, %v4239
    %v4248 = vadd.f32 %v4246, %v4247
    %v4249 = vtanh.pop %v4248
    %v4250 = vmul.f32 %v4245, %v4249
    %4251 = vst.msk [vmem:[#allocation2 + $0xa] sm:$0x3] %vm582, %v4250
    %v4252 = vpack.c.bf16 %v4250, %v4250
    %v4253 = vld [vmem:[#allocation3 + $0xc] sm:$0x3]
    %v4254 = vld [vmem:[#allocation8] sm:$0xf]
    %v4255 = vld [vmem:[#allocation8 + $0x4] sm:$0xf]
    %v4256 = vld [vmem:[#allocation8 + $0x8] sm:$0xf]
    %v4257 = vld [vmem:[#allocation8 + $0xc] sm:$0xf]
    %v4262 = vunpack.c.l.b16 %v4254
    %v4263 = vunpack.c.l.b16 %v4255
    %v4264 = vunpack.c.l.b16 %v4256
    %v4265 = vunpack.c.l.b16 %v4257
    %v4266 = vpack.c.b16 %v4263, %v4262
    %v4267 = vpack.c.b16 %v4265, %v4264
    %v4271 = vsel %vm146, %v4252, 0
    %4273 = vmatprep.subr.bf16.mxu0 0
    %4274 = vmatpush1.bf16.msra.mxu0 0
    %4275 = vmatprep.subr.bf16.mxu0 0
    %4276 = vmatpush1.bf16.msra.mxu0 0
    %4277 = vmatprep.subr.bf16.mxu0 0
    %4278 = vmatpush1.bf16.msra.mxu0 0
    %4279 = vmatprep.subr.bf16.mxu0 0
    %4280 = vmatpush1.bf16.msra.mxu0 0
    %4281 = vmatprep.subr.bf16.mxu0 0
    %4282 = vmatpush1.bf16.msra.mxu0 0
    %4283 = vmatprep.subr.bf16.mxu0 0
    %4284 = vmatpush1.bf16.msra.mxu0 0
    %4285 = vmatprep.subr.bf16.mxu0 0
    %4286 = vmatpush1.bf16.msra.mxu0 %v4267
    %4287 = vmatprep.subr.bf16.mxu0 0
    %4288 = vmatpush1.bf16.msra.mxu0 %v4266
    %4289 = vmatprep.subr.bf16.mxu0 0
    %4290 = vmatpush2.bf16.msra.mxu0 0
    %4291 = vmatprep.subr.bf16.mxu0 0
    %4292 = vmatpush2.bf16.msra.mxu0 0
    %4293 = vmatprep.subr.bf16.mxu0 0
    %4294 = vmatpush2.bf16.msra.mxu0 0
    %4295 = vmatprep.subr.bf16.mxu0 0
    %4296 = vmatpush2.bf16.msra.mxu0 0
    %4297 = vmatprep.subr.bf16.mxu0 0
    %4298 = vmatpush2.bf16.msra.mxu0 0
    %4299 = vmatprep.subr.bf16.mxu0 0
    %4300 = vmatpush2.bf16.msra.mxu0 0
    %4301 = vmatprep.subr.bf16.mxu0 0
    %4302 = vmatpush2.bf16.msra.mxu0 0
    %4303 = vmatprep.subr.bf16.mxu0 0
    %4304 = vmatpush2.bf16.msra.mxu0 0
    %4305 = vmatprep.mubr.bf16.mxu0 0
    %4306 = vmatmul.mubr.bf16.gmra.mxu0 %v4271
    %v4307 = vpop.f32.mrf.mxu0
    %v4308 = vadd.f32 0.0, %v4307
    %v4309 = vpop.f32.mrf.mxu0
    %v4310 = vpop.f32.mrf.mxu0
    %v4311 = vpop.f32.mrf.mxu0
    %4312 = vdwg.mxu0
    %v4313 = vadd.f32 %v4253, %v4308
    %v4314 = vld [vmem:[%s203 + $0xc] sm:$0x3]
    %v4315 = vld [vmem:[%s2746] sm:$0xf]
    %v4316 = vld [vmem:[%s2746 + $0x4] sm:$0xf]
    %v4317 = vld [vmem:[%s2746 + $0x8] sm:$0xf]
    %v4318 = vld [vmem:[%s2746 + $0xc] sm:$0xf]
    %v4323 = vunpack.c.l.b16 %v4315
    %v4324 = vunpack.c.l.b16 %v4316
    %v4325 = vunpack.c.l.b16 %v4317
    %v4326 = vunpack.c.l.b16 %v4318
    %v4327 = vpack.c.b16 %v4324, %v4323
    %v4328 = vpack.c.b16 %v4326, %v4325
    %4331 = vmatprep.subr.bf16.mxu0 0
    %4332 = vmatpush1.bf16.msra.mxu0 0
    %4333 = vmatprep.subr.bf16.mxu0 0
    %4334 = vmatpush1.bf16.msra.mxu0 0
    %4335 = vmatprep.subr.bf16.mxu0 0
    %4336 = vmatpush1.bf16.msra.mxu0 0
    %4337 = vmatprep.subr.bf16.mxu0 0
    %4338 = vmatpush1.bf16.msra.mxu0 0
    %4339 = vmatprep.subr.bf16.mxu0 0
    %4340 = vmatpush1.bf16.msra.mxu0 0
    %4341 = vmatprep.subr.bf16.mxu0 0
    %4342 = vmatpush1.bf16.msra.mxu0 0
    %4343 = vmatprep.subr.bf16.mxu0 0
    %4344 = vmatpush1.bf16.msra.mxu0 %v4328
    %4345 = vmatprep.subr.bf16.mxu0 0
    %4346 = vmatpush1.bf16.msra.mxu0 %v4327
    %4347 = vmatprep.subr.bf16.mxu0 0
    %4348 = vmatpush2.bf16.msra.mxu0 0
    %4349 = vmatprep.subr.bf16.mxu0 0
    %4350 = vmatpush2.bf16.msra.mxu0 0
    %4351 = vmatprep.subr.bf16.mxu0 0
    %4352 = vmatpush2.bf16.msra.mxu0 0
    %4353 = vmatprep.subr.bf16.mxu0 0
    %4354 = vmatpush2.bf16.msra.mxu0 0
    %4355 = vmatprep.subr.bf16.mxu0 0
    %4356 = vmatpush2.bf16.msra.mxu0 0
    %4357 = vmatprep.subr.bf16.mxu0 0
    %4358 = vmatpush2.bf16.msra.mxu0 0
    %4359 = vmatprep.subr.bf16.mxu0 0
    %4360 = vmatpush2.bf16.msra.mxu0 0
    %4361 = vmatprep.subr.bf16.mxu0 0
    %4362 = vmatpush2.bf16.msra.mxu0 0
    %4363 = vmatprep.mubr.bf16.mxu0 0
    %4364 = vmatmul.mubr.bf16.gmra.mxu0 %v4271
    %v4365 = vpop.f32.mrf.mxu0
    %v4366 = vadd.f32 0.0, %v4365
    %v4367 = vpop.f32.mrf.mxu0
    %v4368 = vpop.f32.mrf.mxu0
    %v4369 = vpop.f32.mrf.mxu0
    %4370 = vdwg.mxu0
    %v4371 = vadd.f32 %v4314, %v4366
    %v4372 = vld [vmem:[%s260 + $0xc] sm:$0x3]
    %v4373 = vld [vmem:[%s2805] sm:$0xf]
    %v4374 = vld [vmem:[%s2805 + $0x4] sm:$0xf]
    %v4375 = vld [vmem:[%s2805 + $0x8] sm:$0xf]
    %v4376 = vld [vmem:[%s2805 + $0xc] sm:$0xf]
    %v4381 = vunpack.c.l.b16 %v4373
    %v4382 = vunpack.c.l.b16 %v4374
    %v4383 = vunpack.c.l.b16 %v4375
    %v4384 = vunpack.c.l.b16 %v4376
    %v4385 = vpack.c.b16 %v4382, %v4381
    %v4386 = vpack.c.b16 %v4384, %v4383
    %4389 = vmatprep.subr.bf16.mxu0 0
    %4390 = vmatpush1.bf16.msra.mxu0 0
    %4391 = vmatprep.subr.bf16.mxu0 0
    %4392 = vmatpush1.bf16.msra.mxu0 0
    %4393 = vmatprep.subr.bf16.mxu0 0
    %4394 = vmatpush1.bf16.msra.mxu0 0
    %4395 = vmatprep.subr.bf16.mxu0 0
    %4396 = vmatpush1.bf16.msra.mxu0 0
    %4397 = vmatprep.subr.bf16.mxu0 0
    %4398 = vmatpush1.bf16.msra.mxu0 0
    %4399 = vmatprep.subr.bf16.mxu0 0
    %4400 = vmatpush1.bf16.msra.mxu0 0
    %4401 = vmatprep.subr.bf16.mxu0 0
    %4402 = vmatpush1.bf16.msra.mxu0 %v4386
    %4403 = vmatprep.subr.bf16.mxu0 0
    %4404 = vmatpush1.bf16.msra.mxu0 %v4385
    %4405 = vmatprep.subr.bf16.mxu0 0
    %4406 = vmatpush2.bf16.msra.mxu0 0
    %4407 = vmatprep.subr.bf16.mxu0 0
    %4408 = vmatpush2.bf16.msra.mxu0 0
    %4409 = vmatprep.subr.bf16.mxu0 0
    %4410 = vmatpush2.bf16.msra.mxu0 0
    %4411 = vmatprep.subr.bf16.mxu0 0
    %4412 = vmatpush2.bf16.msra.mxu0 0
    %4413 = vmatprep.subr.bf16.mxu0 0
    %4414 = vmatpush2.bf16.msra.mxu0 0
    %4415 = vmatprep.subr.bf16.mxu0 0
    %4416 = vmatpush2.bf16.msra.mxu0 0
    %4417 = vmatprep.subr.bf16.mxu0 0
    %4418 = vmatpush2.bf16.msra.mxu0 0
    %4419 = vmatprep.subr.bf16.mxu0 0
    %4420 = vmatpush2.bf16.msra.mxu0 0
    %4421 = vmatprep.mubr.bf16.mxu0 0
    %4422 = vmatmul.mubr.bf16.gmra.mxu0 %v4271
    %v4423 = vpop.f32.mrf.mxu0
    %v4424 = vadd.f32 0.0, %v4423
    %v4425 = vpop.f32.mrf.mxu0
    %v4426 = vpop.f32.mrf.mxu0
    %v4427 = vpop.f32.mrf.mxu0
    %4428 = vdwg.mxu0
    %v4429 = vadd.f32 %v4372, %v4424
    %v4430 = vld [vmem:[%s317 + $0xc] sm:$0x3]
    %v4431 = vld [vmem:[%s2864] sm:$0xf]
    %v4432 = vld [vmem:[%s2864 + $0x4] sm:$0xf]
    %v4433 = vld [vmem:[%s2864 + $0x8] sm:$0xf]
    %v4434 = vld [vmem:[%s2864 + $0xc] sm:$0xf]
    %v4439 = vunpack.c.l.b16 %v4431
    %v4440 = vunpack.c.l.b16 %v4432
    %v4441 = vunpack.c.l.b16 %v4433
    %v4442 = vunpack.c.l.b16 %v4434
    %v4443 = vpack.c.b16 %v4440, %v4439
    %v4444 = vpack.c.b16 %v4442, %v4441
    %4447 = vmatprep.subr.bf16.mxu0 0
    %4448 = vmatpush1.bf16.msra.mxu0 0
    %4449 = vmatprep.subr.bf16.mxu0 0
    %4450 = vmatpush1.bf16.msra.mxu0 0
    %4451 = vmatprep.subr.bf16.mxu0 0
    %4452 = vmatpush1.bf16.msra.mxu0 0
    %4453 = vmatprep.subr.bf16.mxu0 0
    %4454 = vmatpush1.bf16.msra.mxu0 0
    %4455 = vmatprep.subr.bf16.mxu0 0
    %4456 = vmatpush1.bf16.msra.mxu0 0
    %4457 = vmatprep.subr.bf16.mxu0 0
    %4458 = vmatpush1.bf16.msra.mxu0 0
    %4459 = vmatprep.subr.bf16.mxu0 0
    %4460 = vmatpush1.bf16.msra.mxu0 %v4444
    %4461 = vmatprep.subr.bf16.mxu0 0
    %4462 = vmatpush1.bf16.msra.mxu0 %v4443
    %4463 = vmatprep.subr.bf16.mxu0 0
    %4464 = vmatpush2.bf16.msra.mxu0 0
    %4465 = vmatprep.subr.bf16.mxu0 0
    %4466 = vmatpush2.bf16.msra.mxu0 0
    %4467 = vmatprep.subr.bf16.mxu0 0
    %4468 = vmatpush2.bf16.msra.mxu0 0
    %4469 = vmatprep.subr.bf16.mxu0 0
    %4470 = vmatpush2.bf16.msra.mxu0 0
    %4471 = vmatprep.subr.bf16.mxu0 0
    %4472 = vmatpush2.bf16.msra.mxu0 0
    %4473 = vmatprep.subr.bf16.mxu0 0
    %4474 = vmatpush2.bf16.msra.mxu0 0
    %4475 = vmatprep.subr.bf16.mxu0 0
    %4476 = vmatpush2.bf16.msra.mxu0 0
    %4477 = vmatprep.subr.bf16.mxu0 0
    %4478 = vmatpush2.bf16.msra.mxu0 0
    %4479 = vmatprep.mubr.bf16.mxu0 0
    %4480 = vmatmul.mubr.bf16.gmra.mxu0 %v4271
    %v4481 = vpop.f32.mrf.mxu0
    %v4482 = vadd.f32 0.0, %v4481
    %v4483 = vpop.f32.mrf.mxu0
    %v4484 = vpop.f32.mrf.mxu0
    %v4485 = vpop.f32.mrf.mxu0
    %4486 = vdwg.mxu0
    %v4487 = vadd.f32 %v4430, %v4482
    %v4488 = vxor.u32 %v4313, 2147483648
    %v4489 = vmul.f32 %v4488, 1.442695
    %v4490 = vpow.pop %v4489
    %v4491 = vadd.f32 %v4490, 1.0
    %v4492 = vrcp.pop %v4491
    %v4493 = vmul.f32 1.0, %v4492
    %v4494 = vxor.u32 %v4371, 2147483648
    %v4495 = vmul.f32 %v4494, 1.442695
    %v4496 = vpow.pop %v4495
    %v4497 = vadd.f32 %v4496, 1.0
    %v4498 = vrcp.pop %v4497
    %v4499 = vmul.f32 1.0, %v4498
    %v4500 = vtanh.pop %v4429
    %v4501 = vxor.u32 %v4487, 2147483648
    %v4502 = vmul.f32 %v4501, 1.442695
    %v4503 = vpow.pop %v4502
    %v4504 = vadd.f32 %v4503, 1.0
    %v4505 = vrcp.pop %v4504
    %v4506 = vmul.f32 1.0, %v4505
    %v4507 = vmul.f32 %v4499, %v4248
    %v4508 = vmul.f32 %v4493, %v4500
    %v4509 = vadd.f32 %v4507, %v4508
    %v4510 = vtanh.pop %v4509
    %v4511 = vmul.f32 %v4506, %v4510
    %4512 = vst.msk [vmem:[#allocation2 + $0xc] sm:$0x3] %vm582, %v4511
    %v4513 = vpack.c.bf16 %v4511, %v4511
    %v4514 = vld [vmem:[#allocation3 + $0xe] sm:$0x3]
    %v4515 = vld [vmem:[#allocation8] sm:$0xf]
    %v4516 = vld [vmem:[#allocation8 + $0x4] sm:$0xf]
    %v4517 = vld [vmem:[#allocation8 + $0x8] sm:$0xf]
    %v4518 = vld [vmem:[#allocation8 + $0xc] sm:$0xf]
    %v4523 = vunpack.c.l.b16 %v4515
    %v4524 = vunpack.c.l.b16 %v4516
    %v4525 = vunpack.c.l.b16 %v4517
    %v4526 = vunpack.c.l.b16 %v4518
    %v4527 = vpack.c.b16 %v4524, %v4523
    %v4528 = vpack.c.b16 %v4526, %v4525
    %v4532 = vsel %vm146, %v4513, 0
    %4534 = vmatprep.subr.bf16.mxu0 0
    %4535 = vmatpush1.bf16.msra.mxu0 0
    %4536 = vmatprep.subr.bf16.mxu0 0
    %4537 = vmatpush1.bf16.msra.mxu0 0
    %4538 = vmatprep.subr.bf16.mxu0 0
    %4539 = vmatpush1.bf16.msra.mxu0 0
    %4540 = vmatprep.subr.bf16.mxu0 0
    %4541 = vmatpush1.bf16.msra.mxu0 0
    %4542 = vmatprep.subr.bf16.mxu0 0
    %4543 = vmatpush1.bf16.msra.mxu0 0
    %4544 = vmatprep.subr.bf16.mxu0 0
    %4545 = vmatpush1.bf16.msra.mxu0 0
    %4546 = vmatprep.subr.bf16.mxu0 0
    %4547 = vmatpush1.bf16.msra.mxu0 %v4528
    %4548 = vmatprep.subr.bf16.mxu0 0
    %4549 = vmatpush1.bf16.msra.mxu0 %v4527
    %4550 = vmatprep.subr.bf16.mxu0 0
    %4551 = vmatpush2.bf16.msra.mxu0 0
    %4552 = vmatprep.subr.bf16.mxu0 0
    %4553 = vmatpush2.bf16.msra.mxu0 0
    %4554 = vmatprep.subr.bf16.mxu0 0
    %4555 = vmatpush2.bf16.msra.mxu0 0
    %4556 = vmatprep.subr.bf16.mxu0 0
    %4557 = vmatpush2.bf16.msra.mxu0 0
    %4558 = vmatprep.subr.bf16.mxu0 0
    %4559 = vmatpush2.bf16.msra.mxu0 0
    %4560 = vmatprep.subr.bf16.mxu0 0
    %4561 = vmatpush2.bf16.msra.mxu0 0
    %4562 = vmatprep.subr.bf16.mxu0 0
    %4563 = vmatpush2.bf16.msra.mxu0 0
    %4564 = vmatprep.subr.bf16.mxu0 0
    %4565 = vmatpush2.bf16.msra.mxu0 0
    %4566 = vmatprep.mubr.bf16.mxu0 0
    %4567 = vmatmul.mubr.bf16.gmra.mxu0 %v4532
    %v4568 = vpop.f32.mrf.mxu0
    %v4569 = vadd.f32 0.0, %v4568
    %v4570 = vpop.f32.mrf.mxu0
    %v4571 = vpop.f32.mrf.mxu0
    %v4572 = vpop.f32.mrf.mxu0
    %4573 = vdwg.mxu0
    %v4574 = vadd.f32 %v4514, %v4569
    %v4575 = vld [vmem:[%s203 + $0xe] sm:$0x3]
    %v4576 = vld [vmem:[%s2746] sm:$0xf]
    %v4577 = vld [vmem:[%s2746 + $0x4] sm:$0xf]
    %v4578 = vld [vmem:[%s2746 + $0x8] sm:$0xf]
    %v4579 = vld [vmem:[%s2746 + $0xc] sm:$0xf]
    %v4584 = vunpack.c.l.b16 %v4576
    %v4585 = vunpack.c.l.b16 %v4577
    %v4586 = vunpack.c.l.b16 %v4578
    %v4587 = vunpack.c.l.b16 %v4579
    %v4588 = vpack.c.b16 %v4585, %v4584
    %v4589 = vpack.c.b16 %v4587, %v4586
    %4592 = vmatprep.subr.bf16.mxu0 0
    %4593 = vmatpush1.bf16.msra.mxu0 0
    %4594 = vmatprep.subr.bf16.mxu0 0
    %4595 = vmatpush1.bf16.msra.mxu0 0
    %4596 = vmatprep.subr.bf16.mxu0 0
    %4597 = vmatpush1.bf16.msra.mxu0 0
    %4598 = vmatprep.subr.bf16.mxu0 0
    %4599 = vmatpush1.bf16.msra.mxu0 0
    %4600 = vmatprep.subr.bf16.mxu0 0
    %4601 = vmatpush1.bf16.msra.mxu0 0
    %4602 = vmatprep.subr.bf16.mxu0 0
    %4603 = vmatpush1.bf16.msra.mxu0 0
    %4604 = vmatprep.subr.bf16.mxu0 0
    %4605 = vmatpush1.bf16.msra.mxu0 %v4589
    %4606 = vmatprep.subr.bf16.mxu0 0
    %4607 = vmatpush1.bf16.msra.mxu0 %v4588
    %4608 = vmatprep.subr.bf16.mxu0 0
    %4609 = vmatpush2.bf16.msra.mxu0 0
    %4610 = vmatprep.subr.bf16.mxu0 0
    %4611 = vmatpush2.bf16.msra.mxu0 0
    %4612 = vmatprep.subr.bf16.mxu0 0
    %4613 = vmatpush2.bf16.msra.mxu0 0
    %4614 = vmatprep.subr.bf16.mxu0 0
    %4615 = vmatpush2.bf16.msra.mxu0 0
    %4616 = vmatprep.subr.bf16.mxu0 0
    %4617 = vmatpush2.bf16.msra.mxu0 0
    %4618 = vmatprep.subr.bf16.mxu0 0
    %4619 = vmatpush2.bf16.msra.mxu0 0
    %4620 = vmatprep.subr.bf16.mxu0 0
    %4621 = vmatpush2.bf16.msra.mxu0 0
    %4622 = vmatprep.subr.bf16.mxu0 0
    %4623 = vmatpush2.bf16.msra.mxu0 0
    %4624 = vmatprep.mubr.bf16.mxu0 0
    %4625 = vmatmul.mubr.bf16.gmra.mxu0 %v4532
    %v4626 = vpop.f32.mrf.mxu0
    %v4627 = vadd.f32 0.0, %v4626
    %v4628 = vpop.f32.mrf.mxu0
    %v4629 = vpop.f32.mrf.mxu0
    %v4630 = vpop.f32.mrf.mxu0
    %4631 = vdwg.mxu0
    %v4632 = vadd.f32 %v4575, %v4627
    %v4633 = vld [vmem:[%s260 + $0xe] sm:$0x3]
    %v4634 = vld [vmem:[%s2805] sm:$0xf]
    %v4635 = vld [vmem:[%s2805 + $0x4] sm:$0xf]
    %v4636 = vld [vmem:[%s2805 + $0x8] sm:$0xf]
    %v4637 = vld [vmem:[%s2805 + $0xc] sm:$0xf]
    %v4642 = vunpack.c.l.b16 %v4634
    %v4643 = vunpack.c.l.b16 %v4635
    %v4644 = vunpack.c.l.b16 %v4636
    %v4645 = vunpack.c.l.b16 %v4637
    %v4646 = vpack.c.b16 %v4643, %v4642
    %v4647 = vpack.c.b16 %v4645, %v4644
    %4650 = vmatprep.subr.bf16.mxu0 0
    %4651 = vmatpush1.bf16.msra.mxu0 0
    %4652 = vmatprep.subr.bf16.mxu0 0
    %4653 = vmatpush1.bf16.msra.mxu0 0
    %4654 = vmatprep.subr.bf16.mxu0 0
    %4655 = vmatpush1.bf16.msra.mxu0 0
    %4656 = vmatprep.subr.bf16.mxu0 0
    %4657 = vmatpush1.bf16.msra.mxu0 0
    %4658 = vmatprep.subr.bf16.mxu0 0
    %4659 = vmatpush1.bf16.msra.mxu0 0
    %4660 = vmatprep.subr.bf16.mxu0 0
    %4661 = vmatpush1.bf16.msra.mxu0 0
    %4662 = vmatprep.subr.bf16.mxu0 0
    %4663 = vmatpush1.bf16.msra.mxu0 %v4647
    %4664 = vmatprep.subr.bf16.mxu0 0
    %4665 = vmatpush1.bf16.msra.mxu0 %v4646
    %4666 = vmatprep.subr.bf16.mxu0 0
    %4667 = vmatpush2.bf16.msra.mxu0 0
    %4668 = vmatprep.subr.bf16.mxu0 0
    %4669 = vmatpush2.bf16.msra.mxu0 0
    %4670 = vmatprep.subr.bf16.mxu0 0
    %4671 = vmatpush2.bf16.msra.mxu0 0
    %4672 = vmatprep.subr.bf16.mxu0 0
    %4673 = vmatpush2.bf16.msra.mxu0 0
    %4674 = vmatprep.subr.bf16.mxu0 0
    %4675 = vmatpush2.bf16.msra.mxu0 0
    %4676 = vmatprep.subr.bf16.mxu0 0
    %4677 = vmatpush2.bf16.msra.mxu0 0
    %4678 = vmatprep.subr.bf16.mxu0 0
    %4679 = vmatpush2.bf16.msra.mxu0 0
    %4680 = vmatprep.subr.bf16.mxu0 0
    %4681 = vmatpush2.bf16.msra.mxu0 0
    %4682 = vmatprep.mubr.bf16.mxu0 0
    %4683 = vmatmul.mubr.bf16.gmra.mxu0 %v4532
    %v4684 = vpop.f32.mrf.mxu0
    %v4685 = vadd.f32 0.0, %v4684
    %v4686 = vpop.f32.mrf.mxu0
    %v4687 = vpop.f32.mrf.mxu0
    %v4688 = vpop.f32.mrf.mxu0
    %4689 = vdwg.mxu0
    %v4690 = vadd.f32 %v4633, %v4685
    %v4691 = vld [vmem:[%s317 + $0xe] sm:$0x3]
    %v4692 = vld [vmem:[%s2864] sm:$0xf]
    %v4693 = vld [vmem:[%s2864 + $0x4] sm:$0xf]
    %v4694 = vld [vmem:[%s2864 + $0x8] sm:$0xf]
    %v4695 = vld [vmem:[%s2864 + $0xc] sm:$0xf]
    %v4700 = vunpack.c.l.b16 %v4692
    %v4701 = vunpack.c.l.b16 %v4693
    %v4702 = vunpack.c.l.b16 %v4694
    %v4703 = vunpack.c.l.b16 %v4695
    %v4704 = vpack.c.b16 %v4701, %v4700
    %v4705 = vpack.c.b16 %v4703, %v4702
    %4708 = vmatprep.subr.bf16.mxu0 0
    %4709 = vmatpush1.bf16.msra.mxu0 0
    %4710 = vmatprep.subr.bf16.mxu0 0
    %4711 = vmatpush1.bf16.msra.mxu0 0
    %4712 = vmatprep.subr.bf16.mxu0 0
    %4713 = vmatpush1.bf16.msra.mxu0 0
    %4714 = vmatprep.subr.bf16.mxu0 0
    %4715 = vmatpush1.bf16.msra.mxu0 0
    %4716 = vmatprep.subr.bf16.mxu0 0
    %4717 = vmatpush1.bf16.msra.mxu0 0
    %4718 = vmatprep.subr.bf16.mxu0 0
    %4719 = vmatpush1.bf16.msra.mxu0 0
    %4720 = vmatprep.subr.bf16.mxu0 0
    %4721 = vmatpush1.bf16.msra.mxu0 %v4705
    %4722 = vmatprep.subr.bf16.mxu0 0
    %4723 = vmatpush1.bf16.msra.mxu0 %v4704
    %4724 = vmatprep.subr.bf16.mxu0 0
    %4725 = vmatpush2.bf16.msra.mxu0 0
    %4726 = vmatprep.subr.bf16.mxu0 0
    %4727 = vmatpush2.bf16.msra.mxu0 0
    %4728 = vmatprep.subr.bf16.mxu0 0
    %4729 = vmatpush2.bf16.msra.mxu0 0
    %4730 = vmatprep.subr.bf16.mxu0 0
    %4731 = vmatpush2.bf16.msra.mxu0 0
    %4732 = vmatprep.subr.bf16.mxu0 0
    %4733 = vmatpush2.bf16.msra.mxu0 0
    %4734 = vmatprep.subr.bf16.mxu0 0
    %4735 = vmatpush2.bf16.msra.mxu0 0
    %4736 = vmatprep.subr.bf16.mxu0 0
    %4737 = vmatpush2.bf16.msra.mxu0 0
    %4738 = vmatprep.subr.bf16.mxu0 0
    %4739 = vmatpush2.bf16.msra.mxu0 0
    %4740 = vmatprep.mubr.bf16.mxu0 0
    %4741 = vmatmul.mubr.bf16.gmra.mxu0 %v4532
    %v4742 = vpop.f32.mrf.mxu0
    %v4743 = vadd.f32 0.0, %v4742
    %v4744 = vpop.f32.mrf.mxu0
    %v4745 = vpop.f32.mrf.mxu0
    %v4746 = vpop.f32.mrf.mxu0
    %4747 = vdwg.mxu0
    %v4748 = vadd.f32 %v4691, %v4743
    %v4749 = vxor.u32 %v4574, 2147483648
    %v4750 = vmul.f32 %v4749, 1.442695
    %v4751 = vpow.pop %v4750
    %v4752 = vadd.f32 %v4751, 1.0
    %v4753 = vrcp.pop %v4752
    %v4754 = vmul.f32 1.0, %v4753
    %v4755 = vxor.u32 %v4632, 2147483648
    %v4756 = vmul.f32 %v4755, 1.442695
    %v4757 = vpow.pop %v4756
    %v4758 = vadd.f32 %v4757, 1.0
    %v4759 = vrcp.pop %v4758
    %v4760 = vmul.f32 1.0, %v4759
    %v4761 = vtanh.pop %v4690
    %v4762 = vxor.u32 %v4748, 2147483648
    %v4763 = vmul.f32 %v4762, 1.442695
    %v4764 = vpow.pop %v4763
    %v4765 = vadd.f32 %v4764, 1.0
    %v4766 = vrcp.pop %v4765
    %v4767 = vmul.f32 1.0, %v4766
    %v4768 = vmul.f32 %v4760, %v4509
    %v4769 = vmul.f32 %v4754, %v4761
    %v4770 = vadd.f32 %v4768, %v4769
    %v4771 = vtanh.pop %v4770
    %v4772 = vmul.f32 %v4767, %v4771
    %4773 = vst.msk [vmem:[#allocation2 + $0xe] sm:$0x3] %vm582, %v4772
    %v4774 = vld [vmem:[#allocation2] sm:$0xff]
    %v4775 = vld [vmem:[#allocation2 + $0x8] sm:$0xff]
    %v4776 = vpack.c.bf16 %v4775, %v4774
    %v4777 = vld [vmem:[%s7] sm:$0xf]
    %v4778 = vld [vmem:[%s7 + $0x4] sm:$0xf]
    %v4779 = vld [vmem:[%s7 + $0x8] sm:$0xf]
    %v4780 = vld [vmem:[%s7 + $0xc] sm:$0xf]
    %v4781 = vld [vmem:[%s8] sm:$0x1]
    %v4783 = vlaneseq
    %v4784 = vshrl.u32 %v4783, 7
    %v4785 = vsub.s32 0, %v4784
    %v4786 = vrot.slane %v4781, %v4785
    %v4792 = vunpack.c.l.b16 %v4777
    %v4793 = vunpack.c.l.b16 %v4778
    %v4794 = vunpack.c.l.b16 %v4779
    %v4795 = vunpack.c.l.b16 %v4780
    %v4796 = vpack.c.b16 %v4793, %v4792
    %v4797 = vpack.c.b16 %v4795, %v4794
    %v4801 = vsel %vm146, %v4776, 0
    %4803 = vmatprep.subr.bf16.mxu0 0
    %4804 = vmatpush1.bf16.msra.mxu0 0
    %4805 = vmatprep.subr.bf16.mxu0 0
    %4806 = vmatpush1.bf16.msra.mxu0 0
    %4807 = vmatprep.subr.bf16.mxu0 0
    %4808 = vmatpush1.bf16.msra.mxu0 0
    %4809 = vmatprep.subr.bf16.mxu0 0
    %4810 = vmatpush1.bf16.msra.mxu0 0
    %4811 = vmatprep.subr.bf16.mxu0 0
    %4812 = vmatpush1.bf16.msra.mxu0 0
    %4813 = vmatprep.subr.bf16.mxu0 0
    %4814 = vmatpush1.bf16.msra.mxu0 0
    %4815 = vmatprep.subr.bf16.mxu0 0
    %4816 = vmatpush1.bf16.msra.mxu0 %v4797
    %4817 = vmatprep.subr.bf16.mxu0 0
    %4818 = vmatpush1.bf16.msra.mxu0 %v4796
    %4819 = vmatprep.subr.bf16.mxu0 0
    %4820 = vmatpush2.bf16.msra.mxu0 0
    %4821 = vmatprep.subr.bf16.mxu0 0
    %4822 = vmatpush2.bf16.msra.mxu0 0
    %4823 = vmatprep.subr.bf16.mxu0 0
    %4824 = vmatpush2.bf16.msra.mxu0 0
    %4825 = vmatprep.subr.bf16.mxu0 0
    %4826 = vmatpush2.bf16.msra.mxu0 0
    %4827 = vmatprep.subr.bf16.mxu0 0
    %4828 = vmatpush2.bf16.msra.mxu0 0
    %4829 = vmatprep.subr.bf16.mxu0 0
    %4830 = vmatpush2.bf16.msra.mxu0 0
    %4831 = vmatprep.subr.bf16.mxu0 0
    %4832 = vmatpush2.bf16.msra.mxu0 0
    %4833 = vmatprep.subr.bf16.mxu0 0
    %4834 = vmatpush2.bf16.msra.mxu0 0
    %4835 = vmatprep.mubr.bf16.mxu0 0
    %4836 = vmatmul.mubr.bf16.gmra.mxu0 %v4801
    %v4837 = vpop.f32.mrf.mxu0
    %v4838 = vadd.f32 %v4786, %v4837
    %v4839 = vpop.f32.mrf.mxu0
    %v4840 = vpop.f32.mrf.mxu0
    %v4841 = vadd.f32 %v4786, %v4840
    %v4842 = vpop.f32.mrf.mxu0
    %4843 = vdwg.mxu0
    %v4844 = vmax.f32 %v4838, 0.0
    %v4845 = vmax.f32 %v4841, 0.0
    %v4846 = vpack.c.bf16 %v4845, %v4844
    %v4847 = vld [vmem:[%s9] sm:$0xf]
    %v4848 = vld [vmem:[%s9 + $0x4] sm:$0xf]
    %v4849 = vld [vmem:[%s9 + $0x8] sm:$0xf]
    %v4850 = vld [vmem:[%s9 + $0xc] sm:$0xf]
    %v4851 = vld [vmem:[%s10] sm:$0x1]
    %v4853 = vlaneseq
    %v4854 = vshrl.u32 %v4853, 7
    %v4855 = vsub.s32 0, %v4854
    %v4856 = vrot.slane %v4851, %v4855
    %v4862 = vunpack.c.l.b16 %v4847
    %v4863 = vunpack.c.l.b16 %v4848
    %v4864 = vunpack.c.l.b16 %v4849
    %v4865 = vunpack.c.l.b16 %v4850
    %v4866 = vpack.c.b16 %v4863, %v4862
    %v4867 = vpack.c.b16 %v4865, %v4864
    %v4871 = vsel %vm146, %v4846, 0
    %4873 = vmatprep.subr.bf16.mxu0 0
    %4874 = vmatpush1.bf16.msra.mxu0 0
    %4875 = vmatprep.subr.bf16.mxu0 0
    %4876 = vmatpush1.bf16.msra.mxu0 0
    %4877 = vmatprep.subr.bf16.mxu0 0
    %4878 = vmatpush1.bf16.msra.mxu0 0
    %4879 = vmatprep.subr.bf16.mxu0 0
    %4880 = vmatpush1.bf16.msra.mxu0 0
    %4881 = vmatprep.subr.bf16.mxu0 0
    %4882 = vmatpush1.bf16.msra.mxu0 0
    %4883 = vmatprep.subr.bf16.mxu0 0
    %4884 = vmatpush1.bf16.msra.mxu0 0
    %4885 = vmatprep.subr.bf16.mxu0 0
    %4886 = vmatpush1.bf16.msra.mxu0 %v4867
    %4887 = vmatprep.subr.bf16.mxu0 0
    %4888 = vmatpush1.bf16.msra.mxu0 %v4866
    %4889 = vmatprep.subr.bf16.mxu0 0
    %4890 = vmatpush2.bf16.msra.mxu0 0
    %4891 = vmatprep.subr.bf16.mxu0 0
    %4892 = vmatpush2.bf16.msra.mxu0 0
    %4893 = vmatprep.subr.bf16.mxu0 0
    %4894 = vmatpush2.bf16.msra.mxu0 0
    %4895 = vmatprep.subr.bf16.mxu0 0
    %4896 = vmatpush2.bf16.msra.mxu0 0
    %4897 = vmatprep.subr.bf16.mxu0 0
    %4898 = vmatpush2.bf16.msra.mxu0 0
    %4899 = vmatprep.subr.bf16.mxu0 0
    %4900 = vmatpush2.bf16.msra.mxu0 0
    %4901 = vmatprep.subr.bf16.mxu0 0
    %4902 = vmatpush2.bf16.msra.mxu0 0
    %4903 = vmatprep.subr.bf16.mxu0 0
    %4904 = vmatpush2.bf16.msra.mxu0 0
    %4905 = vmatprep.mubr.bf16.mxu0 0
    %4906 = vmatmul.mubr.bf16.gmra.mxu0 %v4871
    %v4907 = vpop.f32.mrf.mxu0
    %v4908 = vadd.f32 %v4856, %v4907
    %v4909 = vpop.f32.mrf.mxu0
    %v4910 = vpop.f32.mrf.mxu0
    %v4911 = vadd.f32 %v4856, %v4910
    %v4912 = vpop.f32.mrf.mxu0
    %4913 = vdwg.mxu0
    %v4914 = vld [vmem:[%s12] sm:$0x1]
    %v4915 = vld [vmem:[%s11] sm:$0x1]
    %v4916 = vsub.f32 %v4915, %v4914
    %v4917 = vxor.u32 %v4908, 2147483648
    %v4918 = vxor.u32 %v4911, 2147483648
    %v4919 = vmul.f32 %v4917, 1.442695
    %v4920 = vpow.pop %v4919
    %v4921 = vmul.f32 %v4918, 1.442695
    %v4922 = vpow.pop %v4921
    %v4923 = vadd.f32 %v4920, 1.0
    %v4924 = vadd.f32 %v4922, 1.0
    %v4925 = vrcp.pop %v4923
    %v4926 = vmul.f32 1.0, %v4925
    %v4927 = vrcp.pop %v4924
    %v4928 = vmul.f32 1.0, %v4927
    %v4930 = vlaneseq
    %v4931 = vshrl.u32 %v4930, 7
    %v4932 = vsub.s32 0, %v4931
    %v4933 = vrot.slane %v4916, %v4932
    %v4935 = vmul.f32 %v4933, %v4926
    %v4936 = vmul.f32 %v4933, %v4928
    %v4938 = vlaneseq
    %v4939 = vshrl.u32 %v4938, 7
    %v4940 = vsub.s32 0, %v4939
    %v4941 = vrot.slane %v4914, %v4940
    %v4943 = vadd.f32 %v4941, %v4935
    %v4944 = vadd.f32 %v4941, %v4936
    %vm4945 = vcmask 31744
    %4946 = vst.msk [vmem:[%s13] sm:$0xff] %vm4945, %v4943
    %4947 = vst.msk [vmem:[%s13 + $0x8] sm:$0xff] %vm4945, %v4944
    // Predicated region
    $region66: #{tpu_custom_call.1} parent=1 // pred_check
      _
    $region67: #{tpu_custom_call.1} parent=1 // pred_check_branch
      %4949 = sbr.rel (0) target = $region69
    $region68: #{tpu_custom_call.1} parent=1 // pred_region
      _
    $region69: #{tpu_custom_call.1} parent=1 // pred_fallthru
      _
    // Predicated region
    $region70: #{tpu_custom_call.1} parent=1 // pred_check
      _
    $region71: #{tpu_custom_call.1} parent=1 // pred_check_branch
      %4951 = sbr.rel (0) target = $region73
    $region72: #{tpu_custom_call.1} parent=1 // pred_region
      _
    $region73: #{tpu_custom_call.1} parent=1 // pred_fallthru
      _
    %4952 = vsyncpa [#allocation5], 1
    %4953 = vsyncpa [#allocation7], 1

</llo_original>
